<compile_context>
chip_gen: v6e
topology: v6e:2x2x1
jax: 0.10.0
libtpu: 0.0.40
codegen_flags: <defaults>
</compile_context>

<pallas_src>
import functools

import jax
import jax.numpy as jnp
from jax.experimental import pallas as pl
from jax.experimental.pallas import tpu as pltpu

_LANE = 128


def _round_up(x, m):
    return ((x + m - 1) // m) * m


def _cdiv(a, b):
    return -(-a // b)


@functools.lru_cache(maxsize=None)
def _vmem_budget():
    """(working-set budget, vmem_limit_bytes) for the current generation."""
    try:
        cap = int(pltpu.get_tpu_info().vmem_capacity_bytes)
    except Exception:
        cap = 64 * 2 ** 20                   # conservative (v7x-sized) fallback
    if cap >= 100 * 2 ** 20:                 # 128 MiB parts: v5e / v6e
        return 64 * 2 ** 20, 96 * 2 ** 20
    return 24 * 2 ** 20, 48 * 2 ** 20        # v7x: 64 MiB physical per TC


# ----------------------------------------------------------------------------
# Pallas kernel: bf16 matmul (f32 acc) -> +bias -> (+residual) -> (ReLU)
# ----------------------------------------------------------------------------
def _make_matmul_kernel(post_relu: bool, has_residual: bool):
    def _body(x, w, b, r):
        y = jnp.dot(x, w, preferred_element_type=jnp.float32) + b
        if r is not None:
            y = y + r
        if post_relu:
            y = jnp.maximum(y, 0.0)
        return y

    if has_residual:
        def kernel(x_ref, w_ref, b_ref, r_ref, o_ref):
            o_ref[...] = _body(x_ref[...], w_ref[...], b_ref[...],
                               r_ref[...]).astype(o_ref.dtype)
    else:
        def kernel(x_ref, w_ref, b_ref, o_ref):
            o_ref[...] = _body(x_ref[...], w_ref[...], b_ref[...],
                               None).astype(o_ref.dtype)
    return kernel


# ----------------------------------------------------------------------------
# im2col glue (data movement only; eligible for input fusion into the DMA)
# ----------------------------------------------------------------------------
def _im2col_3x3(x, stride):
    """x: (N, H, W, C) -> ((N*Hout*Wout, 9*C), (N, Hout, Wout))."""
    N, H, W, C = x.shape
    Hout = (H + 2 - 3) // stride + 1
    Wout = (W + 2 - 3) // stride + 1
    xp = jnp.pad(x, ((0, 0), (1, 1), (1, 1), (0, 0)))
    taps = []
    for ky in range(3):
        for kx in range(3):
            taps.append(
                xp[:, ky:ky + stride * (Hout - 1) + 1:stride,
                      kx:kx + stride * (Wout - 1) + 1:stride, :])
    cols = jnp.concatenate(taps, axis=-1)            # (N, Hout, Wout, 9*C)
    return cols.reshape(N * Hout * Wout, 9 * C), (N, Hout, Wout)


def _choose_tm(M, K, Np, has_residual, out_itemsize, budget):
    """M-tile: multiple of 16, fits VMEM, >=2 (near-even) tiles when M > 16."""
    # Double-buffered bytes per output row: bf16 cols + out (+ f32 residual).
    per_row = 2 * (K * 2 + Np * out_itemsize + (Np * 4 if has_residual else 0))
    fixed = K * Np * 2 + Np * 4                      # resident weight + bias
    avail = max(budget - fixed, 1 << 20)
    tm_cap = min(2048, max(16, (int(avail // per_row) // 16) * 16))
    if M <= 16:
        return 16
    n_tiles = max(2, _cdiv(M, tm_cap))               # >=2 steps for v7x megacore
    return min(tm_cap, _round_up(_cdiv(M, n_tiles), 16))


def conv3x3(x, w, b, *, stride=1, pre_relu=False, post_relu=False,
            residual=None, out_dtype=jnp.float32):
    """3x3 conv, padding=1. x: NHWC (f32 or bf16). w: OIHW f32. b: (Cout,)."""
    Cout, Cin = int(w.shape[0]), int(w.shape[1])
    if pre_relu:
        # Once on the activation (not 9x on im2col-replicated data, and before
        # the bf16 cast so no bf16 VALU work lands in the kernel on v5e).
        x = jax.nn.relu(x)
    cols, (N, Hout, Wout) = _im2col_3x3(x.astype(jnp.bfloat16), stride)
    M, K = int(cols.shape[0]), int(cols.shape[1])

    Np = _round_up(Cout, _LANE)                      # lane-dense stores
    has_res = residual is not None
    out_isz = jnp.dtype(out_dtype).itemsize
    budget, vmem_limit = _vmem_budget()
    TM = _choose_tm(M, K, Np, has_res, out_isz, budget)
    Mp = _round_up(M, TM)

    cols_p = cols if Mp == M else jnp.pad(cols, ((0, Mp - M), (0, 0)))
    # OIHW -> (ky, kx, Cin, Cout) -> (9*Cin, Cout): matches im2col tap order.
    w_mat = jnp.transpose(w, (2, 3, 1, 0)).reshape(K, Cout)
    b_mat = b.reshape(1, Cout).astype(jnp.float32)
    if Np != Cout:
        w_mat = jnp.pad(w_mat, ((0, 0), (0, Np - Cout)))
        b_mat = jnp.pad(b_mat, ((0, 0), (0, Np - Cout)))
    w_mat = w_mat.astype(jnp.bfloat16)

    in_arrays = [cols_p, w_mat, b_mat]
    in_specs = [
        pl.BlockSpec((TM, K), lambda i: (i, 0)),     # true K: no HBM K-padding
        pl.BlockSpec((K, Np), lambda i: (0, 0)),     # weight stays VMEM-resident
        pl.BlockSpec((1, Np), lambda i: (0, 0)),
    ]
    if has_res:
        r = residual.reshape(M, Cout).astype(jnp.float32)
        if Mp != M or Np != Cout:
            r = jnp.pad(r, ((0, Mp - M), (0, Np - Cout)))
        in_arrays.append(r)
        in_specs.append(pl.BlockSpec((TM, Np), lambda i: (i, 0)))

    bytes_accessed = (Mp * K * 2 + K * Np * 2 + Np * 4 + Mp * Np * out_isz
                      + (Mp * Np * 4 if has_res else 0))
    out = pl.pallas_call(
        _make_matmul_kernel(post_relu, has_res),
        out_shape=jax.ShapeDtypeStruct((Mp, Np), out_dtype),
        grid=(Mp // TM,),
        in_specs=in_specs,
        out_specs=pl.BlockSpec((TM, Np), lambda i: (i, 0)),
        compiler_params=pltpu.CompilerParams(
            dimension_semantics=("parallel",),       # megacore on v7x
            vmem_limit_bytes=vmem_limit,
            # Let XLA fold im2col / casts / pads into the input DMA instead of
            # materialising them in HBM.
            allow_input_fusion=[True] * len(in_arrays)),
        cost_estimate=pl.CostEstimate(
            flops=2 * Mp * K * Np,
            transcendentals=0,
            bytes_accessed=bytes_accessed),
    )(*in_arrays)
    if Mp != M or Np != Cout:
        out = out[:M, :Cout]
    return out.reshape(N, Hout, Wout, Cout)


# ----------------------------------------------------------------------------
# Parameter construction (deterministic, PyTorch Conv2d shapes: OIHW + bias)
# ----------------------------------------------------------------------------
def _conv_params(key, cin, cout):
    kw, kb = jax.random.split(key)
    scale = 1.0 / jnp.sqrt(cin * 9.0)
    w = jax.random.normal(kw, (cout, cin, 3, 3), jnp.float32) * scale
    b = jax.random.normal(kb, (cout,), jnp.float32) * scale
    return w, b


def init_encoder_params(key, image_channels, latent_dim, res_channels,
                        num_residual_layers):
    keys = jax.random.split(key, 5 + 2 * num_residual_layers)
    half = latent_dim // 2
    params = {
        "c1": _conv_params(keys[0], image_channels, half),
        "d1": _conv_params(keys[1], half, half),
        "c2": _conv_params(keys[2], half, latent_dim),
        "d2": _conv_params(keys[3], latent_dim, latent_dim),
        "c3": _conv_params(keys[4], latent_dim, latent_dim),
        "res": [],
    }
    for i in range(num_residual_layers):
        w1, b1 = _conv_params(keys[5 + 2 * i], latent_dim, res_channels)
        w2, b2 = _conv_params(keys[6 + 2 * i], res_channels, latent_dim)
        params["res"].append((w1, b1, w2, b2))
    return params


# ----------------------------------------------------------------------------
# Encoder forward (Pallas)
# ----------------------------------------------------------------------------
def encoder_forward(params, x_nchw):
    bf16 = jnp.bfloat16
    x = jnp.transpose(x_nchw, (0, 2, 3, 1)).astype(jnp.float32)   # -> NHWC
    p = params
    # Intermediates that only feed the next conv are stored bf16 (half the
    # HBM writeback / re-read on a memory-bound pipeline); residual carriers
    # (c3 output and each ResBlock output) stay f32.
    x = conv3x3(x, *p["c1"], stride=1, out_dtype=bf16)             # Channelizer
    x = conv3x3(x, *p["d1"], stride=2, post_relu=True, out_dtype=bf16)
    x = conv3x3(x, *p["c2"], stride=1, out_dtype=bf16)             # Channelizer
    x = conv3x3(x, *p["d2"], stride=2, post_relu=True, out_dtype=bf16)
    x = conv3x3(x, *p["c3"], stride=1, out_dtype=jnp.float32)      # carrier
    # ResidualStack: x = x + Conv(ReLU(Conv(ReLU(x)))) per block, ReLU at end.
    n = len(p["res"])
    for i, (w1, b1, w2, b2) in enumerate(p["res"]):
        h = conv3x3(x, w1, b1, stride=1, pre_relu=True, out_dtype=bf16)
        x = conv3x3(h, w2, b2, stride=1, pre_relu=True,
                    post_relu=(i == n - 1), residual=x, out_dtype=jnp.float32)
    return jnp.transpose(x, (0, 3, 1, 2))                           # -> NCHW


# ----------------------------------------------------------------------------
# Pure-JAX references (for correctness sanity checks)
# ----------------------------------------------------------------------------
def _ref_conv(x, w, b, stride, *, dtype=jnp.float32):
    y = jax.lax.conv_general_dilated(
        x.astype(dtype), jnp.transpose(w, (2, 3, 1, 0)).astype(dtype),
        window_strides=(stride, stride), padding=((1, 1), (1, 1)),
        dimension_numbers=("NHWC", "HWIO", "NHWC"),
        preferred_element_type=jnp.float32)
    return y + b


def encoder_reference(params, x_nchw, *, matmul_dtype=jnp.float32):
    conv = functools.partial(_ref_conv, dtype=matmul_dtype)
    x = jnp.transpose(x_nchw, (0, 2, 3, 1)).astype(jnp.float32)
    p = params
    x = conv(x, *p["c1"], 1)
    x = jax.nn.relu(conv(x, *p["d1"], 2))
    x = conv(x, *p["c2"], 1)
    x = jax.nn.relu(conv(x, *p["d2"], 2))
    x = conv(x, *p["c3"], 1)
    for (w1, b1, w2, b2) in p["res"]:
        h = conv(jax.nn.relu(x), w1, b1, 1)
        x = x + conv(jax.nn.relu(h), w2, b2, 1)
    x = jax.nn.relu(x)
    return jnp.transpose(x, (0, 3, 1, 2))


if __name__ == "__main__":
    # Encoder(image_channels=4, latent_dim=32, res_channels=16,
    #         num_residual_layers=2) on a (2, 4, 16, 16) NCHW input.
    image_channels, latent_dim, res_channels, num_res = 4, 32, 16, 2
    key = jax.random.PRNGKey(0)
    k_params, k_x = jax.random.split(key)
    params = init_encoder_params(k_params, image_channels, latent_dim,
                                 res_channels, num_res)
    x = jax.random.normal(k_x, (2, image_channels, 16, 16), jnp.float32)

    out = jax.block_until_ready(jax.jit(encoder_forward)(params, x))
    # Reference with matching numerics (bf16 MXU operands, f32 accumulate).
    ref_bf16 = jax.block_until_ready(
        encoder_reference(params, x, matmul_dtype=jnp.bfloat16))
    # Pure-f32 reference (PyTorch fidelity; only bf16 quantization differs).
    ref_f32 = jax.block_until_ready(
        encoder_reference(params, x, matmul_dtype=jnp.float32))

    assert out.shape == (2, latent_dim, 4, 4), out.shape
    assert jnp.allclose(out, ref_bf16, atol=1e-2, rtol=1e-2), \
        float(jnp.max(jnp.abs(out - ref_bf16)))
    assert jnp.allclose(out, ref_f32, atol=0.2, rtol=0.1), \
        float(jnp.max(jnp.abs(out - ref_f32)))
    print("KERNEL_OK")
</pallas_src>

<mosaic_0001>
module attributes {stable_mosaic.version = 11 : i64} {
  func.func @kernel(%arg0: i32, %arg1: memref<256x36xbf16, #tpu.memory_space<vmem>>, %arg2: memref<36x128xbf16, #tpu.memory_space<vmem>>, %arg3: memref<1x128xf32, #tpu.memory_space<vmem>>, %arg4: memref<256x128xbf16, #tpu.memory_space<vmem>>) attributes {dimension_semantics = [#tpu.dimension_semantics<parallel>], iteration_bounds = array<i64: 2>, scalar_prefetch = 0 : i64, scratch_operands = 0 : i64, tpu.core_type = #tpu.core_type<tc>, window_params = [{transform_indices = @transform_0, window_bounds = array<i64: 256, 36>}, {pipeline_mode = #tpu.pipeline_mode<synchronous>, transform_indices = @transform_1, window_bounds = array<i64: 36, 128>}, {pipeline_mode = #tpu.pipeline_mode<synchronous>, transform_indices = @transform_2, window_bounds = array<i64: 1, 128>}, {transform_indices = @transform_3, window_bounds = array<i64: 256, 128>}]} {
    %c0 = arith.constant 0 : index
    %c0_0 = arith.constant 0 : index
    %0 = vector.load %arg1[%c0, %c0_0] : memref<256x36xbf16, #tpu.memory_space<vmem>>, vector<256x36xbf16>
    %c0_1 = arith.constant 0 : index
    %c0_2 = arith.constant 0 : index
    %1 = vector.load %arg2[%c0_1, %c0_2] : memref<36x128xbf16, #tpu.memory_space<vmem>>, vector<36x128xbf16>
    %c0_3 = arith.constant 0 : index
    %c0_4 = arith.constant 0 : index
    %2 = vector.load %arg3[%c0_3, %c0_4] : memref<1x128xf32, #tpu.memory_space<vmem>>, vector<1x128xf32>
    %cst = arith.constant dense<0.000000e+00> : vector<256x128xf32>
    %3 = tpu.matmul %0, %1, %cst {dimension_numbers = #tpu.dot_dimension_numbers<[1], [0], [0], [1], [0, 0, 1, 1], [], []>} : vector<256x36xbf16>, vector<36x128xbf16>, vector<256x128xf32> -> vector<256x128xf32>
    %4 = vector.broadcast %2 : vector<1x128xf32> to vector<256x128xf32>
    %5 = arith.addf %3, %4 : vector<256x128xf32>
    %6 = arith.truncf %5 : vector<256x128xf32> to vector<256x128xbf16>
    %c0_5 = arith.constant 0 : index
    %c0_6 = arith.constant 0 : index
    %7 = vector.load %arg4[%c0_5, %c0_6] : memref<256x128xbf16, #tpu.memory_space<vmem>>, vector<256x128xbf16>
    tpu.vector_store %arg4[%c0_5, %c0_6], %6 {strides = array<i32>} : memref<256x128xbf16, #tpu.memory_space<vmem>>, vector<256x128xbf16>,
    return
  }
  func.func @transform_0(%arg0: i32) -> (i32, i32) {
    %c0_i32 = arith.constant 0 : i32
    %c0_i32_0 = arith.constant 0 : i32
    return %arg0, %c0_i32 : i32, i32
  }
  func.func @transform_1(%arg0: i32) -> (i32, i32) {
    %c0_i32 = arith.constant 0 : i32
    %c0_i32_0 = arith.constant 0 : i32
    %c0_i32_1 = arith.constant 0 : i32
    return %c0_i32, %c0_i32_0 : i32, i32
  }
  func.func @transform_2(%arg0: i32) -> (i32, i32) {
    %c0_i32 = arith.constant 0 : i32
    %c0_i32_0 = arith.constant 0 : i32
    %c0_i32_1 = arith.constant 0 : i32
    return %c0_i32, %c0_i32_0 : i32, i32
  }
  func.func @transform_3(%arg0: i32) -> (i32, i32) {
    %c0_i32 = arith.constant 0 : i32
    %c0_i32_0 = arith.constant 0 : i32
    return %arg0, %c0_i32 : i32, i32
  }
}

module attributes {stable_mosaic.version = 11 : i64} {
  func.func @kernel(%arg0: i32, %arg1: memref<64x144xbf16, #tpu.memory_space<vmem>>, %arg2: memref<144x128xbf16, #tpu.memory_space<vmem>>, %arg3: memref<1x128xf32, #tpu.memory_space<vmem>>, %arg4: memref<64x128xbf16, #tpu.memory_space<vmem>>) attributes {dimension_semantics = [#tpu.dimension_semantics<parallel>], iteration_bounds = array<i64: 2>, scalar_prefetch = 0 : i64, scratch_operands = 0 : i64, tpu.core_type = #tpu.core_type<tc>, window_params = [{transform_indices = @transform_0, window_bounds = array<i64: 64, 144>}, {pipeline_mode = #tpu.pipeline_mode<synchronous>, transform_indices = @transform_1, window_bounds = array<i64: 144, 128>}, {pipeline_mode = #tpu.pipeline_mode<synchronous>, transform_indices = @transform_2, window_bounds = array<i64: 1, 128>}, {transform_indices = @transform_3, window_bounds = array<i64: 64, 128>}]} {
    %c0 = arith.constant 0 : index
    %c0_0 = arith.constant 0 : index
    %0 = vector.load %arg1[%c0, %c0_0] : memref<64x144xbf16, #tpu.memory_space<vmem>>, vector<64x144xbf16>
    %c0_1 = arith.constant 0 : index
    %c0_2 = arith.constant 0 : index
    %1 = vector.load %arg2[%c0_1, %c0_2] : memref<144x128xbf16, #tpu.memory_space<vmem>>, vector<144x128xbf16>
    %c0_3 = arith.constant 0 : index
    %c0_4 = arith.constant 0 : index
    %2 = vector.load %arg3[%c0_3, %c0_4] : memref<1x128xf32, #tpu.memory_space<vmem>>, vector<1x128xf32>
    %cst = arith.constant dense<0.000000e+00> : vector<64x128xf32>
    %3 = tpu.matmul %0, %1, %cst {dimension_numbers = #tpu.dot_dimension_numbers<[1], [0], [0], [1], [0, 0, 1, 1], [], []>} : vector<64x144xbf16>, vector<144x128xbf16>, vector<64x128xf32> -> vector<64x128xf32>
    %4 = vector.broadcast %2 : vector<1x128xf32> to vector<64x128xf32>
    %5 = arith.addf %3, %4 : vector<64x128xf32>
    %cst_5 = arith.constant 0.000000e+00 : f32
    %6 = vector.broadcast %cst_5 : f32 to vector<64x128xf32>
    %7 = arith.maximumf %5, %6 : vector<64x128xf32>
    %8 = arith.truncf %7 : vector<64x128xf32> to vector<64x128xbf16>
    %c0_6 = arith.constant 0 : index
    %c0_7 = arith.constant 0 : index
    %9 = vector.load %arg4[%c0_6, %c0_7] : memref<64x128xbf16, #tpu.memory_space<vmem>>, vector<64x128xbf16>
    tpu.vector_store %arg4[%c0_6, %c0_7], %8 {strides = array<i32>} : memref<64x128xbf16, #tpu.memory_space<vmem>>, vector<64x128xbf16>,
    return
  }
  func.func @transform_0(%arg0: i32) -> (i32, i32) {
    %c0_i32 = arith.constant 0 : i32
    %c0_i32_0 = arith.constant 0 : i32
    return %arg0, %c0_i32 : i32, i32
  }
  func.func @transform_1(%arg0: i32) -> (i32, i32) {
    %c0_i32 = arith.constant 0 : i32
    %c0_i32_0 = arith.constant 0 : i32
    %c0_i32_1 = arith.constant 0 : i32
    return %c0_i32, %c0_i32_0 : i32, i32
  }
  func.func @transform_2(%arg0: i32) -> (i32, i32) {
    %c0_i32 = arith.constant 0 : i32
    %c0_i32_0 = arith.constant 0 : i32
    %c0_i32_1 = arith.constant 0 : i32
    return %c0_i32, %c0_i32_0 : i32, i32
  }
  func.func @transform_3(%arg0: i32) -> (i32, i32) {
    %c0_i32 = arith.constant 0 : i32
    %c0_i32_0 = arith.constant 0 : i32
    return %arg0, %c0_i32 : i32, i32
  }
}

module attributes {stable_mosaic.version = 11 : i64} {
  func.func @kernel(%arg0: i32, %arg1: memref<64x144xbf16, #tpu.memory_space<vmem>>, %arg2: memref<144x128xbf16, #tpu.memory_space<vmem>>, %arg3: memref<1x128xf32, #tpu.memory_space<vmem>>, %arg4: memref<64x128xbf16, #tpu.memory_space<vmem>>) attributes {dimension_semantics = [#tpu.dimension_semantics<parallel>], iteration_bounds = array<i64: 2>, scalar_prefetch = 0 : i64, scratch_operands = 0 : i64, tpu.core_type = #tpu.core_type<tc>, window_params = [{transform_indices = @transform_0, window_bounds = array<i64: 64, 144>}, {pipeline_mode = #tpu.pipeline_mode<synchronous>, transform_indices = @transform_1, window_bounds = array<i64: 144, 128>}, {pipeline_mode = #tpu.pipeline_mode<synchronous>, transform_indices = @transform_2, window_bounds = array<i64: 1, 128>}, {transform_indices = @transform_3, window_bounds = array<i64: 64, 128>}]} {
    %c0 = arith.constant 0 : index
    %c0_0 = arith.constant 0 : index
    %0 = vector.load %arg1[%c0, %c0_0] : memref<64x144xbf16, #tpu.memory_space<vmem>>, vector<64x144xbf16>
    %c0_1 = arith.constant 0 : index
    %c0_2 = arith.constant 0 : index
    %1 = vector.load %arg2[%c0_1, %c0_2] : memref<144x128xbf16, #tpu.memory_space<vmem>>, vector<144x128xbf16>
    %c0_3 = arith.constant 0 : index
    %c0_4 = arith.constant 0 : index
    %2 = vector.load %arg3[%c0_3, %c0_4] : memref<1x128xf32, #tpu.memory_space<vmem>>, vector<1x128xf32>
    %cst = arith.constant dense<0.000000e+00> : vector<64x128xf32>
    %3 = tpu.matmul %0, %1, %cst {dimension_numbers = #tpu.dot_dimension_numbers<[1], [0], [0], [1], [0, 0, 1, 1], [], []>} : vector<64x144xbf16>, vector<144x128xbf16>, vector<64x128xf32> -> vector<64x128xf32>
    %4 = vector.broadcast %2 : vector<1x128xf32> to vector<64x128xf32>
    %5 = arith.addf %3, %4 : vector<64x128xf32>
    %6 = arith.truncf %5 : vector<64x128xf32> to vector<64x128xbf16>
    %c0_5 = arith.constant 0 : index
    %c0_6 = arith.constant 0 : index
    %7 = vector.load %arg4[%c0_5, %c0_6] : memref<64x128xbf16, #tpu.memory_space<vmem>>, vector<64x128xbf16>
    tpu.vector_store %arg4[%c0_5, %c0_6], %6 {strides = array<i32>} : memref<64x128xbf16, #tpu.memory_space<vmem>>, vector<64x128xbf16>,
    return
  }
  func.func @transform_0(%arg0: i32) -> (i32, i32) {
    %c0_i32 = arith.constant 0 : i32
    %c0_i32_0 = arith.constant 0 : i32
    return %arg0, %c0_i32 : i32, i32
  }
  func.func @transform_1(%arg0: i32) -> (i32, i32) {
    %c0_i32 = arith.constant 0 : i32
    %c0_i32_0 = arith.constant 0 : i32
    %c0_i32_1 = arith.constant 0 : i32
    return %c0_i32, %c0_i32_0 : i32, i32
  }
  func.func @transform_2(%arg0: i32) -> (i32, i32) {
    %c0_i32 = arith.constant 0 : i32
    %c0_i32_0 = arith.constant 0 : i32
    %c0_i32_1 = arith.constant 0 : i32
    return %c0_i32, %c0_i32_0 : i32, i32
  }
  func.func @transform_3(%arg0: i32) -> (i32, i32) {
    %c0_i32 = arith.constant 0 : i32
    %c0_i32_0 = arith.constant 0 : i32
    return %arg0, %c0_i32 : i32, i32
  }
}

module attributes {stable_mosaic.version = 11 : i64} {
  func.func @kernel(%arg0: i32, %arg1: memref<16x288xbf16, #tpu.memory_space<vmem>>, %arg2: memref<288x128xbf16, #tpu.memory_space<vmem>>, %arg3: memref<1x128xf32, #tpu.memory_space<vmem>>, %arg4: memref<16x128xbf16, #tpu.memory_space<vmem>>) attributes {dimension_semantics = [#tpu.dimension_semantics<parallel>], iteration_bounds = array<i64: 2>, scalar_prefetch = 0 : i64, scratch_operands = 0 : i64, tpu.core_type = #tpu.core_type<tc>, window_params = [{transform_indices = @transform_0, window_bounds = array<i64: 16, 288>}, {pipeline_mode = #tpu.pipeline_mode<synchronous>, transform_indices = @transform_1, window_bounds = array<i64: 288, 128>}, {pipeline_mode = #tpu.pipeline_mode<synchronous>, transform_indices = @transform_2, window_bounds = array<i64: 1, 128>}, {transform_indices = @transform_3, window_bounds = array<i64: 16, 128>}]} {
    %c0 = arith.constant 0 : index
    %c0_0 = arith.constant 0 : index
    %0 = vector.load %arg1[%c0, %c0_0] : memref<16x288xbf16, #tpu.memory_space<vmem>>, vector<16x288xbf16>
    %c0_1 = arith.constant 0 : index
    %c0_2 = arith.constant 0 : index
    %1 = vector.load %arg2[%c0_1, %c0_2] : memref<288x128xbf16, #tpu.memory_space<vmem>>, vector<288x128xbf16>
    %c0_3 = arith.constant 0 : index
    %c0_4 = arith.constant 0 : index
    %2 = vector.load %arg3[%c0_3, %c0_4] : memref<1x128xf32, #tpu.memory_space<vmem>>, vector<1x128xf32>
    %cst = arith.constant dense<0.000000e+00> : vector<16x128xf32>
    %3 = tpu.matmul %0, %1, %cst {dimension_numbers = #tpu.dot_dimension_numbers<[1], [0], [0], [1], [0, 0, 1, 1], [], []>} : vector<16x288xbf16>, vector<288x128xbf16>, vector<16x128xf32> -> vector<16x128xf32>
    %4 = vector.broadcast %2 : vector<1x128xf32> to vector<16x128xf32>
    %5 = arith.addf %3, %4 : vector<16x128xf32>
    %cst_5 = arith.constant 0.000000e+00 : f32
    %6 = vector.broadcast %cst_5 : f32 to vector<16x128xf32>
    %7 = arith.maximumf %5, %6 : vector<16x128xf32>
    %8 = arith.truncf %7 : vector<16x128xf32> to vector<16x128xbf16>
    %c0_6 = arith.constant 0 : index
    %c0_7 = arith.constant 0 : index
    %9 = vector.load %arg4[%c0_6, %c0_7] : memref<16x128xbf16, #tpu.memory_space<vmem>>, vector<16x128xbf16>
    tpu.vector_store %arg4[%c0_6, %c0_7], %8 {strides = array<i32>} : memref<16x128xbf16, #tpu.memory_space<vmem>>, vector<16x128xbf16>,
    return
  }
  func.func @transform_0(%arg0: i32) -> (i32, i32) {
    %c0_i32 = arith.constant 0 : i32
    %c0_i32_0 = arith.constant 0 : i32
    return %arg0, %c0_i32 : i32, i32
  }
  func.func @transform_1(%arg0: i32) -> (i32, i32) {
    %c0_i32 = arith.constant 0 : i32
    %c0_i32_0 = arith.constant 0 : i32
    %c0_i32_1 = arith.constant 0 : i32
    return %c0_i32, %c0_i32_0 : i32, i32
  }
  func.func @transform_2(%arg0: i32) -> (i32, i32) {
    %c0_i32 = arith.constant 0 : i32
    %c0_i32_0 = arith.constant 0 : i32
    %c0_i32_1 = arith.constant 0 : i32
    return %c0_i32, %c0_i32_0 : i32, i32
  }
  func.func @transform_3(%arg0: i32) -> (i32, i32) {
    %c0_i32 = arith.constant 0 : i32
    %c0_i32_0 = arith.constant 0 : i32
    return %arg0, %c0_i32 : i32, i32
  }
}

module attributes {stable_mosaic.version = 11 : i64} {
  func.func @kernel(%arg0: i32, %arg1: memref<16x288xbf16, #tpu.memory_space<vmem>>, %arg2: memref<288x128xbf16, #tpu.memory_space<vmem>>, %arg3: memref<1x128xf32, #tpu.memory_space<vmem>>, %arg4: memref<16x128xf32, #tpu.memory_space<vmem>>) attributes {dimension_semantics = [#tpu.dimension_semantics<parallel>], iteration_bounds = array<i64: 2>, scalar_prefetch = 0 : i64, scratch_operands = 0 : i64, tpu.core_type = #tpu.core_type<tc>, window_params = [{transform_indices = @transform_0, window_bounds = array<i64: 16, 288>}, {pipeline_mode = #tpu.pipeline_mode<synchronous>, transform_indices = @transform_1, window_bounds = array<i64: 288, 128>}, {pipeline_mode = #tpu.pipeline_mode<synchronous>, transform_indices = @transform_2, window_bounds = array<i64: 1, 128>}, {transform_indices = @transform_3, window_bounds = array<i64: 16, 128>}]} {
    %c0 = arith.constant 0 : index
    %c0_0 = arith.constant 0 : index
    %0 = vector.load %arg1[%c0, %c0_0] : memref<16x288xbf16, #tpu.memory_space<vmem>>, vector<16x288xbf16>
    %c0_1 = arith.constant 0 : index
    %c0_2 = arith.constant 0 : index
    %1 = vector.load %arg2[%c0_1, %c0_2] : memref<288x128xbf16, #tpu.memory_space<vmem>>, vector<288x128xbf16>
    %c0_3 = arith.constant 0 : index
    %c0_4 = arith.constant 0 : index
    %2 = vector.load %arg3[%c0_3, %c0_4] : memref<1x128xf32, #tpu.memory_space<vmem>>, vector<1x128xf32>
    %cst = arith.constant dense<0.000000e+00> : vector<16x128xf32>
    %3 = tpu.matmul %0, %1, %cst {dimension_numbers = #tpu.dot_dimension_numbers<[1], [0], [0], [1], [0, 0, 1, 1], [], []>} : vector<16x288xbf16>, vector<288x128xbf16>, vector<16x128xf32> -> vector<16x128xf32>
    %4 = vector.broadcast %2 : vector<1x128xf32> to vector<16x128xf32>
    %5 = arith.addf %3, %4 : vector<16x128xf32>
    %c0_5 = arith.constant 0 : index
    %c0_6 = arith.constant 0 : index
    %6 = vector.load %arg4[%c0_5, %c0_6] : memref<16x128xf32, #tpu.memory_space<vmem>>, vector<16x128xf32>
    tpu.vector_store %arg4[%c0_5, %c0_6], %5 {strides = array<i32>} : memref<16x128xf32, #tpu.memory_space<vmem>>, vector<16x128xf32>,
    return
  }
  func.func @transform_0(%arg0: i32) -> (i32, i32) {
    %c0_i32 = arith.constant 0 : i32
    %c0_i32_0 = arith.constant 0 : i32
    return %arg0, %c0_i32 : i32, i32
  }
  func.func @transform_1(%arg0: i32) -> (i32, i32) {
    %c0_i32 = arith.constant 0 : i32
    %c0_i32_0 = arith.constant 0 : i32
    %c0_i32_1 = arith.constant 0 : i32
    return %c0_i32, %c0_i32_0 : i32, i32
  }
  func.func @transform_2(%arg0: i32) -> (i32, i32) {
    %c0_i32 = arith.constant 0 : i32
    %c0_i32_0 = arith.constant 0 : i32
    %c0_i32_1 = arith.constant 0 : i32
    return %c0_i32, %c0_i32_0 : i32, i32
  }
  func.func @transform_3(%arg0: i32) -> (i32, i32) {
    %c0_i32 = arith.constant 0 : i32
    %c0_i32_0 = arith.constant 0 : i32
    return %arg0, %c0_i32 : i32, i32
  }
}

module attributes {stable_mosaic.version = 11 : i64} {
  func.func @kernel(%arg0: i32, %arg1: memref<16x288xbf16, #tpu.memory_space<vmem>>, %arg2: memref<288x128xbf16, #tpu.memory_space<vmem>>, %arg3: memref<1x128xf32, #tpu.memory_space<vmem>>, %arg4: memref<16x128xbf16, #tpu.memory_space<vmem>>) attributes {dimension_semantics = [#tpu.dimension_semantics<parallel>], iteration_bounds = array<i64: 2>, scalar_prefetch = 0 : i64, scratch_operands = 0 : i64, tpu.core_type = #tpu.core_type<tc>, window_params = [{transform_indices = @transform_0, window_bounds = array<i64: 16, 288>}, {pipeline_mode = #tpu.pipeline_mode<synchronous>, transform_indices = @transform_1, window_bounds = array<i64: 288, 128>}, {pipeline_mode = #tpu.pipeline_mode<synchronous>, transform_indices = @transform_2, window_bounds = array<i64: 1, 128>}, {transform_indices = @transform_3, window_bounds = array<i64: 16, 128>}]} {
    %c0 = arith.constant 0 : index
    %c0_0 = arith.constant 0 : index
    %0 = vector.load %arg1[%c0, %c0_0] : memref<16x288xbf16, #tpu.memory_space<vmem>>, vector<16x288xbf16>
    %c0_1 = arith.constant 0 : index
    %c0_2 = arith.constant 0 : index
    %1 = vector.load %arg2[%c0_1, %c0_2] : memref<288x128xbf16, #tpu.memory_space<vmem>>, vector<288x128xbf16>
    %c0_3 = arith.constant 0 : index
    %c0_4 = arith.constant 0 : index
    %2 = vector.load %arg3[%c0_3, %c0_4] : memref<1x128xf32, #tpu.memory_space<vmem>>, vector<1x128xf32>
    %cst = arith.constant dense<0.000000e+00> : vector<16x128xf32>
    %3 = tpu.matmul %0, %1, %cst {dimension_numbers = #tpu.dot_dimension_numbers<[1], [0], [0], [1], [0, 0, 1, 1], [], []>} : vector<16x288xbf16>, vector<288x128xbf16>, vector<16x128xf32> -> vector<16x128xf32>
    %4 = vector.broadcast %2 : vector<1x128xf32> to vector<16x128xf32>
    %5 = arith.addf %3, %4 : vector<16x128xf32>
    %6 = arith.truncf %5 : vector<16x128xf32> to vector<16x128xbf16>
    %c0_5 = arith.constant 0 : index
    %c0_6 = arith.constant 0 : index
    %7 = vector.load %arg4[%c0_5, %c0_6] : memref<16x128xbf16, #tpu.memory_space<vmem>>, vector<16x128xbf16>
    tpu.vector_store %arg4[%c0_5, %c0_6], %6 {strides = array<i32>} : memref<16x128xbf16, #tpu.memory_space<vmem>>, vector<16x128xbf16>,
    return
  }
  func.func @transform_0(%arg0: i32) -> (i32, i32) {
    %c0_i32 = arith.constant 0 : i32
    %c0_i32_0 = arith.constant 0 : i32
    return %arg0, %c0_i32 : i32, i32
  }
  func.func @transform_1(%arg0: i32) -> (i32, i32) {
    %c0_i32 = arith.constant 0 : i32
    %c0_i32_0 = arith.constant 0 : i32
    %c0_i32_1 = arith.constant 0 : i32
    return %c0_i32, %c0_i32_0 : i32, i32
  }
  func.func @transform_2(%arg0: i32) -> (i32, i32) {
    %c0_i32 = arith.constant 0 : i32
    %c0_i32_0 = arith.constant 0 : i32
    %c0_i32_1 = arith.constant 0 : i32
    return %c0_i32, %c0_i32_0 : i32, i32
  }
  func.func @transform_3(%arg0: i32) -> (i32, i32) {
    %c0_i32 = arith.constant 0 : i32
    %c0_i32_0 = arith.constant 0 : i32
    return %arg0, %c0_i32 : i32, i32
  }
}

module attributes {stable_mosaic.version = 11 : i64} {
  func.func @kernel(%arg0: i32, %arg1: memref<16x144xbf16, #tpu.memory_space<vmem>>, %arg2: memref<144x128xbf16, #tpu.memory_space<vmem>>, %arg3: memref<1x128xf32, #tpu.memory_space<vmem>>, %arg4: memref<16x128xf32, #tpu.memory_space<vmem>>, %arg5: memref<16x128xf32, #tpu.memory_space<vmem>>) attributes {dimension_semantics = [#tpu.dimension_semantics<parallel>], iteration_bounds = array<i64: 2>, scalar_prefetch = 0 : i64, scratch_operands = 0 : i64, tpu.core_type = #tpu.core_type<tc>, window_params = [{transform_indices = @transform_0, window_bounds = array<i64: 16, 144>}, {pipeline_mode = #tpu.pipeline_mode<synchronous>, transform_indices = @transform_1, window_bounds = array<i64: 144, 128>}, {pipeline_mode = #tpu.pipeline_mode<synchronous>, transform_indices = @transform_2, window_bounds = array<i64: 1, 128>}, {transform_indices = @transform_3, window_bounds = array<i64: 16, 128>}, {transform_indices = @transform_4, window_bounds = array<i64: 16, 128>}]} {
    %c0 = arith.constant 0 : index
    %c0_0 = arith.constant 0 : index
    %0 = vector.load %arg1[%c0, %c0_0] : memref<16x144xbf16, #tpu.memory_space<vmem>>, vector<16x144xbf16>
    %c0_1 = arith.constant 0 : index
    %c0_2 = arith.constant 0 : index
    %1 = vector.load %arg2[%c0_1, %c0_2] : memref<144x128xbf16, #tpu.memory_space<vmem>>, vector<144x128xbf16>
    %c0_3 = arith.constant 0 : index
    %c0_4 = arith.constant 0 : index
    %2 = vector.load %arg3[%c0_3, %c0_4] : memref<1x128xf32, #tpu.memory_space<vmem>>, vector<1x128xf32>
    %c0_5 = arith.constant 0 : index
    %c0_6 = arith.constant 0 : index
    %3 = vector.load %arg4[%c0_5, %c0_6] : memref<16x128xf32, #tpu.memory_space<vmem>>, vector<16x128xf32>
    %cst = arith.constant dense<0.000000e+00> : vector<16x128xf32>
    %4 = tpu.matmul %0, %1, %cst {dimension_numbers = #tpu.dot_dimension_numbers<[1], [0], [0], [1], [0, 0, 1, 1], [], []>} : vector<16x144xbf16>, vector<144x128xbf16>, vector<16x128xf32> -> vector<16x128xf32>
    %5 = vector.broadcast %2 : vector<1x128xf32> to vector<16x128xf32>
    %6 = arith.addf %4, %5 : vector<16x128xf32>
    %7 = arith.addf %6, %3 : vector<16x128xf32>
    %cst_7 = arith.constant 0.000000e+00 : f32
    %8 = vector.broadcast %cst_7 : f32 to vector<16x128xf32>
    %9 = arith.maximumf %7, %8 : vector<16x128xf32>
    %c0_8 = arith.constant 0 : index
    %c0_9 = arith.constant 0 : index
    %10 = vector.load %arg5[%c0_8, %c0_9] : memref<16x128xf32, #tpu.memory_space<vmem>>, vector<16x128xf32>
    tpu.vector_store %arg5[%c0_8, %c0_9], %9 {strides = array<i32>} : memref<16x128xf32, #tpu.memory_space<vmem>>, vector<16x128xf32>,
    return
  }
  func.func @transform_0(%arg0: i32) -> (i32, i32) {
    %c0_i32 = arith.constant 0 : i32
    %c0_i32_0 = arith.constant 0 : i32
    return %arg0, %c0_i32 : i32, i32
  }
  func.func @transform_1(%arg0: i32) -> (i32, i32) {
    %c0_i32 = arith.constant 0 : i32
    %c0_i32_0 = arith.constant 0 : i32
    %c0_i32_1 = arith.constant 0 : i32
    return %c0_i32, %c0_i32_0 : i32, i32
  }
  func.func @transform_2(%arg0: i32) -> (i32, i32) {
    %c0_i32 = arith.constant 0 : i32
    %c0_i32_0 = arith.constant 0 : i32
    %c0_i32_1 = arith.constant 0 : i32
    return %c0_i32, %c0_i32_0 : i32, i32
  }
  func.func @transform_3(%arg0: i32) -> (i32, i32) {
    %c0_i32 = arith.constant 0 : i32
    %c0_i32_0 = arith.constant 0 : i32
    return %arg0, %c0_i32 : i32, i32
  }
  func.func @transform_4(%arg0: i32) -> (i32, i32) {
    %c0_i32 = arith.constant 0 : i32
    %c0_i32_0 = arith.constant 0 : i32
    return %arg0, %c0_i32 : i32, i32
  }
}

module attributes {stable_mosaic.version = 11 : i64} {
  func.func @kernel(%arg0: i32, %arg1: memref<16x144xbf16, #tpu.memory_space<vmem>>, %arg2: memref<144x128xbf16, #tpu.memory_space<vmem>>, %arg3: memref<1x128xf32, #tpu.memory_space<vmem>>, %arg4: memref<16x128xf32, #tpu.memory_space<vmem>>, %arg5: memref<16x128xf32, #tpu.memory_space<vmem>>) attributes {dimension_semantics = [#tpu.dimension_semantics<parallel>], iteration_bounds = array<i64: 2>, scalar_prefetch = 0 : i64, scratch_operands = 0 : i64, tpu.core_type = #tpu.core_type<tc>, window_params = [{transform_indices = @transform_0, window_bounds = array<i64: 16, 144>}, {pipeline_mode = #tpu.pipeline_mode<synchronous>, transform_indices = @transform_1, window_bounds = array<i64: 144, 128>}, {pipeline_mode = #tpu.pipeline_mode<synchronous>, transform_indices = @transform_2, window_bounds = array<i64: 1, 128>}, {transform_indices = @transform_3, window_bounds = array<i64: 16, 128>}, {transform_indices = @transform_4, window_bounds = array<i64: 16, 128>}]} {
    %c0 = arith.constant 0 : index
    %c0_0 = arith.constant 0 : index
    %0 = vector.load %arg1[%c0, %c0_0] : memref<16x144xbf16, #tpu.memory_space<vmem>>, vector<16x144xbf16>
    %c0_1 = arith.constant 0 : index
    %c0_2 = arith.constant 0 : index
    %1 = vector.load %arg2[%c0_1, %c0_2] : memref<144x128xbf16, #tpu.memory_space<vmem>>, vector<144x128xbf16>
    %c0_3 = arith.constant 0 : index
    %c0_4 = arith.constant 0 : index
    %2 = vector.load %arg3[%c0_3, %c0_4] : memref<1x128xf32, #tpu.memory_space<vmem>>, vector<1x128xf32>
    %c0_5 = arith.constant 0 : index
    %c0_6 = arith.constant 0 : index
    %3 = vector.load %arg4[%c0_5, %c0_6] : memref<16x128xf32, #tpu.memory_space<vmem>>, vector<16x128xf32>
    %cst = arith.constant dense<0.000000e+00> : vector<16x128xf32>
    %4 = tpu.matmul %0, %1, %cst {dimension_numbers = #tpu.dot_dimension_numbers<[1], [0], [0], [1], [0, 0, 1, 1], [], []>} : vector<16x144xbf16>, vector<144x128xbf16>, vector<16x128xf32> -> vector<16x128xf32>
    %5 = vector.broadcast %2 : vector<1x128xf32> to vector<16x128xf32>
    %6 = arith.addf %4, %5 : vector<16x128xf32>
    %7 = arith.addf %6, %3 : vector<16x128xf32>
    %c0_7 = arith.constant 0 : index
    %c0_8 = arith.constant 0 : index
    %8 = vector.load %arg5[%c0_7, %c0_8] : memref<16x128xf32, #tpu.memory_space<vmem>>, vector<16x128xf32>
    tpu.vector_store %arg5[%c0_7, %c0_8], %7 {strides = array<i32>} : memref<16x128xf32, #tpu.memory_space<vmem>>, vector<16x128xf32>,
    return
  }
  func.func @transform_0(%arg0: i32) -> (i32, i32) {
    %c0_i32 = arith.constant 0 : i32
    %c0_i32_0 = arith.constant 0 : i32
    return %arg0, %c0_i32 : i32, i32
  }
  func.func @transform_1(%arg0: i32) -> (i32, i32) {
    %c0_i32 = arith.constant 0 : i32
    %c0_i32_0 = arith.constant 0 : i32
    %c0_i32_1 = arith.constant 0 : i32
    return %c0_i32, %c0_i32_0 : i32, i32
  }
  func.func @transform_2(%arg0: i32) -> (i32, i32) {
    %c0_i32 = arith.constant 0 : i32
    %c0_i32_0 = arith.constant 0 : i32
    %c0_i32_1 = arith.constant 0 : i32
    return %c0_i32, %c0_i32_0 : i32, i32
  }
  func.func @transform_3(%arg0: i32) -> (i32, i32) {
    %c0_i32 = arith.constant 0 : i32
    %c0_i32_0 = arith.constant 0 : i32
    return %arg0, %c0_i32 : i32, i32
  }
  func.func @transform_4(%arg0: i32) -> (i32, i32) {
    %c0_i32 = arith.constant 0 : i32
    %c0_i32_0 = arith.constant 0 : i32
    return %arg0, %c0_i32 : i32, i32
  }
}

</mosaic_0001>

<llo_original>
// kernel: encoder_forward.26
$region0: #{encoder_forward.26}
  #allocation0 [shape = 'u32[]', space=smem, size = 0x4, offset = 0x4, fixed_abs, tag = 'smem constant byte address 0x4 - core index']
  #allocation1 [shape = 'u32[144,128]{1,0:T(1,128)}', space=vmem, size = 0x12000, scoped, tag = 'internal scratch']
  #allocation2 [shape = 'u32[2048]{0}', space=vmem, size = 0x2000, scoped, tag = 'scoped memory for encoder_forward.26']
  #allocation3 [shape = 'u32[2048]{0}', space=vmem, size = 0x2000, scoped, tag = 'scoped memory for encoder_forward.26']
  #allocation4 [shape = 'u32[2048]{0}', space=vmem, size = 0x2000, scoped, tag = 'scoped memory for encoder_forward.26']
  #allocation5 [shape = 'u32[2048]{0}', space=vmem, size = 0x2000, scoped, tag = 'scoped memory for encoder_forward.26']
  #allocation6 [shape = 'u32[2048]{0}', space=vmem, size = 0x2000, scoped, tag = 'scoped memory for encoder_forward.26']
  #allocation7 [shape = 'u32[2048]{0}', space=vmem, size = 0x2000, scoped, tag = 'scoped memory for encoder_forward.26']
  #allocation8 [shape = 'u32[2048]{0}', space=vmem, size = 0x2000, scoped, tag = 'scoped memory for encoder_forward.26']
  #allocation9 [shape = 'u32[2048]{0}', space=vmem, size = 0x2000, scoped, tag = 'scoped memory for encoder_forward.26']
  #allocation10 [shape = 'u32[2048]{0}', space=vmem, size = 0x2000, scoped, tag = 'scoped memory for encoder_forward.26']
  #allocation11 [shape = 'u32[2048]{0}', space=vmem, size = 0x2000, scoped, tag = 'scoped memory for encoder_forward.26']
  %s0 = inlined_call_operand.vmem [shape: bf16[512,36], index: 0, kind: input, shape index: {}]
  %s1 = inlined_call_operand.vmem [shape: bf16[36,16], index: 1, kind: input, shape index: {}]
  %s2 = inlined_call_operand.<no memory space> [shape: bf16[], index: 2, kind: input, shape index: {}]
  %s3 = inlined_call_operand.vmem [shape: f32[1,16], index: 3, kind: input, shape index: {}]
  %s4 = inlined_call_operand.<no memory space> [shape: f32[], index: 4, kind: input, shape index: {}]
  %s5 = inlined_call_operand.vmem [shape: bf16[512,128], index: 5, kind: output, shape index: {}]
  %s6 = sld [smem:[#allocation0]]
  $region45: #{encoder_forward.26} parent=0
    _
  %s8 = ssub.s32 1, %s6
  %s9 = scalar_select 0, %s8, %s6
  %v10 = vstv %s2
  %v11 = vunpack.i.l.bf16 %v10
  %v13 = vunpack.i.h.bf16 %v10
  %v15 = vstv %s4
  loop: start=0, step=1, limit=4
  $region2: #{encoder_forward.26} parent=0 // loop_pre_header
    _
  $region3: #{encoder_forward.26} parent=0 // loop_header
    %s17 = sphi 0, %s21
    %p18 = scmp.ge.s32.totalorder %s17, 4
    %s27 = sphi 0, %s29
    %s30 = sphi 0, %s27
    %s31 = sphi 0, %s30
    %s47 = sphi 0, %s31
    %s51 = sphi 0, %s51
    %s53 = sphi 0, %s51
    %s54 = sphi 0, %s53
    %s68 = sphi 0, %s54
    %s72 = sphi 0, %s72
    %s74 = sphi 0, %s72
    %s75 = sphi 0, %s74
    %s89 = sphi 0, %s75
    %s95 = sphi 0, %s97
    %s98 = sphi 0, %s95
    %s99 = sphi 0, %s98
    %s115 = sphi 0, %s99
  $region4: #{encoder_forward.26} parent=0 // loop_header_branch
    %20 = sbr.rel (%p18) target = $region8
  $region5: #{encoder_forward.26} parent=0 // loop_body
    %s22 = ssub.s32 %s17, 1
    %s23 = ssub.s32 %s17, 2
    %s24 = sadd.s32 %s17, 1
    %s25 = ssub.s32 %s17, %s24
    %p26 = scmp.eq.s32.totalorder %s25, 0
    %s28 = sadd.s32 %s27, 1
    %s29 = scalar_select %p26, %s27, %s28
    %p32 = pneg %p26
    %p33 = scmp.eq.s32.totalorder %s17, 1
    %p34 = por %p32, %p33
    %p35 = scmp.ne.s32.totalorder %s27, %s30
    %p36 = scmp.eq.s32.totalorder %s17, 0
    %p37 = por %p35, %p36
    %p38 = scmp.ne.s32.totalorder %s27, %s30
    %p39 = scmp.eq.s32.totalorder %s22, 1
    %p40 = por %p38, %p39
    %p41 = scmp.ne.s32.totalorder %s30, %s31
    %p42 = scmp.eq.s32.totalorder %s22, 0
    %p43 = por %p41, %p42
    %p44 = scmp.ne.s32.totalorder %s30, %s31
    %p45 = scmp.eq.s32.totalorder %s23, 1
    %p46 = por %p44, %p45
    %p48 = scmp.ne.s32.totalorder %s31, %s47
    %p49 = scmp.eq.s32.totalorder %s23, 0
    %p50 = por %p48, %p49
    %s52 = sadd.s32 %s51, 1
    %p55 = scmp.eq.s32.totalorder %s17, 1
    %p56 = scmp.ne.s32.totalorder %s51, %s53
    %p57 = scmp.eq.s32.totalorder %s17, 0
    %p58 = por %p56, %p57
    %p59 = scmp.ne.s32.totalorder %s51, %s53
    %p60 = scmp.eq.s32.totalorder %s22, 1
    %p61 = por %p59, %p60
    %p62 = scmp.ne.s32.totalorder %s53, %s54
    %p63 = scmp.eq.s32.totalorder %s22, 0
    %p64 = por %p62, %p63
    %p65 = scmp.ne.s32.totalorder %s53, %s54
    %p66 = scmp.eq.s32.totalorder %s23, 1
    %p67 = por %p65, %p66
    %p69 = scmp.ne.s32.totalorder %s54, %s68
    %p70 = scmp.eq.s32.totalorder %s23, 0
    %p71 = por %p69, %p70
    %s73 = sadd.s32 %s72, 1
    %p76 = scmp.eq.s32.totalorder %s17, 1
    %p77 = scmp.ne.s32.totalorder %s72, %s74
    %p78 = scmp.eq.s32.totalorder %s17, 0
    %p79 = por %p77, %p78
    %p80 = scmp.ne.s32.totalorder %s72, %s74
    %p81 = scmp.eq.s32.totalorder %s22, 1
    %p82 = por %p80, %p81
    %p83 = scmp.ne.s32.totalorder %s74, %s75
    %p84 = scmp.eq.s32.totalorder %s22, 0
    %p85 = por %p83, %p84
    %p86 = scmp.ne.s32.totalorder %s74, %s75
    %p87 = scmp.eq.s32.totalorder %s23, 1
    %p88 = por %p86, %p87
    %p90 = scmp.ne.s32.totalorder %s75, %s89
    %p91 = scmp.eq.s32.totalorder %s23, 0
    %p92 = por %p90, %p91
    %s93 = ssub.s32 %s17, %s24
    %p94 = scmp.eq.s32.totalorder %s93, 0
    %s96 = sadd.s32 %s95, 1
    %s97 = scalar_select %p94, %s95, %s96
    %p100 = pneg %p94
    %p101 = scmp.eq.s32.totalorder %s17, 1
    %p102 = por %p100, %p101
    %p103 = scmp.ne.s32.totalorder %s95, %s98
    %p104 = scmp.eq.s32.totalorder %s17, 0
    %p105 = por %p103, %p104
    %p106 = scmp.ne.s32.totalorder %s95, %s98
    %p107 = scmp.eq.s32.totalorder %s22, 1
    %p108 = por %p106, %p107
    %p109 = scmp.ne.s32.totalorder %s98, %s99
    %p110 = scmp.eq.s32.totalorder %s22, 0
    %p111 = por %p109, %p110
    %p112 = scmp.ne.s32.totalorder %s98, %s99
    %p113 = scmp.eq.s32.totalorder %s23, 1
    %p114 = por %p112, %p113
    %p116 = scmp.ne.s32.totalorder %s99, %s115
    %p117 = scmp.eq.s32.totalorder %s23, 0
    %p118 = por %p116, %p117
    %p119 = scmp.le.s32.totalorder 1, %s17
    %p120 = scmp.lt.s32.totalorder %s17, 3
    %p121 = pnand %p119, %p120
    %p122 = pneg %p121
    // Predicated region
    $region9: #{encoder_forward.26} parent=5 // pred_check
      _
    $region10: #{encoder_forward.26} parent=5 // pred_check_branch
      %124 = sbr.rel (%p121) target = $region12
    $region11: #{encoder_forward.26} parent=5 // pred_region
      %s125 = ssub.s32 %s17, 1
      // Predicated region
      $region13: #{encoder_forward.26} parent=11 // pred_check
        %p126 = pneg %p64
      $region14: #{encoder_forward.26} parent=11 // pred_check_branch
        %128 = sbr.rel (%p126) target = $region16
      $region15: #{encoder_forward.26} parent=11 // pred_region
        _
      $region16: #{encoder_forward.26} parent=11 // pred_fallthru
        _
      // Predicated region
      $region17: #{encoder_forward.26} parent=11 // pred_check
        %p129 = pneg %p85
      $region18: #{encoder_forward.26} parent=11 // pred_check_branch
        %131 = sbr.rel (%p129) target = $region20
      $region19: #{encoder_forward.26} parent=11 // pred_region
        _
      $region20: #{encoder_forward.26} parent=11 // pred_fallthru
        _
    $region12: #{encoder_forward.26} parent=5 // pred_fallthru
      _
    %p132 = scmp.lt.s32.totalorder %s17, 2
    // Predicated region
    $region21: #{encoder_forward.26} parent=5 // pred_check
      %p133 = pneg %p132
    $region22: #{encoder_forward.26} parent=5 // pred_check_branch
      %135 = sbr.rel (%p133) target = $region24
    $region23: #{encoder_forward.26} parent=5 // pred_region
      // Predicated region
      $region25: #{encoder_forward.26} parent=23 // pred_check
        %p136 = pneg %p37
      $region26: #{encoder_forward.26} parent=23 // pred_check_branch
        %138 = sbr.rel (%p136) target = $region28
      $region27: #{encoder_forward.26} parent=23 // pred_region
        %s139 = smul.u32 32, %s17
        %p140 = scmp.lt.s32.totalorder %s139, 63
        %s141 = scalar_select %p140, %s139, 63
        %s142 = smul.addr %s141, 4
        %s143 = scalar_lea.vmem %s0, %s142
        %s144 = smul.u32 32, %s17
      $region28: #{encoder_forward.26} parent=23 // pred_fallthru
        _
    $region24: #{encoder_forward.26} parent=5 // pred_fallthru
      _
    %p145 = scmp.le.s32.totalorder 1, %s17
    %p146 = scmp.lt.s32.totalorder %s17, 3
    %p147 = pnand %p145, %p146
    %p148 = pneg %p147
    // Predicated region
    $region29: #{encoder_forward.26} parent=5 // pred_check
      _
    $region30: #{encoder_forward.26} parent=5 // pred_check_branch
      %150 = sbr.rel (%p147) target = $region32
    $region31: #{encoder_forward.26} parent=5 // pred_region
      #allocation12 [shape = 'u8[10240]{0}', space=vmem, size = 0x2800, dematerialized = true, scoped, tag = 'FusionAdapter Buffer %fusion.21 = bf16[36,128]{1,0:T(8,128)(2,1)} fusion(%param_1.121, %param_2.34), kind=kLoop, calls=%fused_computation.85.clone, metadata={op_name="jit(encoder_forward)/jit(_pad)/pad" stack_frame_id=19}']
      #allocation13 [shape = 'u8[512]{0}', space=vmem, size = 0x400, dematerialized = true, scoped, tag = 'FusionAdapter Buffer %fusion.34 = f32[1,128]{1,0:T(1,128)} fusion(%param_3.21, %param_4.14), kind=kLoop, calls=%fused_computation.101.clone, metadata={op_name="jit(encoder_forward)/jit(_pad)/pad" stack_frame_id=20}']
      %s151 = ssub.s32 %s17, 1
      %s152 = smul.u32 32, %s22
      %p153 = scmp.lt.s32.totalorder %s152, 63
      %s154 = scalar_select %p153, %s152, 63
      %s155 = smul.addr %s154, 4
      %s156 = scalar_lea.vmem %s0, %s155
      %p157 = pneg %p43
      %p158 = pneg %p40
      %p159 = pneg %p64
      %p160 = pneg %p61
      %p161 = pneg %p85
      %p162 = pneg %p82
      %p163 = pneg %p111
      %p164 = pneg %p108
      %s165 = smul.u32 32, %s22
      %p166 = scmp.lt.s32.totalorder %s165, 63
      %s167 = scalar_select %p166, %s165, 63
      %s168 = smul.addr %s167, 4
      %s169 = scalar_lea.vmem %s5, %s168
      %s170 = smul.u32 32, %s22
      %p171 = scmp.lt.s32.totalorder %s170, 63
      %s172 = scalar_select %p171, %s170, 63
      %s173 = smul.addr %s172, 4
      %s174 = scalar_lea.vmem %s0, %s173
      %s175 = smul.u32 32, %s22
      %s176 = smul.u32 32, %s22
      %p177 = scmp.lt.s32.totalorder %s176, 63
      %s178 = scalar_select %p177, %s176, 63
      %s179 = smul.addr %s178, 4
      %s180 = scalar_lea.vmem %s5, %s179
      %s181 = smul.u32 32, %s22
      %s183 = sor.u32 255, 127
      %s184 = sand.u32 %s183, 85
      %s185 = sshrl.u32 %s184, 1
      %s186 = sor.u32 %s184, %s185
      %s187 = sand.u32 51, %s186
      %s188 = sshrl.u32 %s187, 2
      %s189 = sor.u32 %s187, %s188
      %s190 = sand.u32 15, %s189
      %v191 = vld [vmem:[%s1] sm:%s190]
      %v192 = vunpack.c.l.bf16 %v191
      %v193 = vunpack.c.h.bf16 %v191
      %v194 = vlaneseq
      %v195 = vshrl.u32 %v194, 7
      %vm197 = vcmp.lt.s32.totalorder %v195, 36
      %v198 = vsel %vm197, %v192, %v11
      %v199 = vlaneseq
      %v200 = vand.u32 %v199, 127
      %vm202 = vcmp.lt.s32.totalorder %v200, 16
      %v203 = vsel %vm202, %v198, %v11
      %v204 = vpack.c.bf16 0.0, %v203
      %s206 = ssub.s32 16, 1
      %207 = vst [vmem:[#allocation12] sm:%s206] %v204
      %s208 = scalar_lea.vmem %s1, 4
      %s210 = sor.u32 255, 127
      %s211 = sand.u32 %s210, 85
      %s212 = sshrl.u32 %s211, 1
      %s213 = sor.u32 %s211, %s212
      %s214 = sand.u32 51, %s213
      %s215 = sshrl.u32 %s214, 2
      %s216 = sor.u32 %s214, %s215
      %s217 = sand.u32 15, %s216
      %v218 = vld [vmem:[%s208] sm:%s217]
      %v219 = vunpack.c.l.bf16 %v218
      %v220 = vunpack.c.h.bf16 %v218
      %v221 = vlaneseq
      %v222 = vshrl.u32 %v221, 7
      %v223 = vadd.s32 %v222, 8
      %vm224 = vcmp.lt.s32.totalorder %v223, 36
      %v225 = vsel %vm224, %v219, %v11
      %v226 = vlaneseq
      %v227 = vand.u32 %v226, 127
      %vm229 = vcmp.lt.s32.totalorder %v227, 16
      %v230 = vsel %vm229, %v225, %v11
      %s231 = scalar_lea.vmem [#allocation12], 4
      %v232 = vpack.c.bf16 0.0, %v230
      %s234 = ssub.s32 16, 1
      %235 = vst [vmem:[%s231] sm:%s234] %v232
      %s236 = scalar_lea.vmem %s1, 8
      %s238 = sor.u32 255, 127
      %s239 = sand.u32 %s238, 85
      %s240 = sshrl.u32 %s239, 1
      %s241 = sor.u32 %s239, %s240
      %s242 = sand.u32 51, %s241
      %s243 = sshrl.u32 %s242, 2
      %s244 = sor.u32 %s242, %s243
      %s245 = sand.u32 15, %s244
      %v246 = vld [vmem:[%s236] sm:%s245]
      %v247 = vunpack.c.l.bf16 %v246
      %v248 = vunpack.c.h.bf16 %v246
      %v249 = vlaneseq
      %v250 = vshrl.u32 %v249, 7
      %v251 = vadd.s32 %v250, 16
      %vm252 = vcmp.lt.s32.totalorder %v251, 36
      %v253 = vsel %vm252, %v247, %v11
      %v254 = vlaneseq
      %v255 = vand.u32 %v254, 127
      %vm257 = vcmp.lt.s32.totalorder %v255, 16
      %v258 = vsel %vm257, %v253, %v11
      %s259 = scalar_lea.vmem [#allocation12], 8
      %v260 = vpack.c.bf16 0.0, %v258
      %s262 = ssub.s32 16, 1
      %263 = vst [vmem:[%s259] sm:%s262] %v260
      %s264 = scalar_lea.vmem %s1, 12
      %s266 = sor.u32 255, 127
      %s267 = sand.u32 %s266, 85
      %s268 = sshrl.u32 %s267, 1
      %s269 = sor.u32 %s267, %s268
      %s270 = sand.u32 51, %s269
      %s271 = sshrl.u32 %s270, 2
      %s272 = sor.u32 %s270, %s271
      %s273 = sand.u32 15, %s272
      %v274 = vld [vmem:[%s264] sm:%s273]
      %v275 = vunpack.c.l.bf16 %v274
      %v276 = vunpack.c.h.bf16 %v274
      %v277 = vlaneseq
      %v278 = vshrl.u32 %v277, 7
      %v279 = vadd.s32 %v278, 24
      %vm280 = vcmp.lt.s32.totalorder %v279, 36
      %v281 = vsel %vm280, %v275, %v11
      %v282 = vlaneseq
      %v283 = vand.u32 %v282, 127
      %vm285 = vcmp.lt.s32.totalorder %v283, 16
      %v286 = vsel %vm285, %v281, %v11
      %s287 = scalar_lea.vmem [#allocation12], 12
      %v288 = vpack.c.bf16 0.0, %v286
      %s290 = ssub.s32 16, 1
      %291 = vst [vmem:[%s287] sm:%s290] %v288
      %s292 = scalar_lea.vmem %s1, 16
      %s294 = sor.u32 255, 127
      %s295 = sand.u32 %s294, 85
      %s296 = sshrl.u32 %s295, 1
      %s297 = sor.u32 %s295, %s296
      %s298 = sand.u32 51, %s297
      %s299 = sshrl.u32 %s298, 2
      %s300 = sor.u32 %s298, %s299
      %s301 = sand.u32 15, %s300
      %v302 = vld [vmem:[%s292] sm:%s301]
      %v303 = vunpack.c.l.bf16 %v302
      %v304 = vunpack.c.h.bf16 %v302
      %v305 = vlaneseq
      %v306 = vshrl.u32 %v305, 7
      %v307 = vadd.s32 %v306, 32
      %vm308 = vcmp.lt.s32.totalorder %v307, 36
      %v309 = vsel %vm308, %v303, %v11
      %v310 = vlaneseq
      %v311 = vand.u32 %v310, 127
      %vm313 = vcmp.lt.s32.totalorder %v311, 16
      %v314 = vsel %vm313, %v309, %v11
      %s315 = scalar_lea.vmem [#allocation12], 16
      %v316 = vpack.c.bf16 0.0, %v314
      %s318 = ssub.s32 16, 1
      %319 = vst [vmem:[%s315] sm:%s318] %v316
      %v320 = vld [vmem:[%s3] sm:$0x1]
      %v321 = vlaneseq
      %v322 = vshrl.u32 %v321, 7
      %vm324 = vcmp.lt.s32.totalorder %v322, 1
      %v325 = vsel %vm324, %v320, %v15
      %v326 = vlaneseq
      %v327 = vand.u32 %v326, 127
      %vm329 = vcmp.lt.s32.totalorder %v327, 16
      %v330 = vsel %vm329, %v325, %v15
      %s332 = ssub.s32 2, 1
      %333 = vst [vmem:[#allocation13] sm:%s332] %v330
      %v335 = vld [vmem:[%s174] sm:$0xf]
      %v336 = vld [vmem:[%s174 + $0x4] sm:$0xf]
      %v337 = vld [vmem:[%s174 + $0x8] sm:$0xf]
      %v338 = vld [vmem:[%s174 + $0xc] sm:$0xf]
      %v339 = vld [vmem:[%s174 + $0x10] sm:$0xf]
      %v340 = vld [vmem:[%s174 + $0x14] sm:$0xf]
      %v341 = vld [vmem:[%s174 + $0x18] sm:$0xf]
      %v342 = vld [vmem:[%s174 + $0x1c] sm:$0xf]
      %v343 = vld [vmem:[%s174 + $0x20] sm:$0xf]
      %v344 = vld [vmem:[%s174 + $0x24] sm:$0xf]
      %v345 = vld [vmem:[%s174 + $0x28] sm:$0xf]
      %v346 = vld [vmem:[%s174 + $0x2c] sm:$0xf]
      %v347 = vld [vmem:[%s174 + $0x30] sm:$0xf]
      %v348 = vld [vmem:[%s174 + $0x34] sm:$0xf]
      %v349 = vld [vmem:[%s174 + $0x38] sm:$0xf]
      %v350 = vld [vmem:[%s174 + $0x3c] sm:$0xf]
      %v351 = vld [vmem:[%s174 + $0x40] sm:$0xf]
      %v352 = vld [vmem:[%s174 + $0x44] sm:$0xf]
      %v353 = vld [vmem:[%s174 + $0x48] sm:$0xf]
      %v354 = vld [vmem:[%s174 + $0x4c] sm:$0xf]
      %v355 = vld [vmem:[%s174 + $0x50] sm:$0xf]
      %v356 = vld [vmem:[%s174 + $0x54] sm:$0xf]
      %v357 = vld [vmem:[%s174 + $0x58] sm:$0xf]
      %v358 = vld [vmem:[%s174 + $0x5c] sm:$0xf]
      %v359 = vld [vmem:[%s174 + $0x60] sm:$0xf]
      %v360 = vld [vmem:[%s174 + $0x64] sm:$0xf]
      %v361 = vld [vmem:[%s174 + $0x68] sm:$0xf]
      %v362 = vld [vmem:[%s174 + $0x6c] sm:$0xf]
      %v363 = vld [vmem:[%s174 + $0x70] sm:$0xf]
      %v364 = vld [vmem:[%s174 + $0x74] sm:$0xf]
      %v365 = vld [vmem:[%s174 + $0x78] sm:$0xf]
      %v366 = vld [vmem:[%s174 + $0x7c] sm:$0xf]
      %v367 = vld [vmem:[#allocation12] sm:$0xf]
      %v368 = vld [vmem:[#allocation12 + $0x4] sm:$0xf]
      %v369 = vld [vmem:[#allocation12 + $0x8] sm:$0xf]
      %v370 = vld [vmem:[#allocation12 + $0xc] sm:$0xf]
      %v371 = vld [vmem:[#allocation12 + $0x10] sm:$0x3]
      %v372 = vld [vmem:[#allocation13] sm:$0x1]
      %v374 = vlaneseq
      %v375 = vshrl.u32 %v374, 7
      %v376 = vsub.s32 0, %v375
      %v377 = vrot.slane %v372, %v376
      %v411 = vunpack.c.l.b16 %v335
      %v412 = vunpack.c.l.b16 %v336
      %v413 = vunpack.c.l.b16 %v337
      %v414 = vunpack.c.l.b16 %v338
      %v415 = vunpack.c.l.b16 %v339
      %v416 = vunpack.c.l.b16 %v340
      %v417 = vunpack.c.l.b16 %v341
      %v418 = vunpack.c.l.b16 %v342
      %v419 = vunpack.c.l.b16 %v343
      %v420 = vunpack.c.l.b16 %v344
      %v421 = vunpack.c.l.b16 %v345
      %v422 = vunpack.c.l.b16 %v346
      %v423 = vunpack.c.l.b16 %v347
      %v424 = vunpack.c.l.b16 %v348
      %v425 = vunpack.c.l.b16 %v349
      %v426 = vunpack.c.l.b16 %v350
      %v427 = vunpack.c.l.b16 %v351
      %v428 = vunpack.c.l.b16 %v352
      %v429 = vunpack.c.l.b16 %v353
      %v430 = vunpack.c.l.b16 %v354
      %v431 = vunpack.c.l.b16 %v355
      %v432 = vunpack.c.l.b16 %v356
      %v433 = vunpack.c.l.b16 %v357
      %v434 = vunpack.c.l.b16 %v358
      %v435 = vunpack.c.l.b16 %v359
      %v436 = vunpack.c.l.b16 %v360
      %v437 = vunpack.c.l.b16 %v361
      %v438 = vunpack.c.l.b16 %v362
      %v439 = vunpack.c.l.b16 %v363
      %v440 = vunpack.c.l.b16 %v364
      %v441 = vunpack.c.l.b16 %v365
      %v442 = vunpack.c.l.b16 %v366
      %v443 = vpack.c.b16 %v412, %v411
      %v444 = vpack.c.b16 %v414, %v413
      %v445 = vpack.c.b16 %v416, %v415
      %v446 = vpack.c.b16 %v418, %v417
      %v447 = vpack.c.b16 %v420, %v419
      %v448 = vpack.c.b16 %v422, %v421
      %v449 = vpack.c.b16 %v424, %v423
      %v450 = vpack.c.b16 %v426, %v425
      %v451 = vpack.c.b16 %v428, %v427
      %v452 = vpack.c.b16 %v430, %v429
      %v453 = vpack.c.b16 %v432, %v431
      %v454 = vpack.c.b16 %v434, %v433
      %v455 = vpack.c.b16 %v436, %v435
      %v456 = vpack.c.b16 %v438, %v437
      %v457 = vpack.c.b16 %v440, %v439
      %v458 = vpack.c.b16 %v442, %v441
      %v464 = vunpack.c.l.b16 %v367
      %v465 = vunpack.c.l.b16 %v368
      %v466 = vunpack.c.l.b16 %v369
      %v467 = vunpack.c.l.b16 %v370
      %v468 = vunpack.c.l.b16 %v371
      %v469 = vpack.c.b16 %v465, %v464
      %v470 = vpack.c.b16 %v467, %v466
      %v471 = vpack.c.b16 %v468, %v468
      %vm474 = vcmask 293888
      %v476 = vsel %vm474, %v443, 0
      %v479 = vsel %vm474, %v444, 0
      %v482 = vsel %vm474, %v445, 0
      %v485 = vsel %vm474, %v446, 0
      %v488 = vsel %vm474, %v447, 0
      %v491 = vsel %vm474, %v448, 0
      %v494 = vsel %vm474, %v449, 0
      %v497 = vsel %vm474, %v450, 0
      %v500 = vsel %vm474, %v451, 0
      %v503 = vsel %vm474, %v452, 0
      %v506 = vsel %vm474, %v453, 0
      %v509 = vsel %vm474, %v454, 0
      %v512 = vsel %vm474, %v455, 0
      %v515 = vsel %vm474, %v456, 0
      %v518 = vsel %vm474, %v457, 0
      %v521 = vsel %vm474, %v458, 0
      %vm523 = vcmask 1041408
      %v525 = vsel %vm523, %v471, 0
      %527 = vmatprep.subr.bf16.mxu0 0
      %528 = vmatpush1.bf16.msra.mxu0 0
      %529 = vmatprep.subr.bf16.mxu0 0
      %530 = vmatpush1.bf16.msra.mxu0 0
      %531 = vmatprep.subr.bf16.mxu0 0
      %532 = vmatpush1.bf16.msra.mxu0 0
      %533 = vmatprep.subr.bf16.mxu0 0
      %534 = vmatpush1.bf16.msra.mxu0 0
      %535 = vmatprep.subr.bf16.mxu0 0
      %536 = vmatpush1.bf16.msra.mxu0 0
      %537 = vmatprep.subr.bf16.mxu0 0
      %538 = vmatpush1.bf16.msra.mxu0 %v525
      %539 = vmatprep.subr.bf16.mxu0 0
      %540 = vmatpush1.bf16.msra.mxu0 %v470
      %541 = vmatprep.subr.bf16.mxu0 0
      %542 = vmatpush1.bf16.msra.mxu0 %v469
      %543 = vmatprep.subr.bf16.mxu0 0
      %544 = vmatpush2.bf16.msra.mxu0 0
      %545 = vmatprep.subr.bf16.mxu0 0
      %546 = vmatpush2.bf16.msra.mxu0 0
      %547 = vmatprep.subr.bf16.mxu0 0
      %548 = vmatpush2.bf16.msra.mxu0 0
      %549 = vmatprep.subr.bf16.mxu0 0
      %550 = vmatpush2.bf16.msra.mxu0 0
      %551 = vmatprep.subr.bf16.mxu0 0
      %552 = vmatpush2.bf16.msra.mxu0 0
      %553 = vmatprep.subr.bf16.mxu0 0
      %554 = vmatpush2.bf16.msra.mxu0 0
      %555 = vmatprep.subr.bf16.mxu0 0
      %556 = vmatpush2.bf16.msra.mxu0 0
      %557 = vmatprep.subr.bf16.mxu0 0
      %558 = vmatpush2.bf16.msra.mxu0 0
      %559 = vmatprep.mubr.bf16.mxu0 0
      %560 = vmatmul.mubr.bf16.gmra.mxu0 %v476
      %v561 = vpop.f32.mrf.mxu0
      %v562 = vadd.f32 %v377, %v561
      %v563 = vpop.f32.mrf.mxu0
      %v564 = vpop.f32.mrf.mxu0
      %v565 = vadd.f32 %v377, %v564
      %v566 = vpop.f32.mrf.mxu0
      %567 = vmatprep.mubr.bf16.mxu0 0
      %568 = vmatmul.mubr.bf16.gmra.mxu0 %v479
      %v569 = vpop.f32.mrf.mxu0
      %v570 = vadd.f32 %v377, %v569
      %v571 = vpop.f32.mrf.mxu0
      %v572 = vpop.f32.mrf.mxu0
      %v573 = vadd.f32 %v377, %v572
      %v574 = vpop.f32.mrf.mxu0
      %575 = vmatprep.mubr.bf16.mxu0 0
      %576 = vmatmul.mubr.bf16.gmra.mxu0 %v482
      %v577 = vpop.f32.mrf.mxu0
      %v578 = vadd.f32 %v377, %v577
      %v579 = vpop.f32.mrf.mxu0
      %v580 = vpop.f32.mrf.mxu0
      %v581 = vadd.f32 %v377, %v580
      %v582 = vpop.f32.mrf.mxu0
      %583 = vmatprep.mubr.bf16.mxu0 0
      %584 = vmatmul.mubr.bf16.gmra.mxu0 %v485
      %v585 = vpop.f32.mrf.mxu0
      %v586 = vadd.f32 %v377, %v585
      %v587 = vpop.f32.mrf.mxu0
      %v588 = vpop.f32.mrf.mxu0
      %v589 = vadd.f32 %v377, %v588
      %v590 = vpop.f32.mrf.mxu0
      %591 = vmatprep.mubr.bf16.mxu0 0
      %592 = vmatmul.mubr.bf16.gmra.mxu0 %v488
      %v593 = vpop.f32.mrf.mxu0
      %v594 = vadd.f32 %v377, %v593
      %v595 = vpop.f32.mrf.mxu0
      %v596 = vpop.f32.mrf.mxu0
      %v597 = vadd.f32 %v377, %v596
      %v598 = vpop.f32.mrf.mxu0
      %599 = vmatprep.mubr.bf16.mxu0 0
      %600 = vmatmul.mubr.bf16.gmra.mxu0 %v491
      %v601 = vpop.f32.mrf.mxu0
      %v602 = vadd.f32 %v377, %v601
      %v603 = vpop.f32.mrf.mxu0
      %v604 = vpop.f32.mrf.mxu0
      %v605 = vadd.f32 %v377, %v604
      %v606 = vpop.f32.mrf.mxu0
      %607 = vmatprep.mubr.bf16.mxu0 0
      %608 = vmatmul.mubr.bf16.gmra.mxu0 %v494
      %v609 = vpop.f32.mrf.mxu0
      %v610 = vadd.f32 %v377, %v609
      %v611 = vpop.f32.mrf.mxu0
      %v612 = vpop.f32.mrf.mxu0
      %v613 = vadd.f32 %v377, %v612
      %v614 = vpop.f32.mrf.mxu0
      %615 = vmatprep.mubr.bf16.mxu0 0
      %616 = vmatmul.mubr.bf16.gmra.mxu0 %v497
      %v617 = vpop.f32.mrf.mxu0
      %v618 = vadd.f32 %v377, %v617
      %v619 = vpop.f32.mrf.mxu0
      %v620 = vpop.f32.mrf.mxu0
      %v621 = vadd.f32 %v377, %v620
      %v622 = vpop.f32.mrf.mxu0
      %623 = vmatprep.mubr.bf16.mxu0 0
      %624 = vmatmul.mubr.bf16.gmra.mxu0 %v500
      %v625 = vpop.f32.mrf.mxu0
      %v626 = vadd.f32 %v377, %v625
      %v627 = vpop.f32.mrf.mxu0
      %v628 = vpop.f32.mrf.mxu0
      %v629 = vadd.f32 %v377, %v628
      %v630 = vpop.f32.mrf.mxu0
      %631 = vmatprep.mubr.bf16.mxu0 0
      %632 = vmatmul.mubr.bf16.gmra.mxu0 %v503
      %v633 = vpop.f32.mrf.mxu0
      %v634 = vadd.f32 %v377, %v633
      %v635 = vpop.f32.mrf.mxu0
      %v636 = vpop.f32.mrf.mxu0
      %v637 = vadd.f32 %v377, %v636
      %v638 = vpop.f32.mrf.mxu0
      %639 = vmatprep.mubr.bf16.mxu0 0
      %640 = vmatmul.mubr.bf16.gmra.mxu0 %v506
      %v641 = vpop.f32.mrf.mxu0
      %v642 = vadd.f32 %v377, %v641
      %v643 = vpop.f32.mrf.mxu0
      %v644 = vpop.f32.mrf.mxu0
      %v645 = vadd.f32 %v377, %v644
      %v646 = vpop.f32.mrf.mxu0
      %647 = vmatprep.mubr.bf16.mxu0 0
      %648 = vmatmul.mubr.bf16.gmra.mxu0 %v509
      %v649 = vpop.f32.mrf.mxu0
      %v650 = vadd.f32 %v377, %v649
      %v651 = vpop.f32.mrf.mxu0
      %v652 = vpop.f32.mrf.mxu0
      %v653 = vadd.f32 %v377, %v652
      %v654 = vpop.f32.mrf.mxu0
      %655 = vmatprep.mubr.bf16.mxu0 0
      %656 = vmatmul.mubr.bf16.gmra.mxu0 %v512
      %v657 = vpop.f32.mrf.mxu0
      %v658 = vadd.f32 %v377, %v657
      %v659 = vpop.f32.mrf.mxu0
      %v660 = vpop.f32.mrf.mxu0
      %v661 = vadd.f32 %v377, %v660
      %v662 = vpop.f32.mrf.mxu0
      %663 = vmatprep.mubr.bf16.mxu0 0
      %664 = vmatmul.mubr.bf16.gmra.mxu0 %v515
      %v665 = vpop.f32.mrf.mxu0
      %v666 = vadd.f32 %v377, %v665
      %v667 = vpop.f32.mrf.mxu0
      %v668 = vpop.f32.mrf.mxu0
      %v669 = vadd.f32 %v377, %v668
      %v670 = vpop.f32.mrf.mxu0
      %671 = vmatprep.mubr.bf16.mxu0 0
      %672 = vmatmul.mubr.bf16.gmra.mxu0 %v518
      %v673 = vpop.f32.mrf.mxu0
      %v674 = vadd.f32 %v377, %v673
      %v675 = vpop.f32.mrf.mxu0
      %v676 = vpop.f32.mrf.mxu0
      %v677 = vadd.f32 %v377, %v676
      %v678 = vpop.f32.mrf.mxu0
      %679 = vmatprep.mubr.bf16.mxu0 0
      %680 = vmatmul.mubr.bf16.gmra.mxu0 %v521
      %v681 = vpop.f32.mrf.mxu0
      %v682 = vadd.f32 %v377, %v681
      %v683 = vpop.f32.mrf.mxu0
      %v684 = vpop.f32.mrf.mxu0
      %v685 = vadd.f32 %v377, %v684
      %v686 = vpop.f32.mrf.mxu0
      %687 = vdwg.mxu0
      %v688 = vpack.c.bf16 %v565, %v562
      %v689 = vpack.c.bf16 %v573, %v570
      %v690 = vpack.c.bf16 %v581, %v578
      %v691 = vpack.c.bf16 %v589, %v586
      %v692 = vpack.c.bf16 %v597, %v594
      %v693 = vpack.c.bf16 %v605, %v602
      %v694 = vpack.c.bf16 %v613, %v610
      %v695 = vpack.c.bf16 %v621, %v618
      %v696 = vpack.c.bf16 %v629, %v626
      %v697 = vpack.c.bf16 %v637, %v634
      %v698 = vpack.c.bf16 %v645, %v642
      %v699 = vpack.c.bf16 %v653, %v650
      %v700 = vpack.c.bf16 %v661, %v658
      %v701 = vpack.c.bf16 %v669, %v666
      %v702 = vpack.c.bf16 %v677, %v674
      %v703 = vpack.c.bf16 %v685, %v682
      %v720 = vunpack.c.l.b16 %v688
      %v721 = vunpack.c.h.b16 %v688
      %v722 = vunpack.c.l.b16 %v689
      %v723 = vunpack.c.h.b16 %v689
      %v724 = vunpack.c.l.b16 %v690
      %v725 = vunpack.c.h.b16 %v690
      %v726 = vunpack.c.l.b16 %v691
      %v727 = vunpack.c.h.b16 %v691
      %v728 = vunpack.c.l.b16 %v692
      %v729 = vunpack.c.h.b16 %v692
      %v730 = vunpack.c.l.b16 %v693
      %v731 = vunpack.c.h.b16 %v693
      %v732 = vunpack.c.l.b16 %v694
      %v733 = vunpack.c.h.b16 %v694
      %v734 = vunpack.c.l.b16 %v695
      %v735 = vunpack.c.h.b16 %v695
      %v736 = vunpack.c.l.b16 %v696
      %v737 = vunpack.c.h.b16 %v696
      %v738 = vunpack.c.l.b16 %v697
      %v739 = vunpack.c.h.b16 %v697
      %v740 = vunpack.c.l.b16 %v698
      %v741 = vunpack.c.h.b16 %v698
      %v742 = vunpack.c.l.b16 %v699
      %v743 = vunpack.c.h.b16 %v699
      %v744 = vunpack.c.l.b16 %v700
      %v745 = vunpack.c.h.b16 %v700
      %v746 = vunpack.c.l.b16 %v701
      %v747 = vunpack.c.h.b16 %v701
      %v748 = vunpack.c.l.b16 %v702
      %v749 = vunpack.c.h.b16 %v702
      %v750 = vunpack.c.l.b16 %v703
      %v751 = vunpack.c.h.b16 %v703
      %v752 = vpack.c.b16 %v720, %v720
      %v753 = vpack.c.b16 %v721, %v721
      %v754 = vpack.c.b16 %v722, %v722
      %v755 = vpack.c.b16 %v723, %v723
      %v756 = vpack.c.b16 %v724, %v724
      %v757 = vpack.c.b16 %v725, %v725
      %v758 = vpack.c.b16 %v726, %v726
      %v759 = vpack.c.b16 %v727, %v727
      %v760 = vpack.c.b16 %v728, %v728
      %v761 = vpack.c.b16 %v729, %v729
      %v762 = vpack.c.b16 %v730, %v730
      %v763 = vpack.c.b16 %v731, %v731
      %v764 = vpack.c.b16 %v732, %v732
      %v765 = vpack.c.b16 %v733, %v733
      %v766 = vpack.c.b16 %v734, %v734
      %v767 = vpack.c.b16 %v735, %v735
      %v768 = vpack.c.b16 %v736, %v736
      %v769 = vpack.c.b16 %v737, %v737
      %v770 = vpack.c.b16 %v738, %v738
      %v771 = vpack.c.b16 %v739, %v739
      %v772 = vpack.c.b16 %v740, %v740
      %v773 = vpack.c.b16 %v741, %v741
      %v774 = vpack.c.b16 %v742, %v742
      %v775 = vpack.c.b16 %v743, %v743
      %v776 = vpack.c.b16 %v744, %v744
      %v777 = vpack.c.b16 %v745, %v745
      %v778 = vpack.c.b16 %v746, %v746
      %v779 = vpack.c.b16 %v747, %v747
      %v780 = vpack.c.b16 %v748, %v748
      %v781 = vpack.c.b16 %v749, %v749
      %v782 = vpack.c.b16 %v750, %v750
      %v783 = vpack.c.b16 %v751, %v751
      %816 = vst [vmem:[%s180] sm:$0xf] %v752
      %817 = vst [vmem:[%s180 + $0x4] sm:$0xf] %v753
      %818 = vst [vmem:[%s180 + $0x8] sm:$0xf] %v754
      %819 = vst [vmem:[%s180 + $0xc] sm:$0xf] %v755
      %820 = vst [vmem:[%s180 + $0x10] sm:$0xf] %v756
      %821 = vst [vmem:[%s180 + $0x14] sm:$0xf] %v757
      %822 = vst [vmem:[%s180 + $0x18] sm:$0xf] %v758
      %823 = vst [vmem:[%s180 + $0x1c] sm:$0xf] %v759
      %824 = vst [vmem:[%s180 + $0x20] sm:$0xf] %v760
      %825 = vst [vmem:[%s180 + $0x24] sm:$0xf] %v761
      %826 = vst [vmem:[%s180 + $0x28] sm:$0xf] %v762
      %827 = vst [vmem:[%s180 + $0x2c] sm:$0xf] %v763
      %828 = vst [vmem:[%s180 + $0x30] sm:$0xf] %v764
      %829 = vst [vmem:[%s180 + $0x34] sm:$0xf] %v765
      %830 = vst [vmem:[%s180 + $0x38] sm:$0xf] %v766
      %831 = vst [vmem:[%s180 + $0x3c] sm:$0xf] %v767
      %832 = vst [vmem:[%s180 + $0x40] sm:$0xf] %v768
      %833 = vst [vmem:[%s180 + $0x44] sm:$0xf] %v769
      %834 = vst [vmem:[%s180 + $0x48] sm:$0xf] %v770
      %835 = vst [vmem:[%s180 + $0x4c] sm:$0xf] %v771
      %836 = vst [vmem:[%s180 + $0x50] sm:$0xf] %v772
      %837 = vst [vmem:[%s180 + $0x54] sm:$0xf] %v773
      %838 = vst [vmem:[%s180 + $0x58] sm:$0xf] %v774
      %839 = vst [vmem:[%s180 + $0x5c] sm:$0xf] %v775
      %840 = vst [vmem:[%s180 + $0x60] sm:$0xf] %v776
      %841 = vst [vmem:[%s180 + $0x64] sm:$0xf] %v777
      %842 = vst [vmem:[%s180 + $0x68] sm:$0xf] %v778
      %843 = vst [vmem:[%s180 + $0x6c] sm:$0xf] %v779
      %844 = vst [vmem:[%s180 + $0x70] sm:$0xf] %v780
      %845 = vst [vmem:[%s180 + $0x74] sm:$0xf] %v781
      %846 = vst [vmem:[%s180 + $0x78] sm:$0xf] %v782
      %847 = vst [vmem:[%s180 + $0x7c] sm:$0xf] %v783
      %s848 = smul.u32 32, %s22
      %p849 = scmp.lt.s32.totalorder %s848, 63
      %s850 = scalar_select %p849, %s848, 63
      %s851 = smul.addr %s850, 4
      %s852 = scalar_lea.vmem %s5, %s851
      // Predicated region
      $region33: #{encoder_forward.26} parent=31 // pred_check
        %p853 = pneg %p108
      $region34: #{encoder_forward.26} parent=31 // pred_check_branch
        %855 = sbr.rel (%p853) target = $region36
      $region35: #{encoder_forward.26} parent=31 // pred_region
        %s856 = smul.u32 32, %s22
      $region36: #{encoder_forward.26} parent=31 // pred_fallthru
        _
    $region32: #{encoder_forward.26} parent=5 // pred_fallthru
      _
    %p857 = scmp.le.s32.totalorder 2, %s17
    // Predicated region
    $region37: #{encoder_forward.26} parent=5 // pred_check
      %p858 = pneg %p857
    $region38: #{encoder_forward.26} parent=5 // pred_check_branch
      %860 = sbr.rel (%p858) target = $region40
    $region39: #{encoder_forward.26} parent=5 // pred_region
      %s861 = ssub.s32 %s17, 2
      // Predicated region
      $region41: #{encoder_forward.26} parent=39 // pred_check
        %p862 = pneg %p114
      $region42: #{encoder_forward.26} parent=39 // pred_check_branch
        %864 = sbr.rel (%p862) target = $region44
      $region43: #{encoder_forward.26} parent=39 // pred_region
        %s865 = smul.u32 32, %s23
        %p866 = scmp.lt.s32.totalorder %s865, 63
        %s867 = scalar_select %p866, %s865, 63
        %s868 = smul.addr %s867, 4
        %s869 = scalar_lea.vmem %s5, %s868
      $region44: #{encoder_forward.26} parent=39 // pred_fallthru
        _
    $region40: #{encoder_forward.26} parent=5 // pred_fallthru
      _
  $region6: #{encoder_forward.26} parent=0 // loop_footer
    %s21 = sadd.s32 1, %s17
  $region7: #{encoder_forward.26} parent=0 // loop_footer_branch
    %16 = sbr.rel target = $region3
  $region8: #{encoder_forward.26} parent=0 // loop_exit
    _

// kernel: encoder_forward.22
$region0: #{encoder_forward.22}
  #allocation0 [shape = 'u32[]', space=smem, size = 0x4, offset = 0x4, fixed_abs, tag = 'smem constant byte address 0x4 - core index']
  #allocation1 [shape = 'u32[144,128]{1,0:T(1,128)}', space=vmem, size = 0x12000, scoped, tag = 'internal scratch']
  #allocation2 [shape = 'u32[2048]{0}', space=vmem, size = 0x2000, scoped, tag = 'scoped memory for encoder_forward.22']
  #allocation3 [shape = 'u32[2048]{0}', space=vmem, size = 0x2000, scoped, tag = 'scoped memory for encoder_forward.22']
  #allocation4 [shape = 'u32[2048]{0}', space=vmem, size = 0x2000, scoped, tag = 'scoped memory for encoder_forward.22']
  #allocation5 [shape = 'u32[2048]{0}', space=vmem, size = 0x2000, scoped, tag = 'scoped memory for encoder_forward.22']
  #allocation6 [shape = 'u32[2048]{0}', space=vmem, size = 0x2000, scoped, tag = 'scoped memory for encoder_forward.22']
  #allocation7 [shape = 'u32[2048]{0}', space=vmem, size = 0x2000, scoped, tag = 'scoped memory for encoder_forward.22']
  #allocation8 [shape = 'u32[2048]{0}', space=vmem, size = 0x2000, scoped, tag = 'scoped memory for encoder_forward.22']
  #allocation9 [shape = 'u32[2048]{0}', space=vmem, size = 0x2000, scoped, tag = 'scoped memory for encoder_forward.22']
  #allocation10 [shape = 'u32[2048]{0}', space=vmem, size = 0x2000, scoped, tag = 'scoped memory for encoder_forward.22']
  #allocation11 [shape = 'u32[2048]{0}', space=vmem, size = 0x2000, scoped, tag = 'scoped memory for encoder_forward.22']
  %s0 = inlined_call_operand.vmem [shape: bf16[128,144], index: 0, kind: input, shape index: {}]
  %s1 = inlined_call_operand.vmem [shape: bf16[144,16], index: 1, kind: input, shape index: {}]
  %s2 = inlined_call_operand.<no memory space> [shape: bf16[], index: 2, kind: input, shape index: {}]
  %s3 = inlined_call_operand.vmem [shape: f32[1,16], index: 3, kind: input, shape index: {}]
  %s4 = inlined_call_operand.<no memory space> [shape: f32[], index: 4, kind: input, shape index: {}]
  %s5 = inlined_call_operand.vmem [shape: bf16[128,128], index: 5, kind: output, shape index: {}]
  %s6 = sld [smem:[#allocation0]]
  $region45: #{encoder_forward.22} parent=0
    _
  %s8 = ssub.s32 1, %s6
  %s9 = scalar_select 0, %s8, %s6
  %v10 = vstv %s2
  %v11 = vunpack.i.l.bf16 %v10
  %v13 = vunpack.i.h.bf16 %v10
  %v15 = vstv %s4
  loop: start=0, step=1, limit=4
  $region2: #{encoder_forward.22} parent=0 // loop_pre_header
    _
  $region3: #{encoder_forward.22} parent=0 // loop_header
    %s17 = sphi 0, %s21
    %p18 = scmp.ge.s32.totalorder %s17, 4
    %s27 = sphi 0, %s29
    %s30 = sphi 0, %s27
    %s31 = sphi 0, %s30
    %s47 = sphi 0, %s31
    %s51 = sphi 0, %s51
    %s53 = sphi 0, %s51
    %s54 = sphi 0, %s53
    %s68 = sphi 0, %s54
    %s72 = sphi 0, %s72
    %s74 = sphi 0, %s72
    %s75 = sphi 0, %s74
    %s89 = sphi 0, %s75
    %s95 = sphi 0, %s97
    %s98 = sphi 0, %s95
    %s99 = sphi 0, %s98
    %s115 = sphi 0, %s99
  $region4: #{encoder_forward.22} parent=0 // loop_header_branch
    %20 = sbr.rel (%p18) target = $region8
  $region5: #{encoder_forward.22} parent=0 // loop_body
    %s22 = ssub.s32 %s17, 1
    %s23 = ssub.s32 %s17, 2
    %s24 = sadd.s32 %s17, 1
    %s25 = ssub.s32 %s17, %s24
    %p26 = scmp.eq.s32.totalorder %s25, 0
    %s28 = sadd.s32 %s27, 1
    %s29 = scalar_select %p26, %s27, %s28
    %p32 = pneg %p26
    %p33 = scmp.eq.s32.totalorder %s17, 1
    %p34 = por %p32, %p33
    %p35 = scmp.ne.s32.totalorder %s27, %s30
    %p36 = scmp.eq.s32.totalorder %s17, 0
    %p37 = por %p35, %p36
    %p38 = scmp.ne.s32.totalorder %s27, %s30
    %p39 = scmp.eq.s32.totalorder %s22, 1
    %p40 = por %p38, %p39
    %p41 = scmp.ne.s32.totalorder %s30, %s31
    %p42 = scmp.eq.s32.totalorder %s22, 0
    %p43 = por %p41, %p42
    %p44 = scmp.ne.s32.totalorder %s30, %s31
    %p45 = scmp.eq.s32.totalorder %s23, 1
    %p46 = por %p44, %p45
    %p48 = scmp.ne.s32.totalorder %s31, %s47
    %p49 = scmp.eq.s32.totalorder %s23, 0
    %p50 = por %p48, %p49
    %s52 = sadd.s32 %s51, 1
    %p55 = scmp.eq.s32.totalorder %s17, 1
    %p56 = scmp.ne.s32.totalorder %s51, %s53
    %p57 = scmp.eq.s32.totalorder %s17, 0
    %p58 = por %p56, %p57
    %p59 = scmp.ne.s32.totalorder %s51, %s53
    %p60 = scmp.eq.s32.totalorder %s22, 1
    %p61 = por %p59, %p60
    %p62 = scmp.ne.s32.totalorder %s53, %s54
    %p63 = scmp.eq.s32.totalorder %s22, 0
    %p64 = por %p62, %p63
    %p65 = scmp.ne.s32.totalorder %s53, %s54
    %p66 = scmp.eq.s32.totalorder %s23, 1
    %p67 = por %p65, %p66
    %p69 = scmp.ne.s32.totalorder %s54, %s68
    %p70 = scmp.eq.s32.totalorder %s23, 0
    %p71 = por %p69, %p70
    %s73 = sadd.s32 %s72, 1
    %p76 = scmp.eq.s32.totalorder %s17, 1
    %p77 = scmp.ne.s32.totalorder %s72, %s74
    %p78 = scmp.eq.s32.totalorder %s17, 0
    %p79 = por %p77, %p78
    %p80 = scmp.ne.s32.totalorder %s72, %s74
    %p81 = scmp.eq.s32.totalorder %s22, 1
    %p82 = por %p80, %p81
    %p83 = scmp.ne.s32.totalorder %s74, %s75
    %p84 = scmp.eq.s32.totalorder %s22, 0
    %p85 = por %p83, %p84
    %p86 = scmp.ne.s32.totalorder %s74, %s75
    %p87 = scmp.eq.s32.totalorder %s23, 1
    %p88 = por %p86, %p87
    %p90 = scmp.ne.s32.totalorder %s75, %s89
    %p91 = scmp.eq.s32.totalorder %s23, 0
    %p92 = por %p90, %p91
    %s93 = ssub.s32 %s17, %s24
    %p94 = scmp.eq.s32.totalorder %s93, 0
    %s96 = sadd.s32 %s95, 1
    %s97 = scalar_select %p94, %s95, %s96
    %p100 = pneg %p94
    %p101 = scmp.eq.s32.totalorder %s17, 1
    %p102 = por %p100, %p101
    %p103 = scmp.ne.s32.totalorder %s95, %s98
    %p104 = scmp.eq.s32.totalorder %s17, 0
    %p105 = por %p103, %p104
    %p106 = scmp.ne.s32.totalorder %s95, %s98
    %p107 = scmp.eq.s32.totalorder %s22, 1
    %p108 = por %p106, %p107
    %p109 = scmp.ne.s32.totalorder %s98, %s99
    %p110 = scmp.eq.s32.totalorder %s22, 0
    %p111 = por %p109, %p110
    %p112 = scmp.ne.s32.totalorder %s98, %s99
    %p113 = scmp.eq.s32.totalorder %s23, 1
    %p114 = por %p112, %p113
    %p116 = scmp.ne.s32.totalorder %s99, %s115
    %p117 = scmp.eq.s32.totalorder %s23, 0
    %p118 = por %p116, %p117
    %p119 = scmp.le.s32.totalorder 1, %s17
    %p120 = scmp.lt.s32.totalorder %s17, 3
    %p121 = pnand %p119, %p120
    %p122 = pneg %p121
    // Predicated region
    $region9: #{encoder_forward.22} parent=5 // pred_check
      _
    $region10: #{encoder_forward.22} parent=5 // pred_check_branch
      %124 = sbr.rel (%p121) target = $region12
    $region11: #{encoder_forward.22} parent=5 // pred_region
      %s125 = ssub.s32 %s17, 1
      // Predicated region
      $region13: #{encoder_forward.22} parent=11 // pred_check
        %p126 = pneg %p64
      $region14: #{encoder_forward.22} parent=11 // pred_check_branch
        %128 = sbr.rel (%p126) target = $region16
      $region15: #{encoder_forward.22} parent=11 // pred_region
        _
      $region16: #{encoder_forward.22} parent=11 // pred_fallthru
        _
      // Predicated region
      $region17: #{encoder_forward.22} parent=11 // pred_check
        %p129 = pneg %p85
      $region18: #{encoder_forward.22} parent=11 // pred_check_branch
        %131 = sbr.rel (%p129) target = $region20
      $region19: #{encoder_forward.22} parent=11 // pred_region
        _
      $region20: #{encoder_forward.22} parent=11 // pred_fallthru
        _
    $region12: #{encoder_forward.22} parent=5 // pred_fallthru
      _
    %p132 = scmp.lt.s32.totalorder %s17, 2
    // Predicated region
    $region21: #{encoder_forward.22} parent=5 // pred_check
      %p133 = pneg %p132
    $region22: #{encoder_forward.22} parent=5 // pred_check_branch
      %135 = sbr.rel (%p133) target = $region24
    $region23: #{encoder_forward.22} parent=5 // pred_region
      // Predicated region
      $region25: #{encoder_forward.22} parent=23 // pred_check
        %p136 = pneg %p37
      $region26: #{encoder_forward.22} parent=23 // pred_check_branch
        %138 = sbr.rel (%p136) target = $region28
      $region27: #{encoder_forward.22} parent=23 // pred_region
        %s139 = smul.u32 8, %s17
        %p140 = scmp.lt.s32.totalorder %s139, 15
        %s141 = scalar_select %p140, %s139, 15
        %s142 = smul.addr %s141, 2
        %s143 = smul.addr %s142, 4
        %s144 = scalar_lea.vmem %s0, %s143
        %s145 = smul.u32 8, %s17
      $region28: #{encoder_forward.22} parent=23 // pred_fallthru
        _
    $region24: #{encoder_forward.22} parent=5 // pred_fallthru
      _
    %p146 = scmp.le.s32.totalorder 1, %s17
    %p147 = scmp.lt.s32.totalorder %s17, 3
    %p148 = pnand %p146, %p147
    %p149 = pneg %p148
    // Predicated region
    $region29: #{encoder_forward.22} parent=5 // pred_check
      _
    $region30: #{encoder_forward.22} parent=5 // pred_check_branch
      %151 = sbr.rel (%p148) target = $region32
    $region31: #{encoder_forward.22} parent=5 // pred_region
      #allocation12 [shape = 'u8[36864]{0}', space=vmem, size = 0x9000, dematerialized = true, scoped, tag = 'FusionAdapter Buffer %fusion.9 = bf16[144,128]{1,0:T(8,128)(2,1)} fusion(%param_1.119, %param_2.33), kind=kLoop, calls=%fused_computation.68.clone, metadata={op_name="jit(encoder_forward)/jit(_pad)/pad" stack_frame_id=36}']
      #allocation13 [shape = 'u8[512]{0}', space=vmem, size = 0x400, dematerialized = true, scoped, tag = 'FusionAdapter Buffer %fusion.33 = f32[1,128]{1,0:T(1,128)} fusion(%param_3.20, %param_4.13), kind=kLoop, calls=%fused_computation.100.clone, metadata={op_name="jit(encoder_forward)/jit(_pad)/pad" stack_frame_id=37}']
      %s152 = ssub.s32 %s17, 1
      %s153 = smul.u32 8, %s22
      %p154 = scmp.lt.s32.totalorder %s153, 15
      %s155 = scalar_select %p154, %s153, 15
      %s156 = smul.addr %s155, 2
      %s157 = smul.addr %s156, 4
      %s158 = scalar_lea.vmem %s0, %s157
      %p159 = pneg %p43
      %p160 = pneg %p40
      %p161 = pneg %p64
      %p162 = pneg %p61
      %p163 = pneg %p85
      %p164 = pneg %p82
      %p165 = pneg %p111
      %p166 = pneg %p108
      %s167 = smul.u32 8, %s22
      %p168 = scmp.lt.s32.totalorder %s167, 15
      %s169 = scalar_select %p168, %s167, 15
      %s170 = smul.addr %s169, 4
      %s171 = scalar_lea.vmem %s5, %s170
      %s172 = smul.u32 8, %s22
      %p173 = scmp.lt.s32.totalorder %s172, 15
      %s174 = scalar_select %p173, %s172, 15
      %s175 = smul.addr %s174, 2
      %s176 = smul.addr %s175, 4
      %s177 = scalar_lea.vmem %s0, %s176
      %s178 = smul.u32 8, %s22
      %s179 = smul.u32 8, %s22
      %p180 = scmp.lt.s32.totalorder %s179, 15
      %s181 = scalar_select %p180, %s179, 15
      %s182 = smul.addr %s181, 4
      %s183 = scalar_lea.vmem %s5, %s182
      %s184 = smul.u32 8, %s22
      %s186 = sor.u32 255, 127
      %s187 = sand.u32 %s186, 85
      %s188 = sshrl.u32 %s187, 1
      %s189 = sor.u32 %s187, %s188
      %s190 = sand.u32 51, %s189
      %s191 = sshrl.u32 %s190, 2
      %s192 = sor.u32 %s190, %s191
      %s193 = sand.u32 15, %s192
      %v194 = vld [vmem:[%s1] sm:%s193]
      %v195 = vunpack.c.l.bf16 %v194
      %v196 = vunpack.c.h.bf16 %v194
      %v197 = vlaneseq
      %v198 = vand.u32 %v197, 127
      %vm200 = vcmp.lt.s32.totalorder %v198, 16
      %v201 = vsel %vm200, %v195, %v11
      %v202 = vpack.c.bf16 0.0, %v201
      %s204 = ssub.s32 16, 1
      %205 = vst [vmem:[#allocation12] sm:%s204] %v202
      %s206 = scalar_lea.vmem %s1, 4
      %s208 = sor.u32 255, 127
      %s209 = sand.u32 %s208, 85
      %s210 = sshrl.u32 %s209, 1
      %s211 = sor.u32 %s209, %s210
      %s212 = sand.u32 51, %s211
      %s213 = sshrl.u32 %s212, 2
      %s214 = sor.u32 %s212, %s213
      %s215 = sand.u32 15, %s214
      %v216 = vld [vmem:[%s206] sm:%s215]
      %v217 = vunpack.c.l.bf16 %v216
      %v218 = vunpack.c.h.bf16 %v216
      %v219 = vlaneseq
      %v220 = vand.u32 %v219, 127
      %vm222 = vcmp.lt.s32.totalorder %v220, 16
      %v223 = vsel %vm222, %v217, %v11
      %s224 = scalar_lea.vmem [#allocation12], 4
      %v225 = vpack.c.bf16 0.0, %v223
      %s227 = ssub.s32 16, 1
      %228 = vst [vmem:[%s224] sm:%s227] %v225
      %s229 = scalar_lea.vmem %s1, 8
      %s231 = sor.u32 255, 127
      %s232 = sand.u32 %s231, 85
      %s233 = sshrl.u32 %s232, 1
      %s234 = sor.u32 %s232, %s233
      %s235 = sand.u32 51, %s234
      %s236 = sshrl.u32 %s235, 2
      %s237 = sor.u32 %s235, %s236
      %s238 = sand.u32 15, %s237
      %v239 = vld [vmem:[%s229] sm:%s238]
      %v240 = vunpack.c.l.bf16 %v239
      %v241 = vunpack.c.h.bf16 %v239
      %v242 = vlaneseq
      %v243 = vand.u32 %v242, 127
      %vm245 = vcmp.lt.s32.totalorder %v243, 16
      %v246 = vsel %vm245, %v240, %v11
      %s247 = scalar_lea.vmem [#allocation12], 8
      %v248 = vpack.c.bf16 0.0, %v246
      %s250 = ssub.s32 16, 1
      %251 = vst [vmem:[%s247] sm:%s250] %v248
      %s252 = scalar_lea.vmem %s1, 12
      %s254 = sor.u32 255, 127
      %s255 = sand.u32 %s254, 85
      %s256 = sshrl.u32 %s255, 1
      %s257 = sor.u32 %s255, %s256
      %s258 = sand.u32 51, %s257
      %s259 = sshrl.u32 %s258, 2
      %s260 = sor.u32 %s258, %s259
      %s261 = sand.u32 15, %s260
      %v262 = vld [vmem:[%s252] sm:%s261]
      %v263 = vunpack.c.l.bf16 %v262
      %v264 = vunpack.c.h.bf16 %v262
      %v265 = vlaneseq
      %v266 = vand.u32 %v265, 127
      %vm268 = vcmp.lt.s32.totalorder %v266, 16
      %v269 = vsel %vm268, %v263, %v11
      %s270 = scalar_lea.vmem [#allocation12], 12
      %v271 = vpack.c.bf16 0.0, %v269
      %s273 = ssub.s32 16, 1
      %274 = vst [vmem:[%s270] sm:%s273] %v271
      %s275 = scalar_lea.vmem %s1, 16
      %s277 = sor.u32 255, 127
      %s278 = sand.u32 %s277, 85
      %s279 = sshrl.u32 %s278, 1
      %s280 = sor.u32 %s278, %s279
      %s281 = sand.u32 51, %s280
      %s282 = sshrl.u32 %s281, 2
      %s283 = sor.u32 %s281, %s282
      %s284 = sand.u32 15, %s283
      %v285 = vld [vmem:[%s275] sm:%s284]
      %v286 = vunpack.c.l.bf16 %v285
      %v287 = vunpack.c.h.bf16 %v285
      %v288 = vlaneseq
      %v289 = vand.u32 %v288, 127
      %vm291 = vcmp.lt.s32.totalorder %v289, 16
      %v292 = vsel %vm291, %v286, %v11
      %s293 = scalar_lea.vmem [#allocation12], 16
      %v294 = vpack.c.bf16 0.0, %v292
      %s296 = ssub.s32 16, 1
      %297 = vst [vmem:[%s293] sm:%s296] %v294
      %s298 = scalar_lea.vmem %s1, 20
      %s300 = sor.u32 255, 127
      %s301 = sand.u32 %s300, 85
      %s302 = sshrl.u32 %s301, 1
      %s303 = sor.u32 %s301, %s302
      %s304 = sand.u32 51, %s303
      %s305 = sshrl.u32 %s304, 2
      %s306 = sor.u32 %s304, %s305
      %s307 = sand.u32 15, %s306
      %v308 = vld [vmem:[%s298] sm:%s307]
      %v309 = vunpack.c.l.bf16 %v308
      %v310 = vunpack.c.h.bf16 %v308
      %v311 = vlaneseq
      %v312 = vand.u32 %v311, 127
      %vm314 = vcmp.lt.s32.totalorder %v312, 16
      %v315 = vsel %vm314, %v309, %v11
      %s316 = scalar_lea.vmem [#allocation12], 20
      %v317 = vpack.c.bf16 0.0, %v315
      %s319 = ssub.s32 16, 1
      %320 = vst [vmem:[%s316] sm:%s319] %v317
      %s321 = scalar_lea.vmem %s1, 24
      %s323 = sor.u32 255, 127
      %s324 = sand.u32 %s323, 85
      %s325 = sshrl.u32 %s324, 1
      %s326 = sor.u32 %s324, %s325
      %s327 = sand.u32 51, %s326
      %s328 = sshrl.u32 %s327, 2
      %s329 = sor.u32 %s327, %s328
      %s330 = sand.u32 15, %s329
      %v331 = vld [vmem:[%s321] sm:%s330]
      %v332 = vunpack.c.l.bf16 %v331
      %v333 = vunpack.c.h.bf16 %v331
      %v334 = vlaneseq
      %v335 = vand.u32 %v334, 127
      %vm337 = vcmp.lt.s32.totalorder %v335, 16
      %v338 = vsel %vm337, %v332, %v11
      %s339 = scalar_lea.vmem [#allocation12], 24
      %v340 = vpack.c.bf16 0.0, %v338
      %s342 = ssub.s32 16, 1
      %343 = vst [vmem:[%s339] sm:%s342] %v340
      %s344 = scalar_lea.vmem %s1, 28
      %s346 = sor.u32 255, 127
      %s347 = sand.u32 %s346, 85
      %s348 = sshrl.u32 %s347, 1
      %s349 = sor.u32 %s347, %s348
      %s350 = sand.u32 51, %s349
      %s351 = sshrl.u32 %s350, 2
      %s352 = sor.u32 %s350, %s351
      %s353 = sand.u32 15, %s352
      %v354 = vld [vmem:[%s344] sm:%s353]
      %v355 = vunpack.c.l.bf16 %v354
      %v356 = vunpack.c.h.bf16 %v354
      %v357 = vlaneseq
      %v358 = vand.u32 %v357, 127
      %vm360 = vcmp.lt.s32.totalorder %v358, 16
      %v361 = vsel %vm360, %v355, %v11
      %s362 = scalar_lea.vmem [#allocation12], 28
      %v363 = vpack.c.bf16 0.0, %v361
      %s365 = ssub.s32 16, 1
      %366 = vst [vmem:[%s362] sm:%s365] %v363
      %s367 = scalar_lea.vmem %s1, 32
      %s369 = sor.u32 255, 127
      %s370 = sand.u32 %s369, 85
      %s371 = sshrl.u32 %s370, 1
      %s372 = sor.u32 %s370, %s371
      %s373 = sand.u32 51, %s372
      %s374 = sshrl.u32 %s373, 2
      %s375 = sor.u32 %s373, %s374
      %s376 = sand.u32 15, %s375
      %v377 = vld [vmem:[%s367] sm:%s376]
      %v378 = vunpack.c.l.bf16 %v377
      %v379 = vunpack.c.h.bf16 %v377
      %v380 = vlaneseq
      %v381 = vand.u32 %v380, 127
      %vm383 = vcmp.lt.s32.totalorder %v381, 16
      %v384 = vsel %vm383, %v378, %v11
      %s385 = scalar_lea.vmem [#allocation12], 32
      %v386 = vpack.c.bf16 0.0, %v384
      %s388 = ssub.s32 16, 1
      %389 = vst [vmem:[%s385] sm:%s388] %v386
      %s390 = scalar_lea.vmem %s1, 36
      %s392 = sor.u32 255, 127
      %s393 = sand.u32 %s392, 85
      %s394 = sshrl.u32 %s393, 1
      %s395 = sor.u32 %s393, %s394
      %s396 = sand.u32 51, %s395
      %s397 = sshrl.u32 %s396, 2
      %s398 = sor.u32 %s396, %s397
      %s399 = sand.u32 15, %s398
      %v400 = vld [vmem:[%s390] sm:%s399]
      %v401 = vunpack.c.l.bf16 %v400
      %v402 = vunpack.c.h.bf16 %v400
      %v403 = vlaneseq
      %v404 = vand.u32 %v403, 127
      %vm406 = vcmp.lt.s32.totalorder %v404, 16
      %v407 = vsel %vm406, %v401, %v11
      %s408 = scalar_lea.vmem [#allocation12], 36
      %v409 = vpack.c.bf16 0.0, %v407
      %s411 = ssub.s32 16, 1
      %412 = vst [vmem:[%s408] sm:%s411] %v409
      %s413 = scalar_lea.vmem %s1, 40
      %s415 = sor.u32 255, 127
      %s416 = sand.u32 %s415, 85
      %s417 = sshrl.u32 %s416, 1
      %s418 = sor.u32 %s416, %s417
      %s419 = sand.u32 51, %s418
      %s420 = sshrl.u32 %s419, 2
      %s421 = sor.u32 %s419, %s420
      %s422 = sand.u32 15, %s421
      %v423 = vld [vmem:[%s413] sm:%s422]
      %v424 = vunpack.c.l.bf16 %v423
      %v425 = vunpack.c.h.bf16 %v423
      %v426 = vlaneseq
      %v427 = vand.u32 %v426, 127
      %vm429 = vcmp.lt.s32.totalorder %v427, 16
      %v430 = vsel %vm429, %v424, %v11
      %s431 = scalar_lea.vmem [#allocation12], 40
      %v432 = vpack.c.bf16 0.0, %v430
      %s434 = ssub.s32 16, 1
      %435 = vst [vmem:[%s431] sm:%s434] %v432
      %s436 = scalar_lea.vmem %s1, 44
      %s438 = sor.u32 255, 127
      %s439 = sand.u32 %s438, 85
      %s440 = sshrl.u32 %s439, 1
      %s441 = sor.u32 %s439, %s440
      %s442 = sand.u32 51, %s441
      %s443 = sshrl.u32 %s442, 2
      %s444 = sor.u32 %s442, %s443
      %s445 = sand.u32 15, %s444
      %v446 = vld [vmem:[%s436] sm:%s445]
      %v447 = vunpack.c.l.bf16 %v446
      %v448 = vunpack.c.h.bf16 %v446
      %v449 = vlaneseq
      %v450 = vand.u32 %v449, 127
      %vm452 = vcmp.lt.s32.totalorder %v450, 16
      %v453 = vsel %vm452, %v447, %v11
      %s454 = scalar_lea.vmem [#allocation12], 44
      %v455 = vpack.c.bf16 0.0, %v453
      %s457 = ssub.s32 16, 1
      %458 = vst [vmem:[%s454] sm:%s457] %v455
      %s459 = scalar_lea.vmem %s1, 48
      %s461 = sor.u32 255, 127
      %s462 = sand.u32 %s461, 85
      %s463 = sshrl.u32 %s462, 1
      %s464 = sor.u32 %s462, %s463
      %s465 = sand.u32 51, %s464
      %s466 = sshrl.u32 %s465, 2
      %s467 = sor.u32 %s465, %s466
      %s468 = sand.u32 15, %s467
      %v469 = vld [vmem:[%s459] sm:%s468]
      %v470 = vunpack.c.l.bf16 %v469
      %v471 = vunpack.c.h.bf16 %v469
      %v472 = vlaneseq
      %v473 = vand.u32 %v472, 127
      %vm475 = vcmp.lt.s32.totalorder %v473, 16
      %v476 = vsel %vm475, %v470, %v11
      %s477 = scalar_lea.vmem [#allocation12], 48
      %v478 = vpack.c.bf16 0.0, %v476
      %s480 = ssub.s32 16, 1
      %481 = vst [vmem:[%s477] sm:%s480] %v478
      %s482 = scalar_lea.vmem %s1, 52
      %s484 = sor.u32 255, 127
      %s485 = sand.u32 %s484, 85
      %s486 = sshrl.u32 %s485, 1
      %s487 = sor.u32 %s485, %s486
      %s488 = sand.u32 51, %s487
      %s489 = sshrl.u32 %s488, 2
      %s490 = sor.u32 %s488, %s489
      %s491 = sand.u32 15, %s490
      %v492 = vld [vmem:[%s482] sm:%s491]
      %v493 = vunpack.c.l.bf16 %v492
      %v494 = vunpack.c.h.bf16 %v492
      %v495 = vlaneseq
      %v496 = vand.u32 %v495, 127
      %vm498 = vcmp.lt.s32.totalorder %v496, 16
      %v499 = vsel %vm498, %v493, %v11
      %s500 = scalar_lea.vmem [#allocation12], 52
      %v501 = vpack.c.bf16 0.0, %v499
      %s503 = ssub.s32 16, 1
      %504 = vst [vmem:[%s500] sm:%s503] %v501
      %s505 = scalar_lea.vmem %s1, 56
      %s507 = sor.u32 255, 127
      %s508 = sand.u32 %s507, 85
      %s509 = sshrl.u32 %s508, 1
      %s510 = sor.u32 %s508, %s509
      %s511 = sand.u32 51, %s510
      %s512 = sshrl.u32 %s511, 2
      %s513 = sor.u32 %s511, %s512
      %s514 = sand.u32 15, %s513
      %v515 = vld [vmem:[%s505] sm:%s514]
      %v516 = vunpack.c.l.bf16 %v515
      %v517 = vunpack.c.h.bf16 %v515
      %v518 = vlaneseq
      %v519 = vand.u32 %v518, 127
      %vm521 = vcmp.lt.s32.totalorder %v519, 16
      %v522 = vsel %vm521, %v516, %v11
      %s523 = scalar_lea.vmem [#allocation12], 56
      %v524 = vpack.c.bf16 0.0, %v522
      %s526 = ssub.s32 16, 1
      %527 = vst [vmem:[%s523] sm:%s526] %v524
      %s528 = scalar_lea.vmem %s1, 60
      %s530 = sor.u32 255, 127
      %s531 = sand.u32 %s530, 85
      %s532 = sshrl.u32 %s531, 1
      %s533 = sor.u32 %s531, %s532
      %s534 = sand.u32 51, %s533
      %s535 = sshrl.u32 %s534, 2
      %s536 = sor.u32 %s534, %s535
      %s537 = sand.u32 15, %s536
      %v538 = vld [vmem:[%s528] sm:%s537]
      %v539 = vunpack.c.l.bf16 %v538
      %v540 = vunpack.c.h.bf16 %v538
      %v541 = vlaneseq
      %v542 = vand.u32 %v541, 127
      %vm544 = vcmp.lt.s32.totalorder %v542, 16
      %v545 = vsel %vm544, %v539, %v11
      %s546 = scalar_lea.vmem [#allocation12], 60
      %v547 = vpack.c.bf16 0.0, %v545
      %s549 = ssub.s32 16, 1
      %550 = vst [vmem:[%s546] sm:%s549] %v547
      %s551 = scalar_lea.vmem %s1, 64
      %s553 = sor.u32 255, 127
      %s554 = sand.u32 %s553, 85
      %s555 = sshrl.u32 %s554, 1
      %s556 = sor.u32 %s554, %s555
      %s557 = sand.u32 51, %s556
      %s558 = sshrl.u32 %s557, 2
      %s559 = sor.u32 %s557, %s558
      %s560 = sand.u32 15, %s559
      %v561 = vld [vmem:[%s551] sm:%s560]
      %v562 = vunpack.c.l.bf16 %v561
      %v563 = vunpack.c.h.bf16 %v561
      %v564 = vlaneseq
      %v565 = vand.u32 %v564, 127
      %vm567 = vcmp.lt.s32.totalorder %v565, 16
      %v568 = vsel %vm567, %v562, %v11
      %s569 = scalar_lea.vmem [#allocation12], 64
      %v570 = vpack.c.bf16 0.0, %v568
      %s572 = ssub.s32 16, 1
      %573 = vst [vmem:[%s569] sm:%s572] %v570
      %s574 = scalar_lea.vmem %s1, 68
      %s576 = sor.u32 255, 127
      %s577 = sand.u32 %s576, 85
      %s578 = sshrl.u32 %s577, 1
      %s579 = sor.u32 %s577, %s578
      %s580 = sand.u32 51, %s579
      %s581 = sshrl.u32 %s580, 2
      %s582 = sor.u32 %s580, %s581
      %s583 = sand.u32 15, %s582
      %v584 = vld [vmem:[%s574] sm:%s583]
      %v585 = vunpack.c.l.bf16 %v584
      %v586 = vunpack.c.h.bf16 %v584
      %v587 = vlaneseq
      %v588 = vand.u32 %v587, 127
      %vm590 = vcmp.lt.s32.totalorder %v588, 16
      %v591 = vsel %vm590, %v585, %v11
      %s592 = scalar_lea.vmem [#allocation12], 68
      %v593 = vpack.c.bf16 0.0, %v591
      %s595 = ssub.s32 16, 1
      %596 = vst [vmem:[%s592] sm:%s595] %v593
      %v597 = vld [vmem:[%s3] sm:$0x1]
      %v598 = vlaneseq
      %v599 = vshrl.u32 %v598, 7
      %vm601 = vcmp.lt.s32.totalorder %v599, 1
      %v602 = vsel %vm601, %v597, %v15
      %v603 = vlaneseq
      %v604 = vand.u32 %v603, 127
      %vm606 = vcmp.lt.s32.totalorder %v604, 16
      %v607 = vsel %vm606, %v602, %v15
      %s609 = ssub.s32 2, 1
      %610 = vst [vmem:[#allocation13] sm:%s609] %v607
      %v612 = vld [vmem:[%s177] sm:$0xff]
      %v613 = vld [vmem:[%s177 + $0x8] sm:$0xff]
      %v614 = vld [vmem:[%s177 + $0x10] sm:$0xff]
      %v615 = vld [vmem:[%s177 + $0x18] sm:$0xff]
      %v616 = vld [vmem:[%s177 + $0x20] sm:$0xff]
      %v617 = vld [vmem:[%s177 + $0x28] sm:$0xff]
      %v618 = vld [vmem:[%s177 + $0x30] sm:$0xff]
      %v619 = vld [vmem:[%s177 + $0x38] sm:$0xff]
      %v620 = vld [vmem:[#allocation12] sm:$0xf]
      %v621 = vld [vmem:[#allocation12 + $0x4] sm:$0xf]
      %v622 = vld [vmem:[#allocation12 + $0x8] sm:$0xf]
      %v623 = vld [vmem:[#allocation12 + $0xc] sm:$0xf]
      %v624 = vld [vmem:[#allocation12 + $0x10] sm:$0xf]
      %v625 = vld [vmem:[#allocation12 + $0x14] sm:$0xf]
      %v626 = vld [vmem:[#allocation12 + $0x18] sm:$0xf]
      %v627 = vld [vmem:[#allocation12 + $0x1c] sm:$0xf]
      %v628 = vld [vmem:[#allocation12 + $0x20] sm:$0xf]
      %v629 = vld [vmem:[#allocation12 + $0x24] sm:$0xf]
      %v630 = vld [vmem:[#allocation12 + $0x28] sm:$0xf]
      %v631 = vld [vmem:[#allocation12 + $0x2c] sm:$0xf]
      %v632 = vld [vmem:[#allocation12 + $0x30] sm:$0xf]
      %v633 = vld [vmem:[#allocation12 + $0x34] sm:$0xf]
      %v634 = vld [vmem:[#allocation12 + $0x38] sm:$0xf]
      %v635 = vld [vmem:[#allocation12 + $0x3c] sm:$0xf]
      %v636 = vld [vmem:[#allocation12 + $0x40] sm:$0xf]
      %v637 = vld [vmem:[#allocation12 + $0x44] sm:$0xf]
      %v638 = vld [vmem:[#allocation13] sm:$0x1]
      %v640 = vlaneseq
      %v641 = vshrl.u32 %v640, 7
      %v642 = vsub.s32 0, %v641
      %v643 = vrot.slane %v638, %v642
      %v653 = vunpack.c.l.b16 %v612
      %v654 = vunpack.c.h.b16 %v612
      %v655 = vunpack.c.l.b16 %v613
      %v656 = vunpack.c.h.b16 %v613
      %v657 = vunpack.c.l.b16 %v614
      %v658 = vunpack.c.h.b16 %v614
      %v659 = vunpack.c.l.b16 %v615
      %v660 = vunpack.c.h.b16 %v615
      %v661 = vunpack.c.l.b16 %v616
      %v662 = vunpack.c.h.b16 %v616
      %v663 = vunpack.c.l.b16 %v617
      %v664 = vunpack.c.h.b16 %v617
      %v665 = vunpack.c.l.b16 %v618
      %v666 = vunpack.c.h.b16 %v618
      %v667 = vunpack.c.l.b16 %v619
      %v668 = vunpack.c.h.b16 %v619
      %v669 = vpack.c.b16 %v655, %v653
      %v670 = vpack.c.b16 %v656, %v654
      %v671 = vpack.c.b16 %v659, %v657
      %v672 = vpack.c.b16 %v660, %v658
      %v673 = vpack.c.b16 %v663, %v661
      %v674 = vpack.c.b16 %v664, %v662
      %v675 = vpack.c.b16 %v667, %v665
      %v676 = vpack.c.b16 %v668, %v666
      %v699 = vunpack.c.l.b16 %v620
      %v700 = vunpack.c.l.b16 %v621
      %v701 = vunpack.c.l.b16 %v622
      %v702 = vunpack.c.l.b16 %v623
      %v703 = vunpack.c.l.b16 %v624
      %v704 = vunpack.c.l.b16 %v625
      %v705 = vunpack.c.l.b16 %v626
      %v706 = vunpack.c.l.b16 %v627
      %v707 = vunpack.c.l.b16 %v628
      %v708 = vunpack.c.l.b16 %v629
      %v709 = vunpack.c.l.b16 %v630
      %v710 = vunpack.c.l.b16 %v631
      %v711 = vunpack.c.l.b16 %v632
      %v712 = vunpack.c.l.b16 %v633
      %v713 = vunpack.c.l.b16 %v634
      %v714 = vunpack.c.l.b16 %v635
      %v715 = vunpack.c.l.b16 %v636
      %v716 = vunpack.c.l.b16 %v637
      %v717 = vpack.c.b16 %v700, %v699
      %v718 = vpack.c.b16 %v702, %v701
      %v719 = vpack.c.b16 %v704, %v703
      %v720 = vpack.c.b16 %v706, %v705
      %v721 = vpack.c.b16 %v708, %v707
      %v722 = vpack.c.b16 %v710, %v709
      %v723 = vpack.c.b16 %v712, %v711
      %v724 = vpack.c.b16 %v714, %v713
      %v725 = vpack.c.b16 %v716, %v715
      %vm735 = vcmask 130048
      %v737 = vsel %vm735, %v670, 0
      %v740 = vsel %vm735, %v672, 0
      %v743 = vsel %vm735, %v674, 0
      %v746 = vsel %vm735, %v676, 0
      %748 = vmatprep.subr.bf16.mxu0 0
      %749 = vmatpush1.bf16.msra.mxu0 %v724
      %750 = vmatprep.subr.bf16.mxu0 0
      %751 = vmatpush1.bf16.msra.mxu0 %v723
      %752 = vmatprep.subr.bf16.mxu0 0
      %753 = vmatpush1.bf16.msra.mxu0 %v722
      %754 = vmatprep.subr.bf16.mxu0 0
      %755 = vmatpush1.bf16.msra.mxu0 %v721
      %756 = vmatprep.subr.bf16.mxu0 0
      %757 = vmatpush1.bf16.msra.mxu0 %v720
      %758 = vmatprep.subr.bf16.mxu0 0
      %759 = vmatpush1.bf16.msra.mxu0 %v719
      %760 = vmatprep.subr.bf16.mxu0 0
      %761 = vmatpush1.bf16.msra.mxu0 %v718
      %762 = vmatprep.subr.bf16.mxu0 0
      %763 = vmatpush1.bf16.msra.mxu0 %v717
      %764 = vmatprep.subr.bf16.mxu0 0
      %765 = vmatpush2.bf16.msra.mxu0 0
      %766 = vmatprep.subr.bf16.mxu0 0
      %767 = vmatpush2.bf16.msra.mxu0 0
      %768 = vmatprep.subr.bf16.mxu0 0
      %769 = vmatpush2.bf16.msra.mxu0 0
      %770 = vmatprep.subr.bf16.mxu0 0
      %771 = vmatpush2.bf16.msra.mxu0 0
      %772 = vmatprep.subr.bf16.mxu0 0
      %773 = vmatpush2.bf16.msra.mxu0 0
      %774 = vmatprep.subr.bf16.mxu0 0
      %775 = vmatpush2.bf16.msra.mxu0 0
      %776 = vmatprep.subr.bf16.mxu0 0
      %777 = vmatpush2.bf16.msra.mxu0 0
      %778 = vmatprep.subr.bf16.mxu0 0
      %779 = vmatpush2.bf16.msra.mxu0 %v725
      %780 = vmatprep.mubr.bf16.mxu0 %v737
      %781 = vmatmul.mubr.bf16.gmra.mxu0 %v669
      %v782 = vpop.f32.mrf.mxu0
      %v783 = vadd.f32 %v643, %v782
      %v784 = vpop.f32.mrf.mxu0
      %v785 = vpop.f32.mrf.mxu0
      %v786 = vadd.f32 %v643, %v785
      %v787 = vpop.f32.mrf.mxu0
      %788 = vmatprep.mubr.bf16.mxu0 %v740
      %789 = vmatmul.mubr.bf16.gmra.mxu0 %v671
      %v790 = vpop.f32.mrf.mxu0
      %v791 = vadd.f32 %v643, %v790
      %v792 = vpop.f32.mrf.mxu0
      %v793 = vpop.f32.mrf.mxu0
      %v794 = vadd.f32 %v643, %v793
      %v795 = vpop.f32.mrf.mxu0
      %796 = vmatprep.mubr.bf16.mxu0 %v743
      %797 = vmatmul.mubr.bf16.gmra.mxu0 %v673
      %v798 = vpop.f32.mrf.mxu0
      %v799 = vadd.f32 %v643, %v798
      %v800 = vpop.f32.mrf.mxu0
      %v801 = vpop.f32.mrf.mxu0
      %v802 = vadd.f32 %v643, %v801
      %v803 = vpop.f32.mrf.mxu0
      %804 = vmatprep.mubr.bf16.mxu0 %v746
      %805 = vmatmul.mubr.bf16.gmra.mxu0 %v675
      %v806 = vpop.f32.mrf.mxu0
      %v807 = vadd.f32 %v643, %v806
      %v808 = vpop.f32.mrf.mxu0
      %v809 = vpop.f32.mrf.mxu0
      %v810 = vadd.f32 %v643, %v809
      %v811 = vpop.f32.mrf.mxu0
      %812 = vdwg.mxu0
      %v813 = vmax.f32 %v783, 0.0
      %v814 = vmax.f32 %v786, 0.0
      %v815 = vmax.f32 %v791, 0.0
      %v816 = vmax.f32 %v794, 0.0
      %v817 = vmax.f32 %v799, 0.0
      %v818 = vmax.f32 %v802, 0.0
      %v819 = vmax.f32 %v807, 0.0
      %v820 = vmax.f32 %v810, 0.0
      %v821 = vpack.c.bf16 %v814, %v813
      %v822 = vpack.c.bf16 %v816, %v815
      %v823 = vpack.c.bf16 %v818, %v817
      %v824 = vpack.c.bf16 %v820, %v819
      %v829 = vunpack.c.l.b16 %v821
      %v830 = vunpack.c.h.b16 %v821
      %v831 = vunpack.c.l.b16 %v822
      %v832 = vunpack.c.h.b16 %v822
      %v833 = vunpack.c.l.b16 %v823
      %v834 = vunpack.c.h.b16 %v823
      %v835 = vunpack.c.l.b16 %v824
      %v836 = vunpack.c.h.b16 %v824
      %v837 = vpack.c.b16 %v829, %v829
      %v838 = vpack.c.b16 %v830, %v830
      %v839 = vpack.c.b16 %v831, %v831
      %v840 = vpack.c.b16 %v832, %v832
      %v841 = vpack.c.b16 %v833, %v833
      %v842 = vpack.c.b16 %v834, %v834
      %v843 = vpack.c.b16 %v835, %v835
      %v844 = vpack.c.b16 %v836, %v836
      %853 = vst [vmem:[%s183] sm:$0xf] %v837
      %854 = vst [vmem:[%s183 + $0x4] sm:$0xf] %v838
      %855 = vst [vmem:[%s183 + $0x8] sm:$0xf] %v839
      %856 = vst [vmem:[%s183 + $0xc] sm:$0xf] %v840
      %857 = vst [vmem:[%s183 + $0x10] sm:$0xf] %v841
      %858 = vst [vmem:[%s183 + $0x14] sm:$0xf] %v842
      %859 = vst [vmem:[%s183 + $0x18] sm:$0xf] %v843
      %860 = vst [vmem:[%s183 + $0x1c] sm:$0xf] %v844
      %s861 = smul.u32 8, %s22
      %p862 = scmp.lt.s32.totalorder %s861, 15
      %s863 = scalar_select %p862, %s861, 15
      %s864 = smul.addr %s863, 4
      %s865 = scalar_lea.vmem %s5, %s864
      // Predicated region
      $region33: #{encoder_forward.22} parent=31 // pred_check
        %p866 = pneg %p108
      $region34: #{encoder_forward.22} parent=31 // pred_check_branch
        %868 = sbr.rel (%p866) target = $region36
      $region35: #{encoder_forward.22} parent=31 // pred_region
        %s869 = smul.u32 8, %s22
      $region36: #{encoder_forward.22} parent=31 // pred_fallthru
        _
    $region32: #{encoder_forward.22} parent=5 // pred_fallthru
      _
    %p870 = scmp.le.s32.totalorder 2, %s17
    // Predicated region
    $region37: #{encoder_forward.22} parent=5 // pred_check
      %p871 = pneg %p870
    $region38: #{encoder_forward.22} parent=5 // pred_check_branch
      %873 = sbr.rel (%p871) target = $region40
    $region39: #{encoder_forward.22} parent=5 // pred_region
      %s874 = ssub.s32 %s17, 2
      // Predicated region
      $region41: #{encoder_forward.22} parent=39 // pred_check
        %p875 = pneg %p114
      $region42: #{encoder_forward.22} parent=39 // pred_check_branch
        %877 = sbr.rel (%p875) target = $region44
      $region43: #{encoder_forward.22} parent=39 // pred_region
        %s878 = smul.u32 8, %s23
        %p879 = scmp.lt.s32.totalorder %s878, 15
        %s880 = scalar_select %p879, %s878, 15
        %s881 = smul.addr %s880, 4
        %s882 = scalar_lea.vmem %s5, %s881
      $region44: #{encoder_forward.22} parent=39 // pred_fallthru
        _
    $region40: #{encoder_forward.22} parent=5 // pred_fallthru
      _
  $region6: #{encoder_forward.22} parent=0 // loop_footer
    %s21 = sadd.s32 1, %s17
  $region7: #{encoder_forward.22} parent=0 // loop_footer_branch
    %16 = sbr.rel target = $region3
  $region8: #{encoder_forward.22} parent=0 // loop_exit
    _

// kernel: encoder_forward.23
$region0: #{encoder_forward.23}
  #allocation0 [shape = 'u32[]', space=smem, size = 0x4, offset = 0x4, fixed_abs, tag = 'smem constant byte address 0x4 - core index']
  #allocation1 [shape = 'u32[144,128]{1,0:T(1,128)}', space=vmem, size = 0x12000, scoped, tag = 'internal scratch']
  #allocation2 [shape = 'u32[2048]{0}', space=vmem, size = 0x2000, scoped, tag = 'scoped memory for encoder_forward.23']
  #allocation3 [shape = 'u32[2048]{0}', space=vmem, size = 0x2000, scoped, tag = 'scoped memory for encoder_forward.23']
  #allocation4 [shape = 'u32[2048]{0}', space=vmem, size = 0x2000, scoped, tag = 'scoped memory for encoder_forward.23']
  #allocation5 [shape = 'u32[2048]{0}', space=vmem, size = 0x2000, scoped, tag = 'scoped memory for encoder_forward.23']
  #allocation6 [shape = 'u32[2048]{0}', space=vmem, size = 0x2000, scoped, tag = 'scoped memory for encoder_forward.23']
  #allocation7 [shape = 'u32[2048]{0}', space=vmem, size = 0x2000, scoped, tag = 'scoped memory for encoder_forward.23']
  #allocation8 [shape = 'u32[2048]{0}', space=vmem, size = 0x2000, scoped, tag = 'scoped memory for encoder_forward.23']
  #allocation9 [shape = 'u32[2048]{0}', space=vmem, size = 0x2000, scoped, tag = 'scoped memory for encoder_forward.23']
  #allocation10 [shape = 'u32[2048]{0}', space=vmem, size = 0x2000, scoped, tag = 'scoped memory for encoder_forward.23']
  #allocation11 [shape = 'u32[2048]{0}', space=vmem, size = 0x2000, scoped, tag = 'scoped memory for encoder_forward.23']
  %s0 = inlined_call_operand.vmem [shape: bf16[128,144], index: 0, kind: input, shape index: {}]
  %s1 = inlined_call_operand.vmem [shape: bf16[144,32], index: 1, kind: input, shape index: {}]
  %s2 = inlined_call_operand.<no memory space> [shape: bf16[], index: 2, kind: input, shape index: {}]
  %s3 = inlined_call_operand.vmem [shape: f32[1,32], index: 3, kind: input, shape index: {}]
  %s4 = inlined_call_operand.<no memory space> [shape: f32[], index: 4, kind: input, shape index: {}]
  %s5 = inlined_call_operand.vmem [shape: bf16[128,128], index: 5, kind: output, shape index: {}]
  %s6 = sld [smem:[#allocation0]]
  $region45: #{encoder_forward.23} parent=0
    _
  %s8 = ssub.s32 1, %s6
  %s9 = scalar_select 0, %s8, %s6
  %v10 = vstv %s2
  %v11 = vunpack.i.l.bf16 %v10
  %v13 = vunpack.i.h.bf16 %v10
  %v15 = vstv %s4
  loop: start=0, step=1, limit=4
  $region2: #{encoder_forward.23} parent=0 // loop_pre_header
    _
  $region3: #{encoder_forward.23} parent=0 // loop_header
    %s17 = sphi 0, %s21
    %p18 = scmp.ge.s32.totalorder %s17, 4
    %s27 = sphi 0, %s29
    %s30 = sphi 0, %s27
    %s31 = sphi 0, %s30
    %s47 = sphi 0, %s31
    %s51 = sphi 0, %s51
    %s53 = sphi 0, %s51
    %s54 = sphi 0, %s53
    %s68 = sphi 0, %s54
    %s72 = sphi 0, %s72
    %s74 = sphi 0, %s72
    %s75 = sphi 0, %s74
    %s89 = sphi 0, %s75
    %s95 = sphi 0, %s97
    %s98 = sphi 0, %s95
    %s99 = sphi 0, %s98
    %s115 = sphi 0, %s99
  $region4: #{encoder_forward.23} parent=0 // loop_header_branch
    %20 = sbr.rel (%p18) target = $region8
  $region5: #{encoder_forward.23} parent=0 // loop_body
    %s22 = ssub.s32 %s17, 1
    %s23 = ssub.s32 %s17, 2
    %s24 = sadd.s32 %s17, 1
    %s25 = ssub.s32 %s17, %s24
    %p26 = scmp.eq.s32.totalorder %s25, 0
    %s28 = sadd.s32 %s27, 1
    %s29 = scalar_select %p26, %s27, %s28
    %p32 = pneg %p26
    %p33 = scmp.eq.s32.totalorder %s17, 1
    %p34 = por %p32, %p33
    %p35 = scmp.ne.s32.totalorder %s27, %s30
    %p36 = scmp.eq.s32.totalorder %s17, 0
    %p37 = por %p35, %p36
    %p38 = scmp.ne.s32.totalorder %s27, %s30
    %p39 = scmp.eq.s32.totalorder %s22, 1
    %p40 = por %p38, %p39
    %p41 = scmp.ne.s32.totalorder %s30, %s31
    %p42 = scmp.eq.s32.totalorder %s22, 0
    %p43 = por %p41, %p42
    %p44 = scmp.ne.s32.totalorder %s30, %s31
    %p45 = scmp.eq.s32.totalorder %s23, 1
    %p46 = por %p44, %p45
    %p48 = scmp.ne.s32.totalorder %s31, %s47
    %p49 = scmp.eq.s32.totalorder %s23, 0
    %p50 = por %p48, %p49
    %s52 = sadd.s32 %s51, 1
    %p55 = scmp.eq.s32.totalorder %s17, 1
    %p56 = scmp.ne.s32.totalorder %s51, %s53
    %p57 = scmp.eq.s32.totalorder %s17, 0
    %p58 = por %p56, %p57
    %p59 = scmp.ne.s32.totalorder %s51, %s53
    %p60 = scmp.eq.s32.totalorder %s22, 1
    %p61 = por %p59, %p60
    %p62 = scmp.ne.s32.totalorder %s53, %s54
    %p63 = scmp.eq.s32.totalorder %s22, 0
    %p64 = por %p62, %p63
    %p65 = scmp.ne.s32.totalorder %s53, %s54
    %p66 = scmp.eq.s32.totalorder %s23, 1
    %p67 = por %p65, %p66
    %p69 = scmp.ne.s32.totalorder %s54, %s68
    %p70 = scmp.eq.s32.totalorder %s23, 0
    %p71 = por %p69, %p70
    %s73 = sadd.s32 %s72, 1
    %p76 = scmp.eq.s32.totalorder %s17, 1
    %p77 = scmp.ne.s32.totalorder %s72, %s74
    %p78 = scmp.eq.s32.totalorder %s17, 0
    %p79 = por %p77, %p78
    %p80 = scmp.ne.s32.totalorder %s72, %s74
    %p81 = scmp.eq.s32.totalorder %s22, 1
    %p82 = por %p80, %p81
    %p83 = scmp.ne.s32.totalorder %s74, %s75
    %p84 = scmp.eq.s32.totalorder %s22, 0
    %p85 = por %p83, %p84
    %p86 = scmp.ne.s32.totalorder %s74, %s75
    %p87 = scmp.eq.s32.totalorder %s23, 1
    %p88 = por %p86, %p87
    %p90 = scmp.ne.s32.totalorder %s75, %s89
    %p91 = scmp.eq.s32.totalorder %s23, 0
    %p92 = por %p90, %p91
    %s93 = ssub.s32 %s17, %s24
    %p94 = scmp.eq.s32.totalorder %s93, 0
    %s96 = sadd.s32 %s95, 1
    %s97 = scalar_select %p94, %s95, %s96
    %p100 = pneg %p94
    %p101 = scmp.eq.s32.totalorder %s17, 1
    %p102 = por %p100, %p101
    %p103 = scmp.ne.s32.totalorder %s95, %s98
    %p104 = scmp.eq.s32.totalorder %s17, 0
    %p105 = por %p103, %p104
    %p106 = scmp.ne.s32.totalorder %s95, %s98
    %p107 = scmp.eq.s32.totalorder %s22, 1
    %p108 = por %p106, %p107
    %p109 = scmp.ne.s32.totalorder %s98, %s99
    %p110 = scmp.eq.s32.totalorder %s22, 0
    %p111 = por %p109, %p110
    %p112 = scmp.ne.s32.totalorder %s98, %s99
    %p113 = scmp.eq.s32.totalorder %s23, 1
    %p114 = por %p112, %p113
    %p116 = scmp.ne.s32.totalorder %s99, %s115
    %p117 = scmp.eq.s32.totalorder %s23, 0
    %p118 = por %p116, %p117
    %p119 = scmp.le.s32.totalorder 1, %s17
    %p120 = scmp.lt.s32.totalorder %s17, 3
    %p121 = pnand %p119, %p120
    %p122 = pneg %p121
    // Predicated region
    $region9: #{encoder_forward.23} parent=5 // pred_check
      _
    $region10: #{encoder_forward.23} parent=5 // pred_check_branch
      %124 = sbr.rel (%p121) target = $region12
    $region11: #{encoder_forward.23} parent=5 // pred_region
      %s125 = ssub.s32 %s17, 1
      // Predicated region
      $region13: #{encoder_forward.23} parent=11 // pred_check
        %p126 = pneg %p64
      $region14: #{encoder_forward.23} parent=11 // pred_check_branch
        %128 = sbr.rel (%p126) target = $region16
      $region15: #{encoder_forward.23} parent=11 // pred_region
        _
      $region16: #{encoder_forward.23} parent=11 // pred_fallthru
        _
      // Predicated region
      $region17: #{encoder_forward.23} parent=11 // pred_check
        %p129 = pneg %p85
      $region18: #{encoder_forward.23} parent=11 // pred_check_branch
        %131 = sbr.rel (%p129) target = $region20
      $region19: #{encoder_forward.23} parent=11 // pred_region
        _
      $region20: #{encoder_forward.23} parent=11 // pred_fallthru
        _
    $region12: #{encoder_forward.23} parent=5 // pred_fallthru
      _
    %p132 = scmp.lt.s32.totalorder %s17, 2
    // Predicated region
    $region21: #{encoder_forward.23} parent=5 // pred_check
      %p133 = pneg %p132
    $region22: #{encoder_forward.23} parent=5 // pred_check_branch
      %135 = sbr.rel (%p133) target = $region24
    $region23: #{encoder_forward.23} parent=5 // pred_region
      // Predicated region
      $region25: #{encoder_forward.23} parent=23 // pred_check
        %p136 = pneg %p37
      $region26: #{encoder_forward.23} parent=23 // pred_check_branch
        %138 = sbr.rel (%p136) target = $region28
      $region27: #{encoder_forward.23} parent=23 // pred_region
        %s139 = smul.u32 8, %s17
        %p140 = scmp.lt.s32.totalorder %s139, 15
        %s141 = scalar_select %p140, %s139, 15
        %s142 = smul.addr %s141, 2
        %s143 = smul.addr %s142, 4
        %s144 = scalar_lea.vmem %s0, %s143
        %s145 = smul.u32 8, %s17
      $region28: #{encoder_forward.23} parent=23 // pred_fallthru
        _
    $region24: #{encoder_forward.23} parent=5 // pred_fallthru
      _
    %p146 = scmp.le.s32.totalorder 1, %s17
    %p147 = scmp.lt.s32.totalorder %s17, 3
    %p148 = pnand %p146, %p147
    %p149 = pneg %p148
    // Predicated region
    $region29: #{encoder_forward.23} parent=5 // pred_check
      _
    $region30: #{encoder_forward.23} parent=5 // pred_check_branch
      %151 = sbr.rel (%p148) target = $region32
    $region31: #{encoder_forward.23} parent=5 // pred_region
      #allocation12 [shape = 'u8[36864]{0}', space=vmem, size = 0x9000, dematerialized = true, scoped, tag = 'FusionAdapter Buffer %fusion.11 = bf16[144,128]{1,0:T(8,128)(2,1)} fusion(%param_1.117, %param_2.32), kind=kLoop, calls=%fused_computation.70.clone, metadata={op_name="jit(encoder_forward)/jit(_pad)/pad" stack_frame_id=53}']
      #allocation13 [shape = 'u8[512]{0}', space=vmem, size = 0x400, dematerialized = true, scoped, tag = 'FusionAdapter Buffer %fusion.32 = f32[1,128]{1,0:T(1,128)} fusion(%param_3.19, %param_4.12), kind=kLoop, calls=%fused_computation.99.clone, metadata={op_name="jit(encoder_forward)/jit(_pad)/pad" stack_frame_id=54}']
      %s152 = ssub.s32 %s17, 1
      %s153 = smul.u32 8, %s22
      %p154 = scmp.lt.s32.totalorder %s153, 15
      %s155 = scalar_select %p154, %s153, 15
      %s156 = smul.addr %s155, 2
      %s157 = smul.addr %s156, 4
      %s158 = scalar_lea.vmem %s0, %s157
      %p159 = pneg %p43
      %p160 = pneg %p40
      %p161 = pneg %p64
      %p162 = pneg %p61
      %p163 = pneg %p85
      %p164 = pneg %p82
      %p165 = pneg %p111
      %p166 = pneg %p108
      %s167 = smul.u32 8, %s22
      %p168 = scmp.lt.s32.totalorder %s167, 15
      %s169 = scalar_select %p168, %s167, 15
      %s170 = smul.addr %s169, 4
      %s171 = scalar_lea.vmem %s5, %s170
      %s172 = smul.u32 8, %s22
      %p173 = scmp.lt.s32.totalorder %s172, 15
      %s174 = scalar_select %p173, %s172, 15
      %s175 = smul.addr %s174, 2
      %s176 = smul.addr %s175, 4
      %s177 = scalar_lea.vmem %s0, %s176
      %s178 = smul.u32 8, %s22
      %s179 = smul.u32 8, %s22
      %p180 = scmp.lt.s32.totalorder %s179, 15
      %s181 = scalar_select %p180, %s179, 15
      %s182 = smul.addr %s181, 4
      %s183 = scalar_lea.vmem %s5, %s182
      %s184 = smul.u32 8, %s22
      %s186 = sor.u32 255, 127
      %s187 = sand.u32 %s186, 85
      %s188 = sshrl.u32 %s187, 1
      %s189 = sor.u32 %s187, %s188
      %s190 = sand.u32 51, %s189
      %s191 = sshrl.u32 %s190, 2
      %s192 = sor.u32 %s190, %s191
      %s193 = sand.u32 15, %s192
      %v194 = vld [vmem:[%s1] sm:%s193]
      %v195 = vunpack.c.l.bf16 %v194
      %v196 = vunpack.c.h.bf16 %v194
      %v197 = vlaneseq
      %v198 = vand.u32 %v197, 127
      %vm200 = vcmp.lt.s32.totalorder %v198, 32
      %v201 = vsel %vm200, %v195, %v11
      %v202 = vpack.c.bf16 0.0, %v201
      %s204 = ssub.s32 16, 1
      %205 = vst [vmem:[#allocation12] sm:%s204] %v202
      %s206 = scalar_lea.vmem %s1, 4
      %s208 = sor.u32 255, 127
      %s209 = sand.u32 %s208, 85
      %s210 = sshrl.u32 %s209, 1
      %s211 = sor.u32 %s209, %s210
      %s212 = sand.u32 51, %s211
      %s213 = sshrl.u32 %s212, 2
      %s214 = sor.u32 %s212, %s213
      %s215 = sand.u32 15, %s214
      %v216 = vld [vmem:[%s206] sm:%s215]
      %v217 = vunpack.c.l.bf16 %v216
      %v218 = vunpack.c.h.bf16 %v216
      %v219 = vlaneseq
      %v220 = vand.u32 %v219, 127
      %vm222 = vcmp.lt.s32.totalorder %v220, 32
      %v223 = vsel %vm222, %v217, %v11
      %s224 = scalar_lea.vmem [#allocation12], 4
      %v225 = vpack.c.bf16 0.0, %v223
      %s227 = ssub.s32 16, 1
      %228 = vst [vmem:[%s224] sm:%s227] %v225
      %s229 = scalar_lea.vmem %s1, 8
      %s231 = sor.u32 255, 127
      %s232 = sand.u32 %s231, 85
      %s233 = sshrl.u32 %s232, 1
      %s234 = sor.u32 %s232, %s233
      %s235 = sand.u32 51, %s234
      %s236 = sshrl.u32 %s235, 2
      %s237 = sor.u32 %s235, %s236
      %s238 = sand.u32 15, %s237
      %v239 = vld [vmem:[%s229] sm:%s238]
      %v240 = vunpack.c.l.bf16 %v239
      %v241 = vunpack.c.h.bf16 %v239
      %v242 = vlaneseq
      %v243 = vand.u32 %v242, 127
      %vm245 = vcmp.lt.s32.totalorder %v243, 32
      %v246 = vsel %vm245, %v240, %v11
      %s247 = scalar_lea.vmem [#allocation12], 8
      %v248 = vpack.c.bf16 0.0, %v246
      %s250 = ssub.s32 16, 1
      %251 = vst [vmem:[%s247] sm:%s250] %v248
      %s252 = scalar_lea.vmem %s1, 12
      %s254 = sor.u32 255, 127
      %s255 = sand.u32 %s254, 85
      %s256 = sshrl.u32 %s255, 1
      %s257 = sor.u32 %s255, %s256
      %s258 = sand.u32 51, %s257
      %s259 = sshrl.u32 %s258, 2
      %s260 = sor.u32 %s258, %s259
      %s261 = sand.u32 15, %s260
      %v262 = vld [vmem:[%s252] sm:%s261]
      %v263 = vunpack.c.l.bf16 %v262
      %v264 = vunpack.c.h.bf16 %v262
      %v265 = vlaneseq
      %v266 = vand.u32 %v265, 127
      %vm268 = vcmp.lt.s32.totalorder %v266, 32
      %v269 = vsel %vm268, %v263, %v11
      %s270 = scalar_lea.vmem [#allocation12], 12
      %v271 = vpack.c.bf16 0.0, %v269
      %s273 = ssub.s32 16, 1
      %274 = vst [vmem:[%s270] sm:%s273] %v271
      %s275 = scalar_lea.vmem %s1, 16
      %s277 = sor.u32 255, 127
      %s278 = sand.u32 %s277, 85
      %s279 = sshrl.u32 %s278, 1
      %s280 = sor.u32 %s278, %s279
      %s281 = sand.u32 51, %s280
      %s282 = sshrl.u32 %s281, 2
      %s283 = sor.u32 %s281, %s282
      %s284 = sand.u32 15, %s283
      %v285 = vld [vmem:[%s275] sm:%s284]
      %v286 = vunpack.c.l.bf16 %v285
      %v287 = vunpack.c.h.bf16 %v285
      %v288 = vlaneseq
      %v289 = vand.u32 %v288, 127
      %vm291 = vcmp.lt.s32.totalorder %v289, 32
      %v292 = vsel %vm291, %v286, %v11
      %s293 = scalar_lea.vmem [#allocation12], 16
      %v294 = vpack.c.bf16 0.0, %v292
      %s296 = ssub.s32 16, 1
      %297 = vst [vmem:[%s293] sm:%s296] %v294
      %s298 = scalar_lea.vmem %s1, 20
      %s300 = sor.u32 255, 127
      %s301 = sand.u32 %s300, 85
      %s302 = sshrl.u32 %s301, 1
      %s303 = sor.u32 %s301, %s302
      %s304 = sand.u32 51, %s303
      %s305 = sshrl.u32 %s304, 2
      %s306 = sor.u32 %s304, %s305
      %s307 = sand.u32 15, %s306
      %v308 = vld [vmem:[%s298] sm:%s307]
      %v309 = vunpack.c.l.bf16 %v308
      %v310 = vunpack.c.h.bf16 %v308
      %v311 = vlaneseq
      %v312 = vand.u32 %v311, 127
      %vm314 = vcmp.lt.s32.totalorder %v312, 32
      %v315 = vsel %vm314, %v309, %v11
      %s316 = scalar_lea.vmem [#allocation12], 20
      %v317 = vpack.c.bf16 0.0, %v315
      %s319 = ssub.s32 16, 1
      %320 = vst [vmem:[%s316] sm:%s319] %v317
      %s321 = scalar_lea.vmem %s1, 24
      %s323 = sor.u32 255, 127
      %s324 = sand.u32 %s323, 85
      %s325 = sshrl.u32 %s324, 1
      %s326 = sor.u32 %s324, %s325
      %s327 = sand.u32 51, %s326
      %s328 = sshrl.u32 %s327, 2
      %s329 = sor.u32 %s327, %s328
      %s330 = sand.u32 15, %s329
      %v331 = vld [vmem:[%s321] sm:%s330]
      %v332 = vunpack.c.l.bf16 %v331
      %v333 = vunpack.c.h.bf16 %v331
      %v334 = vlaneseq
      %v335 = vand.u32 %v334, 127
      %vm337 = vcmp.lt.s32.totalorder %v335, 32
      %v338 = vsel %vm337, %v332, %v11
      %s339 = scalar_lea.vmem [#allocation12], 24
      %v340 = vpack.c.bf16 0.0, %v338
      %s342 = ssub.s32 16, 1
      %343 = vst [vmem:[%s339] sm:%s342] %v340
      %s344 = scalar_lea.vmem %s1, 28
      %s346 = sor.u32 255, 127
      %s347 = sand.u32 %s346, 85
      %s348 = sshrl.u32 %s347, 1
      %s349 = sor.u32 %s347, %s348
      %s350 = sand.u32 51, %s349
      %s351 = sshrl.u32 %s350, 2
      %s352 = sor.u32 %s350, %s351
      %s353 = sand.u32 15, %s352
      %v354 = vld [vmem:[%s344] sm:%s353]
      %v355 = vunpack.c.l.bf16 %v354
      %v356 = vunpack.c.h.bf16 %v354
      %v357 = vlaneseq
      %v358 = vand.u32 %v357, 127
      %vm360 = vcmp.lt.s32.totalorder %v358, 32
      %v361 = vsel %vm360, %v355, %v11
      %s362 = scalar_lea.vmem [#allocation12], 28
      %v363 = vpack.c.bf16 0.0, %v361
      %s365 = ssub.s32 16, 1
      %366 = vst [vmem:[%s362] sm:%s365] %v363
      %s367 = scalar_lea.vmem %s1, 32
      %s369 = sor.u32 255, 127
      %s370 = sand.u32 %s369, 85
      %s371 = sshrl.u32 %s370, 1
      %s372 = sor.u32 %s370, %s371
      %s373 = sand.u32 51, %s372
      %s374 = sshrl.u32 %s373, 2
      %s375 = sor.u32 %s373, %s374
      %s376 = sand.u32 15, %s375
      %v377 = vld [vmem:[%s367] sm:%s376]
      %v378 = vunpack.c.l.bf16 %v377
      %v379 = vunpack.c.h.bf16 %v377
      %v380 = vlaneseq
      %v381 = vand.u32 %v380, 127
      %vm383 = vcmp.lt.s32.totalorder %v381, 32
      %v384 = vsel %vm383, %v378, %v11
      %s385 = scalar_lea.vmem [#allocation12], 32
      %v386 = vpack.c.bf16 0.0, %v384
      %s388 = ssub.s32 16, 1
      %389 = vst [vmem:[%s385] sm:%s388] %v386
      %s390 = scalar_lea.vmem %s1, 36
      %s392 = sor.u32 255, 127
      %s393 = sand.u32 %s392, 85
      %s394 = sshrl.u32 %s393, 1
      %s395 = sor.u32 %s393, %s394
      %s396 = sand.u32 51, %s395
      %s397 = sshrl.u32 %s396, 2
      %s398 = sor.u32 %s396, %s397
      %s399 = sand.u32 15, %s398
      %v400 = vld [vmem:[%s390] sm:%s399]
      %v401 = vunpack.c.l.bf16 %v400
      %v402 = vunpack.c.h.bf16 %v400
      %v403 = vlaneseq
      %v404 = vand.u32 %v403, 127
      %vm406 = vcmp.lt.s32.totalorder %v404, 32
      %v407 = vsel %vm406, %v401, %v11
      %s408 = scalar_lea.vmem [#allocation12], 36
      %v409 = vpack.c.bf16 0.0, %v407
      %s411 = ssub.s32 16, 1
      %412 = vst [vmem:[%s408] sm:%s411] %v409
      %s413 = scalar_lea.vmem %s1, 40
      %s415 = sor.u32 255, 127
      %s416 = sand.u32 %s415, 85
      %s417 = sshrl.u32 %s416, 1
      %s418 = sor.u32 %s416, %s417
      %s419 = sand.u32 51, %s418
      %s420 = sshrl.u32 %s419, 2
      %s421 = sor.u32 %s419, %s420
      %s422 = sand.u32 15, %s421
      %v423 = vld [vmem:[%s413] sm:%s422]
      %v424 = vunpack.c.l.bf16 %v423
      %v425 = vunpack.c.h.bf16 %v423
      %v426 = vlaneseq
      %v427 = vand.u32 %v426, 127
      %vm429 = vcmp.lt.s32.totalorder %v427, 32
      %v430 = vsel %vm429, %v424, %v11
      %s431 = scalar_lea.vmem [#allocation12], 40
      %v432 = vpack.c.bf16 0.0, %v430
      %s434 = ssub.s32 16, 1
      %435 = vst [vmem:[%s431] sm:%s434] %v432
      %s436 = scalar_lea.vmem %s1, 44
      %s438 = sor.u32 255, 127
      %s439 = sand.u32 %s438, 85
      %s440 = sshrl.u32 %s439, 1
      %s441 = sor.u32 %s439, %s440
      %s442 = sand.u32 51, %s441
      %s443 = sshrl.u32 %s442, 2
      %s444 = sor.u32 %s442, %s443
      %s445 = sand.u32 15, %s444
      %v446 = vld [vmem:[%s436] sm:%s445]
      %v447 = vunpack.c.l.bf16 %v446
      %v448 = vunpack.c.h.bf16 %v446
      %v449 = vlaneseq
      %v450 = vand.u32 %v449, 127
      %vm452 = vcmp.lt.s32.totalorder %v450, 32
      %v453 = vsel %vm452, %v447, %v11
      %s454 = scalar_lea.vmem [#allocation12], 44
      %v455 = vpack.c.bf16 0.0, %v453
      %s457 = ssub.s32 16, 1
      %458 = vst [vmem:[%s454] sm:%s457] %v455
      %s459 = scalar_lea.vmem %s1, 48
      %s461 = sor.u32 255, 127
      %s462 = sand.u32 %s461, 85
      %s463 = sshrl.u32 %s462, 1
      %s464 = sor.u32 %s462, %s463
      %s465 = sand.u32 51, %s464
      %s466 = sshrl.u32 %s465, 2
      %s467 = sor.u32 %s465, %s466
      %s468 = sand.u32 15, %s467
      %v469 = vld [vmem:[%s459] sm:%s468]
      %v470 = vunpack.c.l.bf16 %v469
      %v471 = vunpack.c.h.bf16 %v469
      %v472 = vlaneseq
      %v473 = vand.u32 %v472, 127
      %vm475 = vcmp.lt.s32.totalorder %v473, 32
      %v476 = vsel %vm475, %v470, %v11
      %s477 = scalar_lea.vmem [#allocation12], 48
      %v478 = vpack.c.bf16 0.0, %v476
      %s480 = ssub.s32 16, 1
      %481 = vst [vmem:[%s477] sm:%s480] %v478
      %s482 = scalar_lea.vmem %s1, 52
      %s484 = sor.u32 255, 127
      %s485 = sand.u32 %s484, 85
      %s486 = sshrl.u32 %s485, 1
      %s487 = sor.u32 %s485, %s486
      %s488 = sand.u32 51, %s487
      %s489 = sshrl.u32 %s488, 2
      %s490 = sor.u32 %s488, %s489
      %s491 = sand.u32 15, %s490
      %v492 = vld [vmem:[%s482] sm:%s491]
      %v493 = vunpack.c.l.bf16 %v492
      %v494 = vunpack.c.h.bf16 %v492
      %v495 = vlaneseq
      %v496 = vand.u32 %v495, 127
      %vm498 = vcmp.lt.s32.totalorder %v496, 32
      %v499 = vsel %vm498, %v493, %v11
      %s500 = scalar_lea.vmem [#allocation12], 52
      %v501 = vpack.c.bf16 0.0, %v499
      %s503 = ssub.s32 16, 1
      %504 = vst [vmem:[%s500] sm:%s503] %v501
      %s505 = scalar_lea.vmem %s1, 56
      %s507 = sor.u32 255, 127
      %s508 = sand.u32 %s507, 85
      %s509 = sshrl.u32 %s508, 1
      %s510 = sor.u32 %s508, %s509
      %s511 = sand.u32 51, %s510
      %s512 = sshrl.u32 %s511, 2
      %s513 = sor.u32 %s511, %s512
      %s514 = sand.u32 15, %s513
      %v515 = vld [vmem:[%s505] sm:%s514]
      %v516 = vunpack.c.l.bf16 %v515
      %v517 = vunpack.c.h.bf16 %v515
      %v518 = vlaneseq
      %v519 = vand.u32 %v518, 127
      %vm521 = vcmp.lt.s32.totalorder %v519, 32
      %v522 = vsel %vm521, %v516, %v11
      %s523 = scalar_lea.vmem [#allocation12], 56
      %v524 = vpack.c.bf16 0.0, %v522
      %s526 = ssub.s32 16, 1
      %527 = vst [vmem:[%s523] sm:%s526] %v524
      %s528 = scalar_lea.vmem %s1, 60
      %s530 = sor.u32 255, 127
      %s531 = sand.u32 %s530, 85
      %s532 = sshrl.u32 %s531, 1
      %s533 = sor.u32 %s531, %s532
      %s534 = sand.u32 51, %s533
      %s535 = sshrl.u32 %s534, 2
      %s536 = sor.u32 %s534, %s535
      %s537 = sand.u32 15, %s536
      %v538 = vld [vmem:[%s528] sm:%s537]
      %v539 = vunpack.c.l.bf16 %v538
      %v540 = vunpack.c.h.bf16 %v538
      %v541 = vlaneseq
      %v542 = vand.u32 %v541, 127
      %vm544 = vcmp.lt.s32.totalorder %v542, 32
      %v545 = vsel %vm544, %v539, %v11
      %s546 = scalar_lea.vmem [#allocation12], 60
      %v547 = vpack.c.bf16 0.0, %v545
      %s549 = ssub.s32 16, 1
      %550 = vst [vmem:[%s546] sm:%s549] %v547
      %s551 = scalar_lea.vmem %s1, 64
      %s553 = sor.u32 255, 127
      %s554 = sand.u32 %s553, 85
      %s555 = sshrl.u32 %s554, 1
      %s556 = sor.u32 %s554, %s555
      %s557 = sand.u32 51, %s556
      %s558 = sshrl.u32 %s557, 2
      %s559 = sor.u32 %s557, %s558
      %s560 = sand.u32 15, %s559
      %v561 = vld [vmem:[%s551] sm:%s560]
      %v562 = vunpack.c.l.bf16 %v561
      %v563 = vunpack.c.h.bf16 %v561
      %v564 = vlaneseq
      %v565 = vand.u32 %v564, 127
      %vm567 = vcmp.lt.s32.totalorder %v565, 32
      %v568 = vsel %vm567, %v562, %v11
      %s569 = scalar_lea.vmem [#allocation12], 64
      %v570 = vpack.c.bf16 0.0, %v568
      %s572 = ssub.s32 16, 1
      %573 = vst [vmem:[%s569] sm:%s572] %v570
      %s574 = scalar_lea.vmem %s1, 68
      %s576 = sor.u32 255, 127
      %s577 = sand.u32 %s576, 85
      %s578 = sshrl.u32 %s577, 1
      %s579 = sor.u32 %s577, %s578
      %s580 = sand.u32 51, %s579
      %s581 = sshrl.u32 %s580, 2
      %s582 = sor.u32 %s580, %s581
      %s583 = sand.u32 15, %s582
      %v584 = vld [vmem:[%s574] sm:%s583]
      %v585 = vunpack.c.l.bf16 %v584
      %v586 = vunpack.c.h.bf16 %v584
      %v587 = vlaneseq
      %v588 = vand.u32 %v587, 127
      %vm590 = vcmp.lt.s32.totalorder %v588, 32
      %v591 = vsel %vm590, %v585, %v11
      %s592 = scalar_lea.vmem [#allocation12], 68
      %v593 = vpack.c.bf16 0.0, %v591
      %s595 = ssub.s32 16, 1
      %596 = vst [vmem:[%s592] sm:%s595] %v593
      %v597 = vld [vmem:[%s3] sm:$0x1]
      %v598 = vlaneseq
      %v599 = vshrl.u32 %v598, 7
      %vm601 = vcmp.lt.s32.totalorder %v599, 1
      %v602 = vsel %vm601, %v597, %v15
      %v603 = vlaneseq
      %v604 = vand.u32 %v603, 127
      %vm606 = vcmp.lt.s32.totalorder %v604, 32
      %v607 = vsel %vm606, %v602, %v15
      %s609 = ssub.s32 2, 1
      %610 = vst [vmem:[#allocation13] sm:%s609] %v607
      %v612 = vld [vmem:[%s177] sm:$0xff]
      %v613 = vld [vmem:[%s177 + $0x8] sm:$0xff]
      %v614 = vld [vmem:[%s177 + $0x10] sm:$0xff]
      %v615 = vld [vmem:[%s177 + $0x18] sm:$0xff]
      %v616 = vld [vmem:[%s177 + $0x20] sm:$0xff]
      %v617 = vld [vmem:[%s177 + $0x28] sm:$0xff]
      %v618 = vld [vmem:[%s177 + $0x30] sm:$0xff]
      %v619 = vld [vmem:[%s177 + $0x38] sm:$0xff]
      %v620 = vld [vmem:[#allocation12] sm:$0xf]
      %v621 = vld [vmem:[#allocation12 + $0x4] sm:$0xf]
      %v622 = vld [vmem:[#allocation12 + $0x8] sm:$0xf]
      %v623 = vld [vmem:[#allocation12 + $0xc] sm:$0xf]
      %v624 = vld [vmem:[#allocation12 + $0x10] sm:$0xf]
      %v625 = vld [vmem:[#allocation12 + $0x14] sm:$0xf]
      %v626 = vld [vmem:[#allocation12 + $0x18] sm:$0xf]
      %v627 = vld [vmem:[#allocation12 + $0x1c] sm:$0xf]
      %v628 = vld [vmem:[#allocation12 + $0x20] sm:$0xf]
      %v629 = vld [vmem:[#allocation12 + $0x24] sm:$0xf]
      %v630 = vld [vmem:[#allocation12 + $0x28] sm:$0xf]
      %v631 = vld [vmem:[#allocation12 + $0x2c] sm:$0xf]
      %v632 = vld [vmem:[#allocation12 + $0x30] sm:$0xf]
      %v633 = vld [vmem:[#allocation12 + $0x34] sm:$0xf]
      %v634 = vld [vmem:[#allocation12 + $0x38] sm:$0xf]
      %v635 = vld [vmem:[#allocation12 + $0x3c] sm:$0xf]
      %v636 = vld [vmem:[#allocation12 + $0x40] sm:$0xf]
      %v637 = vld [vmem:[#allocation12 + $0x44] sm:$0xf]
      %v638 = vld [vmem:[#allocation13] sm:$0x1]
      %v640 = vlaneseq
      %v641 = vshrl.u32 %v640, 7
      %v642 = vsub.s32 0, %v641
      %v643 = vrot.slane %v638, %v642
      %v653 = vunpack.c.l.b16 %v612
      %v654 = vunpack.c.h.b16 %v612
      %v655 = vunpack.c.l.b16 %v613
      %v656 = vunpack.c.h.b16 %v613
      %v657 = vunpack.c.l.b16 %v614
      %v658 = vunpack.c.h.b16 %v614
      %v659 = vunpack.c.l.b16 %v615
      %v660 = vunpack.c.h.b16 %v615
      %v661 = vunpack.c.l.b16 %v616
      %v662 = vunpack.c.h.b16 %v616
      %v663 = vunpack.c.l.b16 %v617
      %v664 = vunpack.c.h.b16 %v617
      %v665 = vunpack.c.l.b16 %v618
      %v666 = vunpack.c.h.b16 %v618
      %v667 = vunpack.c.l.b16 %v619
      %v668 = vunpack.c.h.b16 %v619
      %v669 = vpack.c.b16 %v655, %v653
      %v670 = vpack.c.b16 %v656, %v654
      %v671 = vpack.c.b16 %v659, %v657
      %v672 = vpack.c.b16 %v660, %v658
      %v673 = vpack.c.b16 %v663, %v661
      %v674 = vpack.c.b16 %v664, %v662
      %v675 = vpack.c.b16 %v667, %v665
      %v676 = vpack.c.b16 %v668, %v666
      %v699 = vunpack.c.l.b16 %v620
      %v700 = vunpack.c.l.b16 %v621
      %v701 = vunpack.c.l.b16 %v622
      %v702 = vunpack.c.l.b16 %v623
      %v703 = vunpack.c.l.b16 %v624
      %v704 = vunpack.c.l.b16 %v625
      %v705 = vunpack.c.l.b16 %v626
      %v706 = vunpack.c.l.b16 %v627
      %v707 = vunpack.c.l.b16 %v628
      %v708 = vunpack.c.l.b16 %v629
      %v709 = vunpack.c.l.b16 %v630
      %v710 = vunpack.c.l.b16 %v631
      %v711 = vunpack.c.l.b16 %v632
      %v712 = vunpack.c.l.b16 %v633
      %v713 = vunpack.c.l.b16 %v634
      %v714 = vunpack.c.l.b16 %v635
      %v715 = vunpack.c.l.b16 %v636
      %v716 = vunpack.c.l.b16 %v637
      %v717 = vpack.c.b16 %v700, %v699
      %v718 = vpack.c.b16 %v702, %v701
      %v719 = vpack.c.b16 %v704, %v703
      %v720 = vpack.c.b16 %v706, %v705
      %v721 = vpack.c.b16 %v708, %v707
      %v722 = vpack.c.b16 %v710, %v709
      %v723 = vpack.c.b16 %v712, %v711
      %v724 = vpack.c.b16 %v714, %v713
      %v725 = vpack.c.b16 %v716, %v715
      %vm735 = vcmask 130048
      %v737 = vsel %vm735, %v670, 0
      %v740 = vsel %vm735, %v672, 0
      %v743 = vsel %vm735, %v674, 0
      %v746 = vsel %vm735, %v676, 0
      %748 = vmatprep.subr.bf16.mxu0 0
      %749 = vmatpush1.bf16.msra.mxu0 %v724
      %750 = vmatprep.subr.bf16.mxu0 0
      %751 = vmatpush1.bf16.msra.mxu0 %v723
      %752 = vmatprep.subr.bf16.mxu0 0
      %753 = vmatpush1.bf16.msra.mxu0 %v722
      %754 = vmatprep.subr.bf16.mxu0 0
      %755 = vmatpush1.bf16.msra.mxu0 %v721
      %756 = vmatprep.subr.bf16.mxu0 0
      %757 = vmatpush1.bf16.msra.mxu0 %v720
      %758 = vmatprep.subr.bf16.mxu0 0
      %759 = vmatpush1.bf16.msra.mxu0 %v719
      %760 = vmatprep.subr.bf16.mxu0 0
      %761 = vmatpush1.bf16.msra.mxu0 %v718
      %762 = vmatprep.subr.bf16.mxu0 0
      %763 = vmatpush1.bf16.msra.mxu0 %v717
      %764 = vmatprep.subr.bf16.mxu0 0
      %765 = vmatpush2.bf16.msra.mxu0 0
      %766 = vmatprep.subr.bf16.mxu0 0
      %767 = vmatpush2.bf16.msra.mxu0 0
      %768 = vmatprep.subr.bf16.mxu0 0
      %769 = vmatpush2.bf16.msra.mxu0 0
      %770 = vmatprep.subr.bf16.mxu0 0
      %771 = vmatpush2.bf16.msra.mxu0 0
      %772 = vmatprep.subr.bf16.mxu0 0
      %773 = vmatpush2.bf16.msra.mxu0 0
      %774 = vmatprep.subr.bf16.mxu0 0
      %775 = vmatpush2.bf16.msra.mxu0 0
      %776 = vmatprep.subr.bf16.mxu0 0
      %777 = vmatpush2.bf16.msra.mxu0 0
      %778 = vmatprep.subr.bf16.mxu0 0
      %779 = vmatpush2.bf16.msra.mxu0 %v725
      %780 = vmatprep.mubr.bf16.mxu0 %v737
      %781 = vmatmul.mubr.bf16.gmra.mxu0 %v669
      %v782 = vpop.f32.mrf.mxu0
      %v783 = vadd.f32 %v643, %v782
      %v784 = vpop.f32.mrf.mxu0
      %v785 = vpop.f32.mrf.mxu0
      %v786 = vadd.f32 %v643, %v785
      %v787 = vpop.f32.mrf.mxu0
      %788 = vmatprep.mubr.bf16.mxu0 %v740
      %789 = vmatmul.mubr.bf16.gmra.mxu0 %v671
      %v790 = vpop.f32.mrf.mxu0
      %v791 = vadd.f32 %v643, %v790
      %v792 = vpop.f32.mrf.mxu0
      %v793 = vpop.f32.mrf.mxu0
      %v794 = vadd.f32 %v643, %v793
      %v795 = vpop.f32.mrf.mxu0
      %796 = vmatprep.mubr.bf16.mxu0 %v743
      %797 = vmatmul.mubr.bf16.gmra.mxu0 %v673
      %v798 = vpop.f32.mrf.mxu0
      %v799 = vadd.f32 %v643, %v798
      %v800 = vpop.f32.mrf.mxu0
      %v801 = vpop.f32.mrf.mxu0
      %v802 = vadd.f32 %v643, %v801
      %v803 = vpop.f32.mrf.mxu0
      %804 = vmatprep.mubr.bf16.mxu0 %v746
      %805 = vmatmul.mubr.bf16.gmra.mxu0 %v675
      %v806 = vpop.f32.mrf.mxu0
      %v807 = vadd.f32 %v643, %v806
      %v808 = vpop.f32.mrf.mxu0
      %v809 = vpop.f32.mrf.mxu0
      %v810 = vadd.f32 %v643, %v809
      %v811 = vpop.f32.mrf.mxu0
      %812 = vdwg.mxu0
      %v813 = vpack.c.bf16 %v786, %v783
      %v814 = vpack.c.bf16 %v794, %v791
      %v815 = vpack.c.bf16 %v802, %v799
      %v816 = vpack.c.bf16 %v810, %v807
      %v821 = vunpack.c.l.b16 %v813
      %v822 = vunpack.c.h.b16 %v813
      %v823 = vunpack.c.l.b16 %v814
      %v824 = vunpack.c.h.b16 %v814
      %v825 = vunpack.c.l.b16 %v815
      %v826 = vunpack.c.h.b16 %v815
      %v827 = vunpack.c.l.b16 %v816
      %v828 = vunpack.c.h.b16 %v816
      %v829 = vpack.c.b16 %v821, %v821
      %v830 = vpack.c.b16 %v822, %v822
      %v831 = vpack.c.b16 %v823, %v823
      %v832 = vpack.c.b16 %v824, %v824
      %v833 = vpack.c.b16 %v825, %v825
      %v834 = vpack.c.b16 %v826, %v826
      %v835 = vpack.c.b16 %v827, %v827
      %v836 = vpack.c.b16 %v828, %v828
      %845 = vst [vmem:[%s183] sm:$0xf] %v829
      %846 = vst [vmem:[%s183 + $0x4] sm:$0xf] %v830
      %847 = vst [vmem:[%s183 + $0x8] sm:$0xf] %v831
      %848 = vst [vmem:[%s183 + $0xc] sm:$0xf] %v832
      %849 = vst [vmem:[%s183 + $0x10] sm:$0xf] %v833
      %850 = vst [vmem:[%s183 + $0x14] sm:$0xf] %v834
      %851 = vst [vmem:[%s183 + $0x18] sm:$0xf] %v835
      %852 = vst [vmem:[%s183 + $0x1c] sm:$0xf] %v836
      %s853 = smul.u32 8, %s22
      %p854 = scmp.lt.s32.totalorder %s853, 15
      %s855 = scalar_select %p854, %s853, 15
      %s856 = smul.addr %s855, 4
      %s857 = scalar_lea.vmem %s5, %s856
      // Predicated region
      $region33: #{encoder_forward.23} parent=31 // pred_check
        %p858 = pneg %p108
      $region34: #{encoder_forward.23} parent=31 // pred_check_branch
        %860 = sbr.rel (%p858) target = $region36
      $region35: #{encoder_forward.23} parent=31 // pred_region
        %s861 = smul.u32 8, %s22
      $region36: #{encoder_forward.23} parent=31 // pred_fallthru
        _
    $region32: #{encoder_forward.23} parent=5 // pred_fallthru
      _
    %p862 = scmp.le.s32.totalorder 2, %s17
    // Predicated region
    $region37: #{encoder_forward.23} parent=5 // pred_check
      %p863 = pneg %p862
    $region38: #{encoder_forward.23} parent=5 // pred_check_branch
      %865 = sbr.rel (%p863) target = $region40
    $region39: #{encoder_forward.23} parent=5 // pred_region
      %s866 = ssub.s32 %s17, 2
      // Predicated region
      $region41: #{encoder_forward.23} parent=39 // pred_check
        %p867 = pneg %p114
      $region42: #{encoder_forward.23} parent=39 // pred_check_branch
        %869 = sbr.rel (%p867) target = $region44
      $region43: #{encoder_forward.23} parent=39 // pred_region
        %s870 = smul.u32 8, %s23
        %p871 = scmp.lt.s32.totalorder %s870, 15
        %s872 = scalar_select %p871, %s870, 15
        %s873 = smul.addr %s872, 4
        %s874 = scalar_lea.vmem %s5, %s873
      $region44: #{encoder_forward.23} parent=39 // pred_fallthru
        _
    $region40: #{encoder_forward.23} parent=5 // pred_fallthru
      _
  $region6: #{encoder_forward.23} parent=0 // loop_footer
    %s21 = sadd.s32 1, %s17
  $region7: #{encoder_forward.23} parent=0 // loop_footer_branch
    %16 = sbr.rel target = $region3
  $region8: #{encoder_forward.23} parent=0 // loop_exit
    _

// kernel: encoder_forward.18
$region0: #{encoder_forward.18}
  #allocation0 [shape = 'u32[]', space=smem, size = 0x4, offset = 0x4, fixed_abs, tag = 'smem constant byte address 0x4 - core index']
  #allocation1 [shape = 'u32[144,128]{1,0:T(1,128)}', space=vmem, size = 0x12000, scoped, tag = 'internal scratch']
  #allocation2 [shape = 'u32[2048]{0}', space=vmem, size = 0x2000, scoped, tag = 'scoped memory for encoder_forward.18']
  #allocation3 [shape = 'u32[2048]{0}', space=vmem, size = 0x2000, scoped, tag = 'scoped memory for encoder_forward.18']
  #allocation4 [shape = 'u32[2048]{0}', space=vmem, size = 0x2000, scoped, tag = 'scoped memory for encoder_forward.18']
  #allocation5 [shape = 'u32[2048]{0}', space=vmem, size = 0x2000, scoped, tag = 'scoped memory for encoder_forward.18']
  #allocation6 [shape = 'u32[2048]{0}', space=vmem, size = 0x2000, scoped, tag = 'scoped memory for encoder_forward.18']
  #allocation7 [shape = 'u32[2048]{0}', space=vmem, size = 0x2000, scoped, tag = 'scoped memory for encoder_forward.18']
  #allocation8 [shape = 'u32[2048]{0}', space=vmem, size = 0x2000, scoped, tag = 'scoped memory for encoder_forward.18']
  #allocation9 [shape = 'u32[2048]{0}', space=vmem, size = 0x2000, scoped, tag = 'scoped memory for encoder_forward.18']
  #allocation10 [shape = 'u32[2048]{0}', space=vmem, size = 0x2000, scoped, tag = 'scoped memory for encoder_forward.18']
  #allocation11 [shape = 'u32[2048]{0}', space=vmem, size = 0x2000, scoped, tag = 'scoped memory for encoder_forward.18']
  %s0 = inlined_call_operand.vmem [shape: bf16[32,288], index: 0, kind: input, shape index: {}]
  %s1 = inlined_call_operand.vmem [shape: bf16[288,32], index: 1, kind: input, shape index: {}]
  %s2 = inlined_call_operand.<no memory space> [shape: bf16[], index: 2, kind: input, shape index: {}]
  %s3 = inlined_call_operand.vmem [shape: f32[1,32], index: 3, kind: input, shape index: {}]
  %s4 = inlined_call_operand.<no memory space> [shape: f32[], index: 4, kind: input, shape index: {}]
  %s5 = inlined_call_operand.vmem [shape: bf16[32,128], index: 5, kind: output, shape index: {}]
  %s6 = sld [smem:[#allocation0]]
  $region45: #{encoder_forward.18} parent=0
    _
  %s8 = ssub.s32 1, %s6
  %s9 = scalar_select 0, %s8, %s6
  %v10 = vstv %s2
  %v11 = vunpack.i.l.bf16 %v10
  %v13 = vunpack.i.h.bf16 %v10
  %v15 = vstv %s4
  loop: start=0, step=1, limit=4
  $region2: #{encoder_forward.18} parent=0 // loop_pre_header
    _
  $region3: #{encoder_forward.18} parent=0 // loop_header
    %s17 = sphi 0, %s21
    %p18 = scmp.ge.s32.totalorder %s17, 4
    %s27 = sphi 0, %s29
    %s30 = sphi 0, %s27
    %s31 = sphi 0, %s30
    %s47 = sphi 0, %s31
    %s51 = sphi 0, %s51
    %s53 = sphi 0, %s51
    %s54 = sphi 0, %s53
    %s68 = sphi 0, %s54
    %s72 = sphi 0, %s72
    %s74 = sphi 0, %s72
    %s75 = sphi 0, %s74
    %s89 = sphi 0, %s75
    %s95 = sphi 0, %s97
    %s98 = sphi 0, %s95
    %s99 = sphi 0, %s98
    %s115 = sphi 0, %s99
  $region4: #{encoder_forward.18} parent=0 // loop_header_branch
    %20 = sbr.rel (%p18) target = $region8
  $region5: #{encoder_forward.18} parent=0 // loop_body
    %s22 = ssub.s32 %s17, 1
    %s23 = ssub.s32 %s17, 2
    %s24 = sadd.s32 %s17, 1
    %s25 = ssub.s32 %s17, %s24
    %p26 = scmp.eq.s32.totalorder %s25, 0
    %s28 = sadd.s32 %s27, 1
    %s29 = scalar_select %p26, %s27, %s28
    %p32 = pneg %p26
    %p33 = scmp.eq.s32.totalorder %s17, 1
    %p34 = por %p32, %p33
    %p35 = scmp.ne.s32.totalorder %s27, %s30
    %p36 = scmp.eq.s32.totalorder %s17, 0
    %p37 = por %p35, %p36
    %p38 = scmp.ne.s32.totalorder %s27, %s30
    %p39 = scmp.eq.s32.totalorder %s22, 1
    %p40 = por %p38, %p39
    %p41 = scmp.ne.s32.totalorder %s30, %s31
    %p42 = scmp.eq.s32.totalorder %s22, 0
    %p43 = por %p41, %p42
    %p44 = scmp.ne.s32.totalorder %s30, %s31
    %p45 = scmp.eq.s32.totalorder %s23, 1
    %p46 = por %p44, %p45
    %p48 = scmp.ne.s32.totalorder %s31, %s47
    %p49 = scmp.eq.s32.totalorder %s23, 0
    %p50 = por %p48, %p49
    %s52 = sadd.s32 %s51, 1
    %p55 = scmp.eq.s32.totalorder %s17, 1
    %p56 = scmp.ne.s32.totalorder %s51, %s53
    %p57 = scmp.eq.s32.totalorder %s17, 0
    %p58 = por %p56, %p57
    %p59 = scmp.ne.s32.totalorder %s51, %s53
    %p60 = scmp.eq.s32.totalorder %s22, 1
    %p61 = por %p59, %p60
    %p62 = scmp.ne.s32.totalorder %s53, %s54
    %p63 = scmp.eq.s32.totalorder %s22, 0
    %p64 = por %p62, %p63
    %p65 = scmp.ne.s32.totalorder %s53, %s54
    %p66 = scmp.eq.s32.totalorder %s23, 1
    %p67 = por %p65, %p66
    %p69 = scmp.ne.s32.totalorder %s54, %s68
    %p70 = scmp.eq.s32.totalorder %s23, 0
    %p71 = por %p69, %p70
    %s73 = sadd.s32 %s72, 1
    %p76 = scmp.eq.s32.totalorder %s17, 1
    %p77 = scmp.ne.s32.totalorder %s72, %s74
    %p78 = scmp.eq.s32.totalorder %s17, 0
    %p79 = por %p77, %p78
    %p80 = scmp.ne.s32.totalorder %s72, %s74
    %p81 = scmp.eq.s32.totalorder %s22, 1
    %p82 = por %p80, %p81
    %p83 = scmp.ne.s32.totalorder %s74, %s75
    %p84 = scmp.eq.s32.totalorder %s22, 0
    %p85 = por %p83, %p84
    %p86 = scmp.ne.s32.totalorder %s74, %s75
    %p87 = scmp.eq.s32.totalorder %s23, 1
    %p88 = por %p86, %p87
    %p90 = scmp.ne.s32.totalorder %s75, %s89
    %p91 = scmp.eq.s32.totalorder %s23, 0
    %p92 = por %p90, %p91
    %s93 = ssub.s32 %s17, %s24
    %p94 = scmp.eq.s32.totalorder %s93, 0
    %s96 = sadd.s32 %s95, 1
    %s97 = scalar_select %p94, %s95, %s96
    %p100 = pneg %p94
    %p101 = scmp.eq.s32.totalorder %s17, 1
    %p102 = por %p100, %p101
    %p103 = scmp.ne.s32.totalorder %s95, %s98
    %p104 = scmp.eq.s32.totalorder %s17, 0
    %p105 = por %p103, %p104
    %p106 = scmp.ne.s32.totalorder %s95, %s98
    %p107 = scmp.eq.s32.totalorder %s22, 1
    %p108 = por %p106, %p107
    %p109 = scmp.ne.s32.totalorder %s98, %s99
    %p110 = scmp.eq.s32.totalorder %s22, 0
    %p111 = por %p109, %p110
    %p112 = scmp.ne.s32.totalorder %s98, %s99
    %p113 = scmp.eq.s32.totalorder %s23, 1
    %p114 = por %p112, %p113
    %p116 = scmp.ne.s32.totalorder %s99, %s115
    %p117 = scmp.eq.s32.totalorder %s23, 0
    %p118 = por %p116, %p117
    %p119 = scmp.le.s32.totalorder 1, %s17
    %p120 = scmp.lt.s32.totalorder %s17, 3
    %p121 = pnand %p119, %p120
    %p122 = pneg %p121
    // Predicated region
    $region9: #{encoder_forward.18} parent=5 // pred_check
      _
    $region10: #{encoder_forward.18} parent=5 // pred_check_branch
      %124 = sbr.rel (%p121) target = $region12
    $region11: #{encoder_forward.18} parent=5 // pred_region
      %s125 = ssub.s32 %s17, 1
      // Predicated region
      $region13: #{encoder_forward.18} parent=11 // pred_check
        %p126 = pneg %p64
      $region14: #{encoder_forward.18} parent=11 // pred_check_branch
        %128 = sbr.rel (%p126) target = $region16
      $region15: #{encoder_forward.18} parent=11 // pred_region
        _
      $region16: #{encoder_forward.18} parent=11 // pred_fallthru
        _
      // Predicated region
      $region17: #{encoder_forward.18} parent=11 // pred_check
        %p129 = pneg %p85
      $region18: #{encoder_forward.18} parent=11 // pred_check_branch
        %131 = sbr.rel (%p129) target = $region20
      $region19: #{encoder_forward.18} parent=11 // pred_region
        _
      $region20: #{encoder_forward.18} parent=11 // pred_fallthru
        _
    $region12: #{encoder_forward.18} parent=5 // pred_fallthru
      _
    %p132 = scmp.lt.s32.totalorder %s17, 2
    // Predicated region
    $region21: #{encoder_forward.18} parent=5 // pred_check
      %p133 = pneg %p132
    $region22: #{encoder_forward.18} parent=5 // pred_check_branch
      %135 = sbr.rel (%p133) target = $region24
    $region23: #{encoder_forward.18} parent=5 // pred_region
      // Predicated region
      $region25: #{encoder_forward.18} parent=23 // pred_check
        %p136 = pneg %p37
      $region26: #{encoder_forward.18} parent=23 // pred_check_branch
        %138 = sbr.rel (%p136) target = $region28
      $region27: #{encoder_forward.18} parent=23 // pred_region
        %s139 = smul.u32 2, %s17
        %p140 = scmp.lt.s32.totalorder %s139, 3
        %s141 = scalar_select %p140, %s139, 3
        %s142 = smul.addr %s141, 3
        %s143 = smul.addr %s142, 4
        %s144 = scalar_lea.vmem %s0, %s143
        %s145 = smul.u32 2, %s17
      $region28: #{encoder_forward.18} parent=23 // pred_fallthru
        _
    $region24: #{encoder_forward.18} parent=5 // pred_fallthru
      _
    %p146 = scmp.le.s32.totalorder 1, %s17
    %p147 = scmp.lt.s32.totalorder %s17, 3
    %p148 = pnand %p146, %p147
    %p149 = pneg %p148
    // Predicated region
    $region29: #{encoder_forward.18} parent=5 // pred_check
      _
    $region30: #{encoder_forward.18} parent=5 // pred_check_branch
      %151 = sbr.rel (%p148) target = $region32
    $region31: #{encoder_forward.18} parent=5 // pred_region
      #allocation12 [shape = 'u8[73728]{0}', space=vmem, size = 0x12000, dematerialized = true, scoped, tag = 'FusionAdapter Buffer %fusion.1 = bf16[288,128]{1,0:T(8,128)(2,1)} fusion(%param_1.115, %param_2.31), kind=kLoop, calls=%fused_computation.18.clone, metadata={op_name="jit(encoder_forward)/jit(_pad)/pad" stack_frame_id=70}']
      #allocation13 [shape = 'u8[512]{0}', space=vmem, size = 0x400, dematerialized = true, scoped, tag = 'FusionAdapter Buffer %fusion.31 = f32[1,128]{1,0:T(1,128)} fusion(%param_3.18, %param_4.11), kind=kLoop, calls=%fused_computation.98.clone, metadata={op_name="jit(encoder_forward)/jit(_pad)/pad" stack_frame_id=71}']
      %s152 = ssub.s32 %s17, 1
      %s153 = smul.u32 2, %s22
      %p154 = scmp.lt.s32.totalorder %s153, 3
      %s155 = scalar_select %p154, %s153, 3
      %s156 = smul.addr %s155, 3
      %s157 = smul.addr %s156, 4
      %s158 = scalar_lea.vmem %s0, %s157
      %p159 = pneg %p43
      %p160 = pneg %p40
      %p161 = pneg %p64
      %p162 = pneg %p61
      %p163 = pneg %p85
      %p164 = pneg %p82
      %p165 = pneg %p111
      %p166 = pneg %p108
      %s167 = smul.u32 2, %s22
      %p168 = scmp.lt.s32.totalorder %s167, 3
      %s169 = scalar_select %p168, %s167, 3
      %s170 = smul.addr %s169, 4
      %s171 = scalar_lea.vmem %s5, %s170
      %s172 = smul.u32 2, %s22
      %p173 = scmp.lt.s32.totalorder %s172, 3
      %s174 = scalar_select %p173, %s172, 3
      %s175 = smul.addr %s174, 3
      %s176 = smul.addr %s175, 4
      %s177 = scalar_lea.vmem %s0, %s176
      %s178 = smul.u32 2, %s22
      %s179 = smul.u32 2, %s22
      %p180 = scmp.lt.s32.totalorder %s179, 3
      %s181 = scalar_select %p180, %s179, 3
      %s182 = smul.addr %s181, 4
      %s183 = scalar_lea.vmem %s5, %s182
      %s184 = smul.u32 2, %s22
      %s186 = sor.u32 255, 127
      %s187 = sand.u32 %s186, 85
      %s188 = sshrl.u32 %s187, 1
      %s189 = sor.u32 %s187, %s188
      %s190 = sand.u32 51, %s189
      %s191 = sshrl.u32 %s190, 2
      %s192 = sor.u32 %s190, %s191
      %s193 = sand.u32 15, %s192
      %v194 = vld [vmem:[%s1] sm:%s193]
      %v195 = vunpack.c.l.bf16 %v194
      %v196 = vunpack.c.h.bf16 %v194
      %v197 = vlaneseq
      %v198 = vand.u32 %v197, 127
      %vm200 = vcmp.lt.s32.totalorder %v198, 32
      %v201 = vsel %vm200, %v195, %v11
      %v202 = vpack.c.bf16 0.0, %v201
      %s204 = ssub.s32 16, 1
      %205 = vst [vmem:[#allocation12] sm:%s204] %v202
      %s206 = scalar_lea.vmem %s1, 4
      %s208 = sor.u32 255, 127
      %s209 = sand.u32 %s208, 85
      %s210 = sshrl.u32 %s209, 1
      %s211 = sor.u32 %s209, %s210
      %s212 = sand.u32 51, %s211
      %s213 = sshrl.u32 %s212, 2
      %s214 = sor.u32 %s212, %s213
      %s215 = sand.u32 15, %s214
      %v216 = vld [vmem:[%s206] sm:%s215]
      %v217 = vunpack.c.l.bf16 %v216
      %v218 = vunpack.c.h.bf16 %v216
      %v219 = vlaneseq
      %v220 = vand.u32 %v219, 127
      %vm222 = vcmp.lt.s32.totalorder %v220, 32
      %v223 = vsel %vm222, %v217, %v11
      %s224 = scalar_lea.vmem [#allocation12], 4
      %v225 = vpack.c.bf16 0.0, %v223
      %s227 = ssub.s32 16, 1
      %228 = vst [vmem:[%s224] sm:%s227] %v225
      %s229 = scalar_lea.vmem %s1, 8
      %s231 = sor.u32 255, 127
      %s232 = sand.u32 %s231, 85
      %s233 = sshrl.u32 %s232, 1
      %s234 = sor.u32 %s232, %s233
      %s235 = sand.u32 51, %s234
      %s236 = sshrl.u32 %s235, 2
      %s237 = sor.u32 %s235, %s236
      %s238 = sand.u32 15, %s237
      %v239 = vld [vmem:[%s229] sm:%s238]
      %v240 = vunpack.c.l.bf16 %v239
      %v241 = vunpack.c.h.bf16 %v239
      %v242 = vlaneseq
      %v243 = vand.u32 %v242, 127
      %vm245 = vcmp.lt.s32.totalorder %v243, 32
      %v246 = vsel %vm245, %v240, %v11
      %s247 = scalar_lea.vmem [#allocation12], 8
      %v248 = vpack.c.bf16 0.0, %v246
      %s250 = ssub.s32 16, 1
      %251 = vst [vmem:[%s247] sm:%s250] %v248
      %s252 = scalar_lea.vmem %s1, 12
      %s254 = sor.u32 255, 127
      %s255 = sand.u32 %s254, 85
      %s256 = sshrl.u32 %s255, 1
      %s257 = sor.u32 %s255, %s256
      %s258 = sand.u32 51, %s257
      %s259 = sshrl.u32 %s258, 2
      %s260 = sor.u32 %s258, %s259
      %s261 = sand.u32 15, %s260
      %v262 = vld [vmem:[%s252] sm:%s261]
      %v263 = vunpack.c.l.bf16 %v262
      %v264 = vunpack.c.h.bf16 %v262
      %v265 = vlaneseq
      %v266 = vand.u32 %v265, 127
      %vm268 = vcmp.lt.s32.totalorder %v266, 32
      %v269 = vsel %vm268, %v263, %v11
      %s270 = scalar_lea.vmem [#allocation12], 12
      %v271 = vpack.c.bf16 0.0, %v269
      %s273 = ssub.s32 16, 1
      %274 = vst [vmem:[%s270] sm:%s273] %v271
      %s275 = scalar_lea.vmem %s1, 16
      %s277 = sor.u32 255, 127
      %s278 = sand.u32 %s277, 85
      %s279 = sshrl.u32 %s278, 1
      %s280 = sor.u32 %s278, %s279
      %s281 = sand.u32 51, %s280
      %s282 = sshrl.u32 %s281, 2
      %s283 = sor.u32 %s281, %s282
      %s284 = sand.u32 15, %s283
      %v285 = vld [vmem:[%s275] sm:%s284]
      %v286 = vunpack.c.l.bf16 %v285
      %v287 = vunpack.c.h.bf16 %v285
      %v288 = vlaneseq
      %v289 = vand.u32 %v288, 127
      %vm291 = vcmp.lt.s32.totalorder %v289, 32
      %v292 = vsel %vm291, %v286, %v11
      %s293 = scalar_lea.vmem [#allocation12], 16
      %v294 = vpack.c.bf16 0.0, %v292
      %s296 = ssub.s32 16, 1
      %297 = vst [vmem:[%s293] sm:%s296] %v294
      %s298 = scalar_lea.vmem %s1, 20
      %s300 = sor.u32 255, 127
      %s301 = sand.u32 %s300, 85
      %s302 = sshrl.u32 %s301, 1
      %s303 = sor.u32 %s301, %s302
      %s304 = sand.u32 51, %s303
      %s305 = sshrl.u32 %s304, 2
      %s306 = sor.u32 %s304, %s305
      %s307 = sand.u32 15, %s306
      %v308 = vld [vmem:[%s298] sm:%s307]
      %v309 = vunpack.c.l.bf16 %v308
      %v310 = vunpack.c.h.bf16 %v308
      %v311 = vlaneseq
      %v312 = vand.u32 %v311, 127
      %vm314 = vcmp.lt.s32.totalorder %v312, 32
      %v315 = vsel %vm314, %v309, %v11
      %s316 = scalar_lea.vmem [#allocation12], 20
      %v317 = vpack.c.bf16 0.0, %v315
      %s319 = ssub.s32 16, 1
      %320 = vst [vmem:[%s316] sm:%s319] %v317
      %s321 = scalar_lea.vmem %s1, 24
      %s323 = sor.u32 255, 127
      %s324 = sand.u32 %s323, 85
      %s325 = sshrl.u32 %s324, 1
      %s326 = sor.u32 %s324, %s325
      %s327 = sand.u32 51, %s326
      %s328 = sshrl.u32 %s327, 2
      %s329 = sor.u32 %s327, %s328
      %s330 = sand.u32 15, %s329
      %v331 = vld [vmem:[%s321] sm:%s330]
      %v332 = vunpack.c.l.bf16 %v331
      %v333 = vunpack.c.h.bf16 %v331
      %v334 = vlaneseq
      %v335 = vand.u32 %v334, 127
      %vm337 = vcmp.lt.s32.totalorder %v335, 32
      %v338 = vsel %vm337, %v332, %v11
      %s339 = scalar_lea.vmem [#allocation12], 24
      %v340 = vpack.c.bf16 0.0, %v338
      %s342 = ssub.s32 16, 1
      %343 = vst [vmem:[%s339] sm:%s342] %v340
      %s344 = scalar_lea.vmem %s1, 28
      %s346 = sor.u32 255, 127
      %s347 = sand.u32 %s346, 85
      %s348 = sshrl.u32 %s347, 1
      %s349 = sor.u32 %s347, %s348
      %s350 = sand.u32 51, %s349
      %s351 = sshrl.u32 %s350, 2
      %s352 = sor.u32 %s350, %s351
      %s353 = sand.u32 15, %s352
      %v354 = vld [vmem:[%s344] sm:%s353]
      %v355 = vunpack.c.l.bf16 %v354
      %v356 = vunpack.c.h.bf16 %v354
      %v357 = vlaneseq
      %v358 = vand.u32 %v357, 127
      %vm360 = vcmp.lt.s32.totalorder %v358, 32
      %v361 = vsel %vm360, %v355, %v11
      %s362 = scalar_lea.vmem [#allocation12], 28
      %v363 = vpack.c.bf16 0.0, %v361
      %s365 = ssub.s32 16, 1
      %366 = vst [vmem:[%s362] sm:%s365] %v363
      %s367 = scalar_lea.vmem %s1, 32
      %s369 = sor.u32 255, 127
      %s370 = sand.u32 %s369, 85
      %s371 = sshrl.u32 %s370, 1
      %s372 = sor.u32 %s370, %s371
      %s373 = sand.u32 51, %s372
      %s374 = sshrl.u32 %s373, 2
      %s375 = sor.u32 %s373, %s374
      %s376 = sand.u32 15, %s375
      %v377 = vld [vmem:[%s367] sm:%s376]
      %v378 = vunpack.c.l.bf16 %v377
      %v379 = vunpack.c.h.bf16 %v377
      %v380 = vlaneseq
      %v381 = vand.u32 %v380, 127
      %vm383 = vcmp.lt.s32.totalorder %v381, 32
      %v384 = vsel %vm383, %v378, %v11
      %s385 = scalar_lea.vmem [#allocation12], 32
      %v386 = vpack.c.bf16 0.0, %v384
      %s388 = ssub.s32 16, 1
      %389 = vst [vmem:[%s385] sm:%s388] %v386
      %s390 = scalar_lea.vmem %s1, 36
      %s392 = sor.u32 255, 127
      %s393 = sand.u32 %s392, 85
      %s394 = sshrl.u32 %s393, 1
      %s395 = sor.u32 %s393, %s394
      %s396 = sand.u32 51, %s395
      %s397 = sshrl.u32 %s396, 2
      %s398 = sor.u32 %s396, %s397
      %s399 = sand.u32 15, %s398
      %v400 = vld [vmem:[%s390] sm:%s399]
      %v401 = vunpack.c.l.bf16 %v400
      %v402 = vunpack.c.h.bf16 %v400
      %v403 = vlaneseq
      %v404 = vand.u32 %v403, 127
      %vm406 = vcmp.lt.s32.totalorder %v404, 32
      %v407 = vsel %vm406, %v401, %v11
      %s408 = scalar_lea.vmem [#allocation12], 36
      %v409 = vpack.c.bf16 0.0, %v407
      %s411 = ssub.s32 16, 1
      %412 = vst [vmem:[%s408] sm:%s411] %v409
      %s413 = scalar_lea.vmem %s1, 40
      %s415 = sor.u32 255, 127
      %s416 = sand.u32 %s415, 85
      %s417 = sshrl.u32 %s416, 1
      %s418 = sor.u32 %s416, %s417
      %s419 = sand.u32 51, %s418
      %s420 = sshrl.u32 %s419, 2
      %s421 = sor.u32 %s419, %s420
      %s422 = sand.u32 15, %s421
      %v423 = vld [vmem:[%s413] sm:%s422]
      %v424 = vunpack.c.l.bf16 %v423
      %v425 = vunpack.c.h.bf16 %v423
      %v426 = vlaneseq
      %v427 = vand.u32 %v426, 127
      %vm429 = vcmp.lt.s32.totalorder %v427, 32
      %v430 = vsel %vm429, %v424, %v11
      %s431 = scalar_lea.vmem [#allocation12], 40
      %v432 = vpack.c.bf16 0.0, %v430
      %s434 = ssub.s32 16, 1
      %435 = vst [vmem:[%s431] sm:%s434] %v432
      %s436 = scalar_lea.vmem %s1, 44
      %s438 = sor.u32 255, 127
      %s439 = sand.u32 %s438, 85
      %s440 = sshrl.u32 %s439, 1
      %s441 = sor.u32 %s439, %s440
      %s442 = sand.u32 51, %s441
      %s443 = sshrl.u32 %s442, 2
      %s444 = sor.u32 %s442, %s443
      %s445 = sand.u32 15, %s444
      %v446 = vld [vmem:[%s436] sm:%s445]
      %v447 = vunpack.c.l.bf16 %v446
      %v448 = vunpack.c.h.bf16 %v446
      %v449 = vlaneseq
      %v450 = vand.u32 %v449, 127
      %vm452 = vcmp.lt.s32.totalorder %v450, 32
      %v453 = vsel %vm452, %v447, %v11
      %s454 = scalar_lea.vmem [#allocation12], 44
      %v455 = vpack.c.bf16 0.0, %v453
      %s457 = ssub.s32 16, 1
      %458 = vst [vmem:[%s454] sm:%s457] %v455
      %s459 = scalar_lea.vmem %s1, 48
      %s461 = sor.u32 255, 127
      %s462 = sand.u32 %s461, 85
      %s463 = sshrl.u32 %s462, 1
      %s464 = sor.u32 %s462, %s463
      %s465 = sand.u32 51, %s464
      %s466 = sshrl.u32 %s465, 2
      %s467 = sor.u32 %s465, %s466
      %s468 = sand.u32 15, %s467
      %v469 = vld [vmem:[%s459] sm:%s468]
      %v470 = vunpack.c.l.bf16 %v469
      %v471 = vunpack.c.h.bf16 %v469
      %v472 = vlaneseq
      %v473 = vand.u32 %v472, 127
      %vm475 = vcmp.lt.s32.totalorder %v473, 32
      %v476 = vsel %vm475, %v470, %v11
      %s477 = scalar_lea.vmem [#allocation12], 48
      %v478 = vpack.c.bf16 0.0, %v476
      %s480 = ssub.s32 16, 1
      %481 = vst [vmem:[%s477] sm:%s480] %v478
      %s482 = scalar_lea.vmem %s1, 52
      %s484 = sor.u32 255, 127
      %s485 = sand.u32 %s484, 85
      %s486 = sshrl.u32 %s485, 1
      %s487 = sor.u32 %s485, %s486
      %s488 = sand.u32 51, %s487
      %s489 = sshrl.u32 %s488, 2
      %s490 = sor.u32 %s488, %s489
      %s491 = sand.u32 15, %s490
      %v492 = vld [vmem:[%s482] sm:%s491]
      %v493 = vunpack.c.l.bf16 %v492
      %v494 = vunpack.c.h.bf16 %v492
      %v495 = vlaneseq
      %v496 = vand.u32 %v495, 127
      %vm498 = vcmp.lt.s32.totalorder %v496, 32
      %v499 = vsel %vm498, %v493, %v11
      %s500 = scalar_lea.vmem [#allocation12], 52
      %v501 = vpack.c.bf16 0.0, %v499
      %s503 = ssub.s32 16, 1
      %504 = vst [vmem:[%s500] sm:%s503] %v501
      %s505 = scalar_lea.vmem %s1, 56
      %s507 = sor.u32 255, 127
      %s508 = sand.u32 %s507, 85
      %s509 = sshrl.u32 %s508, 1
      %s510 = sor.u32 %s508, %s509
      %s511 = sand.u32 51, %s510
      %s512 = sshrl.u32 %s511, 2
      %s513 = sor.u32 %s511, %s512
      %s514 = sand.u32 15, %s513
      %v515 = vld [vmem:[%s505] sm:%s514]
      %v516 = vunpack.c.l.bf16 %v515
      %v517 = vunpack.c.h.bf16 %v515
      %v518 = vlaneseq
      %v519 = vand.u32 %v518, 127
      %vm521 = vcmp.lt.s32.totalorder %v519, 32
      %v522 = vsel %vm521, %v516, %v11
      %s523 = scalar_lea.vmem [#allocation12], 56
      %v524 = vpack.c.bf16 0.0, %v522
      %s526 = ssub.s32 16, 1
      %527 = vst [vmem:[%s523] sm:%s526] %v524
      %s528 = scalar_lea.vmem %s1, 60
      %s530 = sor.u32 255, 127
      %s531 = sand.u32 %s530, 85
      %s532 = sshrl.u32 %s531, 1
      %s533 = sor.u32 %s531, %s532
      %s534 = sand.u32 51, %s533
      %s535 = sshrl.u32 %s534, 2
      %s536 = sor.u32 %s534, %s535
      %s537 = sand.u32 15, %s536
      %v538 = vld [vmem:[%s528] sm:%s537]
      %v539 = vunpack.c.l.bf16 %v538
      %v540 = vunpack.c.h.bf16 %v538
      %v541 = vlaneseq
      %v542 = vand.u32 %v541, 127
      %vm544 = vcmp.lt.s32.totalorder %v542, 32
      %v545 = vsel %vm544, %v539, %v11
      %s546 = scalar_lea.vmem [#allocation12], 60
      %v547 = vpack.c.bf16 0.0, %v545
      %s549 = ssub.s32 16, 1
      %550 = vst [vmem:[%s546] sm:%s549] %v547
      %s551 = scalar_lea.vmem %s1, 64
      %s553 = sor.u32 255, 127
      %s554 = sand.u32 %s553, 85
      %s555 = sshrl.u32 %s554, 1
      %s556 = sor.u32 %s554, %s555
      %s557 = sand.u32 51, %s556
      %s558 = sshrl.u32 %s557, 2
      %s559 = sor.u32 %s557, %s558
      %s560 = sand.u32 15, %s559
      %v561 = vld [vmem:[%s551] sm:%s560]
      %v562 = vunpack.c.l.bf16 %v561
      %v563 = vunpack.c.h.bf16 %v561
      %v564 = vlaneseq
      %v565 = vand.u32 %v564, 127
      %vm567 = vcmp.lt.s32.totalorder %v565, 32
      %v568 = vsel %vm567, %v562, %v11
      %s569 = scalar_lea.vmem [#allocation12], 64
      %v570 = vpack.c.bf16 0.0, %v568
      %s572 = ssub.s32 16, 1
      %573 = vst [vmem:[%s569] sm:%s572] %v570
      %s574 = scalar_lea.vmem %s1, 68
      %s576 = sor.u32 255, 127
      %s577 = sand.u32 %s576, 85
      %s578 = sshrl.u32 %s577, 1
      %s579 = sor.u32 %s577, %s578
      %s580 = sand.u32 51, %s579
      %s581 = sshrl.u32 %s580, 2
      %s582 = sor.u32 %s580, %s581
      %s583 = sand.u32 15, %s582
      %v584 = vld [vmem:[%s574] sm:%s583]
      %v585 = vunpack.c.l.bf16 %v584
      %v586 = vunpack.c.h.bf16 %v584
      %v587 = vlaneseq
      %v588 = vand.u32 %v587, 127
      %vm590 = vcmp.lt.s32.totalorder %v588, 32
      %v591 = vsel %vm590, %v585, %v11
      %s592 = scalar_lea.vmem [#allocation12], 68
      %v593 = vpack.c.bf16 0.0, %v591
      %s595 = ssub.s32 16, 1
      %596 = vst [vmem:[%s592] sm:%s595] %v593
      %s597 = scalar_lea.vmem %s1, 72
      %s599 = sor.u32 255, 127
      %s600 = sand.u32 %s599, 85
      %s601 = sshrl.u32 %s600, 1
      %s602 = sor.u32 %s600, %s601
      %s603 = sand.u32 51, %s602
      %s604 = sshrl.u32 %s603, 2
      %s605 = sor.u32 %s603, %s604
      %s606 = sand.u32 15, %s605
      %v607 = vld [vmem:[%s597] sm:%s606]
      %v608 = vunpack.c.l.bf16 %v607
      %v609 = vunpack.c.h.bf16 %v607
      %v610 = vlaneseq
      %v611 = vand.u32 %v610, 127
      %vm613 = vcmp.lt.s32.totalorder %v611, 32
      %v614 = vsel %vm613, %v608, %v11
      %s615 = scalar_lea.vmem [#allocation12], 72
      %v616 = vpack.c.bf16 0.0, %v614
      %s618 = ssub.s32 16, 1
      %619 = vst [vmem:[%s615] sm:%s618] %v616
      %s620 = scalar_lea.vmem %s1, 76
      %s622 = sor.u32 255, 127
      %s623 = sand.u32 %s622, 85
      %s624 = sshrl.u32 %s623, 1
      %s625 = sor.u32 %s623, %s624
      %s626 = sand.u32 51, %s625
      %s627 = sshrl.u32 %s626, 2
      %s628 = sor.u32 %s626, %s627
      %s629 = sand.u32 15, %s628
      %v630 = vld [vmem:[%s620] sm:%s629]
      %v631 = vunpack.c.l.bf16 %v630
      %v632 = vunpack.c.h.bf16 %v630
      %v633 = vlaneseq
      %v634 = vand.u32 %v633, 127
      %vm636 = vcmp.lt.s32.totalorder %v634, 32
      %v637 = vsel %vm636, %v631, %v11
      %s638 = scalar_lea.vmem [#allocation12], 76
      %v639 = vpack.c.bf16 0.0, %v637
      %s641 = ssub.s32 16, 1
      %642 = vst [vmem:[%s638] sm:%s641] %v639
      %s643 = scalar_lea.vmem %s1, 80
      %s645 = sor.u32 255, 127
      %s646 = sand.u32 %s645, 85
      %s647 = sshrl.u32 %s646, 1
      %s648 = sor.u32 %s646, %s647
      %s649 = sand.u32 51, %s648
      %s650 = sshrl.u32 %s649, 2
      %s651 = sor.u32 %s649, %s650
      %s652 = sand.u32 15, %s651
      %v653 = vld [vmem:[%s643] sm:%s652]
      %v654 = vunpack.c.l.bf16 %v653
      %v655 = vunpack.c.h.bf16 %v653
      %v656 = vlaneseq
      %v657 = vand.u32 %v656, 127
      %vm659 = vcmp.lt.s32.totalorder %v657, 32
      %v660 = vsel %vm659, %v654, %v11
      %s661 = scalar_lea.vmem [#allocation12], 80
      %v662 = vpack.c.bf16 0.0, %v660
      %s664 = ssub.s32 16, 1
      %665 = vst [vmem:[%s661] sm:%s664] %v662
      %s666 = scalar_lea.vmem %s1, 84
      %s668 = sor.u32 255, 127
      %s669 = sand.u32 %s668, 85
      %s670 = sshrl.u32 %s669, 1
      %s671 = sor.u32 %s669, %s670
      %s672 = sand.u32 51, %s671
      %s673 = sshrl.u32 %s672, 2
      %s674 = sor.u32 %s672, %s673
      %s675 = sand.u32 15, %s674
      %v676 = vld [vmem:[%s666] sm:%s675]
      %v677 = vunpack.c.l.bf16 %v676
      %v678 = vunpack.c.h.bf16 %v676
      %v679 = vlaneseq
      %v680 = vand.u32 %v679, 127
      %vm682 = vcmp.lt.s32.totalorder %v680, 32
      %v683 = vsel %vm682, %v677, %v11
      %s684 = scalar_lea.vmem [#allocation12], 84
      %v685 = vpack.c.bf16 0.0, %v683
      %s687 = ssub.s32 16, 1
      %688 = vst [vmem:[%s684] sm:%s687] %v685
      %s689 = scalar_lea.vmem %s1, 88
      %s691 = sor.u32 255, 127
      %s692 = sand.u32 %s691, 85
      %s693 = sshrl.u32 %s692, 1
      %s694 = sor.u32 %s692, %s693
      %s695 = sand.u32 51, %s694
      %s696 = sshrl.u32 %s695, 2
      %s697 = sor.u32 %s695, %s696
      %s698 = sand.u32 15, %s697
      %v699 = vld [vmem:[%s689] sm:%s698]
      %v700 = vunpack.c.l.bf16 %v699
      %v701 = vunpack.c.h.bf16 %v699
      %v702 = vlaneseq
      %v703 = vand.u32 %v702, 127
      %vm705 = vcmp.lt.s32.totalorder %v703, 32
      %v706 = vsel %vm705, %v700, %v11
      %s707 = scalar_lea.vmem [#allocation12], 88
      %v708 = vpack.c.bf16 0.0, %v706
      %s710 = ssub.s32 16, 1
      %711 = vst [vmem:[%s707] sm:%s710] %v708
      %s712 = scalar_lea.vmem %s1, 92
      %s714 = sor.u32 255, 127
      %s715 = sand.u32 %s714, 85
      %s716 = sshrl.u32 %s715, 1
      %s717 = sor.u32 %s715, %s716
      %s718 = sand.u32 51, %s717
      %s719 = sshrl.u32 %s718, 2
      %s720 = sor.u32 %s718, %s719
      %s721 = sand.u32 15, %s720
      %v722 = vld [vmem:[%s712] sm:%s721]
      %v723 = vunpack.c.l.bf16 %v722
      %v724 = vunpack.c.h.bf16 %v722
      %v725 = vlaneseq
      %v726 = vand.u32 %v725, 127
      %vm728 = vcmp.lt.s32.totalorder %v726, 32
      %v729 = vsel %vm728, %v723, %v11
      %s730 = scalar_lea.vmem [#allocation12], 92
      %v731 = vpack.c.bf16 0.0, %v729
      %s733 = ssub.s32 16, 1
      %734 = vst [vmem:[%s730] sm:%s733] %v731
      %s735 = scalar_lea.vmem %s1, 96
      %s737 = sor.u32 255, 127
      %s738 = sand.u32 %s737, 85
      %s739 = sshrl.u32 %s738, 1
      %s740 = sor.u32 %s738, %s739
      %s741 = sand.u32 51, %s740
      %s742 = sshrl.u32 %s741, 2
      %s743 = sor.u32 %s741, %s742
      %s744 = sand.u32 15, %s743
      %v745 = vld [vmem:[%s735] sm:%s744]
      %v746 = vunpack.c.l.bf16 %v745
      %v747 = vunpack.c.h.bf16 %v745
      %v748 = vlaneseq
      %v749 = vand.u32 %v748, 127
      %vm751 = vcmp.lt.s32.totalorder %v749, 32
      %v752 = vsel %vm751, %v746, %v11
      %s753 = scalar_lea.vmem [#allocation12], 96
      %v754 = vpack.c.bf16 0.0, %v752
      %s756 = ssub.s32 16, 1
      %757 = vst [vmem:[%s753] sm:%s756] %v754
      %s758 = scalar_lea.vmem %s1, 100
      %s760 = sor.u32 255, 127
      %s761 = sand.u32 %s760, 85
      %s762 = sshrl.u32 %s761, 1
      %s763 = sor.u32 %s761, %s762
      %s764 = sand.u32 51, %s763
      %s765 = sshrl.u32 %s764, 2
      %s766 = sor.u32 %s764, %s765
      %s767 = sand.u32 15, %s766
      %v768 = vld [vmem:[%s758] sm:%s767]
      %v769 = vunpack.c.l.bf16 %v768
      %v770 = vunpack.c.h.bf16 %v768
      %v771 = vlaneseq
      %v772 = vand.u32 %v771, 127
      %vm774 = vcmp.lt.s32.totalorder %v772, 32
      %v775 = vsel %vm774, %v769, %v11
      %s776 = scalar_lea.vmem [#allocation12], 100
      %v777 = vpack.c.bf16 0.0, %v775
      %s779 = ssub.s32 16, 1
      %780 = vst [vmem:[%s776] sm:%s779] %v777
      %s781 = scalar_lea.vmem %s1, 104
      %s783 = sor.u32 255, 127
      %s784 = sand.u32 %s783, 85
      %s785 = sshrl.u32 %s784, 1
      %s786 = sor.u32 %s784, %s785
      %s787 = sand.u32 51, %s786
      %s788 = sshrl.u32 %s787, 2
      %s789 = sor.u32 %s787, %s788
      %s790 = sand.u32 15, %s789
      %v791 = vld [vmem:[%s781] sm:%s790]
      %v792 = vunpack.c.l.bf16 %v791
      %v793 = vunpack.c.h.bf16 %v791
      %v794 = vlaneseq
      %v795 = vand.u32 %v794, 127
      %vm797 = vcmp.lt.s32.totalorder %v795, 32
      %v798 = vsel %vm797, %v792, %v11
      %s799 = scalar_lea.vmem [#allocation12], 104
      %v800 = vpack.c.bf16 0.0, %v798
      %s802 = ssub.s32 16, 1
      %803 = vst [vmem:[%s799] sm:%s802] %v800
      %s804 = scalar_lea.vmem %s1, 108
      %s806 = sor.u32 255, 127
      %s807 = sand.u32 %s806, 85
      %s808 = sshrl.u32 %s807, 1
      %s809 = sor.u32 %s807, %s808
      %s810 = sand.u32 51, %s809
      %s811 = sshrl.u32 %s810, 2
      %s812 = sor.u32 %s810, %s811
      %s813 = sand.u32 15, %s812
      %v814 = vld [vmem:[%s804] sm:%s813]
      %v815 = vunpack.c.l.bf16 %v814
      %v816 = vunpack.c.h.bf16 %v814
      %v817 = vlaneseq
      %v818 = vand.u32 %v817, 127
      %vm820 = vcmp.lt.s32.totalorder %v818, 32
      %v821 = vsel %vm820, %v815, %v11
      %s822 = scalar_lea.vmem [#allocation12], 108
      %v823 = vpack.c.bf16 0.0, %v821
      %s825 = ssub.s32 16, 1
      %826 = vst [vmem:[%s822] sm:%s825] %v823
      %s827 = scalar_lea.vmem %s1, 112
      %s829 = sor.u32 255, 127
      %s830 = sand.u32 %s829, 85
      %s831 = sshrl.u32 %s830, 1
      %s832 = sor.u32 %s830, %s831
      %s833 = sand.u32 51, %s832
      %s834 = sshrl.u32 %s833, 2
      %s835 = sor.u32 %s833, %s834
      %s836 = sand.u32 15, %s835
      %v837 = vld [vmem:[%s827] sm:%s836]
      %v838 = vunpack.c.l.bf16 %v837
      %v839 = vunpack.c.h.bf16 %v837
      %v840 = vlaneseq
      %v841 = vand.u32 %v840, 127
      %vm843 = vcmp.lt.s32.totalorder %v841, 32
      %v844 = vsel %vm843, %v838, %v11
      %s845 = scalar_lea.vmem [#allocation12], 112
      %v846 = vpack.c.bf16 0.0, %v844
      %s848 = ssub.s32 16, 1
      %849 = vst [vmem:[%s845] sm:%s848] %v846
      %s850 = scalar_lea.vmem %s1, 116
      %s852 = sor.u32 255, 127
      %s853 = sand.u32 %s852, 85
      %s854 = sshrl.u32 %s853, 1
      %s855 = sor.u32 %s853, %s854
      %s856 = sand.u32 51, %s855
      %s857 = sshrl.u32 %s856, 2
      %s858 = sor.u32 %s856, %s857
      %s859 = sand.u32 15, %s858
      %v860 = vld [vmem:[%s850] sm:%s859]
      %v861 = vunpack.c.l.bf16 %v860
      %v862 = vunpack.c.h.bf16 %v860
      %v863 = vlaneseq
      %v864 = vand.u32 %v863, 127
      %vm866 = vcmp.lt.s32.totalorder %v864, 32
      %v867 = vsel %vm866, %v861, %v11
      %s868 = scalar_lea.vmem [#allocation12], 116
      %v869 = vpack.c.bf16 0.0, %v867
      %s871 = ssub.s32 16, 1
      %872 = vst [vmem:[%s868] sm:%s871] %v869
      %s873 = scalar_lea.vmem %s1, 120
      %s875 = sor.u32 255, 127
      %s876 = sand.u32 %s875, 85
      %s877 = sshrl.u32 %s876, 1
      %s878 = sor.u32 %s876, %s877
      %s879 = sand.u32 51, %s878
      %s880 = sshrl.u32 %s879, 2
      %s881 = sor.u32 %s879, %s880
      %s882 = sand.u32 15, %s881
      %v883 = vld [vmem:[%s873] sm:%s882]
      %v884 = vunpack.c.l.bf16 %v883
      %v885 = vunpack.c.h.bf16 %v883
      %v886 = vlaneseq
      %v887 = vand.u32 %v886, 127
      %vm889 = vcmp.lt.s32.totalorder %v887, 32
      %v890 = vsel %vm889, %v884, %v11
      %s891 = scalar_lea.vmem [#allocation12], 120
      %v892 = vpack.c.bf16 0.0, %v890
      %s894 = ssub.s32 16, 1
      %895 = vst [vmem:[%s891] sm:%s894] %v892
      %s896 = scalar_lea.vmem %s1, 124
      %s898 = sor.u32 255, 127
      %s899 = sand.u32 %s898, 85
      %s900 = sshrl.u32 %s899, 1
      %s901 = sor.u32 %s899, %s900
      %s902 = sand.u32 51, %s901
      %s903 = sshrl.u32 %s902, 2
      %s904 = sor.u32 %s902, %s903
      %s905 = sand.u32 15, %s904
      %v906 = vld [vmem:[%s896] sm:%s905]
      %v907 = vunpack.c.l.bf16 %v906
      %v908 = vunpack.c.h.bf16 %v906
      %v909 = vlaneseq
      %v910 = vand.u32 %v909, 127
      %vm912 = vcmp.lt.s32.totalorder %v910, 32
      %v913 = vsel %vm912, %v907, %v11
      %s914 = scalar_lea.vmem [#allocation12], 124
      %v915 = vpack.c.bf16 0.0, %v913
      %s917 = ssub.s32 16, 1
      %918 = vst [vmem:[%s914] sm:%s917] %v915
      %s919 = scalar_lea.vmem %s1, 128
      %s921 = sor.u32 255, 127
      %s922 = sand.u32 %s921, 85
      %s923 = sshrl.u32 %s922, 1
      %s924 = sor.u32 %s922, %s923
      %s925 = sand.u32 51, %s924
      %s926 = sshrl.u32 %s925, 2
      %s927 = sor.u32 %s925, %s926
      %s928 = sand.u32 15, %s927
      %v929 = vld [vmem:[%s919] sm:%s928]
      %v930 = vunpack.c.l.bf16 %v929
      %v931 = vunpack.c.h.bf16 %v929
      %v932 = vlaneseq
      %v933 = vand.u32 %v932, 127
      %vm935 = vcmp.lt.s32.totalorder %v933, 32
      %v936 = vsel %vm935, %v930, %v11
      %s937 = scalar_lea.vmem [#allocation12], 128
      %v938 = vpack.c.bf16 0.0, %v936
      %s940 = ssub.s32 16, 1
      %941 = vst [vmem:[%s937] sm:%s940] %v938
      %s942 = scalar_lea.vmem %s1, 132
      %s944 = sor.u32 255, 127
      %s945 = sand.u32 %s944, 85
      %s946 = sshrl.u32 %s945, 1
      %s947 = sor.u32 %s945, %s946
      %s948 = sand.u32 51, %s947
      %s949 = sshrl.u32 %s948, 2
      %s950 = sor.u32 %s948, %s949
      %s951 = sand.u32 15, %s950
      %v952 = vld [vmem:[%s942] sm:%s951]
      %v953 = vunpack.c.l.bf16 %v952
      %v954 = vunpack.c.h.bf16 %v952
      %v955 = vlaneseq
      %v956 = vand.u32 %v955, 127
      %vm958 = vcmp.lt.s32.totalorder %v956, 32
      %v959 = vsel %vm958, %v953, %v11
      %s960 = scalar_lea.vmem [#allocation12], 132
      %v961 = vpack.c.bf16 0.0, %v959
      %s963 = ssub.s32 16, 1
      %964 = vst [vmem:[%s960] sm:%s963] %v961
      %s965 = scalar_lea.vmem %s1, 136
      %s967 = sor.u32 255, 127
      %s968 = sand.u32 %s967, 85
      %s969 = sshrl.u32 %s968, 1
      %s970 = sor.u32 %s968, %s969
      %s971 = sand.u32 51, %s970
      %s972 = sshrl.u32 %s971, 2
      %s973 = sor.u32 %s971, %s972
      %s974 = sand.u32 15, %s973
      %v975 = vld [vmem:[%s965] sm:%s974]
      %v976 = vunpack.c.l.bf16 %v975
      %v977 = vunpack.c.h.bf16 %v975
      %v978 = vlaneseq
      %v979 = vand.u32 %v978, 127
      %vm981 = vcmp.lt.s32.totalorder %v979, 32
      %v982 = vsel %vm981, %v976, %v11
      %s983 = scalar_lea.vmem [#allocation12], 136
      %v984 = vpack.c.bf16 0.0, %v982
      %s986 = ssub.s32 16, 1
      %987 = vst [vmem:[%s983] sm:%s986] %v984
      %s988 = scalar_lea.vmem %s1, 140
      %s990 = sor.u32 255, 127
      %s991 = sand.u32 %s990, 85
      %s992 = sshrl.u32 %s991, 1
      %s993 = sor.u32 %s991, %s992
      %s994 = sand.u32 51, %s993
      %s995 = sshrl.u32 %s994, 2
      %s996 = sor.u32 %s994, %s995
      %s997 = sand.u32 15, %s996
      %v998 = vld [vmem:[%s988] sm:%s997]
      %v999 = vunpack.c.l.bf16 %v998
      %v1000 = vunpack.c.h.bf16 %v998
      %v1001 = vlaneseq
      %v1002 = vand.u32 %v1001, 127
      %vm1004 = vcmp.lt.s32.totalorder %v1002, 32
      %v1005 = vsel %vm1004, %v999, %v11
      %s1006 = scalar_lea.vmem [#allocation12], 140
      %v1007 = vpack.c.bf16 0.0, %v1005
      %s1009 = ssub.s32 16, 1
      %1010 = vst [vmem:[%s1006] sm:%s1009] %v1007
      %v1011 = vld [vmem:[%s3] sm:$0x1]
      %v1012 = vlaneseq
      %v1013 = vshrl.u32 %v1012, 7
      %vm1015 = vcmp.lt.s32.totalorder %v1013, 1
      %v1016 = vsel %vm1015, %v1011, %v15
      %v1017 = vlaneseq
      %v1018 = vand.u32 %v1017, 127
      %vm1020 = vcmp.lt.s32.totalorder %v1018, 32
      %v1021 = vsel %vm1020, %v1016, %v15
      %s1023 = ssub.s32 2, 1
      %1024 = vst [vmem:[#allocation13] sm:%s1023] %v1021
      %v1026 = vld [vmem:[%s177] sm:$0xff]
      %v1027 = vld [vmem:[%s177 + $0x8] sm:$0xf]
      %v1028 = vld [vmem:[%s177 + $0xc] sm:$0xff]
      %v1029 = vld [vmem:[%s177 + $0x14] sm:$0xf]
      %v1030 = vld [vmem:[#allocation12] sm:$0xf]
      %v1031 = vld [vmem:[#allocation12 + $0x4] sm:$0xf]
      %v1032 = vld [vmem:[#allocation12 + $0x8] sm:$0xf]
      %v1033 = vld [vmem:[#allocation12 + $0xc] sm:$0xf]
      %v1034 = vld [vmem:[#allocation12 + $0x10] sm:$0xf]
      %v1035 = vld [vmem:[#allocation12 + $0x14] sm:$0xf]
      %v1036 = vld [vmem:[#allocation12 + $0x18] sm:$0xf]
      %v1037 = vld [vmem:[#allocation12 + $0x1c] sm:$0xf]
      %v1038 = vld [vmem:[#allocation12 + $0x20] sm:$0xf]
      %v1039 = vld [vmem:[#allocation12 + $0x24] sm:$0xf]
      %v1040 = vld [vmem:[#allocation12 + $0x28] sm:$0xf]
      %v1041 = vld [vmem:[#allocation12 + $0x2c] sm:$0xf]
      %v1042 = vld [vmem:[#allocation12 + $0x30] sm:$0xf]
      %v1043 = vld [vmem:[#allocation12 + $0x34] sm:$0xf]
      %v1044 = vld [vmem:[#allocation12 + $0x38] sm:$0xf]
      %v1045 = vld [vmem:[#allocation12 + $0x3c] sm:$0xf]
      %v1046 = vld [vmem:[#allocation12 + $0x40] sm:$0xf]
      %v1047 = vld [vmem:[#allocation12 + $0x44] sm:$0xf]
      %v1048 = vld [vmem:[#allocation12 + $0x48] sm:$0xf]
      %v1049 = vld [vmem:[#allocation12 + $0x4c] sm:$0xf]
      %v1050 = vld [vmem:[#allocation12 + $0x50] sm:$0xf]
      %v1051 = vld [vmem:[#allocation12 + $0x54] sm:$0xf]
      %v1052 = vld [vmem:[#allocation12 + $0x58] sm:$0xf]
      %v1053 = vld [vmem:[#allocation12 + $0x5c] sm:$0xf]
      %v1054 = vld [vmem:[#allocation12 + $0x60] sm:$0xf]
      %v1055 = vld [vmem:[#allocation12 + $0x64] sm:$0xf]
      %v1056 = vld [vmem:[#allocation12 + $0x68] sm:$0xf]
      %v1057 = vld [vmem:[#allocation12 + $0x6c] sm:$0xf]
      %v1058 = vld [vmem:[#allocation12 + $0x70] sm:$0xf]
      %v1059 = vld [vmem:[#allocation12 + $0x74] sm:$0xf]
      %v1060 = vld [vmem:[#allocation12 + $0x78] sm:$0xf]
      %v1061 = vld [vmem:[#allocation12 + $0x7c] sm:$0xf]
      %v1062 = vld [vmem:[#allocation12 + $0x80] sm:$0xf]
      %v1063 = vld [vmem:[#allocation12 + $0x84] sm:$0xf]
      %v1064 = vld [vmem:[#allocation12 + $0x88] sm:$0xf]
      %v1065 = vld [vmem:[#allocation12 + $0x8c] sm:$0xf]
      %v1066 = vld [vmem:[#allocation13] sm:$0x1]
      %v1068 = vlaneseq
      %v1069 = vshrl.u32 %v1068, 7
      %v1070 = vsub.s32 0, %v1069
      %v1071 = vrot.slane %v1066, %v1070
      %v1077 = vunpack.c.l.b16 %v1026
      %v1078 = vunpack.c.h.b16 %v1026
      %v1079 = vunpack.c.l.b16 %v1027
      %v1080 = vunpack.c.l.b16 %v1028
      %v1081 = vunpack.c.h.b16 %v1028
      %v1082 = vunpack.c.l.b16 %v1029
      %v1083 = vpack.c.b16 %v1080, %v1077
      %v1084 = vpack.c.b16 %v1081, %v1078
      %v1085 = vpack.c.b16 %v1082, %v1079
      %v1124 = vunpack.c.l.b16 %v1030
      %v1125 = vunpack.c.l.b16 %v1031
      %v1126 = vunpack.c.l.b16 %v1032
      %v1127 = vunpack.c.l.b16 %v1033
      %v1128 = vunpack.c.l.b16 %v1034
      %v1129 = vunpack.c.l.b16 %v1035
      %v1130 = vunpack.c.l.b16 %v1036
      %v1131 = vunpack.c.l.b16 %v1037
      %v1132 = vunpack.c.l.b16 %v1038
      %v1133 = vunpack.c.l.b16 %v1039
      %v1134 = vunpack.c.l.b16 %v1040
      %v1135 = vunpack.c.l.b16 %v1041
      %v1136 = vunpack.c.l.b16 %v1042
      %v1137 = vunpack.c.l.b16 %v1043
      %v1138 = vunpack.c.l.b16 %v1044
      %v1139 = vunpack.c.l.b16 %v1045
      %v1140 = vunpack.c.l.b16 %v1046
      %v1141 = vunpack.c.l.b16 %v1047
      %v1142 = vunpack.c.l.b16 %v1048
      %v1143 = vunpack.c.l.b16 %v1049
      %v1144 = vunpack.c.l.b16 %v1050
      %v1145 = vunpack.c.l.b16 %v1051
      %v1146 = vunpack.c.l.b16 %v1052
      %v1147 = vunpack.c.l.b16 %v1053
      %v1148 = vunpack.c.l.b16 %v1054
      %v1149 = vunpack.c.l.b16 %v1055
      %v1150 = vunpack.c.l.b16 %v1056
      %v1151 = vunpack.c.l.b16 %v1057
      %v1152 = vunpack.c.l.b16 %v1058
      %v1153 = vunpack.c.l.b16 %v1059
      %v1154 = vunpack.c.l.b16 %v1060
      %v1155 = vunpack.c.l.b16 %v1061
      %v1156 = vunpack.c.l.b16 %v1062
      %v1157 = vunpack.c.l.b16 %v1063
      %v1158 = vunpack.c.l.b16 %v1064
      %v1159 = vunpack.c.l.b16 %v1065
      %v1160 = vpack.c.b16 %v1125, %v1124
      %v1161 = vpack.c.b16 %v1127, %v1126
      %v1162 = vpack.c.b16 %v1129, %v1128
      %v1163 = vpack.c.b16 %v1131, %v1130
      %v1164 = vpack.c.b16 %v1133, %v1132
      %v1165 = vpack.c.b16 %v1135, %v1134
      %v1166 = vpack.c.b16 %v1137, %v1136
      %v1167 = vpack.c.b16 %v1139, %v1138
      %v1168 = vpack.c.b16 %v1141, %v1140
      %v1169 = vpack.c.b16 %v1143, %v1142
      %v1170 = vpack.c.b16 %v1145, %v1144
      %v1171 = vpack.c.b16 %v1147, %v1146
      %v1172 = vpack.c.b16 %v1149, %v1148
      %v1173 = vpack.c.b16 %v1151, %v1150
      %v1174 = vpack.c.b16 %v1153, %v1152
      %v1175 = vpack.c.b16 %v1155, %v1154
      %v1176 = vpack.c.b16 %v1157, %v1156
      %v1177 = vpack.c.b16 %v1159, %v1158
      %vm1196 = vcmask 261120
      %v1198 = vsel %vm1196, %v1085, 0
      %1200 = vmatprep.subr.bf16.mxu0 0
      %1201 = vmatpush1.bf16.msra.mxu0 %v1167
      %1202 = vmatprep.subr.bf16.mxu0 0
      %1203 = vmatpush1.bf16.msra.mxu0 %v1166
      %1204 = vmatprep.subr.bf16.mxu0 0
      %1205 = vmatpush1.bf16.msra.mxu0 %v1165
      %1206 = vmatprep.subr.bf16.mxu0 0
      %1207 = vmatpush1.bf16.msra.mxu0 %v1164
      %1208 = vmatprep.subr.bf16.mxu0 0
      %1209 = vmatpush1.bf16.msra.mxu0 %v1163
      %1210 = vmatprep.subr.bf16.mxu0 0
      %1211 = vmatpush1.bf16.msra.mxu0 %v1162
      %1212 = vmatprep.subr.bf16.mxu0 0
      %1213 = vmatpush1.bf16.msra.mxu0 %v1161
      %1214 = vmatprep.subr.bf16.mxu0 0
      %1215 = vmatpush1.bf16.msra.mxu0 %v1160
      %1216 = vmatprep.subr.bf16.mxu0 0
      %1217 = vmatpush2.bf16.msra.mxu0 %v1175
      %1218 = vmatprep.subr.bf16.mxu0 0
      %1219 = vmatpush2.bf16.msra.mxu0 %v1174
      %1220 = vmatprep.subr.bf16.mxu0 0
      %1221 = vmatpush2.bf16.msra.mxu0 %v1173
      %1222 = vmatprep.subr.bf16.mxu0 0
      %1223 = vmatpush2.bf16.msra.mxu0 %v1172
      %1224 = vmatprep.subr.bf16.mxu0 0
      %1225 = vmatpush2.bf16.msra.mxu0 %v1171
      %1226 = vmatprep.subr.bf16.mxu0 0
      %1227 = vmatpush2.bf16.msra.mxu0 %v1170
      %1228 = vmatprep.subr.bf16.mxu0 0
      %1229 = vmatpush2.bf16.msra.mxu0 %v1169
      %1230 = vmatprep.subr.bf16.mxu0 0
      %1231 = vmatpush2.bf16.msra.mxu0 %v1168
      %1232 = vmatprep.mubr.bf16.mxu0 %v1084
      %1233 = vmatmul.mubr.bf16.gmra.mxu0 %v1083
      %v1234 = vpop.f32.mrf.mxu0
      %v1235 = vadd.f32 %v1071, %v1234
      %v1236 = vpop.f32.mrf.mxu0
      %v1237 = vpop.f32.mrf.mxu0
      %v1238 = vadd.f32 %v1071, %v1237
      %v1239 = vpop.f32.mrf.mxu0
      %1240 = vdwg.mxu0
      %1241 = vmatprep.subr.bf16.mxu0 0
      %1242 = vmatpush1.bf16.msra.mxu0 0
      %1243 = vmatprep.subr.bf16.mxu0 0
      %1244 = vmatpush1.bf16.msra.mxu0 0
      %1245 = vmatprep.subr.bf16.mxu0 0
      %1246 = vmatpush1.bf16.msra.mxu0 0
      %1247 = vmatprep.subr.bf16.mxu0 0
      %1248 = vmatpush1.bf16.msra.mxu0 0
      %1249 = vmatprep.subr.bf16.mxu0 0
      %1250 = vmatpush1.bf16.msra.mxu0 0
      %1251 = vmatprep.subr.bf16.mxu0 0
      %1252 = vmatpush1.bf16.msra.mxu0 0
      %1253 = vmatprep.subr.bf16.mxu0 0
      %1254 = vmatpush1.bf16.msra.mxu0 %v1177
      %1255 = vmatprep.subr.bf16.mxu0 0
      %1256 = vmatpush1.bf16.msra.mxu0 %v1176
      %1257 = vmatprep.subr.bf16.mxu0 0
      %1258 = vmatpush2.bf16.msra.mxu0 0
      %1259 = vmatprep.subr.bf16.mxu0 0
      %1260 = vmatpush2.bf16.msra.mxu0 0
      %1261 = vmatprep.subr.bf16.mxu0 0
      %1262 = vmatpush2.bf16.msra.mxu0 0
      %1263 = vmatprep.subr.bf16.mxu0 0
      %1264 = vmatpush2.bf16.msra.mxu0 0
      %1265 = vmatprep.subr.bf16.mxu0 0
      %1266 = vmatpush2.bf16.msra.mxu0 0
      %1267 = vmatprep.subr.bf16.mxu0 0
      %1268 = vmatpush2.bf16.msra.mxu0 0
      %1269 = vmatprep.subr.bf16.mxu0 0
      %1270 = vmatpush2.bf16.msra.mxu0 0
      %1271 = vmatprep.subr.bf16.mxu0 0
      %1272 = vmatpush2.bf16.msra.mxu0 0
      %1273 = vmatprep.mubr.bf16.mxu0 0
      %1274 = vmatmul.mubr.bf16.gmra.mxu0 %v1198
      %v1275 = vpop.f32.mrf.mxu0
      %v1276 = vadd.f32 %v1235, %v1275
      %v1277 = vpop.f32.mrf.mxu0
      %v1278 = vpop.f32.mrf.mxu0
      %v1279 = vadd.f32 %v1238, %v1278
      %v1280 = vpop.f32.mrf.mxu0
      %1281 = vdwg.mxu0
      %v1282 = vmax.f32 %v1276, 0.0
      %v1283 = vmax.f32 %v1279, 0.0
      %v1284 = vpack.c.bf16 %v1283, %v1282
      %v1286 = vunpack.c.l.b16 %v1284
      %v1287 = vunpack.c.h.b16 %v1284
      %v1288 = vpack.c.b16 %v1286, %v1286
      %v1289 = vpack.c.b16 %v1287, %v1287
      %1292 = vst [vmem:[%s183] sm:$0xf] %v1288
      %1293 = vst [vmem:[%s183 + $0x4] sm:$0xf] %v1289
      %s1294 = smul.u32 2, %s22
      %p1295 = scmp.lt.s32.totalorder %s1294, 3
      %s1296 = scalar_select %p1295, %s1294, 3
      %s1297 = smul.addr %s1296, 4
      %s1298 = scalar_lea.vmem %s5, %s1297
      // Predicated region
      $region33: #{encoder_forward.18} parent=31 // pred_check
        %p1299 = pneg %p108
      $region34: #{encoder_forward.18} parent=31 // pred_check_branch
        %1301 = sbr.rel (%p1299) target = $region36
      $region35: #{encoder_forward.18} parent=31 // pred_region
        %s1302 = smul.u32 2, %s22
      $region36: #{encoder_forward.18} parent=31 // pred_fallthru
        _
    $region32: #{encoder_forward.18} parent=5 // pred_fallthru
      _
    %p1303 = scmp.le.s32.totalorder 2, %s17
    // Predicated region
    $region37: #{encoder_forward.18} parent=5 // pred_check
      %p1304 = pneg %p1303
    $region38: #{encoder_forward.18} parent=5 // pred_check_branch
      %1306 = sbr.rel (%p1304) target = $region40
    $region39: #{encoder_forward.18} parent=5 // pred_region
      %s1307 = ssub.s32 %s17, 2
      // Predicated region
      $region41: #{encoder_forward.18} parent=39 // pred_check
        %p1308 = pneg %p114
      $region42: #{encoder_forward.18} parent=39 // pred_check_branch
        %1310 = sbr.rel (%p1308) target = $region44
      $region43: #{encoder_forward.18} parent=39 // pred_region
        %s1311 = smul.u32 2, %s23
        %p1312 = scmp.lt.s32.totalorder %s1311, 3
        %s1313 = scalar_select %p1312, %s1311, 3
        %s1314 = smul.addr %s1313, 4
        %s1315 = scalar_lea.vmem %s5, %s1314
      $region44: #{encoder_forward.18} parent=39 // pred_fallthru
        _
    $region40: #{encoder_forward.18} parent=5 // pred_fallthru
      _
  $region6: #{encoder_forward.18} parent=0 // loop_footer
    %s21 = sadd.s32 1, %s17
  $region7: #{encoder_forward.18} parent=0 // loop_footer_branch
    %16 = sbr.rel target = $region3
  $region8: #{encoder_forward.18} parent=0 // loop_exit
    _

// kernel: encoder_forward.19
$region0: #{encoder_forward.19}
  #allocation0 [shape = 'u32[]', space=smem, size = 0x4, offset = 0x4, fixed_abs, tag = 'smem constant byte address 0x4 - core index']
  #allocation1 [shape = 'u32[144,128]{1,0:T(1,128)}', space=vmem, size = 0x12000, scoped, tag = 'internal scratch']
  #allocation2 [shape = 'u32[2048]{0}', space=vmem, size = 0x2000, scoped, tag = 'scoped memory for encoder_forward.19']
  #allocation3 [shape = 'u32[2048]{0}', space=vmem, size = 0x2000, scoped, tag = 'scoped memory for encoder_forward.19']
  #allocation4 [shape = 'u32[2048]{0}', space=vmem, size = 0x2000, scoped, tag = 'scoped memory for encoder_forward.19']
  #allocation5 [shape = 'u32[2048]{0}', space=vmem, size = 0x2000, scoped, tag = 'scoped memory for encoder_forward.19']
  #allocation6 [shape = 'u32[2048]{0}', space=vmem, size = 0x2000, scoped, tag = 'scoped memory for encoder_forward.19']
  #allocation7 [shape = 'u32[2048]{0}', space=vmem, size = 0x2000, scoped, tag = 'scoped memory for encoder_forward.19']
  #allocation8 [shape = 'u32[2048]{0}', space=vmem, size = 0x2000, scoped, tag = 'scoped memory for encoder_forward.19']
  #allocation9 [shape = 'u32[2048]{0}', space=vmem, size = 0x2000, scoped, tag = 'scoped memory for encoder_forward.19']
  #allocation10 [shape = 'u32[2048]{0}', space=vmem, size = 0x2000, scoped, tag = 'scoped memory for encoder_forward.19']
  #allocation11 [shape = 'u32[2048]{0}', space=vmem, size = 0x2000, scoped, tag = 'scoped memory for encoder_forward.19']
  %s0 = inlined_call_operand.vmem [shape: bf16[32,288], index: 0, kind: input, shape index: {}]
  %s1 = inlined_call_operand.vmem [shape: bf16[288,32], index: 1, kind: input, shape index: {}]
  %s2 = inlined_call_operand.<no memory space> [shape: bf16[], index: 2, kind: input, shape index: {}]
  %s3 = inlined_call_operand.vmem [shape: f32[1,32], index: 3, kind: input, shape index: {}]
  %s4 = inlined_call_operand.<no memory space> [shape: f32[], index: 4, kind: input, shape index: {}]
  %s5 = inlined_call_operand.vmem [shape: f32[32,128], index: 5, kind: output, shape index: {}]
  %s6 = sld [smem:[#allocation0]]
  $region45: #{encoder_forward.19} parent=0
    _
  %s8 = ssub.s32 1, %s6
  %s9 = scalar_select 0, %s8, %s6
  %v10 = vstv %s2
  %v11 = vunpack.i.l.bf16 %v10
  %v13 = vunpack.i.h.bf16 %v10
  %v15 = vstv %s4
  loop: start=0, step=1, limit=4
  $region2: #{encoder_forward.19} parent=0 // loop_pre_header
    _
  $region3: #{encoder_forward.19} parent=0 // loop_header
    %s17 = sphi 0, %s21
    %p18 = scmp.ge.s32.totalorder %s17, 4
    %s27 = sphi 0, %s29
    %s30 = sphi 0, %s27
    %s31 = sphi 0, %s30
    %s47 = sphi 0, %s31
    %s51 = sphi 0, %s51
    %s53 = sphi 0, %s51
    %s54 = sphi 0, %s53
    %s68 = sphi 0, %s54
    %s72 = sphi 0, %s72
    %s74 = sphi 0, %s72
    %s75 = sphi 0, %s74
    %s89 = sphi 0, %s75
    %s95 = sphi 0, %s97
    %s98 = sphi 0, %s95
    %s99 = sphi 0, %s98
    %s115 = sphi 0, %s99
  $region4: #{encoder_forward.19} parent=0 // loop_header_branch
    %20 = sbr.rel (%p18) target = $region8
  $region5: #{encoder_forward.19} parent=0 // loop_body
    %s22 = ssub.s32 %s17, 1
    %s23 = ssub.s32 %s17, 2
    %s24 = sadd.s32 %s17, 1
    %s25 = ssub.s32 %s17, %s24
    %p26 = scmp.eq.s32.totalorder %s25, 0
    %s28 = sadd.s32 %s27, 1
    %s29 = scalar_select %p26, %s27, %s28
    %p32 = pneg %p26
    %p33 = scmp.eq.s32.totalorder %s17, 1
    %p34 = por %p32, %p33
    %p35 = scmp.ne.s32.totalorder %s27, %s30
    %p36 = scmp.eq.s32.totalorder %s17, 0
    %p37 = por %p35, %p36
    %p38 = scmp.ne.s32.totalorder %s27, %s30
    %p39 = scmp.eq.s32.totalorder %s22, 1
    %p40 = por %p38, %p39
    %p41 = scmp.ne.s32.totalorder %s30, %s31
    %p42 = scmp.eq.s32.totalorder %s22, 0
    %p43 = por %p41, %p42
    %p44 = scmp.ne.s32.totalorder %s30, %s31
    %p45 = scmp.eq.s32.totalorder %s23, 1
    %p46 = por %p44, %p45
    %p48 = scmp.ne.s32.totalorder %s31, %s47
    %p49 = scmp.eq.s32.totalorder %s23, 0
    %p50 = por %p48, %p49
    %s52 = sadd.s32 %s51, 1
    %p55 = scmp.eq.s32.totalorder %s17, 1
    %p56 = scmp.ne.s32.totalorder %s51, %s53
    %p57 = scmp.eq.s32.totalorder %s17, 0
    %p58 = por %p56, %p57
    %p59 = scmp.ne.s32.totalorder %s51, %s53
    %p60 = scmp.eq.s32.totalorder %s22, 1
    %p61 = por %p59, %p60
    %p62 = scmp.ne.s32.totalorder %s53, %s54
    %p63 = scmp.eq.s32.totalorder %s22, 0
    %p64 = por %p62, %p63
    %p65 = scmp.ne.s32.totalorder %s53, %s54
    %p66 = scmp.eq.s32.totalorder %s23, 1
    %p67 = por %p65, %p66
    %p69 = scmp.ne.s32.totalorder %s54, %s68
    %p70 = scmp.eq.s32.totalorder %s23, 0
    %p71 = por %p69, %p70
    %s73 = sadd.s32 %s72, 1
    %p76 = scmp.eq.s32.totalorder %s17, 1
    %p77 = scmp.ne.s32.totalorder %s72, %s74
    %p78 = scmp.eq.s32.totalorder %s17, 0
    %p79 = por %p77, %p78
    %p80 = scmp.ne.s32.totalorder %s72, %s74
    %p81 = scmp.eq.s32.totalorder %s22, 1
    %p82 = por %p80, %p81
    %p83 = scmp.ne.s32.totalorder %s74, %s75
    %p84 = scmp.eq.s32.totalorder %s22, 0
    %p85 = por %p83, %p84
    %p86 = scmp.ne.s32.totalorder %s74, %s75
    %p87 = scmp.eq.s32.totalorder %s23, 1
    %p88 = por %p86, %p87
    %p90 = scmp.ne.s32.totalorder %s75, %s89
    %p91 = scmp.eq.s32.totalorder %s23, 0
    %p92 = por %p90, %p91
    %s93 = ssub.s32 %s17, %s24
    %p94 = scmp.eq.s32.totalorder %s93, 0
    %s96 = sadd.s32 %s95, 1
    %s97 = scalar_select %p94, %s95, %s96
    %p100 = pneg %p94
    %p101 = scmp.eq.s32.totalorder %s17, 1
    %p102 = por %p100, %p101
    %p103 = scmp.ne.s32.totalorder %s95, %s98
    %p104 = scmp.eq.s32.totalorder %s17, 0
    %p105 = por %p103, %p104
    %p106 = scmp.ne.s32.totalorder %s95, %s98
    %p107 = scmp.eq.s32.totalorder %s22, 1
    %p108 = por %p106, %p107
    %p109 = scmp.ne.s32.totalorder %s98, %s99
    %p110 = scmp.eq.s32.totalorder %s22, 0
    %p111 = por %p109, %p110
    %p112 = scmp.ne.s32.totalorder %s98, %s99
    %p113 = scmp.eq.s32.totalorder %s23, 1
    %p114 = por %p112, %p113
    %p116 = scmp.ne.s32.totalorder %s99, %s115
    %p117 = scmp.eq.s32.totalorder %s23, 0
    %p118 = por %p116, %p117
    %p119 = scmp.le.s32.totalorder 1, %s17
    %p120 = scmp.lt.s32.totalorder %s17, 3
    %p121 = pnand %p119, %p120
    %p122 = pneg %p121
    // Predicated region
    $region9: #{encoder_forward.19} parent=5 // pred_check
      _
    $region10: #{encoder_forward.19} parent=5 // pred_check_branch
      %124 = sbr.rel (%p121) target = $region12
    $region11: #{encoder_forward.19} parent=5 // pred_region
      %s125 = ssub.s32 %s17, 1
      // Predicated region
      $region13: #{encoder_forward.19} parent=11 // pred_check
        %p126 = pneg %p64
      $region14: #{encoder_forward.19} parent=11 // pred_check_branch
        %128 = sbr.rel (%p126) target = $region16
      $region15: #{encoder_forward.19} parent=11 // pred_region
        _
      $region16: #{encoder_forward.19} parent=11 // pred_fallthru
        _
      // Predicated region
      $region17: #{encoder_forward.19} parent=11 // pred_check
        %p129 = pneg %p85
      $region18: #{encoder_forward.19} parent=11 // pred_check_branch
        %131 = sbr.rel (%p129) target = $region20
      $region19: #{encoder_forward.19} parent=11 // pred_region
        _
      $region20: #{encoder_forward.19} parent=11 // pred_fallthru
        _
    $region12: #{encoder_forward.19} parent=5 // pred_fallthru
      _
    %p132 = scmp.lt.s32.totalorder %s17, 2
    // Predicated region
    $region21: #{encoder_forward.19} parent=5 // pred_check
      %p133 = pneg %p132
    $region22: #{encoder_forward.19} parent=5 // pred_check_branch
      %135 = sbr.rel (%p133) target = $region24
    $region23: #{encoder_forward.19} parent=5 // pred_region
      // Predicated region
      $region25: #{encoder_forward.19} parent=23 // pred_check
        %p136 = pneg %p37
      $region26: #{encoder_forward.19} parent=23 // pred_check_branch
        %138 = sbr.rel (%p136) target = $region28
      $region27: #{encoder_forward.19} parent=23 // pred_region
        %s139 = smul.u32 2, %s17
        %p140 = scmp.lt.s32.totalorder %s139, 3
        %s141 = scalar_select %p140, %s139, 3
        %s142 = smul.addr %s141, 3
        %s143 = smul.addr %s142, 4
        %s144 = scalar_lea.vmem %s0, %s143
        %s145 = smul.u32 2, %s17
      $region28: #{encoder_forward.19} parent=23 // pred_fallthru
        _
    $region24: #{encoder_forward.19} parent=5 // pred_fallthru
      _
    %p146 = scmp.le.s32.totalorder 1, %s17
    %p147 = scmp.lt.s32.totalorder %s17, 3
    %p148 = pnand %p146, %p147
    %p149 = pneg %p148
    // Predicated region
    $region29: #{encoder_forward.19} parent=5 // pred_check
      _
    $region30: #{encoder_forward.19} parent=5 // pred_check_branch
      %151 = sbr.rel (%p148) target = $region32
    $region31: #{encoder_forward.19} parent=5 // pred_region
      #allocation12 [shape = 'u8[73728]{0}', space=vmem, size = 0x12000, dematerialized = true, scoped, tag = 'FusionAdapter Buffer %fusion.3 = bf16[288,128]{1,0:T(8,128)(2,1)} fusion(%param_1.113, %param_2.30), kind=kLoop, calls=%fused_computation.21.clone, metadata={op_name="jit(encoder_forward)/jit(_pad)/pad" stack_frame_id=87}']
      #allocation13 [shape = 'u8[512]{0}', space=vmem, size = 0x400, dematerialized = true, scoped, tag = 'FusionAdapter Buffer %fusion.30 = f32[1,128]{1,0:T(1,128)} fusion(%param_3.17, %param_4.10), kind=kLoop, calls=%fused_computation.97.clone, metadata={op_name="jit(encoder_forward)/jit(_pad)/pad" stack_frame_id=88}']
      %s152 = ssub.s32 %s17, 1
      %s153 = smul.u32 2, %s22
      %p154 = scmp.lt.s32.totalorder %s153, 3
      %s155 = scalar_select %p154, %s153, 3
      %s156 = smul.addr %s155, 3
      %s157 = smul.addr %s156, 4
      %s158 = scalar_lea.vmem %s0, %s157
      %p159 = pneg %p43
      %p160 = pneg %p40
      %p161 = pneg %p64
      %p162 = pneg %p61
      %p163 = pneg %p85
      %p164 = pneg %p82
      %p165 = pneg %p111
      %p166 = pneg %p108
      %s167 = smul.u32 2, %s22
      %p168 = scmp.lt.s32.totalorder %s167, 3
      %s169 = scalar_select %p168, %s167, 3
      %s170 = smul.addr %s169, 8
      %s171 = scalar_lea.vmem %s5, %s170
      %s172 = smul.u32 2, %s22
      %p173 = scmp.lt.s32.totalorder %s172, 3
      %s174 = scalar_select %p173, %s172, 3
      %s175 = smul.addr %s174, 3
      %s176 = smul.addr %s175, 4
      %s177 = scalar_lea.vmem %s0, %s176
      %s178 = smul.u32 2, %s22
      %s179 = smul.u32 2, %s22
      %p180 = scmp.lt.s32.totalorder %s179, 3
      %s181 = scalar_select %p180, %s179, 3
      %s182 = smul.addr %s181, 8
      %s183 = scalar_lea.vmem %s5, %s182
      %s184 = smul.u32 2, %s22
      %s186 = sor.u32 255, 127
      %s187 = sand.u32 %s186, 85
      %s188 = sshrl.u32 %s187, 1
      %s189 = sor.u32 %s187, %s188
      %s190 = sand.u32 51, %s189
      %s191 = sshrl.u32 %s190, 2
      %s192 = sor.u32 %s190, %s191
      %s193 = sand.u32 15, %s192
      %v194 = vld [vmem:[%s1] sm:%s193]
      %v195 = vunpack.c.l.bf16 %v194
      %v196 = vunpack.c.h.bf16 %v194
      %v197 = vlaneseq
      %v198 = vand.u32 %v197, 127
      %vm200 = vcmp.lt.s32.totalorder %v198, 32
      %v201 = vsel %vm200, %v195, %v11
      %v202 = vpack.c.bf16 0.0, %v201
      %s204 = ssub.s32 16, 1
      %205 = vst [vmem:[#allocation12] sm:%s204] %v202
      %s206 = scalar_lea.vmem %s1, 4
      %s208 = sor.u32 255, 127
      %s209 = sand.u32 %s208, 85
      %s210 = sshrl.u32 %s209, 1
      %s211 = sor.u32 %s209, %s210
      %s212 = sand.u32 51, %s211
      %s213 = sshrl.u32 %s212, 2
      %s214 = sor.u32 %s212, %s213
      %s215 = sand.u32 15, %s214
      %v216 = vld [vmem:[%s206] sm:%s215]
      %v217 = vunpack.c.l.bf16 %v216
      %v218 = vunpack.c.h.bf16 %v216
      %v219 = vlaneseq
      %v220 = vand.u32 %v219, 127
      %vm222 = vcmp.lt.s32.totalorder %v220, 32
      %v223 = vsel %vm222, %v217, %v11
      %s224 = scalar_lea.vmem [#allocation12], 4
      %v225 = vpack.c.bf16 0.0, %v223
      %s227 = ssub.s32 16, 1
      %228 = vst [vmem:[%s224] sm:%s227] %v225
      %s229 = scalar_lea.vmem %s1, 8
      %s231 = sor.u32 255, 127
      %s232 = sand.u32 %s231, 85
      %s233 = sshrl.u32 %s232, 1
      %s234 = sor.u32 %s232, %s233
      %s235 = sand.u32 51, %s234
      %s236 = sshrl.u32 %s235, 2
      %s237 = sor.u32 %s235, %s236
      %s238 = sand.u32 15, %s237
      %v239 = vld [vmem:[%s229] sm:%s238]
      %v240 = vunpack.c.l.bf16 %v239
      %v241 = vunpack.c.h.bf16 %v239
      %v242 = vlaneseq
      %v243 = vand.u32 %v242, 127
      %vm245 = vcmp.lt.s32.totalorder %v243, 32
      %v246 = vsel %vm245, %v240, %v11
      %s247 = scalar_lea.vmem [#allocation12], 8
      %v248 = vpack.c.bf16 0.0, %v246
      %s250 = ssub.s32 16, 1
      %251 = vst [vmem:[%s247] sm:%s250] %v248
      %s252 = scalar_lea.vmem %s1, 12
      %s254 = sor.u32 255, 127
      %s255 = sand.u32 %s254, 85
      %s256 = sshrl.u32 %s255, 1
      %s257 = sor.u32 %s255, %s256
      %s258 = sand.u32 51, %s257
      %s259 = sshrl.u32 %s258, 2
      %s260 = sor.u32 %s258, %s259
      %s261 = sand.u32 15, %s260
      %v262 = vld [vmem:[%s252] sm:%s261]
      %v263 = vunpack.c.l.bf16 %v262
      %v264 = vunpack.c.h.bf16 %v262
      %v265 = vlaneseq
      %v266 = vand.u32 %v265, 127
      %vm268 = vcmp.lt.s32.totalorder %v266, 32
      %v269 = vsel %vm268, %v263, %v11
      %s270 = scalar_lea.vmem [#allocation12], 12
      %v271 = vpack.c.bf16 0.0, %v269
      %s273 = ssub.s32 16, 1
      %274 = vst [vmem:[%s270] sm:%s273] %v271
      %s275 = scalar_lea.vmem %s1, 16
      %s277 = sor.u32 255, 127
      %s278 = sand.u32 %s277, 85
      %s279 = sshrl.u32 %s278, 1
      %s280 = sor.u32 %s278, %s279
      %s281 = sand.u32 51, %s280
      %s282 = sshrl.u32 %s281, 2
      %s283 = sor.u32 %s281, %s282
      %s284 = sand.u32 15, %s283
      %v285 = vld [vmem:[%s275] sm:%s284]
      %v286 = vunpack.c.l.bf16 %v285
      %v287 = vunpack.c.h.bf16 %v285
      %v288 = vlaneseq
      %v289 = vand.u32 %v288, 127
      %vm291 = vcmp.lt.s32.totalorder %v289, 32
      %v292 = vsel %vm291, %v286, %v11
      %s293 = scalar_lea.vmem [#allocation12], 16
      %v294 = vpack.c.bf16 0.0, %v292
      %s296 = ssub.s32 16, 1
      %297 = vst [vmem:[%s293] sm:%s296] %v294
      %s298 = scalar_lea.vmem %s1, 20
      %s300 = sor.u32 255, 127
      %s301 = sand.u32 %s300, 85
      %s302 = sshrl.u32 %s301, 1
      %s303 = sor.u32 %s301, %s302
      %s304 = sand.u32 51, %s303
      %s305 = sshrl.u32 %s304, 2
      %s306 = sor.u32 %s304, %s305
      %s307 = sand.u32 15, %s306
      %v308 = vld [vmem:[%s298] sm:%s307]
      %v309 = vunpack.c.l.bf16 %v308
      %v310 = vunpack.c.h.bf16 %v308
      %v311 = vlaneseq
      %v312 = vand.u32 %v311, 127
      %vm314 = vcmp.lt.s32.totalorder %v312, 32
      %v315 = vsel %vm314, %v309, %v11
      %s316 = scalar_lea.vmem [#allocation12], 20
      %v317 = vpack.c.bf16 0.0, %v315
      %s319 = ssub.s32 16, 1
      %320 = vst [vmem:[%s316] sm:%s319] %v317
      %s321 = scalar_lea.vmem %s1, 24
      %s323 = sor.u32 255, 127
      %s324 = sand.u32 %s323, 85
      %s325 = sshrl.u32 %s324, 1
      %s326 = sor.u32 %s324, %s325
      %s327 = sand.u32 51, %s326
      %s328 = sshrl.u32 %s327, 2
      %s329 = sor.u32 %s327, %s328
      %s330 = sand.u32 15, %s329
      %v331 = vld [vmem:[%s321] sm:%s330]
      %v332 = vunpack.c.l.bf16 %v331
      %v333 = vunpack.c.h.bf16 %v331
      %v334 = vlaneseq
      %v335 = vand.u32 %v334, 127
      %vm337 = vcmp.lt.s32.totalorder %v335, 32
      %v338 = vsel %vm337, %v332, %v11
      %s339 = scalar_lea.vmem [#allocation12], 24
      %v340 = vpack.c.bf16 0.0, %v338
      %s342 = ssub.s32 16, 1
      %343 = vst [vmem:[%s339] sm:%s342] %v340
      %s344 = scalar_lea.vmem %s1, 28
      %s346 = sor.u32 255, 127
      %s347 = sand.u32 %s346, 85
      %s348 = sshrl.u32 %s347, 1
      %s349 = sor.u32 %s347, %s348
      %s350 = sand.u32 51, %s349
      %s351 = sshrl.u32 %s350, 2
      %s352 = sor.u32 %s350, %s351
      %s353 = sand.u32 15, %s352
      %v354 = vld [vmem:[%s344] sm:%s353]
      %v355 = vunpack.c.l.bf16 %v354
      %v356 = vunpack.c.h.bf16 %v354
      %v357 = vlaneseq
      %v358 = vand.u32 %v357, 127
      %vm360 = vcmp.lt.s32.totalorder %v358, 32
      %v361 = vsel %vm360, %v355, %v11
      %s362 = scalar_lea.vmem [#allocation12], 28
      %v363 = vpack.c.bf16 0.0, %v361
      %s365 = ssub.s32 16, 1
      %366 = vst [vmem:[%s362] sm:%s365] %v363
      %s367 = scalar_lea.vmem %s1, 32
      %s369 = sor.u32 255, 127
      %s370 = sand.u32 %s369, 85
      %s371 = sshrl.u32 %s370, 1
      %s372 = sor.u32 %s370, %s371
      %s373 = sand.u32 51, %s372
      %s374 = sshrl.u32 %s373, 2
      %s375 = sor.u32 %s373, %s374
      %s376 = sand.u32 15, %s375
      %v377 = vld [vmem:[%s367] sm:%s376]
      %v378 = vunpack.c.l.bf16 %v377
      %v379 = vunpack.c.h.bf16 %v377
      %v380 = vlaneseq
      %v381 = vand.u32 %v380, 127
      %vm383 = vcmp.lt.s32.totalorder %v381, 32
      %v384 = vsel %vm383, %v378, %v11
      %s385 = scalar_lea.vmem [#allocation12], 32
      %v386 = vpack.c.bf16 0.0, %v384
      %s388 = ssub.s32 16, 1
      %389 = vst [vmem:[%s385] sm:%s388] %v386
      %s390 = scalar_lea.vmem %s1, 36
      %s392 = sor.u32 255, 127
      %s393 = sand.u32 %s392, 85
      %s394 = sshrl.u32 %s393, 1
      %s395 = sor.u32 %s393, %s394
      %s396 = sand.u32 51, %s395
      %s397 = sshrl.u32 %s396, 2
      %s398 = sor.u32 %s396, %s397
      %s399 = sand.u32 15, %s398
      %v400 = vld [vmem:[%s390] sm:%s399]
      %v401 = vunpack.c.l.bf16 %v400
      %v402 = vunpack.c.h.bf16 %v400
      %v403 = vlaneseq
      %v404 = vand.u32 %v403, 127
      %vm406 = vcmp.lt.s32.totalorder %v404, 32
      %v407 = vsel %vm406, %v401, %v11
      %s408 = scalar_lea.vmem [#allocation12], 36
      %v409 = vpack.c.bf16 0.0, %v407
      %s411 = ssub.s32 16, 1
      %412 = vst [vmem:[%s408] sm:%s411] %v409
      %s413 = scalar_lea.vmem %s1, 40
      %s415 = sor.u32 255, 127
      %s416 = sand.u32 %s415, 85
      %s417 = sshrl.u32 %s416, 1
      %s418 = sor.u32 %s416, %s417
      %s419 = sand.u32 51, %s418
      %s420 = sshrl.u32 %s419, 2
      %s421 = sor.u32 %s419, %s420
      %s422 = sand.u32 15, %s421
      %v423 = vld [vmem:[%s413] sm:%s422]
      %v424 = vunpack.c.l.bf16 %v423
      %v425 = vunpack.c.h.bf16 %v423
      %v426 = vlaneseq
      %v427 = vand.u32 %v426, 127
      %vm429 = vcmp.lt.s32.totalorder %v427, 32
      %v430 = vsel %vm429, %v424, %v11
      %s431 = scalar_lea.vmem [#allocation12], 40
      %v432 = vpack.c.bf16 0.0, %v430
      %s434 = ssub.s32 16, 1
      %435 = vst [vmem:[%s431] sm:%s434] %v432
      %s436 = scalar_lea.vmem %s1, 44
      %s438 = sor.u32 255, 127
      %s439 = sand.u32 %s438, 85
      %s440 = sshrl.u32 %s439, 1
      %s441 = sor.u32 %s439, %s440
      %s442 = sand.u32 51, %s441
      %s443 = sshrl.u32 %s442, 2
      %s444 = sor.u32 %s442, %s443
      %s445 = sand.u32 15, %s444
      %v446 = vld [vmem:[%s436] sm:%s445]
      %v447 = vunpack.c.l.bf16 %v446
      %v448 = vunpack.c.h.bf16 %v446
      %v449 = vlaneseq
      %v450 = vand.u32 %v449, 127
      %vm452 = vcmp.lt.s32.totalorder %v450, 32
      %v453 = vsel %vm452, %v447, %v11
      %s454 = scalar_lea.vmem [#allocation12], 44
      %v455 = vpack.c.bf16 0.0, %v453
      %s457 = ssub.s32 16, 1
      %458 = vst [vmem:[%s454] sm:%s457] %v455
      %s459 = scalar_lea.vmem %s1, 48
      %s461 = sor.u32 255, 127
      %s462 = sand.u32 %s461, 85
      %s463 = sshrl.u32 %s462, 1
      %s464 = sor.u32 %s462, %s463
      %s465 = sand.u32 51, %s464
      %s466 = sshrl.u32 %s465, 2
      %s467 = sor.u32 %s465, %s466
      %s468 = sand.u32 15, %s467
      %v469 = vld [vmem:[%s459] sm:%s468]
      %v470 = vunpack.c.l.bf16 %v469
      %v471 = vunpack.c.h.bf16 %v469
      %v472 = vlaneseq
      %v473 = vand.u32 %v472, 127
      %vm475 = vcmp.lt.s32.totalorder %v473, 32
      %v476 = vsel %vm475, %v470, %v11
      %s477 = scalar_lea.vmem [#allocation12], 48
      %v478 = vpack.c.bf16 0.0, %v476
      %s480 = ssub.s32 16, 1
      %481 = vst [vmem:[%s477] sm:%s480] %v478
      %s482 = scalar_lea.vmem %s1, 52
      %s484 = sor.u32 255, 127
      %s485 = sand.u32 %s484, 85
      %s486 = sshrl.u32 %s485, 1
      %s487 = sor.u32 %s485, %s486
      %s488 = sand.u32 51, %s487
      %s489 = sshrl.u32 %s488, 2
      %s490 = sor.u32 %s488, %s489
      %s491 = sand.u32 15, %s490
      %v492 = vld [vmem:[%s482] sm:%s491]
      %v493 = vunpack.c.l.bf16 %v492
      %v494 = vunpack.c.h.bf16 %v492
      %v495 = vlaneseq
      %v496 = vand.u32 %v495, 127
      %vm498 = vcmp.lt.s32.totalorder %v496, 32
      %v499 = vsel %vm498, %v493, %v11
      %s500 = scalar_lea.vmem [#allocation12], 52
      %v501 = vpack.c.bf16 0.0, %v499
      %s503 = ssub.s32 16, 1
      %504 = vst [vmem:[%s500] sm:%s503] %v501
      %s505 = scalar_lea.vmem %s1, 56
      %s507 = sor.u32 255, 127
      %s508 = sand.u32 %s507, 85
      %s509 = sshrl.u32 %s508, 1
      %s510 = sor.u32 %s508, %s509
      %s511 = sand.u32 51, %s510
      %s512 = sshrl.u32 %s511, 2
      %s513 = sor.u32 %s511, %s512
      %s514 = sand.u32 15, %s513
      %v515 = vld [vmem:[%s505] sm:%s514]
      %v516 = vunpack.c.l.bf16 %v515
      %v517 = vunpack.c.h.bf16 %v515
      %v518 = vlaneseq
      %v519 = vand.u32 %v518, 127
      %vm521 = vcmp.lt.s32.totalorder %v519, 32
      %v522 = vsel %vm521, %v516, %v11
      %s523 = scalar_lea.vmem [#allocation12], 56
      %v524 = vpack.c.bf16 0.0, %v522
      %s526 = ssub.s32 16, 1
      %527 = vst [vmem:[%s523] sm:%s526] %v524
      %s528 = scalar_lea.vmem %s1, 60
      %s530 = sor.u32 255, 127
      %s531 = sand.u32 %s530, 85
      %s532 = sshrl.u32 %s531, 1
      %s533 = sor.u32 %s531, %s532
      %s534 = sand.u32 51, %s533
      %s535 = sshrl.u32 %s534, 2
      %s536 = sor.u32 %s534, %s535
      %s537 = sand.u32 15, %s536
      %v538 = vld [vmem:[%s528] sm:%s537]
      %v539 = vunpack.c.l.bf16 %v538
      %v540 = vunpack.c.h.bf16 %v538
      %v541 = vlaneseq
      %v542 = vand.u32 %v541, 127
      %vm544 = vcmp.lt.s32.totalorder %v542, 32
      %v545 = vsel %vm544, %v539, %v11
      %s546 = scalar_lea.vmem [#allocation12], 60
      %v547 = vpack.c.bf16 0.0, %v545
      %s549 = ssub.s32 16, 1
      %550 = vst [vmem:[%s546] sm:%s549] %v547
      %s551 = scalar_lea.vmem %s1, 64
      %s553 = sor.u32 255, 127
      %s554 = sand.u32 %s553, 85
      %s555 = sshrl.u32 %s554, 1
      %s556 = sor.u32 %s554, %s555
      %s557 = sand.u32 51, %s556
      %s558 = sshrl.u32 %s557, 2
      %s559 = sor.u32 %s557, %s558
      %s560 = sand.u32 15, %s559
      %v561 = vld [vmem:[%s551] sm:%s560]
      %v562 = vunpack.c.l.bf16 %v561
      %v563 = vunpack.c.h.bf16 %v561
      %v564 = vlaneseq
      %v565 = vand.u32 %v564, 127
      %vm567 = vcmp.lt.s32.totalorder %v565, 32
      %v568 = vsel %vm567, %v562, %v11
      %s569 = scalar_lea.vmem [#allocation12], 64
      %v570 = vpack.c.bf16 0.0, %v568
      %s572 = ssub.s32 16, 1
      %573 = vst [vmem:[%s569] sm:%s572] %v570
      %s574 = scalar_lea.vmem %s1, 68
      %s576 = sor.u32 255, 127
      %s577 = sand.u32 %s576, 85
      %s578 = sshrl.u32 %s577, 1
      %s579 = sor.u32 %s577, %s578
      %s580 = sand.u32 51, %s579
      %s581 = sshrl.u32 %s580, 2
      %s582 = sor.u32 %s580, %s581
      %s583 = sand.u32 15, %s582
      %v584 = vld [vmem:[%s574] sm:%s583]
      %v585 = vunpack.c.l.bf16 %v584
      %v586 = vunpack.c.h.bf16 %v584
      %v587 = vlaneseq
      %v588 = vand.u32 %v587, 127
      %vm590 = vcmp.lt.s32.totalorder %v588, 32
      %v591 = vsel %vm590, %v585, %v11
      %s592 = scalar_lea.vmem [#allocation12], 68
      %v593 = vpack.c.bf16 0.0, %v591
      %s595 = ssub.s32 16, 1
      %596 = vst [vmem:[%s592] sm:%s595] %v593
      %s597 = scalar_lea.vmem %s1, 72
      %s599 = sor.u32 255, 127
      %s600 = sand.u32 %s599, 85
      %s601 = sshrl.u32 %s600, 1
      %s602 = sor.u32 %s600, %s601
      %s603 = sand.u32 51, %s602
      %s604 = sshrl.u32 %s603, 2
      %s605 = sor.u32 %s603, %s604
      %s606 = sand.u32 15, %s605
      %v607 = vld [vmem:[%s597] sm:%s606]
      %v608 = vunpack.c.l.bf16 %v607
      %v609 = vunpack.c.h.bf16 %v607
      %v610 = vlaneseq
      %v611 = vand.u32 %v610, 127
      %vm613 = vcmp.lt.s32.totalorder %v611, 32
      %v614 = vsel %vm613, %v608, %v11
      %s615 = scalar_lea.vmem [#allocation12], 72
      %v616 = vpack.c.bf16 0.0, %v614
      %s618 = ssub.s32 16, 1
      %619 = vst [vmem:[%s615] sm:%s618] %v616
      %s620 = scalar_lea.vmem %s1, 76
      %s622 = sor.u32 255, 127
      %s623 = sand.u32 %s622, 85
      %s624 = sshrl.u32 %s623, 1
      %s625 = sor.u32 %s623, %s624
      %s626 = sand.u32 51, %s625
      %s627 = sshrl.u32 %s626, 2
      %s628 = sor.u32 %s626, %s627
      %s629 = sand.u32 15, %s628
      %v630 = vld [vmem:[%s620] sm:%s629]
      %v631 = vunpack.c.l.bf16 %v630
      %v632 = vunpack.c.h.bf16 %v630
      %v633 = vlaneseq
      %v634 = vand.u32 %v633, 127
      %vm636 = vcmp.lt.s32.totalorder %v634, 32
      %v637 = vsel %vm636, %v631, %v11
      %s638 = scalar_lea.vmem [#allocation12], 76
      %v639 = vpack.c.bf16 0.0, %v637
      %s641 = ssub.s32 16, 1
      %642 = vst [vmem:[%s638] sm:%s641] %v639
      %s643 = scalar_lea.vmem %s1, 80
      %s645 = sor.u32 255, 127
      %s646 = sand.u32 %s645, 85
      %s647 = sshrl.u32 %s646, 1
      %s648 = sor.u32 %s646, %s647
      %s649 = sand.u32 51, %s648
      %s650 = sshrl.u32 %s649, 2
      %s651 = sor.u32 %s649, %s650
      %s652 = sand.u32 15, %s651
      %v653 = vld [vmem:[%s643] sm:%s652]
      %v654 = vunpack.c.l.bf16 %v653
      %v655 = vunpack.c.h.bf16 %v653
      %v656 = vlaneseq
      %v657 = vand.u32 %v656, 127
      %vm659 = vcmp.lt.s32.totalorder %v657, 32
      %v660 = vsel %vm659, %v654, %v11
      %s661 = scalar_lea.vmem [#allocation12], 80
      %v662 = vpack.c.bf16 0.0, %v660
      %s664 = ssub.s32 16, 1
      %665 = vst [vmem:[%s661] sm:%s664] %v662
      %s666 = scalar_lea.vmem %s1, 84
      %s668 = sor.u32 255, 127
      %s669 = sand.u32 %s668, 85
      %s670 = sshrl.u32 %s669, 1
      %s671 = sor.u32 %s669, %s670
      %s672 = sand.u32 51, %s671
      %s673 = sshrl.u32 %s672, 2
      %s674 = sor.u32 %s672, %s673
      %s675 = sand.u32 15, %s674
      %v676 = vld [vmem:[%s666] sm:%s675]
      %v677 = vunpack.c.l.bf16 %v676
      %v678 = vunpack.c.h.bf16 %v676
      %v679 = vlaneseq
      %v680 = vand.u32 %v679, 127
      %vm682 = vcmp.lt.s32.totalorder %v680, 32
      %v683 = vsel %vm682, %v677, %v11
      %s684 = scalar_lea.vmem [#allocation12], 84
      %v685 = vpack.c.bf16 0.0, %v683
      %s687 = ssub.s32 16, 1
      %688 = vst [vmem:[%s684] sm:%s687] %v685
      %s689 = scalar_lea.vmem %s1, 88
      %s691 = sor.u32 255, 127
      %s692 = sand.u32 %s691, 85
      %s693 = sshrl.u32 %s692, 1
      %s694 = sor.u32 %s692, %s693
      %s695 = sand.u32 51, %s694
      %s696 = sshrl.u32 %s695, 2
      %s697 = sor.u32 %s695, %s696
      %s698 = sand.u32 15, %s697
      %v699 = vld [vmem:[%s689] sm:%s698]
      %v700 = vunpack.c.l.bf16 %v699
      %v701 = vunpack.c.h.bf16 %v699
      %v702 = vlaneseq
      %v703 = vand.u32 %v702, 127
      %vm705 = vcmp.lt.s32.totalorder %v703, 32
      %v706 = vsel %vm705, %v700, %v11
      %s707 = scalar_lea.vmem [#allocation12], 88
      %v708 = vpack.c.bf16 0.0, %v706
      %s710 = ssub.s32 16, 1
      %711 = vst [vmem:[%s707] sm:%s710] %v708
      %s712 = scalar_lea.vmem %s1, 92
      %s714 = sor.u32 255, 127
      %s715 = sand.u32 %s714, 85
      %s716 = sshrl.u32 %s715, 1
      %s717 = sor.u32 %s715, %s716
      %s718 = sand.u32 51, %s717
      %s719 = sshrl.u32 %s718, 2
      %s720 = sor.u32 %s718, %s719
      %s721 = sand.u32 15, %s720
      %v722 = vld [vmem:[%s712] sm:%s721]
      %v723 = vunpack.c.l.bf16 %v722
      %v724 = vunpack.c.h.bf16 %v722
      %v725 = vlaneseq
      %v726 = vand.u32 %v725, 127
      %vm728 = vcmp.lt.s32.totalorder %v726, 32
      %v729 = vsel %vm728, %v723, %v11
      %s730 = scalar_lea.vmem [#allocation12], 92
      %v731 = vpack.c.bf16 0.0, %v729
      %s733 = ssub.s32 16, 1
      %734 = vst [vmem:[%s730] sm:%s733] %v731
      %s735 = scalar_lea.vmem %s1, 96
      %s737 = sor.u32 255, 127
      %s738 = sand.u32 %s737, 85
      %s739 = sshrl.u32 %s738, 1
      %s740 = sor.u32 %s738, %s739
      %s741 = sand.u32 51, %s740
      %s742 = sshrl.u32 %s741, 2
      %s743 = sor.u32 %s741, %s742
      %s744 = sand.u32 15, %s743
      %v745 = vld [vmem:[%s735] sm:%s744]
      %v746 = vunpack.c.l.bf16 %v745
      %v747 = vunpack.c.h.bf16 %v745
      %v748 = vlaneseq
      %v749 = vand.u32 %v748, 127
      %vm751 = vcmp.lt.s32.totalorder %v749, 32
      %v752 = vsel %vm751, %v746, %v11
      %s753 = scalar_lea.vmem [#allocation12], 96
      %v754 = vpack.c.bf16 0.0, %v752
      %s756 = ssub.s32 16, 1
      %757 = vst [vmem:[%s753] sm:%s756] %v754
      %s758 = scalar_lea.vmem %s1, 100
      %s760 = sor.u32 255, 127
      %s761 = sand.u32 %s760, 85
      %s762 = sshrl.u32 %s761, 1
      %s763 = sor.u32 %s761, %s762
      %s764 = sand.u32 51, %s763
      %s765 = sshrl.u32 %s764, 2
      %s766 = sor.u32 %s764, %s765
      %s767 = sand.u32 15, %s766
      %v768 = vld [vmem:[%s758] sm:%s767]
      %v769 = vunpack.c.l.bf16 %v768
      %v770 = vunpack.c.h.bf16 %v768
      %v771 = vlaneseq
      %v772 = vand.u32 %v771, 127
      %vm774 = vcmp.lt.s32.totalorder %v772, 32
      %v775 = vsel %vm774, %v769, %v11
      %s776 = scalar_lea.vmem [#allocation12], 100
      %v777 = vpack.c.bf16 0.0, %v775
      %s779 = ssub.s32 16, 1
      %780 = vst [vmem:[%s776] sm:%s779] %v777
      %s781 = scalar_lea.vmem %s1, 104
      %s783 = sor.u32 255, 127
      %s784 = sand.u32 %s783, 85
      %s785 = sshrl.u32 %s784, 1
      %s786 = sor.u32 %s784, %s785
      %s787 = sand.u32 51, %s786
      %s788 = sshrl.u32 %s787, 2
      %s789 = sor.u32 %s787, %s788
      %s790 = sand.u32 15, %s789
      %v791 = vld [vmem:[%s781] sm:%s790]
      %v792 = vunpack.c.l.bf16 %v791
      %v793 = vunpack.c.h.bf16 %v791
      %v794 = vlaneseq
      %v795 = vand.u32 %v794, 127
      %vm797 = vcmp.lt.s32.totalorder %v795, 32
      %v798 = vsel %vm797, %v792, %v11
      %s799 = scalar_lea.vmem [#allocation12], 104
      %v800 = vpack.c.bf16 0.0, %v798
      %s802 = ssub.s32 16, 1
      %803 = vst [vmem:[%s799] sm:%s802] %v800
      %s804 = scalar_lea.vmem %s1, 108
      %s806 = sor.u32 255, 127
      %s807 = sand.u32 %s806, 85
      %s808 = sshrl.u32 %s807, 1
      %s809 = sor.u32 %s807, %s808
      %s810 = sand.u32 51, %s809
      %s811 = sshrl.u32 %s810, 2
      %s812 = sor.u32 %s810, %s811
      %s813 = sand.u32 15, %s812
      %v814 = vld [vmem:[%s804] sm:%s813]
      %v815 = vunpack.c.l.bf16 %v814
      %v816 = vunpack.c.h.bf16 %v814
      %v817 = vlaneseq
      %v818 = vand.u32 %v817, 127
      %vm820 = vcmp.lt.s32.totalorder %v818, 32
      %v821 = vsel %vm820, %v815, %v11
      %s822 = scalar_lea.vmem [#allocation12], 108
      %v823 = vpack.c.bf16 0.0, %v821
      %s825 = ssub.s32 16, 1
      %826 = vst [vmem:[%s822] sm:%s825] %v823
      %s827 = scalar_lea.vmem %s1, 112
      %s829 = sor.u32 255, 127
      %s830 = sand.u32 %s829, 85
      %s831 = sshrl.u32 %s830, 1
      %s832 = sor.u32 %s830, %s831
      %s833 = sand.u32 51, %s832
      %s834 = sshrl.u32 %s833, 2
      %s835 = sor.u32 %s833, %s834
      %s836 = sand.u32 15, %s835
      %v837 = vld [vmem:[%s827] sm:%s836]
      %v838 = vunpack.c.l.bf16 %v837
      %v839 = vunpack.c.h.bf16 %v837
      %v840 = vlaneseq
      %v841 = vand.u32 %v840, 127
      %vm843 = vcmp.lt.s32.totalorder %v841, 32
      %v844 = vsel %vm843, %v838, %v11
      %s845 = scalar_lea.vmem [#allocation12], 112
      %v846 = vpack.c.bf16 0.0, %v844
      %s848 = ssub.s32 16, 1
      %849 = vst [vmem:[%s845] sm:%s848] %v846
      %s850 = scalar_lea.vmem %s1, 116
      %s852 = sor.u32 255, 127
      %s853 = sand.u32 %s852, 85
      %s854 = sshrl.u32 %s853, 1
      %s855 = sor.u32 %s853, %s854
      %s856 = sand.u32 51, %s855
      %s857 = sshrl.u32 %s856, 2
      %s858 = sor.u32 %s856, %s857
      %s859 = sand.u32 15, %s858
      %v860 = vld [vmem:[%s850] sm:%s859]
      %v861 = vunpack.c.l.bf16 %v860
      %v862 = vunpack.c.h.bf16 %v860
      %v863 = vlaneseq
      %v864 = vand.u32 %v863, 127
      %vm866 = vcmp.lt.s32.totalorder %v864, 32
      %v867 = vsel %vm866, %v861, %v11
      %s868 = scalar_lea.vmem [#allocation12], 116
      %v869 = vpack.c.bf16 0.0, %v867
      %s871 = ssub.s32 16, 1
      %872 = vst [vmem:[%s868] sm:%s871] %v869
      %s873 = scalar_lea.vmem %s1, 120
      %s875 = sor.u32 255, 127
      %s876 = sand.u32 %s875, 85
      %s877 = sshrl.u32 %s876, 1
      %s878 = sor.u32 %s876, %s877
      %s879 = sand.u32 51, %s878
      %s880 = sshrl.u32 %s879, 2
      %s881 = sor.u32 %s879, %s880
      %s882 = sand.u32 15, %s881
      %v883 = vld [vmem:[%s873] sm:%s882]
      %v884 = vunpack.c.l.bf16 %v883
      %v885 = vunpack.c.h.bf16 %v883
      %v886 = vlaneseq
      %v887 = vand.u32 %v886, 127
      %vm889 = vcmp.lt.s32.totalorder %v887, 32
      %v890 = vsel %vm889, %v884, %v11
      %s891 = scalar_lea.vmem [#allocation12], 120
      %v892 = vpack.c.bf16 0.0, %v890
      %s894 = ssub.s32 16, 1
      %895 = vst [vmem:[%s891] sm:%s894] %v892
      %s896 = scalar_lea.vmem %s1, 124
      %s898 = sor.u32 255, 127
      %s899 = sand.u32 %s898, 85
      %s900 = sshrl.u32 %s899, 1
      %s901 = sor.u32 %s899, %s900
      %s902 = sand.u32 51, %s901
      %s903 = sshrl.u32 %s902, 2
      %s904 = sor.u32 %s902, %s903
      %s905 = sand.u32 15, %s904
      %v906 = vld [vmem:[%s896] sm:%s905]
      %v907 = vunpack.c.l.bf16 %v906
      %v908 = vunpack.c.h.bf16 %v906
      %v909 = vlaneseq
      %v910 = vand.u32 %v909, 127
      %vm912 = vcmp.lt.s32.totalorder %v910, 32
      %v913 = vsel %vm912, %v907, %v11
      %s914 = scalar_lea.vmem [#allocation12], 124
      %v915 = vpack.c.bf16 0.0, %v913
      %s917 = ssub.s32 16, 1
      %918 = vst [vmem:[%s914] sm:%s917] %v915
      %s919 = scalar_lea.vmem %s1, 128
      %s921 = sor.u32 255, 127
      %s922 = sand.u32 %s921, 85
      %s923 = sshrl.u32 %s922, 1
      %s924 = sor.u32 %s922, %s923
      %s925 = sand.u32 51, %s924
      %s926 = sshrl.u32 %s925, 2
      %s927 = sor.u32 %s925, %s926
      %s928 = sand.u32 15, %s927
      %v929 = vld [vmem:[%s919] sm:%s928]
      %v930 = vunpack.c.l.bf16 %v929
      %v931 = vunpack.c.h.bf16 %v929
      %v932 = vlaneseq
      %v933 = vand.u32 %v932, 127
      %vm935 = vcmp.lt.s32.totalorder %v933, 32
      %v936 = vsel %vm935, %v930, %v11
      %s937 = scalar_lea.vmem [#allocation12], 128
      %v938 = vpack.c.bf16 0.0, %v936
      %s940 = ssub.s32 16, 1
      %941 = vst [vmem:[%s937] sm:%s940] %v938
      %s942 = scalar_lea.vmem %s1, 132
      %s944 = sor.u32 255, 127
      %s945 = sand.u32 %s944, 85
      %s946 = sshrl.u32 %s945, 1
      %s947 = sor.u32 %s945, %s946
      %s948 = sand.u32 51, %s947
      %s949 = sshrl.u32 %s948, 2
      %s950 = sor.u32 %s948, %s949
      %s951 = sand.u32 15, %s950
      %v952 = vld [vmem:[%s942] sm:%s951]
      %v953 = vunpack.c.l.bf16 %v952
      %v954 = vunpack.c.h.bf16 %v952
      %v955 = vlaneseq
      %v956 = vand.u32 %v955, 127
      %vm958 = vcmp.lt.s32.totalorder %v956, 32
      %v959 = vsel %vm958, %v953, %v11
      %s960 = scalar_lea.vmem [#allocation12], 132
      %v961 = vpack.c.bf16 0.0, %v959
      %s963 = ssub.s32 16, 1
      %964 = vst [vmem:[%s960] sm:%s963] %v961
      %s965 = scalar_lea.vmem %s1, 136
      %s967 = sor.u32 255, 127
      %s968 = sand.u32 %s967, 85
      %s969 = sshrl.u32 %s968, 1
      %s970 = sor.u32 %s968, %s969
      %s971 = sand.u32 51, %s970
      %s972 = sshrl.u32 %s971, 2
      %s973 = sor.u32 %s971, %s972
      %s974 = sand.u32 15, %s973
      %v975 = vld [vmem:[%s965] sm:%s974]
      %v976 = vunpack.c.l.bf16 %v975
      %v977 = vunpack.c.h.bf16 %v975
      %v978 = vlaneseq
      %v979 = vand.u32 %v978, 127
      %vm981 = vcmp.lt.s32.totalorder %v979, 32
      %v982 = vsel %vm981, %v976, %v11
      %s983 = scalar_lea.vmem [#allocation12], 136
      %v984 = vpack.c.bf16 0.0, %v982
      %s986 = ssub.s32 16, 1
      %987 = vst [vmem:[%s983] sm:%s986] %v984
      %s988 = scalar_lea.vmem %s1, 140
      %s990 = sor.u32 255, 127
      %s991 = sand.u32 %s990, 85
      %s992 = sshrl.u32 %s991, 1
      %s993 = sor.u32 %s991, %s992
      %s994 = sand.u32 51, %s993
      %s995 = sshrl.u32 %s994, 2
      %s996 = sor.u32 %s994, %s995
      %s997 = sand.u32 15, %s996
      %v998 = vld [vmem:[%s988] sm:%s997]
      %v999 = vunpack.c.l.bf16 %v998
      %v1000 = vunpack.c.h.bf16 %v998
      %v1001 = vlaneseq
      %v1002 = vand.u32 %v1001, 127
      %vm1004 = vcmp.lt.s32.totalorder %v1002, 32
      %v1005 = vsel %vm1004, %v999, %v11
      %s1006 = scalar_lea.vmem [#allocation12], 140
      %v1007 = vpack.c.bf16 0.0, %v1005
      %s1009 = ssub.s32 16, 1
      %1010 = vst [vmem:[%s1006] sm:%s1009] %v1007
      %v1011 = vld [vmem:[%s3] sm:$0x1]
      %v1012 = vlaneseq
      %v1013 = vshrl.u32 %v1012, 7
      %vm1015 = vcmp.lt.s32.totalorder %v1013, 1
      %v1016 = vsel %vm1015, %v1011, %v15
      %v1017 = vlaneseq
      %v1018 = vand.u32 %v1017, 127
      %vm1020 = vcmp.lt.s32.totalorder %v1018, 32
      %v1021 = vsel %vm1020, %v1016, %v15
      %s1023 = ssub.s32 2, 1
      %1024 = vst [vmem:[#allocation13] sm:%s1023] %v1021
      %v1026 = vld [vmem:[%s177] sm:$0xff]
      %v1027 = vld [vmem:[%s177 + $0x8] sm:$0xf]
      %v1028 = vld [vmem:[%s177 + $0xc] sm:$0xff]
      %v1029 = vld [vmem:[%s177 + $0x14] sm:$0xf]
      %v1030 = vld [vmem:[#allocation12] sm:$0xf]
      %v1031 = vld [vmem:[#allocation12 + $0x4] sm:$0xf]
      %v1032 = vld [vmem:[#allocation12 + $0x8] sm:$0xf]
      %v1033 = vld [vmem:[#allocation12 + $0xc] sm:$0xf]
      %v1034 = vld [vmem:[#allocation12 + $0x10] sm:$0xf]
      %v1035 = vld [vmem:[#allocation12 + $0x14] sm:$0xf]
      %v1036 = vld [vmem:[#allocation12 + $0x18] sm:$0xf]
      %v1037 = vld [vmem:[#allocation12 + $0x1c] sm:$0xf]
      %v1038 = vld [vmem:[#allocation12 + $0x20] sm:$0xf]
      %v1039 = vld [vmem:[#allocation12 + $0x24] sm:$0xf]
      %v1040 = vld [vmem:[#allocation12 + $0x28] sm:$0xf]
      %v1041 = vld [vmem:[#allocation12 + $0x2c] sm:$0xf]
      %v1042 = vld [vmem:[#allocation12 + $0x30] sm:$0xf]
      %v1043 = vld [vmem:[#allocation12 + $0x34] sm:$0xf]
      %v1044 = vld [vmem:[#allocation12 + $0x38] sm:$0xf]
      %v1045 = vld [vmem:[#allocation12 + $0x3c] sm:$0xf]
      %v1046 = vld [vmem:[#allocation12 + $0x40] sm:$0xf]
      %v1047 = vld [vmem:[#allocation12 + $0x44] sm:$0xf]
      %v1048 = vld [vmem:[#allocation12 + $0x48] sm:$0xf]
      %v1049 = vld [vmem:[#allocation12 + $0x4c] sm:$0xf]
      %v1050 = vld [vmem:[#allocation12 + $0x50] sm:$0xf]
      %v1051 = vld [vmem:[#allocation12 + $0x54] sm:$0xf]
      %v1052 = vld [vmem:[#allocation12 + $0x58] sm:$0xf]
      %v1053 = vld [vmem:[#allocation12 + $0x5c] sm:$0xf]
      %v1054 = vld [vmem:[#allocation12 + $0x60] sm:$0xf]
      %v1055 = vld [vmem:[#allocation12 + $0x64] sm:$0xf]
      %v1056 = vld [vmem:[#allocation12 + $0x68] sm:$0xf]
      %v1057 = vld [vmem:[#allocation12 + $0x6c] sm:$0xf]
      %v1058 = vld [vmem:[#allocation12 + $0x70] sm:$0xf]
      %v1059 = vld [vmem:[#allocation12 + $0x74] sm:$0xf]
      %v1060 = vld [vmem:[#allocation12 + $0x78] sm:$0xf]
      %v1061 = vld [vmem:[#allocation12 + $0x7c] sm:$0xf]
      %v1062 = vld [vmem:[#allocation12 + $0x80] sm:$0xf]
      %v1063 = vld [vmem:[#allocation12 + $0x84] sm:$0xf]
      %v1064 = vld [vmem:[#allocation12 + $0x88] sm:$0xf]
      %v1065 = vld [vmem:[#allocation12 + $0x8c] sm:$0xf]
      %v1066 = vld [vmem:[#allocation13] sm:$0x1]
      %v1068 = vlaneseq
      %v1069 = vshrl.u32 %v1068, 7
      %v1070 = vsub.s32 0, %v1069
      %v1071 = vrot.slane %v1066, %v1070
      %v1077 = vunpack.c.l.b16 %v1026
      %v1078 = vunpack.c.h.b16 %v1026
      %v1079 = vunpack.c.l.b16 %v1027
      %v1080 = vunpack.c.l.b16 %v1028
      %v1081 = vunpack.c.h.b16 %v1028
      %v1082 = vunpack.c.l.b16 %v1029
      %v1083 = vpack.c.b16 %v1080, %v1077
      %v1084 = vpack.c.b16 %v1081, %v1078
      %v1085 = vpack.c.b16 %v1082, %v1079
      %v1124 = vunpack.c.l.b16 %v1030
      %v1125 = vunpack.c.l.b16 %v1031
      %v1126 = vunpack.c.l.b16 %v1032
      %v1127 = vunpack.c.l.b16 %v1033
      %v1128 = vunpack.c.l.b16 %v1034
      %v1129 = vunpack.c.l.b16 %v1035
      %v1130 = vunpack.c.l.b16 %v1036
      %v1131 = vunpack.c.l.b16 %v1037
      %v1132 = vunpack.c.l.b16 %v1038
      %v1133 = vunpack.c.l.b16 %v1039
      %v1134 = vunpack.c.l.b16 %v1040
      %v1135 = vunpack.c.l.b16 %v1041
      %v1136 = vunpack.c.l.b16 %v1042
      %v1137 = vunpack.c.l.b16 %v1043
      %v1138 = vunpack.c.l.b16 %v1044
      %v1139 = vunpack.c.l.b16 %v1045
      %v1140 = vunpack.c.l.b16 %v1046
      %v1141 = vunpack.c.l.b16 %v1047
      %v1142 = vunpack.c.l.b16 %v1048
      %v1143 = vunpack.c.l.b16 %v1049
      %v1144 = vunpack.c.l.b16 %v1050
      %v1145 = vunpack.c.l.b16 %v1051
      %v1146 = vunpack.c.l.b16 %v1052
      %v1147 = vunpack.c.l.b16 %v1053
      %v1148 = vunpack.c.l.b16 %v1054
      %v1149 = vunpack.c.l.b16 %v1055
      %v1150 = vunpack.c.l.b16 %v1056
      %v1151 = vunpack.c.l.b16 %v1057
      %v1152 = vunpack.c.l.b16 %v1058
      %v1153 = vunpack.c.l.b16 %v1059
      %v1154 = vunpack.c.l.b16 %v1060
      %v1155 = vunpack.c.l.b16 %v1061
      %v1156 = vunpack.c.l.b16 %v1062
      %v1157 = vunpack.c.l.b16 %v1063
      %v1158 = vunpack.c.l.b16 %v1064
      %v1159 = vunpack.c.l.b16 %v1065
      %v1160 = vpack.c.b16 %v1125, %v1124
      %v1161 = vpack.c.b16 %v1127, %v1126
      %v1162 = vpack.c.b16 %v1129, %v1128
      %v1163 = vpack.c.b16 %v1131, %v1130
      %v1164 = vpack.c.b16 %v1133, %v1132
      %v1165 = vpack.c.b16 %v1135, %v1134
      %v1166 = vpack.c.b16 %v1137, %v1136
      %v1167 = vpack.c.b16 %v1139, %v1138
      %v1168 = vpack.c.b16 %v1141, %v1140
      %v1169 = vpack.c.b16 %v1143, %v1142
      %v1170 = vpack.c.b16 %v1145, %v1144
      %v1171 = vpack.c.b16 %v1147, %v1146
      %v1172 = vpack.c.b16 %v1149, %v1148
      %v1173 = vpack.c.b16 %v1151, %v1150
      %v1174 = vpack.c.b16 %v1153, %v1152
      %v1175 = vpack.c.b16 %v1155, %v1154
      %v1176 = vpack.c.b16 %v1157, %v1156
      %v1177 = vpack.c.b16 %v1159, %v1158
      %vm1196 = vcmask 261120
      %v1198 = vsel %vm1196, %v1085, 0
      %1200 = vmatprep.subr.bf16.mxu0 0
      %1201 = vmatpush1.bf16.msra.mxu0 %v1167
      %1202 = vmatprep.subr.bf16.mxu0 0
      %1203 = vmatpush1.bf16.msra.mxu0 %v1166
      %1204 = vmatprep.subr.bf16.mxu0 0
      %1205 = vmatpush1.bf16.msra.mxu0 %v1165
      %1206 = vmatprep.subr.bf16.mxu0 0
      %1207 = vmatpush1.bf16.msra.mxu0 %v1164
      %1208 = vmatprep.subr.bf16.mxu0 0
      %1209 = vmatpush1.bf16.msra.mxu0 %v1163
      %1210 = vmatprep.subr.bf16.mxu0 0
      %1211 = vmatpush1.bf16.msra.mxu0 %v1162
      %1212 = vmatprep.subr.bf16.mxu0 0
      %1213 = vmatpush1.bf16.msra.mxu0 %v1161
      %1214 = vmatprep.subr.bf16.mxu0 0
      %1215 = vmatpush1.bf16.msra.mxu0 %v1160
      %1216 = vmatprep.subr.bf16.mxu0 0
      %1217 = vmatpush2.bf16.msra.mxu0 %v1175
      %1218 = vmatprep.subr.bf16.mxu0 0
      %1219 = vmatpush2.bf16.msra.mxu0 %v1174
      %1220 = vmatprep.subr.bf16.mxu0 0
      %1221 = vmatpush2.bf16.msra.mxu0 %v1173
      %1222 = vmatprep.subr.bf16.mxu0 0
      %1223 = vmatpush2.bf16.msra.mxu0 %v1172
      %1224 = vmatprep.subr.bf16.mxu0 0
      %1225 = vmatpush2.bf16.msra.mxu0 %v1171
      %1226 = vmatprep.subr.bf16.mxu0 0
      %1227 = vmatpush2.bf16.msra.mxu0 %v1170
      %1228 = vmatprep.subr.bf16.mxu0 0
      %1229 = vmatpush2.bf16.msra.mxu0 %v1169
      %1230 = vmatprep.subr.bf16.mxu0 0
      %1231 = vmatpush2.bf16.msra.mxu0 %v1168
      %1232 = vmatprep.mubr.bf16.mxu0 %v1084
      %1233 = vmatmul.mubr.bf16.gmra.mxu0 %v1083
      %v1234 = vpop.f32.mrf.mxu0
      %v1235 = vadd.f32 %v1071, %v1234
      %v1236 = vpop.f32.mrf.mxu0
      %v1237 = vpop.f32.mrf.mxu0
      %v1238 = vadd.f32 %v1071, %v1237
      %v1239 = vpop.f32.mrf.mxu0
      %1240 = vdwg.mxu0
      %1241 = vmatprep.subr.bf16.mxu0 0
      %1242 = vmatpush1.bf16.msra.mxu0 0
      %1243 = vmatprep.subr.bf16.mxu0 0
      %1244 = vmatpush1.bf16.msra.mxu0 0
      %1245 = vmatprep.subr.bf16.mxu0 0
      %1246 = vmatpush1.bf16.msra.mxu0 0
      %1247 = vmatprep.subr.bf16.mxu0 0
      %1248 = vmatpush1.bf16.msra.mxu0 0
      %1249 = vmatprep.subr.bf16.mxu0 0
      %1250 = vmatpush1.bf16.msra.mxu0 0
      %1251 = vmatprep.subr.bf16.mxu0 0
      %1252 = vmatpush1.bf16.msra.mxu0 0
      %1253 = vmatprep.subr.bf16.mxu0 0
      %1254 = vmatpush1.bf16.msra.mxu0 %v1177
      %1255 = vmatprep.subr.bf16.mxu0 0
      %1256 = vmatpush1.bf16.msra.mxu0 %v1176
      %1257 = vmatprep.subr.bf16.mxu0 0
      %1258 = vmatpush2.bf16.msra.mxu0 0
      %1259 = vmatprep.subr.bf16.mxu0 0
      %1260 = vmatpush2.bf16.msra.mxu0 0
      %1261 = vmatprep.subr.bf16.mxu0 0
      %1262 = vmatpush2.bf16.msra.mxu0 0
      %1263 = vmatprep.subr.bf16.mxu0 0
      %1264 = vmatpush2.bf16.msra.mxu0 0
      %1265 = vmatprep.subr.bf16.mxu0 0
      %1266 = vmatpush2.bf16.msra.mxu0 0
      %1267 = vmatprep.subr.bf16.mxu0 0
      %1268 = vmatpush2.bf16.msra.mxu0 0
      %1269 = vmatprep.subr.bf16.mxu0 0
      %1270 = vmatpush2.bf16.msra.mxu0 0
      %1271 = vmatprep.subr.bf16.mxu0 0
      %1272 = vmatpush2.bf16.msra.mxu0 0
      %1273 = vmatprep.mubr.bf16.mxu0 0
      %1274 = vmatmul.mubr.bf16.gmra.mxu0 %v1198
      %v1275 = vpop.f32.mrf.mxu0
      %v1276 = vadd.f32 %v1235, %v1275
      %v1277 = vpop.f32.mrf.mxu0
      %v1278 = vpop.f32.mrf.mxu0
      %v1279 = vadd.f32 %v1238, %v1278
      %v1280 = vpop.f32.mrf.mxu0
      %1281 = vdwg.mxu0
      %1282 = vst [vmem:[%s183] sm:$0xff] %v1276
      %1283 = vst [vmem:[%s183 + $0x8] sm:$0xff] %v1279
      %s1284 = smul.u32 2, %s22
      %p1285 = scmp.lt.s32.totalorder %s1284, 3
      %s1286 = scalar_select %p1285, %s1284, 3
      %s1287 = smul.addr %s1286, 8
      %s1288 = scalar_lea.vmem %s5, %s1287
      // Predicated region
      $region33: #{encoder_forward.19} parent=31 // pred_check
        %p1289 = pneg %p108
      $region34: #{encoder_forward.19} parent=31 // pred_check_branch
        %1291 = sbr.rel (%p1289) target = $region36
      $region35: #{encoder_forward.19} parent=31 // pred_region
        %s1292 = smul.u32 2, %s22
      $region36: #{encoder_forward.19} parent=31 // pred_fallthru
        _
    $region32: #{encoder_forward.19} parent=5 // pred_fallthru
      _
    %p1293 = scmp.le.s32.totalorder 2, %s17
    // Predicated region
    $region37: #{encoder_forward.19} parent=5 // pred_check
      %p1294 = pneg %p1293
    $region38: #{encoder_forward.19} parent=5 // pred_check_branch
      %1296 = sbr.rel (%p1294) target = $region40
    $region39: #{encoder_forward.19} parent=5 // pred_region
      %s1297 = ssub.s32 %s17, 2
      // Predicated region
      $region41: #{encoder_forward.19} parent=39 // pred_check
        %p1298 = pneg %p114
      $region42: #{encoder_forward.19} parent=39 // pred_check_branch
        %1300 = sbr.rel (%p1298) target = $region44
      $region43: #{encoder_forward.19} parent=39 // pred_region
        %s1301 = smul.u32 2, %s23
        %p1302 = scmp.lt.s32.totalorder %s1301, 3
        %s1303 = scalar_select %p1302, %s1301, 3
        %s1304 = smul.addr %s1303, 8
        %s1305 = scalar_lea.vmem %s5, %s1304
      $region44: #{encoder_forward.19} parent=39 // pred_fallthru
        _
    $region40: #{encoder_forward.19} parent=5 // pred_fallthru
      _
  $region6: #{encoder_forward.19} parent=0 // loop_footer
    %s21 = sadd.s32 1, %s17
  $region7: #{encoder_forward.19} parent=0 // loop_footer_branch
    %16 = sbr.rel target = $region3
  $region8: #{encoder_forward.19} parent=0 // loop_exit
    _

// kernel: encoder_forward.20
$region0: #{encoder_forward.20}
  #allocation0 [shape = 'u32[]', space=smem, size = 0x4, offset = 0x4, fixed_abs, tag = 'smem constant byte address 0x4 - core index']
  #allocation1 [shape = 'u32[144,128]{1,0:T(1,128)}', space=vmem, size = 0x12000, scoped, tag = 'internal scratch']
  #allocation2 [shape = 'u32[2048]{0}', space=vmem, size = 0x2000, scoped, tag = 'scoped memory for encoder_forward.20']
  #allocation3 [shape = 'u32[2048]{0}', space=vmem, size = 0x2000, scoped, tag = 'scoped memory for encoder_forward.20']
  #allocation4 [shape = 'u32[2048]{0}', space=vmem, size = 0x2000, scoped, tag = 'scoped memory for encoder_forward.20']
  #allocation5 [shape = 'u32[2048]{0}', space=vmem, size = 0x2000, scoped, tag = 'scoped memory for encoder_forward.20']
  #allocation6 [shape = 'u32[2048]{0}', space=vmem, size = 0x2000, scoped, tag = 'scoped memory for encoder_forward.20']
  #allocation7 [shape = 'u32[2048]{0}', space=vmem, size = 0x2000, scoped, tag = 'scoped memory for encoder_forward.20']
  #allocation8 [shape = 'u32[2048]{0}', space=vmem, size = 0x2000, scoped, tag = 'scoped memory for encoder_forward.20']
  #allocation9 [shape = 'u32[2048]{0}', space=vmem, size = 0x2000, scoped, tag = 'scoped memory for encoder_forward.20']
  #allocation10 [shape = 'u32[2048]{0}', space=vmem, size = 0x2000, scoped, tag = 'scoped memory for encoder_forward.20']
  #allocation11 [shape = 'u32[2048]{0}', space=vmem, size = 0x2000, scoped, tag = 'scoped memory for encoder_forward.20']
  %s0 = inlined_call_operand.vmem [shape: bf16[32,288], index: 0, kind: input, shape index: {}]
  %s1 = inlined_call_operand.vmem [shape: bf16[288,16], index: 1, kind: input, shape index: {}]
  %s2 = inlined_call_operand.<no memory space> [shape: bf16[], index: 2, kind: input, shape index: {}]
  %s3 = inlined_call_operand.vmem [shape: f32[1,16], index: 3, kind: input, shape index: {}]
  %s4 = inlined_call_operand.<no memory space> [shape: f32[], index: 4, kind: input, shape index: {}]
  %s5 = inlined_call_operand.vmem [shape: bf16[32,128], index: 5, kind: output, shape index: {}]
  %s6 = sld [smem:[#allocation0]]
  $region45: #{encoder_forward.20} parent=0
    _
  %s8 = ssub.s32 1, %s6
  %s9 = scalar_select 0, %s8, %s6
  %v10 = vstv %s2
  %v11 = vunpack.i.l.bf16 %v10
  %v13 = vunpack.i.h.bf16 %v10
  %v15 = vstv %s4
  loop: start=0, step=1, limit=4
  $region2: #{encoder_forward.20} parent=0 // loop_pre_header
    _
  $region3: #{encoder_forward.20} parent=0 // loop_header
    %s17 = sphi 0, %s21
    %p18 = scmp.ge.s32.totalorder %s17, 4
    %s27 = sphi 0, %s29
    %s30 = sphi 0, %s27
    %s31 = sphi 0, %s30
    %s47 = sphi 0, %s31
    %s51 = sphi 0, %s51
    %s53 = sphi 0, %s51
    %s54 = sphi 0, %s53
    %s68 = sphi 0, %s54
    %s72 = sphi 0, %s72
    %s74 = sphi 0, %s72
    %s75 = sphi 0, %s74
    %s89 = sphi 0, %s75
    %s95 = sphi 0, %s97
    %s98 = sphi 0, %s95
    %s99 = sphi 0, %s98
    %s115 = sphi 0, %s99
  $region4: #{encoder_forward.20} parent=0 // loop_header_branch
    %20 = sbr.rel (%p18) target = $region8
  $region5: #{encoder_forward.20} parent=0 // loop_body
    %s22 = ssub.s32 %s17, 1
    %s23 = ssub.s32 %s17, 2
    %s24 = sadd.s32 %s17, 1
    %s25 = ssub.s32 %s17, %s24
    %p26 = scmp.eq.s32.totalorder %s25, 0
    %s28 = sadd.s32 %s27, 1
    %s29 = scalar_select %p26, %s27, %s28
    %p32 = pneg %p26
    %p33 = scmp.eq.s32.totalorder %s17, 1
    %p34 = por %p32, %p33
    %p35 = scmp.ne.s32.totalorder %s27, %s30
    %p36 = scmp.eq.s32.totalorder %s17, 0
    %p37 = por %p35, %p36
    %p38 = scmp.ne.s32.totalorder %s27, %s30
    %p39 = scmp.eq.s32.totalorder %s22, 1
    %p40 = por %p38, %p39
    %p41 = scmp.ne.s32.totalorder %s30, %s31
    %p42 = scmp.eq.s32.totalorder %s22, 0
    %p43 = por %p41, %p42
    %p44 = scmp.ne.s32.totalorder %s30, %s31
    %p45 = scmp.eq.s32.totalorder %s23, 1
    %p46 = por %p44, %p45
    %p48 = scmp.ne.s32.totalorder %s31, %s47
    %p49 = scmp.eq.s32.totalorder %s23, 0
    %p50 = por %p48, %p49
    %s52 = sadd.s32 %s51, 1
    %p55 = scmp.eq.s32.totalorder %s17, 1
    %p56 = scmp.ne.s32.totalorder %s51, %s53
    %p57 = scmp.eq.s32.totalorder %s17, 0
    %p58 = por %p56, %p57
    %p59 = scmp.ne.s32.totalorder %s51, %s53
    %p60 = scmp.eq.s32.totalorder %s22, 1
    %p61 = por %p59, %p60
    %p62 = scmp.ne.s32.totalorder %s53, %s54
    %p63 = scmp.eq.s32.totalorder %s22, 0
    %p64 = por %p62, %p63
    %p65 = scmp.ne.s32.totalorder %s53, %s54
    %p66 = scmp.eq.s32.totalorder %s23, 1
    %p67 = por %p65, %p66
    %p69 = scmp.ne.s32.totalorder %s54, %s68
    %p70 = scmp.eq.s32.totalorder %s23, 0
    %p71 = por %p69, %p70
    %s73 = sadd.s32 %s72, 1
    %p76 = scmp.eq.s32.totalorder %s17, 1
    %p77 = scmp.ne.s32.totalorder %s72, %s74
    %p78 = scmp.eq.s32.totalorder %s17, 0
    %p79 = por %p77, %p78
    %p80 = scmp.ne.s32.totalorder %s72, %s74
    %p81 = scmp.eq.s32.totalorder %s22, 1
    %p82 = por %p80, %p81
    %p83 = scmp.ne.s32.totalorder %s74, %s75
    %p84 = scmp.eq.s32.totalorder %s22, 0
    %p85 = por %p83, %p84
    %p86 = scmp.ne.s32.totalorder %s74, %s75
    %p87 = scmp.eq.s32.totalorder %s23, 1
    %p88 = por %p86, %p87
    %p90 = scmp.ne.s32.totalorder %s75, %s89
    %p91 = scmp.eq.s32.totalorder %s23, 0
    %p92 = por %p90, %p91
    %s93 = ssub.s32 %s17, %s24
    %p94 = scmp.eq.s32.totalorder %s93, 0
    %s96 = sadd.s32 %s95, 1
    %s97 = scalar_select %p94, %s95, %s96
    %p100 = pneg %p94
    %p101 = scmp.eq.s32.totalorder %s17, 1
    %p102 = por %p100, %p101
    %p103 = scmp.ne.s32.totalorder %s95, %s98
    %p104 = scmp.eq.s32.totalorder %s17, 0
    %p105 = por %p103, %p104
    %p106 = scmp.ne.s32.totalorder %s95, %s98
    %p107 = scmp.eq.s32.totalorder %s22, 1
    %p108 = por %p106, %p107
    %p109 = scmp.ne.s32.totalorder %s98, %s99
    %p110 = scmp.eq.s32.totalorder %s22, 0
    %p111 = por %p109, %p110
    %p112 = scmp.ne.s32.totalorder %s98, %s99
    %p113 = scmp.eq.s32.totalorder %s23, 1
    %p114 = por %p112, %p113
    %p116 = scmp.ne.s32.totalorder %s99, %s115
    %p117 = scmp.eq.s32.totalorder %s23, 0
    %p118 = por %p116, %p117
    %p119 = scmp.le.s32.totalorder 1, %s17
    %p120 = scmp.lt.s32.totalorder %s17, 3
    %p121 = pnand %p119, %p120
    %p122 = pneg %p121
    // Predicated region
    $region9: #{encoder_forward.20} parent=5 // pred_check
      _
    $region10: #{encoder_forward.20} parent=5 // pred_check_branch
      %124 = sbr.rel (%p121) target = $region12
    $region11: #{encoder_forward.20} parent=5 // pred_region
      %s125 = ssub.s32 %s17, 1
      // Predicated region
      $region13: #{encoder_forward.20} parent=11 // pred_check
        %p126 = pneg %p64
      $region14: #{encoder_forward.20} parent=11 // pred_check_branch
        %128 = sbr.rel (%p126) target = $region16
      $region15: #{encoder_forward.20} parent=11 // pred_region
        _
      $region16: #{encoder_forward.20} parent=11 // pred_fallthru
        _
      // Predicated region
      $region17: #{encoder_forward.20} parent=11 // pred_check
        %p129 = pneg %p85
      $region18: #{encoder_forward.20} parent=11 // pred_check_branch
        %131 = sbr.rel (%p129) target = $region20
      $region19: #{encoder_forward.20} parent=11 // pred_region
        _
      $region20: #{encoder_forward.20} parent=11 // pred_fallthru
        _
    $region12: #{encoder_forward.20} parent=5 // pred_fallthru
      _
    %p132 = scmp.lt.s32.totalorder %s17, 2
    // Predicated region
    $region21: #{encoder_forward.20} parent=5 // pred_check
      %p133 = pneg %p132
    $region22: #{encoder_forward.20} parent=5 // pred_check_branch
      %135 = sbr.rel (%p133) target = $region24
    $region23: #{encoder_forward.20} parent=5 // pred_region
      // Predicated region
      $region25: #{encoder_forward.20} parent=23 // pred_check
        %p136 = pneg %p37
      $region26: #{encoder_forward.20} parent=23 // pred_check_branch
        %138 = sbr.rel (%p136) target = $region28
      $region27: #{encoder_forward.20} parent=23 // pred_region
        %s139 = smul.u32 2, %s17
        %p140 = scmp.lt.s32.totalorder %s139, 3
        %s141 = scalar_select %p140, %s139, 3
        %s142 = smul.addr %s141, 3
        %s143 = smul.addr %s142, 4
        %s144 = scalar_lea.vmem %s0, %s143
        %s145 = smul.u32 2, %s17
      $region28: #{encoder_forward.20} parent=23 // pred_fallthru
        _
    $region24: #{encoder_forward.20} parent=5 // pred_fallthru
      _
    %p146 = scmp.le.s32.totalorder 1, %s17
    %p147 = scmp.lt.s32.totalorder %s17, 3
    %p148 = pnand %p146, %p147
    %p149 = pneg %p148
    // Predicated region
    $region29: #{encoder_forward.20} parent=5 // pred_check
      _
    $region30: #{encoder_forward.20} parent=5 // pred_check_branch
      %151 = sbr.rel (%p148) target = $region32
    $region31: #{encoder_forward.20} parent=5 // pred_region
      #allocation12 [shape = 'u8[73728]{0}', space=vmem, size = 0x12000, dematerialized = true, scoped, tag = 'FusionAdapter Buffer %fusion.5 = bf16[288,128]{1,0:T(8,128)(2,1)} fusion(%param_1.111, %param_2.29), kind=kLoop, calls=%fused_computation.23.clone, metadata={op_name="jit(encoder_forward)/jit(_pad)/pad" stack_frame_id=106}']
      #allocation13 [shape = 'u8[512]{0}', space=vmem, size = 0x400, dematerialized = true, scoped, tag = 'FusionAdapter Buffer %fusion.29 = f32[1,128]{1,0:T(1,128)} fusion(%param_3.16, %param_4.9), kind=kLoop, calls=%fused_computation.96.clone, metadata={op_name="jit(encoder_forward)/jit(_pad)/pad" stack_frame_id=107}']
      %s152 = ssub.s32 %s17, 1
      %s153 = smul.u32 2, %s22
      %p154 = scmp.lt.s32.totalorder %s153, 3
      %s155 = scalar_select %p154, %s153, 3
      %s156 = smul.addr %s155, 3
      %s157 = smul.addr %s156, 4
      %s158 = scalar_lea.vmem %s0, %s157
      %p159 = pneg %p43
      %p160 = pneg %p40
      %p161 = pneg %p64
      %p162 = pneg %p61
      %p163 = pneg %p85
      %p164 = pneg %p82
      %p165 = pneg %p111
      %p166 = pneg %p108
      %s167 = smul.u32 2, %s22
      %p168 = scmp.lt.s32.totalorder %s167, 3
      %s169 = scalar_select %p168, %s167, 3
      %s170 = smul.addr %s169, 4
      %s171 = scalar_lea.vmem %s5, %s170
      %s172 = smul.u32 2, %s22
      %p173 = scmp.lt.s32.totalorder %s172, 3
      %s174 = scalar_select %p173, %s172, 3
      %s175 = smul.addr %s174, 3
      %s176 = smul.addr %s175, 4
      %s177 = scalar_lea.vmem %s0, %s176
      %s178 = smul.u32 2, %s22
      %s179 = smul.u32 2, %s22
      %p180 = scmp.lt.s32.totalorder %s179, 3
      %s181 = scalar_select %p180, %s179, 3
      %s182 = smul.addr %s181, 4
      %s183 = scalar_lea.vmem %s5, %s182
      %s184 = smul.u32 2, %s22
      %s186 = sor.u32 255, 127
      %s187 = sand.u32 %s186, 85
      %s188 = sshrl.u32 %s187, 1
      %s189 = sor.u32 %s187, %s188
      %s190 = sand.u32 51, %s189
      %s191 = sshrl.u32 %s190, 2
      %s192 = sor.u32 %s190, %s191
      %s193 = sand.u32 15, %s192
      %v194 = vld [vmem:[%s1] sm:%s193]
      %v195 = vunpack.c.l.bf16 %v194
      %v196 = vunpack.c.h.bf16 %v194
      %v197 = vlaneseq
      %v198 = vand.u32 %v197, 127
      %vm200 = vcmp.lt.s32.totalorder %v198, 16
      %v201 = vsel %vm200, %v195, %v11
      %v202 = vpack.c.bf16 0.0, %v201
      %s204 = ssub.s32 16, 1
      %205 = vst [vmem:[#allocation12] sm:%s204] %v202
      %s206 = scalar_lea.vmem %s1, 4
      %s208 = sor.u32 255, 127
      %s209 = sand.u32 %s208, 85
      %s210 = sshrl.u32 %s209, 1
      %s211 = sor.u32 %s209, %s210
      %s212 = sand.u32 51, %s211
      %s213 = sshrl.u32 %s212, 2
      %s214 = sor.u32 %s212, %s213
      %s215 = sand.u32 15, %s214
      %v216 = vld [vmem:[%s206] sm:%s215]
      %v217 = vunpack.c.l.bf16 %v216
      %v218 = vunpack.c.h.bf16 %v216
      %v219 = vlaneseq
      %v220 = vand.u32 %v219, 127
      %vm222 = vcmp.lt.s32.totalorder %v220, 16
      %v223 = vsel %vm222, %v217, %v11
      %s224 = scalar_lea.vmem [#allocation12], 4
      %v225 = vpack.c.bf16 0.0, %v223
      %s227 = ssub.s32 16, 1
      %228 = vst [vmem:[%s224] sm:%s227] %v225
      %s229 = scalar_lea.vmem %s1, 8
      %s231 = sor.u32 255, 127
      %s232 = sand.u32 %s231, 85
      %s233 = sshrl.u32 %s232, 1
      %s234 = sor.u32 %s232, %s233
      %s235 = sand.u32 51, %s234
      %s236 = sshrl.u32 %s235, 2
      %s237 = sor.u32 %s235, %s236
      %s238 = sand.u32 15, %s237
      %v239 = vld [vmem:[%s229] sm:%s238]
      %v240 = vunpack.c.l.bf16 %v239
      %v241 = vunpack.c.h.bf16 %v239
      %v242 = vlaneseq
      %v243 = vand.u32 %v242, 127
      %vm245 = vcmp.lt.s32.totalorder %v243, 16
      %v246 = vsel %vm245, %v240, %v11
      %s247 = scalar_lea.vmem [#allocation12], 8
      %v248 = vpack.c.bf16 0.0, %v246
      %s250 = ssub.s32 16, 1
      %251 = vst [vmem:[%s247] sm:%s250] %v248
      %s252 = scalar_lea.vmem %s1, 12
      %s254 = sor.u32 255, 127
      %s255 = sand.u32 %s254, 85
      %s256 = sshrl.u32 %s255, 1
      %s257 = sor.u32 %s255, %s256
      %s258 = sand.u32 51, %s257
      %s259 = sshrl.u32 %s258, 2
      %s260 = sor.u32 %s258, %s259
      %s261 = sand.u32 15, %s260
      %v262 = vld [vmem:[%s252] sm:%s261]
      %v263 = vunpack.c.l.bf16 %v262
      %v264 = vunpack.c.h.bf16 %v262
      %v265 = vlaneseq
      %v266 = vand.u32 %v265, 127
      %vm268 = vcmp.lt.s32.totalorder %v266, 16
      %v269 = vsel %vm268, %v263, %v11
      %s270 = scalar_lea.vmem [#allocation12], 12
      %v271 = vpack.c.bf16 0.0, %v269
      %s273 = ssub.s32 16, 1
      %274 = vst [vmem:[%s270] sm:%s273] %v271
      %s275 = scalar_lea.vmem %s1, 16
      %s277 = sor.u32 255, 127
      %s278 = sand.u32 %s277, 85
      %s279 = sshrl.u32 %s278, 1
      %s280 = sor.u32 %s278, %s279
      %s281 = sand.u32 51, %s280
      %s282 = sshrl.u32 %s281, 2
      %s283 = sor.u32 %s281, %s282
      %s284 = sand.u32 15, %s283
      %v285 = vld [vmem:[%s275] sm:%s284]
      %v286 = vunpack.c.l.bf16 %v285
      %v287 = vunpack.c.h.bf16 %v285
      %v288 = vlaneseq
      %v289 = vand.u32 %v288, 127
      %vm291 = vcmp.lt.s32.totalorder %v289, 16
      %v292 = vsel %vm291, %v286, %v11
      %s293 = scalar_lea.vmem [#allocation12], 16
      %v294 = vpack.c.bf16 0.0, %v292
      %s296 = ssub.s32 16, 1
      %297 = vst [vmem:[%s293] sm:%s296] %v294
      %s298 = scalar_lea.vmem %s1, 20
      %s300 = sor.u32 255, 127
      %s301 = sand.u32 %s300, 85
      %s302 = sshrl.u32 %s301, 1
      %s303 = sor.u32 %s301, %s302
      %s304 = sand.u32 51, %s303
      %s305 = sshrl.u32 %s304, 2
      %s306 = sor.u32 %s304, %s305
      %s307 = sand.u32 15, %s306
      %v308 = vld [vmem:[%s298] sm:%s307]
      %v309 = vunpack.c.l.bf16 %v308
      %v310 = vunpack.c.h.bf16 %v308
      %v311 = vlaneseq
      %v312 = vand.u32 %v311, 127
      %vm314 = vcmp.lt.s32.totalorder %v312, 16
      %v315 = vsel %vm314, %v309, %v11
      %s316 = scalar_lea.vmem [#allocation12], 20
      %v317 = vpack.c.bf16 0.0, %v315
      %s319 = ssub.s32 16, 1
      %320 = vst [vmem:[%s316] sm:%s319] %v317
      %s321 = scalar_lea.vmem %s1, 24
      %s323 = sor.u32 255, 127
      %s324 = sand.u32 %s323, 85
      %s325 = sshrl.u32 %s324, 1
      %s326 = sor.u32 %s324, %s325
      %s327 = sand.u32 51, %s326
      %s328 = sshrl.u32 %s327, 2
      %s329 = sor.u32 %s327, %s328
      %s330 = sand.u32 15, %s329
      %v331 = vld [vmem:[%s321] sm:%s330]
      %v332 = vunpack.c.l.bf16 %v331
      %v333 = vunpack.c.h.bf16 %v331
      %v334 = vlaneseq
      %v335 = vand.u32 %v334, 127
      %vm337 = vcmp.lt.s32.totalorder %v335, 16
      %v338 = vsel %vm337, %v332, %v11
      %s339 = scalar_lea.vmem [#allocation12], 24
      %v340 = vpack.c.bf16 0.0, %v338
      %s342 = ssub.s32 16, 1
      %343 = vst [vmem:[%s339] sm:%s342] %v340
      %s344 = scalar_lea.vmem %s1, 28
      %s346 = sor.u32 255, 127
      %s347 = sand.u32 %s346, 85
      %s348 = sshrl.u32 %s347, 1
      %s349 = sor.u32 %s347, %s348
      %s350 = sand.u32 51, %s349
      %s351 = sshrl.u32 %s350, 2
      %s352 = sor.u32 %s350, %s351
      %s353 = sand.u32 15, %s352
      %v354 = vld [vmem:[%s344] sm:%s353]
      %v355 = vunpack.c.l.bf16 %v354
      %v356 = vunpack.c.h.bf16 %v354
      %v357 = vlaneseq
      %v358 = vand.u32 %v357, 127
      %vm360 = vcmp.lt.s32.totalorder %v358, 16
      %v361 = vsel %vm360, %v355, %v11
      %s362 = scalar_lea.vmem [#allocation12], 28
      %v363 = vpack.c.bf16 0.0, %v361
      %s365 = ssub.s32 16, 1
      %366 = vst [vmem:[%s362] sm:%s365] %v363
      %s367 = scalar_lea.vmem %s1, 32
      %s369 = sor.u32 255, 127
      %s370 = sand.u32 %s369, 85
      %s371 = sshrl.u32 %s370, 1
      %s372 = sor.u32 %s370, %s371
      %s373 = sand.u32 51, %s372
      %s374 = sshrl.u32 %s373, 2
      %s375 = sor.u32 %s373, %s374
      %s376 = sand.u32 15, %s375
      %v377 = vld [vmem:[%s367] sm:%s376]
      %v378 = vunpack.c.l.bf16 %v377
      %v379 = vunpack.c.h.bf16 %v377
      %v380 = vlaneseq
      %v381 = vand.u32 %v380, 127
      %vm383 = vcmp.lt.s32.totalorder %v381, 16
      %v384 = vsel %vm383, %v378, %v11
      %s385 = scalar_lea.vmem [#allocation12], 32
      %v386 = vpack.c.bf16 0.0, %v384
      %s388 = ssub.s32 16, 1
      %389 = vst [vmem:[%s385] sm:%s388] %v386
      %s390 = scalar_lea.vmem %s1, 36
      %s392 = sor.u32 255, 127
      %s393 = sand.u32 %s392, 85
      %s394 = sshrl.u32 %s393, 1
      %s395 = sor.u32 %s393, %s394
      %s396 = sand.u32 51, %s395
      %s397 = sshrl.u32 %s396, 2
      %s398 = sor.u32 %s396, %s397
      %s399 = sand.u32 15, %s398
      %v400 = vld [vmem:[%s390] sm:%s399]
      %v401 = vunpack.c.l.bf16 %v400
      %v402 = vunpack.c.h.bf16 %v400
      %v403 = vlaneseq
      %v404 = vand.u32 %v403, 127
      %vm406 = vcmp.lt.s32.totalorder %v404, 16
      %v407 = vsel %vm406, %v401, %v11
      %s408 = scalar_lea.vmem [#allocation12], 36
      %v409 = vpack.c.bf16 0.0, %v407
      %s411 = ssub.s32 16, 1
      %412 = vst [vmem:[%s408] sm:%s411] %v409
      %s413 = scalar_lea.vmem %s1, 40
      %s415 = sor.u32 255, 127
      %s416 = sand.u32 %s415, 85
      %s417 = sshrl.u32 %s416, 1
      %s418 = sor.u32 %s416, %s417
      %s419 = sand.u32 51, %s418
      %s420 = sshrl.u32 %s419, 2
      %s421 = sor.u32 %s419, %s420
      %s422 = sand.u32 15, %s421
      %v423 = vld [vmem:[%s413] sm:%s422]
      %v424 = vunpack.c.l.bf16 %v423
      %v425 = vunpack.c.h.bf16 %v423
      %v426 = vlaneseq
      %v427 = vand.u32 %v426, 127
      %vm429 = vcmp.lt.s32.totalorder %v427, 16
      %v430 = vsel %vm429, %v424, %v11
      %s431 = scalar_lea.vmem [#allocation12], 40
      %v432 = vpack.c.bf16 0.0, %v430
      %s434 = ssub.s32 16, 1
      %435 = vst [vmem:[%s431] sm:%s434] %v432
      %s436 = scalar_lea.vmem %s1, 44
      %s438 = sor.u32 255, 127
      %s439 = sand.u32 %s438, 85
      %s440 = sshrl.u32 %s439, 1
      %s441 = sor.u32 %s439, %s440
      %s442 = sand.u32 51, %s441
      %s443 = sshrl.u32 %s442, 2
      %s444 = sor.u32 %s442, %s443
      %s445 = sand.u32 15, %s444
      %v446 = vld [vmem:[%s436] sm:%s445]
      %v447 = vunpack.c.l.bf16 %v446
      %v448 = vunpack.c.h.bf16 %v446
      %v449 = vlaneseq
      %v450 = vand.u32 %v449, 127
      %vm452 = vcmp.lt.s32.totalorder %v450, 16
      %v453 = vsel %vm452, %v447, %v11
      %s454 = scalar_lea.vmem [#allocation12], 44
      %v455 = vpack.c.bf16 0.0, %v453
      %s457 = ssub.s32 16, 1
      %458 = vst [vmem:[%s454] sm:%s457] %v455
      %s459 = scalar_lea.vmem %s1, 48
      %s461 = sor.u32 255, 127
      %s462 = sand.u32 %s461, 85
      %s463 = sshrl.u32 %s462, 1
      %s464 = sor.u32 %s462, %s463
      %s465 = sand.u32 51, %s464
      %s466 = sshrl.u32 %s465, 2
      %s467 = sor.u32 %s465, %s466
      %s468 = sand.u32 15, %s467
      %v469 = vld [vmem:[%s459] sm:%s468]
      %v470 = vunpack.c.l.bf16 %v469
      %v471 = vunpack.c.h.bf16 %v469
      %v472 = vlaneseq
      %v473 = vand.u32 %v472, 127
      %vm475 = vcmp.lt.s32.totalorder %v473, 16
      %v476 = vsel %vm475, %v470, %v11
      %s477 = scalar_lea.vmem [#allocation12], 48
      %v478 = vpack.c.bf16 0.0, %v476
      %s480 = ssub.s32 16, 1
      %481 = vst [vmem:[%s477] sm:%s480] %v478
      %s482 = scalar_lea.vmem %s1, 52
      %s484 = sor.u32 255, 127
      %s485 = sand.u32 %s484, 85
      %s486 = sshrl.u32 %s485, 1
      %s487 = sor.u32 %s485, %s486
      %s488 = sand.u32 51, %s487
      %s489 = sshrl.u32 %s488, 2
      %s490 = sor.u32 %s488, %s489
      %s491 = sand.u32 15, %s490
      %v492 = vld [vmem:[%s482] sm:%s491]
      %v493 = vunpack.c.l.bf16 %v492
      %v494 = vunpack.c.h.bf16 %v492
      %v495 = vlaneseq
      %v496 = vand.u32 %v495, 127
      %vm498 = vcmp.lt.s32.totalorder %v496, 16
      %v499 = vsel %vm498, %v493, %v11
      %s500 = scalar_lea.vmem [#allocation12], 52
      %v501 = vpack.c.bf16 0.0, %v499
      %s503 = ssub.s32 16, 1
      %504 = vst [vmem:[%s500] sm:%s503] %v501
      %s505 = scalar_lea.vmem %s1, 56
      %s507 = sor.u32 255, 127
      %s508 = sand.u32 %s507, 85
      %s509 = sshrl.u32 %s508, 1
      %s510 = sor.u32 %s508, %s509
      %s511 = sand.u32 51, %s510
      %s512 = sshrl.u32 %s511, 2
      %s513 = sor.u32 %s511, %s512
      %s514 = sand.u32 15, %s513
      %v515 = vld [vmem:[%s505] sm:%s514]
      %v516 = vunpack.c.l.bf16 %v515
      %v517 = vunpack.c.h.bf16 %v515
      %v518 = vlaneseq
      %v519 = vand.u32 %v518, 127
      %vm521 = vcmp.lt.s32.totalorder %v519, 16
      %v522 = vsel %vm521, %v516, %v11
      %s523 = scalar_lea.vmem [#allocation12], 56
      %v524 = vpack.c.bf16 0.0, %v522
      %s526 = ssub.s32 16, 1
      %527 = vst [vmem:[%s523] sm:%s526] %v524
      %s528 = scalar_lea.vmem %s1, 60
      %s530 = sor.u32 255, 127
      %s531 = sand.u32 %s530, 85
      %s532 = sshrl.u32 %s531, 1
      %s533 = sor.u32 %s531, %s532
      %s534 = sand.u32 51, %s533
      %s535 = sshrl.u32 %s534, 2
      %s536 = sor.u32 %s534, %s535
      %s537 = sand.u32 15, %s536
      %v538 = vld [vmem:[%s528] sm:%s537]
      %v539 = vunpack.c.l.bf16 %v538
      %v540 = vunpack.c.h.bf16 %v538
      %v541 = vlaneseq
      %v542 = vand.u32 %v541, 127
      %vm544 = vcmp.lt.s32.totalorder %v542, 16
      %v545 = vsel %vm544, %v539, %v11
      %s546 = scalar_lea.vmem [#allocation12], 60
      %v547 = vpack.c.bf16 0.0, %v545
      %s549 = ssub.s32 16, 1
      %550 = vst [vmem:[%s546] sm:%s549] %v547
      %s551 = scalar_lea.vmem %s1, 64
      %s553 = sor.u32 255, 127
      %s554 = sand.u32 %s553, 85
      %s555 = sshrl.u32 %s554, 1
      %s556 = sor.u32 %s554, %s555
      %s557 = sand.u32 51, %s556
      %s558 = sshrl.u32 %s557, 2
      %s559 = sor.u32 %s557, %s558
      %s560 = sand.u32 15, %s559
      %v561 = vld [vmem:[%s551] sm:%s560]
      %v562 = vunpack.c.l.bf16 %v561
      %v563 = vunpack.c.h.bf16 %v561
      %v564 = vlaneseq
      %v565 = vand.u32 %v564, 127
      %vm567 = vcmp.lt.s32.totalorder %v565, 16
      %v568 = vsel %vm567, %v562, %v11
      %s569 = scalar_lea.vmem [#allocation12], 64
      %v570 = vpack.c.bf16 0.0, %v568
      %s572 = ssub.s32 16, 1
      %573 = vst [vmem:[%s569] sm:%s572] %v570
      %s574 = scalar_lea.vmem %s1, 68
      %s576 = sor.u32 255, 127
      %s577 = sand.u32 %s576, 85
      %s578 = sshrl.u32 %s577, 1
      %s579 = sor.u32 %s577, %s578
      %s580 = sand.u32 51, %s579
      %s581 = sshrl.u32 %s580, 2
      %s582 = sor.u32 %s580, %s581
      %s583 = sand.u32 15, %s582
      %v584 = vld [vmem:[%s574] sm:%s583]
      %v585 = vunpack.c.l.bf16 %v584
      %v586 = vunpack.c.h.bf16 %v584
      %v587 = vlaneseq
      %v588 = vand.u32 %v587, 127
      %vm590 = vcmp.lt.s32.totalorder %v588, 16
      %v591 = vsel %vm590, %v585, %v11
      %s592 = scalar_lea.vmem [#allocation12], 68
      %v593 = vpack.c.bf16 0.0, %v591
      %s595 = ssub.s32 16, 1
      %596 = vst [vmem:[%s592] sm:%s595] %v593
      %s597 = scalar_lea.vmem %s1, 72
      %s599 = sor.u32 255, 127
      %s600 = sand.u32 %s599, 85
      %s601 = sshrl.u32 %s600, 1
      %s602 = sor.u32 %s600, %s601
      %s603 = sand.u32 51, %s602
      %s604 = sshrl.u32 %s603, 2
      %s605 = sor.u32 %s603, %s604
      %s606 = sand.u32 15, %s605
      %v607 = vld [vmem:[%s597] sm:%s606]
      %v608 = vunpack.c.l.bf16 %v607
      %v609 = vunpack.c.h.bf16 %v607
      %v610 = vlaneseq
      %v611 = vand.u32 %v610, 127
      %vm613 = vcmp.lt.s32.totalorder %v611, 16
      %v614 = vsel %vm613, %v608, %v11
      %s615 = scalar_lea.vmem [#allocation12], 72
      %v616 = vpack.c.bf16 0.0, %v614
      %s618 = ssub.s32 16, 1
      %619 = vst [vmem:[%s615] sm:%s618] %v616
      %s620 = scalar_lea.vmem %s1, 76
      %s622 = sor.u32 255, 127
      %s623 = sand.u32 %s622, 85
      %s624 = sshrl.u32 %s623, 1
      %s625 = sor.u32 %s623, %s624
      %s626 = sand.u32 51, %s625
      %s627 = sshrl.u32 %s626, 2
      %s628 = sor.u32 %s626, %s627
      %s629 = sand.u32 15, %s628
      %v630 = vld [vmem:[%s620] sm:%s629]
      %v631 = vunpack.c.l.bf16 %v630
      %v632 = vunpack.c.h.bf16 %v630
      %v633 = vlaneseq
      %v634 = vand.u32 %v633, 127
      %vm636 = vcmp.lt.s32.totalorder %v634, 16
      %v637 = vsel %vm636, %v631, %v11
      %s638 = scalar_lea.vmem [#allocation12], 76
      %v639 = vpack.c.bf16 0.0, %v637
      %s641 = ssub.s32 16, 1
      %642 = vst [vmem:[%s638] sm:%s641] %v639
      %s643 = scalar_lea.vmem %s1, 80
      %s645 = sor.u32 255, 127
      %s646 = sand.u32 %s645, 85
      %s647 = sshrl.u32 %s646, 1
      %s648 = sor.u32 %s646, %s647
      %s649 = sand.u32 51, %s648
      %s650 = sshrl.u32 %s649, 2
      %s651 = sor.u32 %s649, %s650
      %s652 = sand.u32 15, %s651
      %v653 = vld [vmem:[%s643] sm:%s652]
      %v654 = vunpack.c.l.bf16 %v653
      %v655 = vunpack.c.h.bf16 %v653
      %v656 = vlaneseq
      %v657 = vand.u32 %v656, 127
      %vm659 = vcmp.lt.s32.totalorder %v657, 16
      %v660 = vsel %vm659, %v654, %v11
      %s661 = scalar_lea.vmem [#allocation12], 80
      %v662 = vpack.c.bf16 0.0, %v660
      %s664 = ssub.s32 16, 1
      %665 = vst [vmem:[%s661] sm:%s664] %v662
      %s666 = scalar_lea.vmem %s1, 84
      %s668 = sor.u32 255, 127
      %s669 = sand.u32 %s668, 85
      %s670 = sshrl.u32 %s669, 1
      %s671 = sor.u32 %s669, %s670
      %s672 = sand.u32 51, %s671
      %s673 = sshrl.u32 %s672, 2
      %s674 = sor.u32 %s672, %s673
      %s675 = sand.u32 15, %s674
      %v676 = vld [vmem:[%s666] sm:%s675]
      %v677 = vunpack.c.l.bf16 %v676
      %v678 = vunpack.c.h.bf16 %v676
      %v679 = vlaneseq
      %v680 = vand.u32 %v679, 127
      %vm682 = vcmp.lt.s32.totalorder %v680, 16
      %v683 = vsel %vm682, %v677, %v11
      %s684 = scalar_lea.vmem [#allocation12], 84
      %v685 = vpack.c.bf16 0.0, %v683
      %s687 = ssub.s32 16, 1
      %688 = vst [vmem:[%s684] sm:%s687] %v685
      %s689 = scalar_lea.vmem %s1, 88
      %s691 = sor.u32 255, 127
      %s692 = sand.u32 %s691, 85
      %s693 = sshrl.u32 %s692, 1
      %s694 = sor.u32 %s692, %s693
      %s695 = sand.u32 51, %s694
      %s696 = sshrl.u32 %s695, 2
      %s697 = sor.u32 %s695, %s696
      %s698 = sand.u32 15, %s697
      %v699 = vld [vmem:[%s689] sm:%s698]
      %v700 = vunpack.c.l.bf16 %v699
      %v701 = vunpack.c.h.bf16 %v699
      %v702 = vlaneseq
      %v703 = vand.u32 %v702, 127
      %vm705 = vcmp.lt.s32.totalorder %v703, 16
      %v706 = vsel %vm705, %v700, %v11
      %s707 = scalar_lea.vmem [#allocation12], 88
      %v708 = vpack.c.bf16 0.0, %v706
      %s710 = ssub.s32 16, 1
      %711 = vst [vmem:[%s707] sm:%s710] %v708
      %s712 = scalar_lea.vmem %s1, 92
      %s714 = sor.u32 255, 127
      %s715 = sand.u32 %s714, 85
      %s716 = sshrl.u32 %s715, 1
      %s717 = sor.u32 %s715, %s716
      %s718 = sand.u32 51, %s717
      %s719 = sshrl.u32 %s718, 2
      %s720 = sor.u32 %s718, %s719
      %s721 = sand.u32 15, %s720
      %v722 = vld [vmem:[%s712] sm:%s721]
      %v723 = vunpack.c.l.bf16 %v722
      %v724 = vunpack.c.h.bf16 %v722
      %v725 = vlaneseq
      %v726 = vand.u32 %v725, 127
      %vm728 = vcmp.lt.s32.totalorder %v726, 16
      %v729 = vsel %vm728, %v723, %v11
      %s730 = scalar_lea.vmem [#allocation12], 92
      %v731 = vpack.c.bf16 0.0, %v729
      %s733 = ssub.s32 16, 1
      %734 = vst [vmem:[%s730] sm:%s733] %v731
      %s735 = scalar_lea.vmem %s1, 96
      %s737 = sor.u32 255, 127
      %s738 = sand.u32 %s737, 85
      %s739 = sshrl.u32 %s738, 1
      %s740 = sor.u32 %s738, %s739
      %s741 = sand.u32 51, %s740
      %s742 = sshrl.u32 %s741, 2
      %s743 = sor.u32 %s741, %s742
      %s744 = sand.u32 15, %s743
      %v745 = vld [vmem:[%s735] sm:%s744]
      %v746 = vunpack.c.l.bf16 %v745
      %v747 = vunpack.c.h.bf16 %v745
      %v748 = vlaneseq
      %v749 = vand.u32 %v748, 127
      %vm751 = vcmp.lt.s32.totalorder %v749, 16
      %v752 = vsel %vm751, %v746, %v11
      %s753 = scalar_lea.vmem [#allocation12], 96
      %v754 = vpack.c.bf16 0.0, %v752
      %s756 = ssub.s32 16, 1
      %757 = vst [vmem:[%s753] sm:%s756] %v754
      %s758 = scalar_lea.vmem %s1, 100
      %s760 = sor.u32 255, 127
      %s761 = sand.u32 %s760, 85
      %s762 = sshrl.u32 %s761, 1
      %s763 = sor.u32 %s761, %s762
      %s764 = sand.u32 51, %s763
      %s765 = sshrl.u32 %s764, 2
      %s766 = sor.u32 %s764, %s765
      %s767 = sand.u32 15, %s766
      %v768 = vld [vmem:[%s758] sm:%s767]
      %v769 = vunpack.c.l.bf16 %v768
      %v770 = vunpack.c.h.bf16 %v768
      %v771 = vlaneseq
      %v772 = vand.u32 %v771, 127
      %vm774 = vcmp.lt.s32.totalorder %v772, 16
      %v775 = vsel %vm774, %v769, %v11
      %s776 = scalar_lea.vmem [#allocation12], 100
      %v777 = vpack.c.bf16 0.0, %v775
      %s779 = ssub.s32 16, 1
      %780 = vst [vmem:[%s776] sm:%s779] %v777
      %s781 = scalar_lea.vmem %s1, 104
      %s783 = sor.u32 255, 127
      %s784 = sand.u32 %s783, 85
      %s785 = sshrl.u32 %s784, 1
      %s786 = sor.u32 %s784, %s785
      %s787 = sand.u32 51, %s786
      %s788 = sshrl.u32 %s787, 2
      %s789 = sor.u32 %s787, %s788
      %s790 = sand.u32 15, %s789
      %v791 = vld [vmem:[%s781] sm:%s790]
      %v792 = vunpack.c.l.bf16 %v791
      %v793 = vunpack.c.h.bf16 %v791
      %v794 = vlaneseq
      %v795 = vand.u32 %v794, 127
      %vm797 = vcmp.lt.s32.totalorder %v795, 16
      %v798 = vsel %vm797, %v792, %v11
      %s799 = scalar_lea.vmem [#allocation12], 104
      %v800 = vpack.c.bf16 0.0, %v798
      %s802 = ssub.s32 16, 1
      %803 = vst [vmem:[%s799] sm:%s802] %v800
      %s804 = scalar_lea.vmem %s1, 108
      %s806 = sor.u32 255, 127
      %s807 = sand.u32 %s806, 85
      %s808 = sshrl.u32 %s807, 1
      %s809 = sor.u32 %s807, %s808
      %s810 = sand.u32 51, %s809
      %s811 = sshrl.u32 %s810, 2
      %s812 = sor.u32 %s810, %s811
      %s813 = sand.u32 15, %s812
      %v814 = vld [vmem:[%s804] sm:%s813]
      %v815 = vunpack.c.l.bf16 %v814
      %v816 = vunpack.c.h.bf16 %v814
      %v817 = vlaneseq
      %v818 = vand.u32 %v817, 127
      %vm820 = vcmp.lt.s32.totalorder %v818, 16
      %v821 = vsel %vm820, %v815, %v11
      %s822 = scalar_lea.vmem [#allocation12], 108
      %v823 = vpack.c.bf16 0.0, %v821
      %s825 = ssub.s32 16, 1
      %826 = vst [vmem:[%s822] sm:%s825] %v823
      %s827 = scalar_lea.vmem %s1, 112
      %s829 = sor.u32 255, 127
      %s830 = sand.u32 %s829, 85
      %s831 = sshrl.u32 %s830, 1
      %s832 = sor.u32 %s830, %s831
      %s833 = sand.u32 51, %s832
      %s834 = sshrl.u32 %s833, 2
      %s835 = sor.u32 %s833, %s834
      %s836 = sand.u32 15, %s835
      %v837 = vld [vmem:[%s827] sm:%s836]
      %v838 = vunpack.c.l.bf16 %v837
      %v839 = vunpack.c.h.bf16 %v837
      %v840 = vlaneseq
      %v841 = vand.u32 %v840, 127
      %vm843 = vcmp.lt.s32.totalorder %v841, 16
      %v844 = vsel %vm843, %v838, %v11
      %s845 = scalar_lea.vmem [#allocation12], 112
      %v846 = vpack.c.bf16 0.0, %v844
      %s848 = ssub.s32 16, 1
      %849 = vst [vmem:[%s845] sm:%s848] %v846
      %s850 = scalar_lea.vmem %s1, 116
      %s852 = sor.u32 255, 127
      %s853 = sand.u32 %s852, 85
      %s854 = sshrl.u32 %s853, 1
      %s855 = sor.u32 %s853, %s854
      %s856 = sand.u32 51, %s855
      %s857 = sshrl.u32 %s856, 2
      %s858 = sor.u32 %s856, %s857
      %s859 = sand.u32 15, %s858
      %v860 = vld [vmem:[%s850] sm:%s859]
      %v861 = vunpack.c.l.bf16 %v860
      %v862 = vunpack.c.h.bf16 %v860
      %v863 = vlaneseq
      %v864 = vand.u32 %v863, 127
      %vm866 = vcmp.lt.s32.totalorder %v864, 16
      %v867 = vsel %vm866, %v861, %v11
      %s868 = scalar_lea.vmem [#allocation12], 116
      %v869 = vpack.c.bf16 0.0, %v867
      %s871 = ssub.s32 16, 1
      %872 = vst [vmem:[%s868] sm:%s871] %v869
      %s873 = scalar_lea.vmem %s1, 120
      %s875 = sor.u32 255, 127
      %s876 = sand.u32 %s875, 85
      %s877 = sshrl.u32 %s876, 1
      %s878 = sor.u32 %s876, %s877
      %s879 = sand.u32 51, %s878
      %s880 = sshrl.u32 %s879, 2
      %s881 = sor.u32 %s879, %s880
      %s882 = sand.u32 15, %s881
      %v883 = vld [vmem:[%s873] sm:%s882]
      %v884 = vunpack.c.l.bf16 %v883
      %v885 = vunpack.c.h.bf16 %v883
      %v886 = vlaneseq
      %v887 = vand.u32 %v886, 127
      %vm889 = vcmp.lt.s32.totalorder %v887, 16
      %v890 = vsel %vm889, %v884, %v11
      %s891 = scalar_lea.vmem [#allocation12], 120
      %v892 = vpack.c.bf16 0.0, %v890
      %s894 = ssub.s32 16, 1
      %895 = vst [vmem:[%s891] sm:%s894] %v892
      %s896 = scalar_lea.vmem %s1, 124
      %s898 = sor.u32 255, 127
      %s899 = sand.u32 %s898, 85
      %s900 = sshrl.u32 %s899, 1
      %s901 = sor.u32 %s899, %s900
      %s902 = sand.u32 51, %s901
      %s903 = sshrl.u32 %s902, 2
      %s904 = sor.u32 %s902, %s903
      %s905 = sand.u32 15, %s904
      %v906 = vld [vmem:[%s896] sm:%s905]
      %v907 = vunpack.c.l.bf16 %v906
      %v908 = vunpack.c.h.bf16 %v906
      %v909 = vlaneseq
      %v910 = vand.u32 %v909, 127
      %vm912 = vcmp.lt.s32.totalorder %v910, 16
      %v913 = vsel %vm912, %v907, %v11
      %s914 = scalar_lea.vmem [#allocation12], 124
      %v915 = vpack.c.bf16 0.0, %v913
      %s917 = ssub.s32 16, 1
      %918 = vst [vmem:[%s914] sm:%s917] %v915
      %s919 = scalar_lea.vmem %s1, 128
      %s921 = sor.u32 255, 127
      %s922 = sand.u32 %s921, 85
      %s923 = sshrl.u32 %s922, 1
      %s924 = sor.u32 %s922, %s923
      %s925 = sand.u32 51, %s924
      %s926 = sshrl.u32 %s925, 2
      %s927 = sor.u32 %s925, %s926
      %s928 = sand.u32 15, %s927
      %v929 = vld [vmem:[%s919] sm:%s928]
      %v930 = vunpack.c.l.bf16 %v929
      %v931 = vunpack.c.h.bf16 %v929
      %v932 = vlaneseq
      %v933 = vand.u32 %v932, 127
      %vm935 = vcmp.lt.s32.totalorder %v933, 16
      %v936 = vsel %vm935, %v930, %v11
      %s937 = scalar_lea.vmem [#allocation12], 128
      %v938 = vpack.c.bf16 0.0, %v936
      %s940 = ssub.s32 16, 1
      %941 = vst [vmem:[%s937] sm:%s940] %v938
      %s942 = scalar_lea.vmem %s1, 132
      %s944 = sor.u32 255, 127
      %s945 = sand.u32 %s944, 85
      %s946 = sshrl.u32 %s945, 1
      %s947 = sor.u32 %s945, %s946
      %s948 = sand.u32 51, %s947
      %s949 = sshrl.u32 %s948, 2
      %s950 = sor.u32 %s948, %s949
      %s951 = sand.u32 15, %s950
      %v952 = vld [vmem:[%s942] sm:%s951]
      %v953 = vunpack.c.l.bf16 %v952
      %v954 = vunpack.c.h.bf16 %v952
      %v955 = vlaneseq
      %v956 = vand.u32 %v955, 127
      %vm958 = vcmp.lt.s32.totalorder %v956, 16
      %v959 = vsel %vm958, %v953, %v11
      %s960 = scalar_lea.vmem [#allocation12], 132
      %v961 = vpack.c.bf16 0.0, %v959
      %s963 = ssub.s32 16, 1
      %964 = vst [vmem:[%s960] sm:%s963] %v961
      %s965 = scalar_lea.vmem %s1, 136
      %s967 = sor.u32 255, 127
      %s968 = sand.u32 %s967, 85
      %s969 = sshrl.u32 %s968, 1
      %s970 = sor.u32 %s968, %s969
      %s971 = sand.u32 51, %s970
      %s972 = sshrl.u32 %s971, 2
      %s973 = sor.u32 %s971, %s972
      %s974 = sand.u32 15, %s973
      %v975 = vld [vmem:[%s965] sm:%s974]
      %v976 = vunpack.c.l.bf16 %v975
      %v977 = vunpack.c.h.bf16 %v975
      %v978 = vlaneseq
      %v979 = vand.u32 %v978, 127
      %vm981 = vcmp.lt.s32.totalorder %v979, 16
      %v982 = vsel %vm981, %v976, %v11
      %s983 = scalar_lea.vmem [#allocation12], 136
      %v984 = vpack.c.bf16 0.0, %v982
      %s986 = ssub.s32 16, 1
      %987 = vst [vmem:[%s983] sm:%s986] %v984
      %s988 = scalar_lea.vmem %s1, 140
      %s990 = sor.u32 255, 127
      %s991 = sand.u32 %s990, 85
      %s992 = sshrl.u32 %s991, 1
      %s993 = sor.u32 %s991, %s992
      %s994 = sand.u32 51, %s993
      %s995 = sshrl.u32 %s994, 2
      %s996 = sor.u32 %s994, %s995
      %s997 = sand.u32 15, %s996
      %v998 = vld [vmem:[%s988] sm:%s997]
      %v999 = vunpack.c.l.bf16 %v998
      %v1000 = vunpack.c.h.bf16 %v998
      %v1001 = vlaneseq
      %v1002 = vand.u32 %v1001, 127
      %vm1004 = vcmp.lt.s32.totalorder %v1002, 16
      %v1005 = vsel %vm1004, %v999, %v11
      %s1006 = scalar_lea.vmem [#allocation12], 140
      %v1007 = vpack.c.bf16 0.0, %v1005
      %s1009 = ssub.s32 16, 1
      %1010 = vst [vmem:[%s1006] sm:%s1009] %v1007
      %v1011 = vld [vmem:[%s3] sm:$0x1]
      %v1012 = vlaneseq
      %v1013 = vshrl.u32 %v1012, 7
      %vm1015 = vcmp.lt.s32.totalorder %v1013, 1
      %v1016 = vsel %vm1015, %v1011, %v15
      %v1017 = vlaneseq
      %v1018 = vand.u32 %v1017, 127
      %vm1020 = vcmp.lt.s32.totalorder %v1018, 16
      %v1021 = vsel %vm1020, %v1016, %v15
      %s1023 = ssub.s32 2, 1
      %1024 = vst [vmem:[#allocation13] sm:%s1023] %v1021
      %v1026 = vld [vmem:[%s177] sm:$0xff]
      %v1027 = vld [vmem:[%s177 + $0x8] sm:$0xf]
      %v1028 = vld [vmem:[%s177 + $0xc] sm:$0xff]
      %v1029 = vld [vmem:[%s177 + $0x14] sm:$0xf]
      %v1030 = vld [vmem:[#allocation12] sm:$0xf]
      %v1031 = vld [vmem:[#allocation12 + $0x4] sm:$0xf]
      %v1032 = vld [vmem:[#allocation12 + $0x8] sm:$0xf]
      %v1033 = vld [vmem:[#allocation12 + $0xc] sm:$0xf]
      %v1034 = vld [vmem:[#allocation12 + $0x10] sm:$0xf]
      %v1035 = vld [vmem:[#allocation12 + $0x14] sm:$0xf]
      %v1036 = vld [vmem:[#allocation12 + $0x18] sm:$0xf]
      %v1037 = vld [vmem:[#allocation12 + $0x1c] sm:$0xf]
      %v1038 = vld [vmem:[#allocation12 + $0x20] sm:$0xf]
      %v1039 = vld [vmem:[#allocation12 + $0x24] sm:$0xf]
      %v1040 = vld [vmem:[#allocation12 + $0x28] sm:$0xf]
      %v1041 = vld [vmem:[#allocation12 + $0x2c] sm:$0xf]
      %v1042 = vld [vmem:[#allocation12 + $0x30] sm:$0xf]
      %v1043 = vld [vmem:[#allocation12 + $0x34] sm:$0xf]
      %v1044 = vld [vmem:[#allocation12 + $0x38] sm:$0xf]
      %v1045 = vld [vmem:[#allocation12 + $0x3c] sm:$0xf]
      %v1046 = vld [vmem:[#allocation12 + $0x40] sm:$0xf]
      %v1047 = vld [vmem:[#allocation12 + $0x44] sm:$0xf]
      %v1048 = vld [vmem:[#allocation12 + $0x48] sm:$0xf]
      %v1049 = vld [vmem:[#allocation12 + $0x4c] sm:$0xf]
      %v1050 = vld [vmem:[#allocation12 + $0x50] sm:$0xf]
      %v1051 = vld [vmem:[#allocation12 + $0x54] sm:$0xf]
      %v1052 = vld [vmem:[#allocation12 + $0x58] sm:$0xf]
      %v1053 = vld [vmem:[#allocation12 + $0x5c] sm:$0xf]
      %v1054 = vld [vmem:[#allocation12 + $0x60] sm:$0xf]
      %v1055 = vld [vmem:[#allocation12 + $0x64] sm:$0xf]
      %v1056 = vld [vmem:[#allocation12 + $0x68] sm:$0xf]
      %v1057 = vld [vmem:[#allocation12 + $0x6c] sm:$0xf]
      %v1058 = vld [vmem:[#allocation12 + $0x70] sm:$0xf]
      %v1059 = vld [vmem:[#allocation12 + $0x74] sm:$0xf]
      %v1060 = vld [vmem:[#allocation12 + $0x78] sm:$0xf]
      %v1061 = vld [vmem:[#allocation12 + $0x7c] sm:$0xf]
      %v1062 = vld [vmem:[#allocation12 + $0x80] sm:$0xf]
      %v1063 = vld [vmem:[#allocation12 + $0x84] sm:$0xf]
      %v1064 = vld [vmem:[#allocation12 + $0x88] sm:$0xf]
      %v1065 = vld [vmem:[#allocation12 + $0x8c] sm:$0xf]
      %v1066 = vld [vmem:[#allocation13] sm:$0x1]
      %v1068 = vlaneseq
      %v1069 = vshrl.u32 %v1068, 7
      %v1070 = vsub.s32 0, %v1069
      %v1071 = vrot.slane %v1066, %v1070
      %v1077 = vunpack.c.l.b16 %v1026
      %v1078 = vunpack.c.h.b16 %v1026
      %v1079 = vunpack.c.l.b16 %v1027
      %v1080 = vunpack.c.l.b16 %v1028
      %v1081 = vunpack.c.h.b16 %v1028
      %v1082 = vunpack.c.l.b16 %v1029
      %v1083 = vpack.c.b16 %v1080, %v1077
      %v1084 = vpack.c.b16 %v1081, %v1078
      %v1085 = vpack.c.b16 %v1082, %v1079
      %v1124 = vunpack.c.l.b16 %v1030
      %v1125 = vunpack.c.l.b16 %v1031
      %v1126 = vunpack.c.l.b16 %v1032
      %v1127 = vunpack.c.l.b16 %v1033
      %v1128 = vunpack.c.l.b16 %v1034
      %v1129 = vunpack.c.l.b16 %v1035
      %v1130 = vunpack.c.l.b16 %v1036
      %v1131 = vunpack.c.l.b16 %v1037
      %v1132 = vunpack.c.l.b16 %v1038
      %v1133 = vunpack.c.l.b16 %v1039
      %v1134 = vunpack.c.l.b16 %v1040
      %v1135 = vunpack.c.l.b16 %v1041
      %v1136 = vunpack.c.l.b16 %v1042
      %v1137 = vunpack.c.l.b16 %v1043
      %v1138 = vunpack.c.l.b16 %v1044
      %v1139 = vunpack.c.l.b16 %v1045
      %v1140 = vunpack.c.l.b16 %v1046
      %v1141 = vunpack.c.l.b16 %v1047
      %v1142 = vunpack.c.l.b16 %v1048
      %v1143 = vunpack.c.l.b16 %v1049
      %v1144 = vunpack.c.l.b16 %v1050
      %v1145 = vunpack.c.l.b16 %v1051
      %v1146 = vunpack.c.l.b16 %v1052
      %v1147 = vunpack.c.l.b16 %v1053
      %v1148 = vunpack.c.l.b16 %v1054
      %v1149 = vunpack.c.l.b16 %v1055
      %v1150 = vunpack.c.l.b16 %v1056
      %v1151 = vunpack.c.l.b16 %v1057
      %v1152 = vunpack.c.l.b16 %v1058
      %v1153 = vunpack.c.l.b16 %v1059
      %v1154 = vunpack.c.l.b16 %v1060
      %v1155 = vunpack.c.l.b16 %v1061
      %v1156 = vunpack.c.l.b16 %v1062
      %v1157 = vunpack.c.l.b16 %v1063
      %v1158 = vunpack.c.l.b16 %v1064
      %v1159 = vunpack.c.l.b16 %v1065
      %v1160 = vpack.c.b16 %v1125, %v1124
      %v1161 = vpack.c.b16 %v1127, %v1126
      %v1162 = vpack.c.b16 %v1129, %v1128
      %v1163 = vpack.c.b16 %v1131, %v1130
      %v1164 = vpack.c.b16 %v1133, %v1132
      %v1165 = vpack.c.b16 %v1135, %v1134
      %v1166 = vpack.c.b16 %v1137, %v1136
      %v1167 = vpack.c.b16 %v1139, %v1138
      %v1168 = vpack.c.b16 %v1141, %v1140
      %v1169 = vpack.c.b16 %v1143, %v1142
      %v1170 = vpack.c.b16 %v1145, %v1144
      %v1171 = vpack.c.b16 %v1147, %v1146
      %v1172 = vpack.c.b16 %v1149, %v1148
      %v1173 = vpack.c.b16 %v1151, %v1150
      %v1174 = vpack.c.b16 %v1153, %v1152
      %v1175 = vpack.c.b16 %v1155, %v1154
      %v1176 = vpack.c.b16 %v1157, %v1156
      %v1177 = vpack.c.b16 %v1159, %v1158
      %vm1196 = vcmask 261120
      %v1198 = vsel %vm1196, %v1085, 0
      %1200 = vmatprep.subr.bf16.mxu0 0
      %1201 = vmatpush1.bf16.msra.mxu0 %v1167
      %1202 = vmatprep.subr.bf16.mxu0 0
      %1203 = vmatpush1.bf16.msra.mxu0 %v1166
      %1204 = vmatprep.subr.bf16.mxu0 0
      %1205 = vmatpush1.bf16.msra.mxu0 %v1165
      %1206 = vmatprep.subr.bf16.mxu0 0
      %1207 = vmatpush1.bf16.msra.mxu0 %v1164
      %1208 = vmatprep.subr.bf16.mxu0 0
      %1209 = vmatpush1.bf16.msra.mxu0 %v1163
      %1210 = vmatprep.subr.bf16.mxu0 0
      %1211 = vmatpush1.bf16.msra.mxu0 %v1162
      %1212 = vmatprep.subr.bf16.mxu0 0
      %1213 = vmatpush1.bf16.msra.mxu0 %v1161
      %1214 = vmatprep.subr.bf16.mxu0 0
      %1215 = vmatpush1.bf16.msra.mxu0 %v1160
      %1216 = vmatprep.subr.bf16.mxu0 0
      %1217 = vmatpush2.bf16.msra.mxu0 %v1175
      %1218 = vmatprep.subr.bf16.mxu0 0
      %1219 = vmatpush2.bf16.msra.mxu0 %v1174
      %1220 = vmatprep.subr.bf16.mxu0 0
      %1221 = vmatpush2.bf16.msra.mxu0 %v1173
      %1222 = vmatprep.subr.bf16.mxu0 0
      %1223 = vmatpush2.bf16.msra.mxu0 %v1172
      %1224 = vmatprep.subr.bf16.mxu0 0
      %1225 = vmatpush2.bf16.msra.mxu0 %v1171
      %1226 = vmatprep.subr.bf16.mxu0 0
      %1227 = vmatpush2.bf16.msra.mxu0 %v1170
      %1228 = vmatprep.subr.bf16.mxu0 0
      %1229 = vmatpush2.bf16.msra.mxu0 %v1169
      %1230 = vmatprep.subr.bf16.mxu0 0
      %1231 = vmatpush2.bf16.msra.mxu0 %v1168
      %1232 = vmatprep.mubr.bf16.mxu0 %v1084
      %1233 = vmatmul.mubr.bf16.gmra.mxu0 %v1083
      %v1234 = vpop.f32.mrf.mxu0
      %v1235 = vadd.f32 %v1071, %v1234
      %v1236 = vpop.f32.mrf.mxu0
      %v1237 = vpop.f32.mrf.mxu0
      %v1238 = vadd.f32 %v1071, %v1237
      %v1239 = vpop.f32.mrf.mxu0
      %1240 = vdwg.mxu0
      %1241 = vmatprep.subr.bf16.mxu0 0
      %1242 = vmatpush1.bf16.msra.mxu0 0
      %1243 = vmatprep.subr.bf16.mxu0 0
      %1244 = vmatpush1.bf16.msra.mxu0 0
      %1245 = vmatprep.subr.bf16.mxu0 0
      %1246 = vmatpush1.bf16.msra.mxu0 0
      %1247 = vmatprep.subr.bf16.mxu0 0
      %1248 = vmatpush1.bf16.msra.mxu0 0
      %1249 = vmatprep.subr.bf16.mxu0 0
      %1250 = vmatpush1.bf16.msra.mxu0 0
      %1251 = vmatprep.subr.bf16.mxu0 0
      %1252 = vmatpush1.bf16.msra.mxu0 0
      %1253 = vmatprep.subr.bf16.mxu0 0
      %1254 = vmatpush1.bf16.msra.mxu0 %v1177
      %1255 = vmatprep.subr.bf16.mxu0 0
      %1256 = vmatpush1.bf16.msra.mxu0 %v1176
      %1257 = vmatprep.subr.bf16.mxu0 0
      %1258 = vmatpush2.bf16.msra.mxu0 0
      %1259 = vmatprep.subr.bf16.mxu0 0
      %1260 = vmatpush2.bf16.msra.mxu0 0
      %1261 = vmatprep.subr.bf16.mxu0 0
      %1262 = vmatpush2.bf16.msra.mxu0 0
      %1263 = vmatprep.subr.bf16.mxu0 0
      %1264 = vmatpush2.bf16.msra.mxu0 0
      %1265 = vmatprep.subr.bf16.mxu0 0
      %1266 = vmatpush2.bf16.msra.mxu0 0
      %1267 = vmatprep.subr.bf16.mxu0 0
      %1268 = vmatpush2.bf16.msra.mxu0 0
      %1269 = vmatprep.subr.bf16.mxu0 0
      %1270 = vmatpush2.bf16.msra.mxu0 0
      %1271 = vmatprep.subr.bf16.mxu0 0
      %1272 = vmatpush2.bf16.msra.mxu0 0
      %1273 = vmatprep.mubr.bf16.mxu0 0
      %1274 = vmatmul.mubr.bf16.gmra.mxu0 %v1198
      %v1275 = vpop.f32.mrf.mxu0
      %v1276 = vadd.f32 %v1235, %v1275
      %v1277 = vpop.f32.mrf.mxu0
      %v1278 = vpop.f32.mrf.mxu0
      %v1279 = vadd.f32 %v1238, %v1278
      %v1280 = vpop.f32.mrf.mxu0
      %1281 = vdwg.mxu0
      %v1282 = vpack.c.bf16 %v1279, %v1276
      %v1284 = vunpack.c.l.b16 %v1282
      %v1285 = vunpack.c.h.b16 %v1282
      %v1286 = vpack.c.b16 %v1284, %v1284
      %v1287 = vpack.c.b16 %v1285, %v1285
      %1290 = vst [vmem:[%s183] sm:$0xf] %v1286
      %1291 = vst [vmem:[%s183 + $0x4] sm:$0xf] %v1287
      %s1292 = smul.u32 2, %s22
      %p1293 = scmp.lt.s32.totalorder %s1292, 3
      %s1294 = scalar_select %p1293, %s1292, 3
      %s1295 = smul.addr %s1294, 4
      %s1296 = scalar_lea.vmem %s5, %s1295
      // Predicated region
      $region33: #{encoder_forward.20} parent=31 // pred_check
        %p1297 = pneg %p108
      $region34: #{encoder_forward.20} parent=31 // pred_check_branch
        %1299 = sbr.rel (%p1297) target = $region36
      $region35: #{encoder_forward.20} parent=31 // pred_region
        %s1300 = smul.u32 2, %s22
      $region36: #{encoder_forward.20} parent=31 // pred_fallthru
        _
    $region32: #{encoder_forward.20} parent=5 // pred_fallthru
      _
    %p1301 = scmp.le.s32.totalorder 2, %s17
    // Predicated region
    $region37: #{encoder_forward.20} parent=5 // pred_check
      %p1302 = pneg %p1301
    $region38: #{encoder_forward.20} parent=5 // pred_check_branch
      %1304 = sbr.rel (%p1302) target = $region40
    $region39: #{encoder_forward.20} parent=5 // pred_region
      %s1305 = ssub.s32 %s17, 2
      // Predicated region
      $region41: #{encoder_forward.20} parent=39 // pred_check
        %p1306 = pneg %p114
      $region42: #{encoder_forward.20} parent=39 // pred_check_branch
        %1308 = sbr.rel (%p1306) target = $region44
      $region43: #{encoder_forward.20} parent=39 // pred_region
        %s1309 = smul.u32 2, %s23
        %p1310 = scmp.lt.s32.totalorder %s1309, 3
        %s1311 = scalar_select %p1310, %s1309, 3
        %s1312 = smul.addr %s1311, 4
        %s1313 = scalar_lea.vmem %s5, %s1312
      $region44: #{encoder_forward.20} parent=39 // pred_fallthru
        _
    $region40: #{encoder_forward.20} parent=5 // pred_fallthru
      _
  $region6: #{encoder_forward.20} parent=0 // loop_footer
    %s21 = sadd.s32 1, %s17
  $region7: #{encoder_forward.20} parent=0 // loop_footer_branch
    %16 = sbr.rel target = $region3
  $region8: #{encoder_forward.20} parent=0 // loop_exit
    _

// kernel: encoder_forward.25
$region0: #{encoder_forward.25}
  #allocation0 [shape = 'u32[]', space=smem, size = 0x4, offset = 0x4, fixed_abs, tag = 'smem constant byte address 0x4 - core index']
  #allocation1 [shape = 'u32[144,128]{1,0:T(1,128)}', space=vmem, size = 0x12000, scoped, tag = 'internal scratch']
  #allocation2 [shape = 'u32[2048]{0}', space=vmem, size = 0x2000, scoped, tag = 'scoped memory for encoder_forward.25']
  #allocation3 [shape = 'u32[2048]{0}', space=vmem, size = 0x2000, scoped, tag = 'scoped memory for encoder_forward.25']
  #allocation4 [shape = 'u32[2048]{0}', space=vmem, size = 0x2000, scoped, tag = 'scoped memory for encoder_forward.25']
  #allocation5 [shape = 'u32[2048]{0}', space=vmem, size = 0x2000, scoped, tag = 'scoped memory for encoder_forward.25']
  #allocation6 [shape = 'u32[2048]{0}', space=vmem, size = 0x2000, scoped, tag = 'scoped memory for encoder_forward.25']
  #allocation7 [shape = 'u32[2048]{0}', space=vmem, size = 0x2000, scoped, tag = 'scoped memory for encoder_forward.25']
  #allocation8 [shape = 'u32[2048]{0}', space=vmem, size = 0x2000, scoped, tag = 'scoped memory for encoder_forward.25']
  #allocation9 [shape = 'u32[2048]{0}', space=vmem, size = 0x2000, scoped, tag = 'scoped memory for encoder_forward.25']
  #allocation10 [shape = 'u32[2048]{0}', space=vmem, size = 0x2000, scoped, tag = 'scoped memory for encoder_forward.25']
  #allocation11 [shape = 'u32[2048]{0}', space=vmem, size = 0x2000, scoped, tag = 'scoped memory for encoder_forward.25']
  %s0 = inlined_call_operand.vmem [shape: bf16[32,144], index: 0, kind: input, shape index: {}]
  %s1 = inlined_call_operand.vmem [shape: bf16[144,32], index: 1, kind: input, shape index: {}]
  %s2 = inlined_call_operand.<no memory space> [shape: bf16[], index: 2, kind: input, shape index: {}]
  %s3 = inlined_call_operand.vmem [shape: f32[32,128], index: 3, kind: input, shape index: {}]
  %s4 = inlined_call_operand.<no memory space> [shape: f32[], index: 4, kind: input, shape index: {}]
  %s5 = inlined_call_operand.vmem [shape: pred[128], index: 5, kind: input, shape index: {}]
  %s6 = inlined_call_operand.vmem [shape: f32[1,32], index: 6, kind: input, shape index: {}]
  %s7 = inlined_call_operand.hbm [shape: f32[32,128], index: 7, kind: output, shape index: {}]
  %s8 = sld [smem:[#allocation0]]
  $region53: #{encoder_forward.25} parent=0
    _
  %s10 = ssub.s32 1, %s8
  %s11 = scalar_select 0, %s10, %s8
  %v12 = vstv %s2
  %v13 = vunpack.i.l.bf16 %v12
  %v15 = vunpack.i.h.bf16 %v12
  %v17 = vstv %s4
  %v18 = vstv %s4
  $region1: #{encoder_forward.25} parent=0
    #allocation12 [shape = 'u8[16384]{0}', space=vmem, size = 0x4000, scoped, tag = 'output window, operand 0']
    #allocation13 [shape = 's32[2]{0}', space=sflag, size = 0x8, scoped, tag = 'scoped memory for encoder_forward.25']
    %19 = vsyncpa [#allocation13], 0
    %s20 = scalar_lea.sflag [#allocation13], 1
    %21 = vsyncpa %s20, 0
    loop: start=0, step=1, limit=4
    $region2: #{encoder_forward.25} parent=1 // loop_pre_header
      _
    $region3: #{encoder_forward.25} parent=1 // loop_header
      %s23 = sphi 0, %s27
      %p24 = scmp.ge.s32.totalorder %s23, 4
      %s33 = sphi 0, %s35
      %s36 = sphi 0, %s33
      %s37 = sphi 0, %s36
      %s53 = sphi 0, %s37
      %s57 = sphi 0, %s57
      %s59 = sphi 0, %s57
      %s60 = sphi 0, %s59
      %s74 = sphi 0, %s60
      %s78 = sphi 0, %s78
      %s80 = sphi 0, %s78
      %s81 = sphi 0, %s80
      %s95 = sphi 0, %s81
      %s101 = sphi 0, %s103
      %s104 = sphi 0, %s101
      %s105 = sphi 0, %s104
      %s121 = sphi 0, %s105
      %s125 = sphi 0, %s125
      %s127 = sphi 0, %s125
      %s128 = sphi 0, %s127
      %s142 = sphi 0, %s128
      %s148 = sphi 0, %s150
      %s151 = sphi 0, %s148
      %s152 = sphi 0, %s151
      %s168 = sphi 0, %s152
    $region4: #{encoder_forward.25} parent=1 // loop_header_branch
      %26 = sbr.rel (%p24) target = $region8
    $region5: #{encoder_forward.25} parent=1 // loop_body
      %s28 = ssub.s32 %s23, 1
      %s29 = ssub.s32 %s23, 2
      %s30 = sadd.s32 %s23, 1
      %s31 = ssub.s32 %s23, %s30
      %p32 = scmp.eq.s32.totalorder %s31, 0
      %s34 = sadd.s32 %s33, 1
      %s35 = scalar_select %p32, %s33, %s34
      %p38 = pneg %p32
      %p39 = scmp.eq.s32.totalorder %s23, 1
      %p40 = por %p38, %p39
      %p41 = scmp.ne.s32.totalorder %s33, %s36
      %p42 = scmp.eq.s32.totalorder %s23, 0
      %p43 = por %p41, %p42
      %p44 = scmp.ne.s32.totalorder %s33, %s36
      %p45 = scmp.eq.s32.totalorder %s28, 1
      %p46 = por %p44, %p45
      %p47 = scmp.ne.s32.totalorder %s36, %s37
      %p48 = scmp.eq.s32.totalorder %s28, 0
      %p49 = por %p47, %p48
      %p50 = scmp.ne.s32.totalorder %s36, %s37
      %p51 = scmp.eq.s32.totalorder %s29, 1
      %p52 = por %p50, %p51
      %p54 = scmp.ne.s32.totalorder %s37, %s53
      %p55 = scmp.eq.s32.totalorder %s29, 0
      %p56 = por %p54, %p55
      %s58 = sadd.s32 %s57, 1
      %p61 = scmp.eq.s32.totalorder %s23, 1
      %p62 = scmp.ne.s32.totalorder %s57, %s59
      %p63 = scmp.eq.s32.totalorder %s23, 0
      %p64 = por %p62, %p63
      %p65 = scmp.ne.s32.totalorder %s57, %s59
      %p66 = scmp.eq.s32.totalorder %s28, 1
      %p67 = por %p65, %p66
      %p68 = scmp.ne.s32.totalorder %s59, %s60
      %p69 = scmp.eq.s32.totalorder %s28, 0
      %p70 = por %p68, %p69
      %p71 = scmp.ne.s32.totalorder %s59, %s60
      %p72 = scmp.eq.s32.totalorder %s29, 1
      %p73 = por %p71, %p72
      %p75 = scmp.ne.s32.totalorder %s60, %s74
      %p76 = scmp.eq.s32.totalorder %s29, 0
      %p77 = por %p75, %p76
      %s79 = sadd.s32 %s78, 1
      %p82 = scmp.eq.s32.totalorder %s23, 1
      %p83 = scmp.ne.s32.totalorder %s78, %s80
      %p84 = scmp.eq.s32.totalorder %s23, 0
      %p85 = por %p83, %p84
      %p86 = scmp.ne.s32.totalorder %s78, %s80
      %p87 = scmp.eq.s32.totalorder %s28, 1
      %p88 = por %p86, %p87
      %p89 = scmp.ne.s32.totalorder %s80, %s81
      %p90 = scmp.eq.s32.totalorder %s28, 0
      %p91 = por %p89, %p90
      %p92 = scmp.ne.s32.totalorder %s80, %s81
      %p93 = scmp.eq.s32.totalorder %s29, 1
      %p94 = por %p92, %p93
      %p96 = scmp.ne.s32.totalorder %s81, %s95
      %p97 = scmp.eq.s32.totalorder %s29, 0
      %p98 = por %p96, %p97
      %s99 = ssub.s32 %s23, %s30
      %p100 = scmp.eq.s32.totalorder %s99, 0
      %s102 = sadd.s32 %s101, 1
      %s103 = scalar_select %p100, %s101, %s102
      %p106 = pneg %p100
      %p107 = scmp.eq.s32.totalorder %s23, 1
      %p108 = por %p106, %p107
      %p109 = scmp.ne.s32.totalorder %s101, %s104
      %p110 = scmp.eq.s32.totalorder %s23, 0
      %p111 = por %p109, %p110
      %p112 = scmp.ne.s32.totalorder %s101, %s104
      %p113 = scmp.eq.s32.totalorder %s28, 1
      %p114 = por %p112, %p113
      %p115 = scmp.ne.s32.totalorder %s104, %s105
      %p116 = scmp.eq.s32.totalorder %s28, 0
      %p117 = por %p115, %p116
      %p118 = scmp.ne.s32.totalorder %s104, %s105
      %p119 = scmp.eq.s32.totalorder %s29, 1
      %p120 = por %p118, %p119
      %p122 = scmp.ne.s32.totalorder %s105, %s121
      %p123 = scmp.eq.s32.totalorder %s29, 0
      %p124 = por %p122, %p123
      %s126 = sadd.s32 %s125, 1
      %p129 = scmp.eq.s32.totalorder %s23, 1
      %p130 = scmp.ne.s32.totalorder %s125, %s127
      %p131 = scmp.eq.s32.totalorder %s23, 0
      %p132 = por %p130, %p131
      %p133 = scmp.ne.s32.totalorder %s125, %s127
      %p134 = scmp.eq.s32.totalorder %s28, 1
      %p135 = por %p133, %p134
      %p136 = scmp.ne.s32.totalorder %s127, %s128
      %p137 = scmp.eq.s32.totalorder %s28, 0
      %p138 = por %p136, %p137
      %p139 = scmp.ne.s32.totalorder %s127, %s128
      %p140 = scmp.eq.s32.totalorder %s29, 1
      %p141 = por %p139, %p140
      %p143 = scmp.ne.s32.totalorder %s128, %s142
      %p144 = scmp.eq.s32.totalorder %s29, 0
      %p145 = por %p143, %p144
      %s146 = ssub.s32 %s23, %s30
      %p147 = scmp.eq.s32.totalorder %s146, 0
      %s149 = sadd.s32 %s148, 1
      %s150 = scalar_select %p147, %s148, %s149
      %p153 = pneg %p147
      %p154 = scmp.eq.s32.totalorder %s23, 1
      %p155 = por %p153, %p154
      %p156 = scmp.ne.s32.totalorder %s148, %s151
      %p157 = scmp.eq.s32.totalorder %s23, 0
      %p158 = por %p156, %p157
      %p159 = scmp.ne.s32.totalorder %s148, %s151
      %p160 = scmp.eq.s32.totalorder %s28, 1
      %p161 = por %p159, %p160
      %p162 = scmp.ne.s32.totalorder %s151, %s152
      %p163 = scmp.eq.s32.totalorder %s28, 0
      %p164 = por %p162, %p163
      %p165 = scmp.ne.s32.totalorder %s151, %s152
      %p166 = scmp.eq.s32.totalorder %s29, 1
      %p167 = por %p165, %p166
      %p169 = scmp.ne.s32.totalorder %s152, %s168
      %p170 = scmp.eq.s32.totalorder %s29, 0
      %p171 = por %p169, %p170
      %p172 = scmp.le.s32.totalorder 1, %s23
      %p173 = scmp.lt.s32.totalorder %s23, 3
      %p174 = pnand %p172, %p173
      %p175 = pneg %p174
      // Predicated region
      $region9: #{encoder_forward.25} parent=5 // pred_check
        _
      $region10: #{encoder_forward.25} parent=5 // pred_check_branch
        %177 = sbr.rel (%p174) target = $region12
      $region11: #{encoder_forward.25} parent=5 // pred_region
        %s178 = ssub.s32 %s23, 1
        // Predicated region
        $region13: #{encoder_forward.25} parent=11 // pred_check
          %p179 = pneg %p70
        $region14: #{encoder_forward.25} parent=11 // pred_check_branch
          %181 = sbr.rel (%p179) target = $region16
        $region15: #{encoder_forward.25} parent=11 // pred_region
          _
        $region16: #{encoder_forward.25} parent=11 // pred_fallthru
          _
        // Predicated region
        $region17: #{encoder_forward.25} parent=11 // pred_check
          %p182 = pneg %p91
        $region18: #{encoder_forward.25} parent=11 // pred_check_branch
          %184 = sbr.rel (%p182) target = $region20
        $region19: #{encoder_forward.25} parent=11 // pred_region
          _
        $region20: #{encoder_forward.25} parent=11 // pred_fallthru
          _
      $region12: #{encoder_forward.25} parent=5 // pred_fallthru
        _
      %p185 = scmp.lt.s32.totalorder %s23, 2
      // Predicated region
      $region21: #{encoder_forward.25} parent=5 // pred_check
        %p186 = pneg %p185
      $region22: #{encoder_forward.25} parent=5 // pred_check_branch
        %188 = sbr.rel (%p186) target = $region24
      $region23: #{encoder_forward.25} parent=5 // pred_region
        // Predicated region
        $region25: #{encoder_forward.25} parent=23 // pred_check
          %p189 = pneg %p43
        $region26: #{encoder_forward.25} parent=23 // pred_check_branch
          %191 = sbr.rel (%p189) target = $region28
        $region27: #{encoder_forward.25} parent=23 // pred_region
          %s192 = smul.u32 2, %s23
          %p193 = scmp.lt.s32.totalorder %s192, 3
          %s194 = scalar_select %p193, %s192, 3
          %s195 = smul.addr %s194, 2
          %s196 = smul.addr %s195, 4
          %s197 = scalar_lea.vmem %s0, %s196
          %s198 = smul.u32 2, %s23
        $region28: #{encoder_forward.25} parent=23 // pred_fallthru
          _
        // Predicated region
        $region29: #{encoder_forward.25} parent=23 // pred_check
          %p199 = pneg %p111
        $region30: #{encoder_forward.25} parent=23 // pred_check_branch
          %201 = sbr.rel (%p199) target = $region32
        $region31: #{encoder_forward.25} parent=23 // pred_region
          %s202 = smul.u32 2, %s23
          %p203 = scmp.lt.s32.totalorder %s202, 3
          %s204 = scalar_select %p203, %s202, 3
          %s205 = smul.addr %s204, 8
          %s206 = scalar_lea.vmem %s3, %s205
          %s207 = smul.u32 2, %s23
        $region32: #{encoder_forward.25} parent=23 // pred_fallthru
          _
        // Predicated region
        $region33: #{encoder_forward.25} parent=23 // pred_check
          %p208 = pneg %p132
        $region34: #{encoder_forward.25} parent=23 // pred_check_branch
          %210 = sbr.rel (%p208) target = $region36
        $region35: #{encoder_forward.25} parent=23 // pred_region
          _
        $region36: #{encoder_forward.25} parent=23 // pred_fallthru
          _
      $region24: #{encoder_forward.25} parent=5 // pred_fallthru
        _
      %p211 = scmp.le.s32.totalorder 1, %s23
      %p212 = scmp.lt.s32.totalorder %s23, 3
      %p213 = pnand %p211, %p212
      %p214 = pneg %p213
      // Predicated region
      $region37: #{encoder_forward.25} parent=5 // pred_check
        _
      $region38: #{encoder_forward.25} parent=5 // pred_check_branch
        %216 = sbr.rel (%p213) target = $region40
      $region39: #{encoder_forward.25} parent=5 // pred_region
        #allocation14 [shape = 'u8[36864]{0}', space=vmem, size = 0x9000, dematerialized = true, scoped, tag = 'FusionAdapter Buffer %fusion.15 = bf16[144,128]{1,0:T(8,128)(2,1)} fusion(%param_1.105, %param_2.26), kind=kLoop, calls=%fused_computation.76.clone, metadata={op_name="jit(encoder_forward)/jit(_pad)/pad" stack_frame_id=124}']
        #allocation15 [shape = 'u8[512]{0}', space=vmem, size = 0x400, dematerialized = true, scoped, tag = 'FusionAdapter Buffer %fusion.26 = f32[1,128]{1,0:T(1,128)} fusion(%param_6.6, %param_4.6), kind=kLoop, calls=%fused_computation.93.clone, metadata={op_name="jit(encoder_forward)/jit(_pad)/pad" stack_frame_id=125}']
        #allocation16 [shape = 'u8[8192]{0}', space=vmem, size = 0x2000, dematerialized = true, scoped, tag = 'FusionAdapter Buffer %fusion.18 = f32[32,128]{1,0:T(8,128)} fusion(%param_3.13, %param_4.6, %param_5.4), kind=kLoop, calls=%fused_computation.82.clone, metadata={op_name="jit(encoder_forward)/jit(_pad)/pad" stack_frame_id=127}']
        %s217 = ssub.s32 %s23, 1
        %s218 = smul.u32 2, %s28
        %p219 = scmp.lt.s32.totalorder %s218, 3
        %s220 = scalar_select %p219, %s218, 3
        %s221 = smul.addr %s220, 2
        %s222 = smul.addr %s221, 4
        %s223 = scalar_lea.vmem %s0, %s222
        %p224 = pneg %p49
        %p225 = pneg %p46
        %p226 = pneg %p70
        %p227 = pneg %p67
        %p228 = pneg %p91
        %p229 = pneg %p88
        %s230 = smul.u32 2, %s28
        %p231 = scmp.lt.s32.totalorder %s230, 3
        %s232 = scalar_select %p231, %s230, 3
        %s233 = smul.addr %s232, 8
        %s234 = scalar_lea.vmem %s3, %s233
        %p235 = pneg %p117
        %p236 = pneg %p114
        %p237 = pneg %p138
        %p238 = pneg %p135
        %p239 = pneg %p164
        %p240 = pneg %p161
        %s241 = sand.u32 %s151, 1
        %s242 = scalar_lea.sflag [#allocation13], %s241
        %s243 = sand.u32 %s151, 1
        %s244 = smul.addr %s243, 16
        %s245 = scalar_lea.vmem [#allocation12], %s244
        %s246 = smul.u32 2, %s28
        %p247 = scmp.lt.s32.totalorder %s246, 3
        %s248 = scalar_select %p247, %s246, 3
        %s249 = smul.addr %s248, 2
        %s250 = smul.addr %s249, 4
        %s251 = scalar_lea.vmem %s0, %s250
        %s252 = smul.u32 2, %s28
        %s253 = smul.u32 2, %s28
        %p254 = scmp.lt.s32.totalorder %s253, 3
        %s255 = scalar_select %p254, %s253, 3
        %s256 = smul.addr %s255, 8
        %s257 = scalar_lea.vmem %s3, %s256
        %s258 = smul.u32 2, %s28
        %s259 = smul.u32 2, %s28
        %s260 = smul.u32 2, %s28
        %s262 = sor.u32 255, 127
        %s263 = sand.u32 %s262, 85
        %s264 = sshrl.u32 %s263, 1
        %s265 = sor.u32 %s263, %s264
        %s266 = sand.u32 51, %s265
        %s267 = sshrl.u32 %s266, 2
        %s268 = sor.u32 %s266, %s267
        %s269 = sand.u32 15, %s268
        %v270 = vld [vmem:[%s1] sm:%s269]
        %v271 = vunpack.c.l.bf16 %v270
        %v272 = vunpack.c.h.bf16 %v270
        %v273 = vlaneseq
        %v274 = vand.u32 %v273, 127
        %vm276 = vcmp.lt.s32.totalorder %v274, 32
        %v277 = vsel %vm276, %v271, %v13
        %v278 = vpack.c.bf16 0.0, %v277
        %s280 = ssub.s32 16, 1
        %281 = vst [vmem:[#allocation14] sm:%s280] %v278
        %s282 = scalar_lea.vmem %s1, 4
        %s284 = sor.u32 255, 127
        %s285 = sand.u32 %s284, 85
        %s286 = sshrl.u32 %s285, 1
        %s287 = sor.u32 %s285, %s286
        %s288 = sand.u32 51, %s287
        %s289 = sshrl.u32 %s288, 2
        %s290 = sor.u32 %s288, %s289
        %s291 = sand.u32 15, %s290
        %v292 = vld [vmem:[%s282] sm:%s291]
        %v293 = vunpack.c.l.bf16 %v292
        %v294 = vunpack.c.h.bf16 %v292
        %v295 = vlaneseq
        %v296 = vand.u32 %v295, 127
        %vm298 = vcmp.lt.s32.totalorder %v296, 32
        %v299 = vsel %vm298, %v293, %v13
        %s300 = scalar_lea.vmem [#allocation14], 4
        %v301 = vpack.c.bf16 0.0, %v299
        %s303 = ssub.s32 16, 1
        %304 = vst [vmem:[%s300] sm:%s303] %v301
        %s305 = scalar_lea.vmem %s1, 8
        %s307 = sor.u32 255, 127
        %s308 = sand.u32 %s307, 85
        %s309 = sshrl.u32 %s308, 1
        %s310 = sor.u32 %s308, %s309
        %s311 = sand.u32 51, %s310
        %s312 = sshrl.u32 %s311, 2
        %s313 = sor.u32 %s311, %s312
        %s314 = sand.u32 15, %s313
        %v315 = vld [vmem:[%s305] sm:%s314]
        %v316 = vunpack.c.l.bf16 %v315
        %v317 = vunpack.c.h.bf16 %v315
        %v318 = vlaneseq
        %v319 = vand.u32 %v318, 127
        %vm321 = vcmp.lt.s32.totalorder %v319, 32
        %v322 = vsel %vm321, %v316, %v13
        %s323 = scalar_lea.vmem [#allocation14], 8
        %v324 = vpack.c.bf16 0.0, %v322
        %s326 = ssub.s32 16, 1
        %327 = vst [vmem:[%s323] sm:%s326] %v324
        %s328 = scalar_lea.vmem %s1, 12
        %s330 = sor.u32 255, 127
        %s331 = sand.u32 %s330, 85
        %s332 = sshrl.u32 %s331, 1
        %s333 = sor.u32 %s331, %s332
        %s334 = sand.u32 51, %s333
        %s335 = sshrl.u32 %s334, 2
        %s336 = sor.u32 %s334, %s335
        %s337 = sand.u32 15, %s336
        %v338 = vld [vmem:[%s328] sm:%s337]
        %v339 = vunpack.c.l.bf16 %v338
        %v340 = vunpack.c.h.bf16 %v338
        %v341 = vlaneseq
        %v342 = vand.u32 %v341, 127
        %vm344 = vcmp.lt.s32.totalorder %v342, 32
        %v345 = vsel %vm344, %v339, %v13
        %s346 = scalar_lea.vmem [#allocation14], 12
        %v347 = vpack.c.bf16 0.0, %v345
        %s349 = ssub.s32 16, 1
        %350 = vst [vmem:[%s346] sm:%s349] %v347
        %s351 = scalar_lea.vmem %s1, 16
        %s353 = sor.u32 255, 127
        %s354 = sand.u32 %s353, 85
        %s355 = sshrl.u32 %s354, 1
        %s356 = sor.u32 %s354, %s355
        %s357 = sand.u32 51, %s356
        %s358 = sshrl.u32 %s357, 2
        %s359 = sor.u32 %s357, %s358
        %s360 = sand.u32 15, %s359
        %v361 = vld [vmem:[%s351] sm:%s360]
        %v362 = vunpack.c.l.bf16 %v361
        %v363 = vunpack.c.h.bf16 %v361
        %v364 = vlaneseq
        %v365 = vand.u32 %v364, 127
        %vm367 = vcmp.lt.s32.totalorder %v365, 32
        %v368 = vsel %vm367, %v362, %v13
        %s369 = scalar_lea.vmem [#allocation14], 16
        %v370 = vpack.c.bf16 0.0, %v368
        %s372 = ssub.s32 16, 1
        %373 = vst [vmem:[%s369] sm:%s372] %v370
        %s374 = scalar_lea.vmem %s1, 20
        %s376 = sor.u32 255, 127
        %s377 = sand.u32 %s376, 85
        %s378 = sshrl.u32 %s377, 1
        %s379 = sor.u32 %s377, %s378
        %s380 = sand.u32 51, %s379
        %s381 = sshrl.u32 %s380, 2
        %s382 = sor.u32 %s380, %s381
        %s383 = sand.u32 15, %s382
        %v384 = vld [vmem:[%s374] sm:%s383]
        %v385 = vunpack.c.l.bf16 %v384
        %v386 = vunpack.c.h.bf16 %v384
        %v387 = vlaneseq
        %v388 = vand.u32 %v387, 127
        %vm390 = vcmp.lt.s32.totalorder %v388, 32
        %v391 = vsel %vm390, %v385, %v13
        %s392 = scalar_lea.vmem [#allocation14], 20
        %v393 = vpack.c.bf16 0.0, %v391
        %s395 = ssub.s32 16, 1
        %396 = vst [vmem:[%s392] sm:%s395] %v393
        %s397 = scalar_lea.vmem %s1, 24
        %s399 = sor.u32 255, 127
        %s400 = sand.u32 %s399, 85
        %s401 = sshrl.u32 %s400, 1
        %s402 = sor.u32 %s400, %s401
        %s403 = sand.u32 51, %s402
        %s404 = sshrl.u32 %s403, 2
        %s405 = sor.u32 %s403, %s404
        %s406 = sand.u32 15, %s405
        %v407 = vld [vmem:[%s397] sm:%s406]
        %v408 = vunpack.c.l.bf16 %v407
        %v409 = vunpack.c.h.bf16 %v407
        %v410 = vlaneseq
        %v411 = vand.u32 %v410, 127
        %vm413 = vcmp.lt.s32.totalorder %v411, 32
        %v414 = vsel %vm413, %v408, %v13
        %s415 = scalar_lea.vmem [#allocation14], 24
        %v416 = vpack.c.bf16 0.0, %v414
        %s418 = ssub.s32 16, 1
        %419 = vst [vmem:[%s415] sm:%s418] %v416
        %s420 = scalar_lea.vmem %s1, 28
        %s422 = sor.u32 255, 127
        %s423 = sand.u32 %s422, 85
        %s424 = sshrl.u32 %s423, 1
        %s425 = sor.u32 %s423, %s424
        %s426 = sand.u32 51, %s425
        %s427 = sshrl.u32 %s426, 2
        %s428 = sor.u32 %s426, %s427
        %s429 = sand.u32 15, %s428
        %v430 = vld [vmem:[%s420] sm:%s429]
        %v431 = vunpack.c.l.bf16 %v430
        %v432 = vunpack.c.h.bf16 %v430
        %v433 = vlaneseq
        %v434 = vand.u32 %v433, 127
        %vm436 = vcmp.lt.s32.totalorder %v434, 32
        %v437 = vsel %vm436, %v431, %v13
        %s438 = scalar_lea.vmem [#allocation14], 28
        %v439 = vpack.c.bf16 0.0, %v437
        %s441 = ssub.s32 16, 1
        %442 = vst [vmem:[%s438] sm:%s441] %v439
        %s443 = scalar_lea.vmem %s1, 32
        %s445 = sor.u32 255, 127
        %s446 = sand.u32 %s445, 85
        %s447 = sshrl.u32 %s446, 1
        %s448 = sor.u32 %s446, %s447
        %s449 = sand.u32 51, %s448
        %s450 = sshrl.u32 %s449, 2
        %s451 = sor.u32 %s449, %s450
        %s452 = sand.u32 15, %s451
        %v453 = vld [vmem:[%s443] sm:%s452]
        %v454 = vunpack.c.l.bf16 %v453
        %v455 = vunpack.c.h.bf16 %v453
        %v456 = vlaneseq
        %v457 = vand.u32 %v456, 127
        %vm459 = vcmp.lt.s32.totalorder %v457, 32
        %v460 = vsel %vm459, %v454, %v13
        %s461 = scalar_lea.vmem [#allocation14], 32
        %v462 = vpack.c.bf16 0.0, %v460
        %s464 = ssub.s32 16, 1
        %465 = vst [vmem:[%s461] sm:%s464] %v462
        %s466 = scalar_lea.vmem %s1, 36
        %s468 = sor.u32 255, 127
        %s469 = sand.u32 %s468, 85
        %s470 = sshrl.u32 %s469, 1
        %s471 = sor.u32 %s469, %s470
        %s472 = sand.u32 51, %s471
        %s473 = sshrl.u32 %s472, 2
        %s474 = sor.u32 %s472, %s473
        %s475 = sand.u32 15, %s474
        %v476 = vld [vmem:[%s466] sm:%s475]
        %v477 = vunpack.c.l.bf16 %v476
        %v478 = vunpack.c.h.bf16 %v476
        %v479 = vlaneseq
        %v480 = vand.u32 %v479, 127
        %vm482 = vcmp.lt.s32.totalorder %v480, 32
        %v483 = vsel %vm482, %v477, %v13
        %s484 = scalar_lea.vmem [#allocation14], 36
        %v485 = vpack.c.bf16 0.0, %v483
        %s487 = ssub.s32 16, 1
        %488 = vst [vmem:[%s484] sm:%s487] %v485
        %s489 = scalar_lea.vmem %s1, 40
        %s491 = sor.u32 255, 127
        %s492 = sand.u32 %s491, 85
        %s493 = sshrl.u32 %s492, 1
        %s494 = sor.u32 %s492, %s493
        %s495 = sand.u32 51, %s494
        %s496 = sshrl.u32 %s495, 2
        %s497 = sor.u32 %s495, %s496
        %s498 = sand.u32 15, %s497
        %v499 = vld [vmem:[%s489] sm:%s498]
        %v500 = vunpack.c.l.bf16 %v499
        %v501 = vunpack.c.h.bf16 %v499
        %v502 = vlaneseq
        %v503 = vand.u32 %v502, 127
        %vm505 = vcmp.lt.s32.totalorder %v503, 32
        %v506 = vsel %vm505, %v500, %v13
        %s507 = scalar_lea.vmem [#allocation14], 40
        %v508 = vpack.c.bf16 0.0, %v506
        %s510 = ssub.s32 16, 1
        %511 = vst [vmem:[%s507] sm:%s510] %v508
        %s512 = scalar_lea.vmem %s1, 44
        %s514 = sor.u32 255, 127
        %s515 = sand.u32 %s514, 85
        %s516 = sshrl.u32 %s515, 1
        %s517 = sor.u32 %s515, %s516
        %s518 = sand.u32 51, %s517
        %s519 = sshrl.u32 %s518, 2
        %s520 = sor.u32 %s518, %s519
        %s521 = sand.u32 15, %s520
        %v522 = vld [vmem:[%s512] sm:%s521]
        %v523 = vunpack.c.l.bf16 %v522
        %v524 = vunpack.c.h.bf16 %v522
        %v525 = vlaneseq
        %v526 = vand.u32 %v525, 127
        %vm528 = vcmp.lt.s32.totalorder %v526, 32
        %v529 = vsel %vm528, %v523, %v13
        %s530 = scalar_lea.vmem [#allocation14], 44
        %v531 = vpack.c.bf16 0.0, %v529
        %s533 = ssub.s32 16, 1
        %534 = vst [vmem:[%s530] sm:%s533] %v531
        %s535 = scalar_lea.vmem %s1, 48
        %s537 = sor.u32 255, 127
        %s538 = sand.u32 %s537, 85
        %s539 = sshrl.u32 %s538, 1
        %s540 = sor.u32 %s538, %s539
        %s541 = sand.u32 51, %s540
        %s542 = sshrl.u32 %s541, 2
        %s543 = sor.u32 %s541, %s542
        %s544 = sand.u32 15, %s543
        %v545 = vld [vmem:[%s535] sm:%s544]
        %v546 = vunpack.c.l.bf16 %v545
        %v547 = vunpack.c.h.bf16 %v545
        %v548 = vlaneseq
        %v549 = vand.u32 %v548, 127
        %vm551 = vcmp.lt.s32.totalorder %v549, 32
        %v552 = vsel %vm551, %v546, %v13
        %s553 = scalar_lea.vmem [#allocation14], 48
        %v554 = vpack.c.bf16 0.0, %v552
        %s556 = ssub.s32 16, 1
        %557 = vst [vmem:[%s553] sm:%s556] %v554
        %s558 = scalar_lea.vmem %s1, 52
        %s560 = sor.u32 255, 127
        %s561 = sand.u32 %s560, 85
        %s562 = sshrl.u32 %s561, 1
        %s563 = sor.u32 %s561, %s562
        %s564 = sand.u32 51, %s563
        %s565 = sshrl.u32 %s564, 2
        %s566 = sor.u32 %s564, %s565
        %s567 = sand.u32 15, %s566
        %v568 = vld [vmem:[%s558] sm:%s567]
        %v569 = vunpack.c.l.bf16 %v568
        %v570 = vunpack.c.h.bf16 %v568
        %v571 = vlaneseq
        %v572 = vand.u32 %v571, 127
        %vm574 = vcmp.lt.s32.totalorder %v572, 32
        %v575 = vsel %vm574, %v569, %v13
        %s576 = scalar_lea.vmem [#allocation14], 52
        %v577 = vpack.c.bf16 0.0, %v575
        %s579 = ssub.s32 16, 1
        %580 = vst [vmem:[%s576] sm:%s579] %v577
        %s581 = scalar_lea.vmem %s1, 56
        %s583 = sor.u32 255, 127
        %s584 = sand.u32 %s583, 85
        %s585 = sshrl.u32 %s584, 1
        %s586 = sor.u32 %s584, %s585
        %s587 = sand.u32 51, %s586
        %s588 = sshrl.u32 %s587, 2
        %s589 = sor.u32 %s587, %s588
        %s590 = sand.u32 15, %s589
        %v591 = vld [vmem:[%s581] sm:%s590]
        %v592 = vunpack.c.l.bf16 %v591
        %v593 = vunpack.c.h.bf16 %v591
        %v594 = vlaneseq
        %v595 = vand.u32 %v594, 127
        %vm597 = vcmp.lt.s32.totalorder %v595, 32
        %v598 = vsel %vm597, %v592, %v13
        %s599 = scalar_lea.vmem [#allocation14], 56
        %v600 = vpack.c.bf16 0.0, %v598
        %s602 = ssub.s32 16, 1
        %603 = vst [vmem:[%s599] sm:%s602] %v600
        %s604 = scalar_lea.vmem %s1, 60
        %s606 = sor.u32 255, 127
        %s607 = sand.u32 %s606, 85
        %s608 = sshrl.u32 %s607, 1
        %s609 = sor.u32 %s607, %s608
        %s610 = sand.u32 51, %s609
        %s611 = sshrl.u32 %s610, 2
        %s612 = sor.u32 %s610, %s611
        %s613 = sand.u32 15, %s612
        %v614 = vld [vmem:[%s604] sm:%s613]
        %v615 = vunpack.c.l.bf16 %v614
        %v616 = vunpack.c.h.bf16 %v614
        %v617 = vlaneseq
        %v618 = vand.u32 %v617, 127
        %vm620 = vcmp.lt.s32.totalorder %v618, 32
        %v621 = vsel %vm620, %v615, %v13
        %s622 = scalar_lea.vmem [#allocation14], 60
        %v623 = vpack.c.bf16 0.0, %v621
        %s625 = ssub.s32 16, 1
        %626 = vst [vmem:[%s622] sm:%s625] %v623
        %s627 = scalar_lea.vmem %s1, 64
        %s629 = sor.u32 255, 127
        %s630 = sand.u32 %s629, 85
        %s631 = sshrl.u32 %s630, 1
        %s632 = sor.u32 %s630, %s631
        %s633 = sand.u32 51, %s632
        %s634 = sshrl.u32 %s633, 2
        %s635 = sor.u32 %s633, %s634
        %s636 = sand.u32 15, %s635
        %v637 = vld [vmem:[%s627] sm:%s636]
        %v638 = vunpack.c.l.bf16 %v637
        %v639 = vunpack.c.h.bf16 %v637
        %v640 = vlaneseq
        %v641 = vand.u32 %v640, 127
        %vm643 = vcmp.lt.s32.totalorder %v641, 32
        %v644 = vsel %vm643, %v638, %v13
        %s645 = scalar_lea.vmem [#allocation14], 64
        %v646 = vpack.c.bf16 0.0, %v644
        %s648 = ssub.s32 16, 1
        %649 = vst [vmem:[%s645] sm:%s648] %v646
        %s650 = scalar_lea.vmem %s1, 68
        %s652 = sor.u32 255, 127
        %s653 = sand.u32 %s652, 85
        %s654 = sshrl.u32 %s653, 1
        %s655 = sor.u32 %s653, %s654
        %s656 = sand.u32 51, %s655
        %s657 = sshrl.u32 %s656, 2
        %s658 = sor.u32 %s656, %s657
        %s659 = sand.u32 15, %s658
        %v660 = vld [vmem:[%s650] sm:%s659]
        %v661 = vunpack.c.l.bf16 %v660
        %v662 = vunpack.c.h.bf16 %v660
        %v663 = vlaneseq
        %v664 = vand.u32 %v663, 127
        %vm666 = vcmp.lt.s32.totalorder %v664, 32
        %v667 = vsel %vm666, %v661, %v13
        %s668 = scalar_lea.vmem [#allocation14], 68
        %v669 = vpack.c.bf16 0.0, %v667
        %s671 = ssub.s32 16, 1
        %672 = vst [vmem:[%s668] sm:%s671] %v669
        %v673 = vld [vmem:[%s6] sm:$0x1]
        %v674 = vlaneseq
        %v675 = vshrl.u32 %v674, 7
        %vm677 = vcmp.lt.s32.totalorder %v675, 1
        %v678 = vsel %vm677, %v673, %v17
        %v679 = vlaneseq
        %v680 = vand.u32 %v679, 127
        %vm682 = vcmp.lt.s32.totalorder %v680, 32
        %v683 = vsel %vm682, %v678, %v17
        %s685 = ssub.s32 2, 1
        %686 = vst [vmem:[#allocation15] sm:%s685] %v683
        %s687 = smul.addr %s28, 2
        %s688 = smul.addr %s687, 8
        %v689 = vld [vmem:[%s257] sm:$0xff]
        %v690 = vld [vmem:[%s5] ss:$0 sm:$0xff]
        %v692 = vshra.s32 %v690, 0
        %v693 = vand.u32 %v692, 255
        %694 = xla_tuple %v693, %v689, %v18
        %695 = xla_tuple %694
        %vm696 = vcmp.ne.s32.totalorder %v693, 0
        %v697 = vsel %vm696, %v689, %v18
        %698 = xla_tuple %v697
        %s700 = ssub.s32 256, 1
        %701 = vst [vmem:[#allocation16] sm:%s700] %v697
        %s702 = scalar_lea.vmem %s257, 8
        %v703 = vld [vmem:[%s702] sm:$0xff]
        %704 = xla_tuple %v693, %v703, %v18
        %705 = xla_tuple %704
        %vm706 = vcmp.ne.s32.totalorder %v693, 0
        %v707 = vsel %vm706, %v703, %v18
        %708 = xla_tuple %v707
        %s709 = scalar_lea.vmem [#allocation16], 8
        %s711 = ssub.s32 256, 1
        %712 = vst [vmem:[%s709] sm:%s711] %v707
        %v714 = vld [vmem:[%s251] sm:$0xff]
        %v715 = vld [vmem:[%s251 + $0x8] sm:$0xff]
        %v716 = vld [vmem:[#allocation14] sm:$0xf]
        %v717 = vld [vmem:[#allocation14 + $0x4] sm:$0xf]
        %v718 = vld [vmem:[#allocation14 + $0x8] sm:$0xf]
        %v719 = vld [vmem:[#allocation14 + $0xc] sm:$0xf]
        %v720 = vld [vmem:[#allocation14 + $0x10] sm:$0xf]
        %v721 = vld [vmem:[#allocation14 + $0x14] sm:$0xf]
        %v722 = vld [vmem:[#allocation14 + $0x18] sm:$0xf]
        %v723 = vld [vmem:[#allocation14 + $0x1c] sm:$0xf]
        %v724 = vld [vmem:[#allocation14 + $0x20] sm:$0xf]
        %v725 = vld [vmem:[#allocation14 + $0x24] sm:$0xf]
        %v726 = vld [vmem:[#allocation14 + $0x28] sm:$0xf]
        %v727 = vld [vmem:[#allocation14 + $0x2c] sm:$0xf]
        %v728 = vld [vmem:[#allocation14 + $0x30] sm:$0xf]
        %v729 = vld [vmem:[#allocation14 + $0x34] sm:$0xf]
        %v730 = vld [vmem:[#allocation14 + $0x38] sm:$0xf]
        %v731 = vld [vmem:[#allocation14 + $0x3c] sm:$0xf]
        %v732 = vld [vmem:[#allocation14 + $0x40] sm:$0xf]
        %v733 = vld [vmem:[#allocation14 + $0x44] sm:$0xf]
        %v734 = vld [vmem:[#allocation15] sm:$0x1]
        %v735 = vld [vmem:[#allocation16] sm:$0xff]
        %v736 = vld [vmem:[#allocation16 + $0x8] sm:$0xff]
        %v738 = vlaneseq
        %v739 = vshrl.u32 %v738, 7
        %v740 = vsub.s32 0, %v739
        %v741 = vrot.slane %v734, %v740
        %v745 = vunpack.c.l.b16 %v714
        %v746 = vunpack.c.h.b16 %v714
        %v747 = vunpack.c.l.b16 %v715
        %v748 = vunpack.c.h.b16 %v715
        %v749 = vpack.c.b16 %v747, %v745
        %v750 = vpack.c.b16 %v748, %v746
        %v770 = vunpack.c.l.b16 %v716
        %v771 = vunpack.c.l.b16 %v717
        %v772 = vunpack.c.l.b16 %v718
        %v773 = vunpack.c.l.b16 %v719
        %v774 = vunpack.c.l.b16 %v720
        %v775 = vunpack.c.l.b16 %v721
        %v776 = vunpack.c.l.b16 %v722
        %v777 = vunpack.c.l.b16 %v723
        %v778 = vunpack.c.l.b16 %v724
        %v779 = vunpack.c.l.b16 %v725
        %v780 = vunpack.c.l.b16 %v726
        %v781 = vunpack.c.l.b16 %v727
        %v782 = vunpack.c.l.b16 %v728
        %v783 = vunpack.c.l.b16 %v729
        %v784 = vunpack.c.l.b16 %v730
        %v785 = vunpack.c.l.b16 %v731
        %v786 = vunpack.c.l.b16 %v732
        %v787 = vunpack.c.l.b16 %v733
        %v788 = vpack.c.b16 %v771, %v770
        %v789 = vpack.c.b16 %v773, %v772
        %v790 = vpack.c.b16 %v775, %v774
        %v791 = vpack.c.b16 %v777, %v776
        %v792 = vpack.c.b16 %v779, %v778
        %v793 = vpack.c.b16 %v781, %v780
        %v794 = vpack.c.b16 %v783, %v782
        %v795 = vpack.c.b16 %v785, %v784
        %v796 = vpack.c.b16 %v787, %v786
        %vm806 = vcmask 130048
        %v808 = vsel %vm806, %v750, 0
        %810 = vmatprep.subr.bf16.mxu0 0
        %811 = vmatpush1.bf16.msra.mxu0 %v795
        %812 = vmatprep.subr.bf16.mxu0 0
        %813 = vmatpush1.bf16.msra.mxu0 %v794
        %814 = vmatprep.subr.bf16.mxu0 0
        %815 = vmatpush1.bf16.msra.mxu0 %v793
        %816 = vmatprep.subr.bf16.mxu0 0
        %817 = vmatpush1.bf16.msra.mxu0 %v792
        %818 = vmatprep.subr.bf16.mxu0 0
        %819 = vmatpush1.bf16.msra.mxu0 %v791
        %820 = vmatprep.subr.bf16.mxu0 0
        %821 = vmatpush1.bf16.msra.mxu0 %v790
        %822 = vmatprep.subr.bf16.mxu0 0
        %823 = vmatpush1.bf16.msra.mxu0 %v789
        %824 = vmatprep.subr.bf16.mxu0 0
        %825 = vmatpush1.bf16.msra.mxu0 %v788
        %826 = vmatprep.subr.bf16.mxu0 0
        %827 = vmatpush2.bf16.msra.mxu0 0
        %828 = vmatprep.subr.bf16.mxu0 0
        %829 = vmatpush2.bf16.msra.mxu0 0
        %830 = vmatprep.subr.bf16.mxu0 0
        %831 = vmatpush2.bf16.msra.mxu0 0
        %832 = vmatprep.subr.bf16.mxu0 0
        %833 = vmatpush2.bf16.msra.mxu0 0
        %834 = vmatprep.subr.bf16.mxu0 0
        %835 = vmatpush2.bf16.msra.mxu0 0
        %836 = vmatprep.subr.bf16.mxu0 0
        %837 = vmatpush2.bf16.msra.mxu0 0
        %838 = vmatprep.subr.bf16.mxu0 0
        %839 = vmatpush2.bf16.msra.mxu0 0
        %840 = vmatprep.subr.bf16.mxu0 0
        %841 = vmatpush2.bf16.msra.mxu0 %v796
        %842 = vmatprep.mubr.bf16.mxu0 %v808
        %843 = vmatmul.mubr.bf16.gmra.mxu0 %v749
        %v844 = vpop.f32.mrf.mxu0
        %v845 = vadd.f32 %v741, %v844
        %v846 = vpop.f32.mrf.mxu0
        %v847 = vpop.f32.mrf.mxu0
        %v848 = vadd.f32 %v741, %v847
        %v849 = vpop.f32.mrf.mxu0
        %850 = vdwg.mxu0
        %v851 = vadd.f32 %v845, %v735
        %v852 = vadd.f32 %v848, %v736
        %v853 = vmax.f32 %v851, 0.0
        %v854 = vmax.f32 %v852, 0.0
        %855 = vst [vmem:[%s245] sm:$0xff] %v853
        %856 = vst [vmem:[%s245 + $0x8] sm:$0xff] %v854
        %s857 = sand.u32 %s151, 1
        %s858 = scalar_lea.sflag [#allocation13], %s857
        %s859 = sand.u32 %s151, 1
        %s860 = smul.addr %s859, 16
        %s861 = scalar_lea.vmem [#allocation12], %s860
        // Predicated region
        $region41: #{encoder_forward.25} parent=39 // pred_check
          %p862 = pneg %p161
        $region42: #{encoder_forward.25} parent=39 // pred_check_branch
          %864 = sbr.rel (%p862) target = $region44
        $region43: #{encoder_forward.25} parent=39 // pred_region
          %s865 = smul.u32 2, %s28
          %s867 = ssub.s32 256, 256
          %868 = vsyncadd %s858, %s867
          %s869 = smul.addr %s865, 128
          %s870 = scalar_lea.hbm %s7, %s869
          %s871 = sshll.u32 %s861, 4
          %s872 = int_to_ptr.vmem [resolvable:$true] %s871
          %877 = dma.vmem_to_hbm [thread:$0]  %s872, 256, %s870, %s858, 128, 128, 8
        $region44: #{encoder_forward.25} parent=39 // pred_fallthru
          _
      $region40: #{encoder_forward.25} parent=5 // pred_fallthru
        _
      %p878 = scmp.le.s32.totalorder 2, %s23
      // Predicated region
      $region45: #{encoder_forward.25} parent=5 // pred_check
        %p879 = pneg %p878
      $region46: #{encoder_forward.25} parent=5 // pred_check_branch
        %881 = sbr.rel (%p879) target = $region48
      $region47: #{encoder_forward.25} parent=5 // pred_region
        %s882 = ssub.s32 %s23, 2
        // Predicated region
        $region49: #{encoder_forward.25} parent=47 // pred_check
          %p883 = pneg %p167
        $region50: #{encoder_forward.25} parent=47 // pred_check_branch
          %885 = sbr.rel (%p883) target = $region52
        $region51: #{encoder_forward.25} parent=47 // pred_region
          %s886 = sand.u32 %s152, 1
          %s887 = scalar_lea.sflag [#allocation13], %s886
          %s888 = sand.u32 %s152, 1
          %s889 = smul.addr %s888, 16
          %s890 = scalar_lea.vmem [#allocation12], %s889
          %891 = dma.done %s887, 256
        $region52: #{encoder_forward.25} parent=47 // pred_fallthru
          _
      $region48: #{encoder_forward.25} parent=5 // pred_fallthru
        _
    $region6: #{encoder_forward.25} parent=1 // loop_footer
      %s27 = sadd.s32 1, %s23
    $region7: #{encoder_forward.25} parent=1 // loop_footer_branch
      %22 = sbr.rel target = $region3
    $region8: #{encoder_forward.25} parent=1 // loop_exit
      _
    %892 = vsyncpa [#allocation13], 1
    %s893 = scalar_lea.sflag [#allocation13], 1
    %894 = vsyncpa %s893, 1

// kernel: encoder_forward.24
$region0: #{encoder_forward.24}
  #allocation0 [shape = 'u32[]', space=smem, size = 0x4, offset = 0x4, fixed_abs, tag = 'smem constant byte address 0x4 - core index']
  #allocation1 [shape = 'u32[144,128]{1,0:T(1,128)}', space=vmem, size = 0x12000, scoped, tag = 'internal scratch']
  #allocation2 [shape = 'u32[2048]{0}', space=vmem, size = 0x2000, scoped, tag = 'scoped memory for encoder_forward.24']
  #allocation3 [shape = 'u32[2048]{0}', space=vmem, size = 0x2000, scoped, tag = 'scoped memory for encoder_forward.24']
  #allocation4 [shape = 'u32[2048]{0}', space=vmem, size = 0x2000, scoped, tag = 'scoped memory for encoder_forward.24']
  #allocation5 [shape = 'u32[2048]{0}', space=vmem, size = 0x2000, scoped, tag = 'scoped memory for encoder_forward.24']
  #allocation6 [shape = 'u32[2048]{0}', space=vmem, size = 0x2000, scoped, tag = 'scoped memory for encoder_forward.24']
  #allocation7 [shape = 'u32[2048]{0}', space=vmem, size = 0x2000, scoped, tag = 'scoped memory for encoder_forward.24']
  #allocation8 [shape = 'u32[2048]{0}', space=vmem, size = 0x2000, scoped, tag = 'scoped memory for encoder_forward.24']
  #allocation9 [shape = 'u32[2048]{0}', space=vmem, size = 0x2000, scoped, tag = 'scoped memory for encoder_forward.24']
  #allocation10 [shape = 'u32[2048]{0}', space=vmem, size = 0x2000, scoped, tag = 'scoped memory for encoder_forward.24']
  #allocation11 [shape = 'u32[2048]{0}', space=vmem, size = 0x2000, scoped, tag = 'scoped memory for encoder_forward.24']
  %s0 = inlined_call_operand.vmem [shape: bf16[32,144], index: 0, kind: input, shape index: {}]
  %s1 = inlined_call_operand.vmem [shape: bf16[144,32], index: 1, kind: input, shape index: {}]
  %s2 = inlined_call_operand.<no memory space> [shape: bf16[], index: 2, kind: input, shape index: {}]
  %s3 = inlined_call_operand.vmem [shape: f32[32,128], index: 3, kind: input, shape index: {}]
  %s4 = inlined_call_operand.<no memory space> [shape: f32[], index: 4, kind: input, shape index: {}]
  %s5 = inlined_call_operand.vmem [shape: pred[128], index: 5, kind: input, shape index: {}]
  %s6 = inlined_call_operand.vmem [shape: f32[1,32], index: 6, kind: input, shape index: {}]
  %s7 = inlined_call_operand.vmem [shape: f32[32,128], index: 7, kind: output, shape index: {}]
  %s8 = sld [smem:[#allocation0]]
  $region53: #{encoder_forward.24} parent=0
    _
  %s10 = ssub.s32 1, %s8
  %s11 = scalar_select 0, %s10, %s8
  %v12 = vstv %s2
  %v13 = vunpack.i.l.bf16 %v12
  %v15 = vunpack.i.h.bf16 %v12
  %v17 = vstv %s4
  %v18 = vstv %s4
  loop: start=0, step=1, limit=4
  $region2: #{encoder_forward.24} parent=0 // loop_pre_header
    _
  $region3: #{encoder_forward.24} parent=0 // loop_header
    %s20 = sphi 0, %s24
    %p21 = scmp.ge.s32.totalorder %s20, 4
    %s30 = sphi 0, %s32
    %s33 = sphi 0, %s30
    %s34 = sphi 0, %s33
    %s50 = sphi 0, %s34
    %s54 = sphi 0, %s54
    %s56 = sphi 0, %s54
    %s57 = sphi 0, %s56
    %s71 = sphi 0, %s57
    %s75 = sphi 0, %s75
    %s77 = sphi 0, %s75
    %s78 = sphi 0, %s77
    %s92 = sphi 0, %s78
    %s98 = sphi 0, %s100
    %s101 = sphi 0, %s98
    %s102 = sphi 0, %s101
    %s118 = sphi 0, %s102
    %s122 = sphi 0, %s122
    %s124 = sphi 0, %s122
    %s125 = sphi 0, %s124
    %s139 = sphi 0, %s125
    %s145 = sphi 0, %s147
    %s148 = sphi 0, %s145
    %s149 = sphi 0, %s148
    %s165 = sphi 0, %s149
  $region4: #{encoder_forward.24} parent=0 // loop_header_branch
    %23 = sbr.rel (%p21) target = $region8
  $region5: #{encoder_forward.24} parent=0 // loop_body
    %s25 = ssub.s32 %s20, 1
    %s26 = ssub.s32 %s20, 2
    %s27 = sadd.s32 %s20, 1
    %s28 = ssub.s32 %s20, %s27
    %p29 = scmp.eq.s32.totalorder %s28, 0
    %s31 = sadd.s32 %s30, 1
    %s32 = scalar_select %p29, %s30, %s31
    %p35 = pneg %p29
    %p36 = scmp.eq.s32.totalorder %s20, 1
    %p37 = por %p35, %p36
    %p38 = scmp.ne.s32.totalorder %s30, %s33
    %p39 = scmp.eq.s32.totalorder %s20, 0
    %p40 = por %p38, %p39
    %p41 = scmp.ne.s32.totalorder %s30, %s33
    %p42 = scmp.eq.s32.totalorder %s25, 1
    %p43 = por %p41, %p42
    %p44 = scmp.ne.s32.totalorder %s33, %s34
    %p45 = scmp.eq.s32.totalorder %s25, 0
    %p46 = por %p44, %p45
    %p47 = scmp.ne.s32.totalorder %s33, %s34
    %p48 = scmp.eq.s32.totalorder %s26, 1
    %p49 = por %p47, %p48
    %p51 = scmp.ne.s32.totalorder %s34, %s50
    %p52 = scmp.eq.s32.totalorder %s26, 0
    %p53 = por %p51, %p52
    %s55 = sadd.s32 %s54, 1
    %p58 = scmp.eq.s32.totalorder %s20, 1
    %p59 = scmp.ne.s32.totalorder %s54, %s56
    %p60 = scmp.eq.s32.totalorder %s20, 0
    %p61 = por %p59, %p60
    %p62 = scmp.ne.s32.totalorder %s54, %s56
    %p63 = scmp.eq.s32.totalorder %s25, 1
    %p64 = por %p62, %p63
    %p65 = scmp.ne.s32.totalorder %s56, %s57
    %p66 = scmp.eq.s32.totalorder %s25, 0
    %p67 = por %p65, %p66
    %p68 = scmp.ne.s32.totalorder %s56, %s57
    %p69 = scmp.eq.s32.totalorder %s26, 1
    %p70 = por %p68, %p69
    %p72 = scmp.ne.s32.totalorder %s57, %s71
    %p73 = scmp.eq.s32.totalorder %s26, 0
    %p74 = por %p72, %p73
    %s76 = sadd.s32 %s75, 1
    %p79 = scmp.eq.s32.totalorder %s20, 1
    %p80 = scmp.ne.s32.totalorder %s75, %s77
    %p81 = scmp.eq.s32.totalorder %s20, 0
    %p82 = por %p80, %p81
    %p83 = scmp.ne.s32.totalorder %s75, %s77
    %p84 = scmp.eq.s32.totalorder %s25, 1
    %p85 = por %p83, %p84
    %p86 = scmp.ne.s32.totalorder %s77, %s78
    %p87 = scmp.eq.s32.totalorder %s25, 0
    %p88 = por %p86, %p87
    %p89 = scmp.ne.s32.totalorder %s77, %s78
    %p90 = scmp.eq.s32.totalorder %s26, 1
    %p91 = por %p89, %p90
    %p93 = scmp.ne.s32.totalorder %s78, %s92
    %p94 = scmp.eq.s32.totalorder %s26, 0
    %p95 = por %p93, %p94
    %s96 = ssub.s32 %s20, %s27
    %p97 = scmp.eq.s32.totalorder %s96, 0
    %s99 = sadd.s32 %s98, 1
    %s100 = scalar_select %p97, %s98, %s99
    %p103 = pneg %p97
    %p104 = scmp.eq.s32.totalorder %s20, 1
    %p105 = por %p103, %p104
    %p106 = scmp.ne.s32.totalorder %s98, %s101
    %p107 = scmp.eq.s32.totalorder %s20, 0
    %p108 = por %p106, %p107
    %p109 = scmp.ne.s32.totalorder %s98, %s101
    %p110 = scmp.eq.s32.totalorder %s25, 1
    %p111 = por %p109, %p110
    %p112 = scmp.ne.s32.totalorder %s101, %s102
    %p113 = scmp.eq.s32.totalorder %s25, 0
    %p114 = por %p112, %p113
    %p115 = scmp.ne.s32.totalorder %s101, %s102
    %p116 = scmp.eq.s32.totalorder %s26, 1
    %p117 = por %p115, %p116
    %p119 = scmp.ne.s32.totalorder %s102, %s118
    %p120 = scmp.eq.s32.totalorder %s26, 0
    %p121 = por %p119, %p120
    %s123 = sadd.s32 %s122, 1
    %p126 = scmp.eq.s32.totalorder %s20, 1
    %p127 = scmp.ne.s32.totalorder %s122, %s124
    %p128 = scmp.eq.s32.totalorder %s20, 0
    %p129 = por %p127, %p128
    %p130 = scmp.ne.s32.totalorder %s122, %s124
    %p131 = scmp.eq.s32.totalorder %s25, 1
    %p132 = por %p130, %p131
    %p133 = scmp.ne.s32.totalorder %s124, %s125
    %p134 = scmp.eq.s32.totalorder %s25, 0
    %p135 = por %p133, %p134
    %p136 = scmp.ne.s32.totalorder %s124, %s125
    %p137 = scmp.eq.s32.totalorder %s26, 1
    %p138 = por %p136, %p137
    %p140 = scmp.ne.s32.totalorder %s125, %s139
    %p141 = scmp.eq.s32.totalorder %s26, 0
    %p142 = por %p140, %p141
    %s143 = ssub.s32 %s20, %s27
    %p144 = scmp.eq.s32.totalorder %s143, 0
    %s146 = sadd.s32 %s145, 1
    %s147 = scalar_select %p144, %s145, %s146
    %p150 = pneg %p144
    %p151 = scmp.eq.s32.totalorder %s20, 1
    %p152 = por %p150, %p151
    %p153 = scmp.ne.s32.totalorder %s145, %s148
    %p154 = scmp.eq.s32.totalorder %s20, 0
    %p155 = por %p153, %p154
    %p156 = scmp.ne.s32.totalorder %s145, %s148
    %p157 = scmp.eq.s32.totalorder %s25, 1
    %p158 = por %p156, %p157
    %p159 = scmp.ne.s32.totalorder %s148, %s149
    %p160 = scmp.eq.s32.totalorder %s25, 0
    %p161 = por %p159, %p160
    %p162 = scmp.ne.s32.totalorder %s148, %s149
    %p163 = scmp.eq.s32.totalorder %s26, 1
    %p164 = por %p162, %p163
    %p166 = scmp.ne.s32.totalorder %s149, %s165
    %p167 = scmp.eq.s32.totalorder %s26, 0
    %p168 = por %p166, %p167
    %p169 = scmp.le.s32.totalorder 1, %s20
    %p170 = scmp.lt.s32.totalorder %s20, 3
    %p171 = pnand %p169, %p170
    %p172 = pneg %p171
    // Predicated region
    $region9: #{encoder_forward.24} parent=5 // pred_check
      _
    $region10: #{encoder_forward.24} parent=5 // pred_check_branch
      %174 = sbr.rel (%p171) target = $region12
    $region11: #{encoder_forward.24} parent=5 // pred_region
      %s175 = ssub.s32 %s20, 1
      // Predicated region
      $region13: #{encoder_forward.24} parent=11 // pred_check
        %p176 = pneg %p67
      $region14: #{encoder_forward.24} parent=11 // pred_check_branch
        %178 = sbr.rel (%p176) target = $region16
      $region15: #{encoder_forward.24} parent=11 // pred_region
        _
      $region16: #{encoder_forward.24} parent=11 // pred_fallthru
        _
      // Predicated region
      $region17: #{encoder_forward.24} parent=11 // pred_check
        %p179 = pneg %p88
      $region18: #{encoder_forward.24} parent=11 // pred_check_branch
        %181 = sbr.rel (%p179) target = $region20
      $region19: #{encoder_forward.24} parent=11 // pred_region
        _
      $region20: #{encoder_forward.24} parent=11 // pred_fallthru
        _
    $region12: #{encoder_forward.24} parent=5 // pred_fallthru
      _
    %p182 = scmp.lt.s32.totalorder %s20, 2
    // Predicated region
    $region21: #{encoder_forward.24} parent=5 // pred_check
      %p183 = pneg %p182
    $region22: #{encoder_forward.24} parent=5 // pred_check_branch
      %185 = sbr.rel (%p183) target = $region24
    $region23: #{encoder_forward.24} parent=5 // pred_region
      // Predicated region
      $region25: #{encoder_forward.24} parent=23 // pred_check
        %p186 = pneg %p40
      $region26: #{encoder_forward.24} parent=23 // pred_check_branch
        %188 = sbr.rel (%p186) target = $region28
      $region27: #{encoder_forward.24} parent=23 // pred_region
        %s189 = smul.u32 2, %s20
        %p190 = scmp.lt.s32.totalorder %s189, 3
        %s191 = scalar_select %p190, %s189, 3
        %s192 = smul.addr %s191, 2
        %s193 = smul.addr %s192, 4
        %s194 = scalar_lea.vmem %s0, %s193
        %s195 = smul.u32 2, %s20
      $region28: #{encoder_forward.24} parent=23 // pred_fallthru
        _
      // Predicated region
      $region29: #{encoder_forward.24} parent=23 // pred_check
        %p196 = pneg %p108
      $region30: #{encoder_forward.24} parent=23 // pred_check_branch
        %198 = sbr.rel (%p196) target = $region32
      $region31: #{encoder_forward.24} parent=23 // pred_region
        %s199 = smul.u32 2, %s20
        %p200 = scmp.lt.s32.totalorder %s199, 3
        %s201 = scalar_select %p200, %s199, 3
        %s202 = smul.addr %s201, 8
        %s203 = scalar_lea.vmem %s3, %s202
        %s204 = smul.u32 2, %s20
      $region32: #{encoder_forward.24} parent=23 // pred_fallthru
        _
      // Predicated region
      $region33: #{encoder_forward.24} parent=23 // pred_check
        %p205 = pneg %p129
      $region34: #{encoder_forward.24} parent=23 // pred_check_branch
        %207 = sbr.rel (%p205) target = $region36
      $region35: #{encoder_forward.24} parent=23 // pred_region
        _
      $region36: #{encoder_forward.24} parent=23 // pred_fallthru
        _
    $region24: #{encoder_forward.24} parent=5 // pred_fallthru
      _
    %p208 = scmp.le.s32.totalorder 1, %s20
    %p209 = scmp.lt.s32.totalorder %s20, 3
    %p210 = pnand %p208, %p209
    %p211 = pneg %p210
    // Predicated region
    $region37: #{encoder_forward.24} parent=5 // pred_check
      _
    $region38: #{encoder_forward.24} parent=5 // pred_check_branch
      %213 = sbr.rel (%p210) target = $region40
    $region39: #{encoder_forward.24} parent=5 // pred_region
      #allocation12 [shape = 'u8[36864]{0}', space=vmem, size = 0x9000, dematerialized = true, scoped, tag = 'FusionAdapter Buffer %fusion.13 = bf16[144,128]{1,0:T(8,128)(2,1)} fusion(%param_1.109, %param_2.28), kind=kLoop, calls=%fused_computation.73.clone, metadata={op_name="jit(encoder_forward)/jit(_pad)/pad" stack_frame_id=124}']
      #allocation13 [shape = 'u8[512]{0}', space=vmem, size = 0x400, dematerialized = true, scoped, tag = 'FusionAdapter Buffer %fusion.28 = f32[1,128]{1,0:T(1,128)} fusion(%param_6.7, %param_4.8), kind=kLoop, calls=%fused_computation.95.clone, metadata={op_name="jit(encoder_forward)/jit(_pad)/pad" stack_frame_id=125}']
      #allocation14 [shape = 'u8[8192]{0}', space=vmem, size = 0x2000, dematerialized = true, scoped, tag = 'FusionAdapter Buffer %fusion.19 = f32[32,128]{1,0:T(8,128)} fusion(%param_3.15, %param_4.8, %param_5.5), kind=kLoop, calls=%fused_computation.83.clone, metadata={op_name="jit(encoder_forward)/jit(_pad)/pad" stack_frame_id=127}']
      %s214 = ssub.s32 %s20, 1
      %s215 = smul.u32 2, %s25
      %p216 = scmp.lt.s32.totalorder %s215, 3
      %s217 = scalar_select %p216, %s215, 3
      %s218 = smul.addr %s217, 2
      %s219 = smul.addr %s218, 4
      %s220 = scalar_lea.vmem %s0, %s219
      %p221 = pneg %p46
      %p222 = pneg %p43
      %p223 = pneg %p67
      %p224 = pneg %p64
      %p225 = pneg %p88
      %p226 = pneg %p85
      %s227 = smul.u32 2, %s25
      %p228 = scmp.lt.s32.totalorder %s227, 3
      %s229 = scalar_select %p228, %s227, 3
      %s230 = smul.addr %s229, 8
      %s231 = scalar_lea.vmem %s3, %s230
      %p232 = pneg %p114
      %p233 = pneg %p111
      %p234 = pneg %p135
      %p235 = pneg %p132
      %p236 = pneg %p161
      %p237 = pneg %p158
      %s238 = smul.u32 2, %s25
      %p239 = scmp.lt.s32.totalorder %s238, 3
      %s240 = scalar_select %p239, %s238, 3
      %s241 = smul.addr %s240, 8
      %s242 = scalar_lea.vmem %s7, %s241
      %s243 = smul.u32 2, %s25
      %p244 = scmp.lt.s32.totalorder %s243, 3
      %s245 = scalar_select %p244, %s243, 3
      %s246 = smul.addr %s245, 2
      %s247 = smul.addr %s246, 4
      %s248 = scalar_lea.vmem %s0, %s247
      %s249 = smul.u32 2, %s25
      %s250 = smul.u32 2, %s25
      %p251 = scmp.lt.s32.totalorder %s250, 3
      %s252 = scalar_select %p251, %s250, 3
      %s253 = smul.addr %s252, 8
      %s254 = scalar_lea.vmem %s3, %s253
      %s255 = smul.u32 2, %s25
      %s256 = smul.u32 2, %s25
      %s257 = smul.u32 2, %s25
      %p258 = scmp.lt.s32.totalorder %s257, 3
      %s259 = scalar_select %p258, %s257, 3
      %s260 = smul.addr %s259, 8
      %s261 = scalar_lea.vmem %s7, %s260
      %s262 = smul.u32 2, %s25
      %s264 = sor.u32 255, 127
      %s265 = sand.u32 %s264, 85
      %s266 = sshrl.u32 %s265, 1
      %s267 = sor.u32 %s265, %s266
      %s268 = sand.u32 51, %s267
      %s269 = sshrl.u32 %s268, 2
      %s270 = sor.u32 %s268, %s269
      %s271 = sand.u32 15, %s270
      %v272 = vld [vmem:[%s1] sm:%s271]
      %v273 = vunpack.c.l.bf16 %v272
      %v274 = vunpack.c.h.bf16 %v272
      %v275 = vlaneseq
      %v276 = vand.u32 %v275, 127
      %vm278 = vcmp.lt.s32.totalorder %v276, 32
      %v279 = vsel %vm278, %v273, %v13
      %v280 = vpack.c.bf16 0.0, %v279
      %s282 = ssub.s32 16, 1
      %283 = vst [vmem:[#allocation12] sm:%s282] %v280
      %s284 = scalar_lea.vmem %s1, 4
      %s286 = sor.u32 255, 127
      %s287 = sand.u32 %s286, 85
      %s288 = sshrl.u32 %s287, 1
      %s289 = sor.u32 %s287, %s288
      %s290 = sand.u32 51, %s289
      %s291 = sshrl.u32 %s290, 2
      %s292 = sor.u32 %s290, %s291
      %s293 = sand.u32 15, %s292
      %v294 = vld [vmem:[%s284] sm:%s293]
      %v295 = vunpack.c.l.bf16 %v294
      %v296 = vunpack.c.h.bf16 %v294
      %v297 = vlaneseq
      %v298 = vand.u32 %v297, 127
      %vm300 = vcmp.lt.s32.totalorder %v298, 32
      %v301 = vsel %vm300, %v295, %v13
      %s302 = scalar_lea.vmem [#allocation12], 4
      %v303 = vpack.c.bf16 0.0, %v301
      %s305 = ssub.s32 16, 1
      %306 = vst [vmem:[%s302] sm:%s305] %v303
      %s307 = scalar_lea.vmem %s1, 8
      %s309 = sor.u32 255, 127
      %s310 = sand.u32 %s309, 85
      %s311 = sshrl.u32 %s310, 1
      %s312 = sor.u32 %s310, %s311
      %s313 = sand.u32 51, %s312
      %s314 = sshrl.u32 %s313, 2
      %s315 = sor.u32 %s313, %s314
      %s316 = sand.u32 15, %s315
      %v317 = vld [vmem:[%s307] sm:%s316]
      %v318 = vunpack.c.l.bf16 %v317
      %v319 = vunpack.c.h.bf16 %v317
      %v320 = vlaneseq
      %v321 = vand.u32 %v320, 127
      %vm323 = vcmp.lt.s32.totalorder %v321, 32
      %v324 = vsel %vm323, %v318, %v13
      %s325 = scalar_lea.vmem [#allocation12], 8
      %v326 = vpack.c.bf16 0.0, %v324
      %s328 = ssub.s32 16, 1
      %329 = vst [vmem:[%s325] sm:%s328] %v326
      %s330 = scalar_lea.vmem %s1, 12
      %s332 = sor.u32 255, 127
      %s333 = sand.u32 %s332, 85
      %s334 = sshrl.u32 %s333, 1
      %s335 = sor.u32 %s333, %s334
      %s336 = sand.u32 51, %s335
      %s337 = sshrl.u32 %s336, 2
      %s338 = sor.u32 %s336, %s337
      %s339 = sand.u32 15, %s338
      %v340 = vld [vmem:[%s330] sm:%s339]
      %v341 = vunpack.c.l.bf16 %v340
      %v342 = vunpack.c.h.bf16 %v340
      %v343 = vlaneseq
      %v344 = vand.u32 %v343, 127
      %vm346 = vcmp.lt.s32.totalorder %v344, 32
      %v347 = vsel %vm346, %v341, %v13
      %s348 = scalar_lea.vmem [#allocation12], 12
      %v349 = vpack.c.bf16 0.0, %v347
      %s351 = ssub.s32 16, 1
      %352 = vst [vmem:[%s348] sm:%s351] %v349
      %s353 = scalar_lea.vmem %s1, 16
      %s355 = sor.u32 255, 127
      %s356 = sand.u32 %s355, 85
      %s357 = sshrl.u32 %s356, 1
      %s358 = sor.u32 %s356, %s357
      %s359 = sand.u32 51, %s358
      %s360 = sshrl.u32 %s359, 2
      %s361 = sor.u32 %s359, %s360
      %s362 = sand.u32 15, %s361
      %v363 = vld [vmem:[%s353] sm:%s362]
      %v364 = vunpack.c.l.bf16 %v363
      %v365 = vunpack.c.h.bf16 %v363
      %v366 = vlaneseq
      %v367 = vand.u32 %v366, 127
      %vm369 = vcmp.lt.s32.totalorder %v367, 32
      %v370 = vsel %vm369, %v364, %v13
      %s371 = scalar_lea.vmem [#allocation12], 16
      %v372 = vpack.c.bf16 0.0, %v370
      %s374 = ssub.s32 16, 1
      %375 = vst [vmem:[%s371] sm:%s374] %v372
      %s376 = scalar_lea.vmem %s1, 20
      %s378 = sor.u32 255, 127
      %s379 = sand.u32 %s378, 85
      %s380 = sshrl.u32 %s379, 1
      %s381 = sor.u32 %s379, %s380
      %s382 = sand.u32 51, %s381
      %s383 = sshrl.u32 %s382, 2
      %s384 = sor.u32 %s382, %s383
      %s385 = sand.u32 15, %s384
      %v386 = vld [vmem:[%s376] sm:%s385]
      %v387 = vunpack.c.l.bf16 %v386
      %v388 = vunpack.c.h.bf16 %v386
      %v389 = vlaneseq
      %v390 = vand.u32 %v389, 127
      %vm392 = vcmp.lt.s32.totalorder %v390, 32
      %v393 = vsel %vm392, %v387, %v13
      %s394 = scalar_lea.vmem [#allocation12], 20
      %v395 = vpack.c.bf16 0.0, %v393
      %s397 = ssub.s32 16, 1
      %398 = vst [vmem:[%s394] sm:%s397] %v395
      %s399 = scalar_lea.vmem %s1, 24
      %s401 = sor.u32 255, 127
      %s402 = sand.u32 %s401, 85
      %s403 = sshrl.u32 %s402, 1
      %s404 = sor.u32 %s402, %s403
      %s405 = sand.u32 51, %s404
      %s406 = sshrl.u32 %s405, 2
      %s407 = sor.u32 %s405, %s406
      %s408 = sand.u32 15, %s407
      %v409 = vld [vmem:[%s399] sm:%s408]
      %v410 = vunpack.c.l.bf16 %v409
      %v411 = vunpack.c.h.bf16 %v409
      %v412 = vlaneseq
      %v413 = vand.u32 %v412, 127
      %vm415 = vcmp.lt.s32.totalorder %v413, 32
      %v416 = vsel %vm415, %v410, %v13
      %s417 = scalar_lea.vmem [#allocation12], 24
      %v418 = vpack.c.bf16 0.0, %v416
      %s420 = ssub.s32 16, 1
      %421 = vst [vmem:[%s417] sm:%s420] %v418
      %s422 = scalar_lea.vmem %s1, 28
      %s424 = sor.u32 255, 127
      %s425 = sand.u32 %s424, 85
      %s426 = sshrl.u32 %s425, 1
      %s427 = sor.u32 %s425, %s426
      %s428 = sand.u32 51, %s427
      %s429 = sshrl.u32 %s428, 2
      %s430 = sor.u32 %s428, %s429
      %s431 = sand.u32 15, %s430
      %v432 = vld [vmem:[%s422] sm:%s431]
      %v433 = vunpack.c.l.bf16 %v432
      %v434 = vunpack.c.h.bf16 %v432
      %v435 = vlaneseq
      %v436 = vand.u32 %v435, 127
      %vm438 = vcmp.lt.s32.totalorder %v436, 32
      %v439 = vsel %vm438, %v433, %v13
      %s440 = scalar_lea.vmem [#allocation12], 28
      %v441 = vpack.c.bf16 0.0, %v439
      %s443 = ssub.s32 16, 1
      %444 = vst [vmem:[%s440] sm:%s443] %v441
      %s445 = scalar_lea.vmem %s1, 32
      %s447 = sor.u32 255, 127
      %s448 = sand.u32 %s447, 85
      %s449 = sshrl.u32 %s448, 1
      %s450 = sor.u32 %s448, %s449
      %s451 = sand.u32 51, %s450
      %s452 = sshrl.u32 %s451, 2
      %s453 = sor.u32 %s451, %s452
      %s454 = sand.u32 15, %s453
      %v455 = vld [vmem:[%s445] sm:%s454]
      %v456 = vunpack.c.l.bf16 %v455
      %v457 = vunpack.c.h.bf16 %v455
      %v458 = vlaneseq
      %v459 = vand.u32 %v458, 127
      %vm461 = vcmp.lt.s32.totalorder %v459, 32
      %v462 = vsel %vm461, %v456, %v13
      %s463 = scalar_lea.vmem [#allocation12], 32
      %v464 = vpack.c.bf16 0.0, %v462
      %s466 = ssub.s32 16, 1
      %467 = vst [vmem:[%s463] sm:%s466] %v464
      %s468 = scalar_lea.vmem %s1, 36
      %s470 = sor.u32 255, 127
      %s471 = sand.u32 %s470, 85
      %s472 = sshrl.u32 %s471, 1
      %s473 = sor.u32 %s471, %s472
      %s474 = sand.u32 51, %s473
      %s475 = sshrl.u32 %s474, 2
      %s476 = sor.u32 %s474, %s475
      %s477 = sand.u32 15, %s476
      %v478 = vld [vmem:[%s468] sm:%s477]
      %v479 = vunpack.c.l.bf16 %v478
      %v480 = vunpack.c.h.bf16 %v478
      %v481 = vlaneseq
      %v482 = vand.u32 %v481, 127
      %vm484 = vcmp.lt.s32.totalorder %v482, 32
      %v485 = vsel %vm484, %v479, %v13
      %s486 = scalar_lea.vmem [#allocation12], 36
      %v487 = vpack.c.bf16 0.0, %v485
      %s489 = ssub.s32 16, 1
      %490 = vst [vmem:[%s486] sm:%s489] %v487
      %s491 = scalar_lea.vmem %s1, 40
      %s493 = sor.u32 255, 127
      %s494 = sand.u32 %s493, 85
      %s495 = sshrl.u32 %s494, 1
      %s496 = sor.u32 %s494, %s495
      %s497 = sand.u32 51, %s496
      %s498 = sshrl.u32 %s497, 2
      %s499 = sor.u32 %s497, %s498
      %s500 = sand.u32 15, %s499
      %v501 = vld [vmem:[%s491] sm:%s500]
      %v502 = vunpack.c.l.bf16 %v501
      %v503 = vunpack.c.h.bf16 %v501
      %v504 = vlaneseq
      %v505 = vand.u32 %v504, 127
      %vm507 = vcmp.lt.s32.totalorder %v505, 32
      %v508 = vsel %vm507, %v502, %v13
      %s509 = scalar_lea.vmem [#allocation12], 40
      %v510 = vpack.c.bf16 0.0, %v508
      %s512 = ssub.s32 16, 1
      %513 = vst [vmem:[%s509] sm:%s512] %v510
      %s514 = scalar_lea.vmem %s1, 44
      %s516 = sor.u32 255, 127
      %s517 = sand.u32 %s516, 85
      %s518 = sshrl.u32 %s517, 1
      %s519 = sor.u32 %s517, %s518
      %s520 = sand.u32 51, %s519
      %s521 = sshrl.u32 %s520, 2
      %s522 = sor.u32 %s520, %s521
      %s523 = sand.u32 15, %s522
      %v524 = vld [vmem:[%s514] sm:%s523]
      %v525 = vunpack.c.l.bf16 %v524
      %v526 = vunpack.c.h.bf16 %v524
      %v527 = vlaneseq
      %v528 = vand.u32 %v527, 127
      %vm530 = vcmp.lt.s32.totalorder %v528, 32
      %v531 = vsel %vm530, %v525, %v13
      %s532 = scalar_lea.vmem [#allocation12], 44
      %v533 = vpack.c.bf16 0.0, %v531
      %s535 = ssub.s32 16, 1
      %536 = vst [vmem:[%s532] sm:%s535] %v533
      %s537 = scalar_lea.vmem %s1, 48
      %s539 = sor.u32 255, 127
      %s540 = sand.u32 %s539, 85
      %s541 = sshrl.u32 %s540, 1
      %s542 = sor.u32 %s540, %s541
      %s543 = sand.u32 51, %s542
      %s544 = sshrl.u32 %s543, 2
      %s545 = sor.u32 %s543, %s544
      %s546 = sand.u32 15, %s545
      %v547 = vld [vmem:[%s537] sm:%s546]
      %v548 = vunpack.c.l.bf16 %v547
      %v549 = vunpack.c.h.bf16 %v547
      %v550 = vlaneseq
      %v551 = vand.u32 %v550, 127
      %vm553 = vcmp.lt.s32.totalorder %v551, 32
      %v554 = vsel %vm553, %v548, %v13
      %s555 = scalar_lea.vmem [#allocation12], 48
      %v556 = vpack.c.bf16 0.0, %v554
      %s558 = ssub.s32 16, 1
      %559 = vst [vmem:[%s555] sm:%s558] %v556
      %s560 = scalar_lea.vmem %s1, 52
      %s562 = sor.u32 255, 127
      %s563 = sand.u32 %s562, 85
      %s564 = sshrl.u32 %s563, 1
      %s565 = sor.u32 %s563, %s564
      %s566 = sand.u32 51, %s565
      %s567 = sshrl.u32 %s566, 2
      %s568 = sor.u32 %s566, %s567
      %s569 = sand.u32 15, %s568
      %v570 = vld [vmem:[%s560] sm:%s569]
      %v571 = vunpack.c.l.bf16 %v570
      %v572 = vunpack.c.h.bf16 %v570
      %v573 = vlaneseq
      %v574 = vand.u32 %v573, 127
      %vm576 = vcmp.lt.s32.totalorder %v574, 32
      %v577 = vsel %vm576, %v571, %v13
      %s578 = scalar_lea.vmem [#allocation12], 52
      %v579 = vpack.c.bf16 0.0, %v577
      %s581 = ssub.s32 16, 1
      %582 = vst [vmem:[%s578] sm:%s581] %v579
      %s583 = scalar_lea.vmem %s1, 56
      %s585 = sor.u32 255, 127
      %s586 = sand.u32 %s585, 85
      %s587 = sshrl.u32 %s586, 1
      %s588 = sor.u32 %s586, %s587
      %s589 = sand.u32 51, %s588
      %s590 = sshrl.u32 %s589, 2
      %s591 = sor.u32 %s589, %s590
      %s592 = sand.u32 15, %s591
      %v593 = vld [vmem:[%s583] sm:%s592]
      %v594 = vunpack.c.l.bf16 %v593
      %v595 = vunpack.c.h.bf16 %v593
      %v596 = vlaneseq
      %v597 = vand.u32 %v596, 127
      %vm599 = vcmp.lt.s32.totalorder %v597, 32
      %v600 = vsel %vm599, %v594, %v13
      %s601 = scalar_lea.vmem [#allocation12], 56
      %v602 = vpack.c.bf16 0.0, %v600
      %s604 = ssub.s32 16, 1
      %605 = vst [vmem:[%s601] sm:%s604] %v602
      %s606 = scalar_lea.vmem %s1, 60
      %s608 = sor.u32 255, 127
      %s609 = sand.u32 %s608, 85
      %s610 = sshrl.u32 %s609, 1
      %s611 = sor.u32 %s609, %s610
      %s612 = sand.u32 51, %s611
      %s613 = sshrl.u32 %s612, 2
      %s614 = sor.u32 %s612, %s613
      %s615 = sand.u32 15, %s614
      %v616 = vld [vmem:[%s606] sm:%s615]
      %v617 = vunpack.c.l.bf16 %v616
      %v618 = vunpack.c.h.bf16 %v616
      %v619 = vlaneseq
      %v620 = vand.u32 %v619, 127
      %vm622 = vcmp.lt.s32.totalorder %v620, 32
      %v623 = vsel %vm622, %v617, %v13
      %s624 = scalar_lea.vmem [#allocation12], 60
      %v625 = vpack.c.bf16 0.0, %v623
      %s627 = ssub.s32 16, 1
      %628 = vst [vmem:[%s624] sm:%s627] %v625
      %s629 = scalar_lea.vmem %s1, 64
      %s631 = sor.u32 255, 127
      %s632 = sand.u32 %s631, 85
      %s633 = sshrl.u32 %s632, 1
      %s634 = sor.u32 %s632, %s633
      %s635 = sand.u32 51, %s634
      %s636 = sshrl.u32 %s635, 2
      %s637 = sor.u32 %s635, %s636
      %s638 = sand.u32 15, %s637
      %v639 = vld [vmem:[%s629] sm:%s638]
      %v640 = vunpack.c.l.bf16 %v639
      %v641 = vunpack.c.h.bf16 %v639
      %v642 = vlaneseq
      %v643 = vand.u32 %v642, 127
      %vm645 = vcmp.lt.s32.totalorder %v643, 32
      %v646 = vsel %vm645, %v640, %v13
      %s647 = scalar_lea.vmem [#allocation12], 64
      %v648 = vpack.c.bf16 0.0, %v646
      %s650 = ssub.s32 16, 1
      %651 = vst [vmem:[%s647] sm:%s650] %v648
      %s652 = scalar_lea.vmem %s1, 68
      %s654 = sor.u32 255, 127
      %s655 = sand.u32 %s654, 85
      %s656 = sshrl.u32 %s655, 1
      %s657 = sor.u32 %s655, %s656
      %s658 = sand.u32 51, %s657
      %s659 = sshrl.u32 %s658, 2
      %s660 = sor.u32 %s658, %s659
      %s661 = sand.u32 15, %s660
      %v662 = vld [vmem:[%s652] sm:%s661]
      %v663 = vunpack.c.l.bf16 %v662
      %v664 = vunpack.c.h.bf16 %v662
      %v665 = vlaneseq
      %v666 = vand.u32 %v665, 127
      %vm668 = vcmp.lt.s32.totalorder %v666, 32
      %v669 = vsel %vm668, %v663, %v13
      %s670 = scalar_lea.vmem [#allocation12], 68
      %v671 = vpack.c.bf16 0.0, %v669
      %s673 = ssub.s32 16, 1
      %674 = vst [vmem:[%s670] sm:%s673] %v671
      %v675 = vld [vmem:[%s6] sm:$0x1]
      %v676 = vlaneseq
      %v677 = vshrl.u32 %v676, 7
      %vm679 = vcmp.lt.s32.totalorder %v677, 1
      %v680 = vsel %vm679, %v675, %v17
      %v681 = vlaneseq
      %v682 = vand.u32 %v681, 127
      %vm684 = vcmp.lt.s32.totalorder %v682, 32
      %v685 = vsel %vm684, %v680, %v17
      %s687 = ssub.s32 2, 1
      %688 = vst [vmem:[#allocation13] sm:%s687] %v685
      %s689 = smul.addr %s25, 2
      %s690 = smul.addr %s689, 8
      %v691 = vld [vmem:[%s254] sm:$0xff]
      %v692 = vld [vmem:[%s5] ss:$0 sm:$0xff]
      %v694 = vshra.s32 %v692, 0
      %v695 = vand.u32 %v694, 255
      %696 = xla_tuple %v695, %v691, %v18
      %697 = xla_tuple %696
      %vm698 = vcmp.ne.s32.totalorder %v695, 0
      %v699 = vsel %vm698, %v691, %v18
      %700 = xla_tuple %v699
      %s702 = ssub.s32 256, 1
      %703 = vst [vmem:[#allocation14] sm:%s702] %v699
      %s704 = scalar_lea.vmem %s254, 8
      %v705 = vld [vmem:[%s704] sm:$0xff]
      %706 = xla_tuple %v695, %v705, %v18
      %707 = xla_tuple %706
      %vm708 = vcmp.ne.s32.totalorder %v695, 0
      %v709 = vsel %vm708, %v705, %v18
      %710 = xla_tuple %v709
      %s711 = scalar_lea.vmem [#allocation14], 8
      %s713 = ssub.s32 256, 1
      %714 = vst [vmem:[%s711] sm:%s713] %v709
      %v716 = vld [vmem:[%s248] sm:$0xff]
      %v717 = vld [vmem:[%s248 + $0x8] sm:$0xff]
      %v718 = vld [vmem:[#allocation12] sm:$0xf]
      %v719 = vld [vmem:[#allocation12 + $0x4] sm:$0xf]
      %v720 = vld [vmem:[#allocation12 + $0x8] sm:$0xf]
      %v721 = vld [vmem:[#allocation12 + $0xc] sm:$0xf]
      %v722 = vld [vmem:[#allocation12 + $0x10] sm:$0xf]
      %v723 = vld [vmem:[#allocation12 + $0x14] sm:$0xf]
      %v724 = vld [vmem:[#allocation12 + $0x18] sm:$0xf]
      %v725 = vld [vmem:[#allocation12 + $0x1c] sm:$0xf]
      %v726 = vld [vmem:[#allocation12 + $0x20] sm:$0xf]
      %v727 = vld [vmem:[#allocation12 + $0x24] sm:$0xf]
      %v728 = vld [vmem:[#allocation12 + $0x28] sm:$0xf]
      %v729 = vld [vmem:[#allocation12 + $0x2c] sm:$0xf]
      %v730 = vld [vmem:[#allocation12 + $0x30] sm:$0xf]
      %v731 = vld [vmem:[#allocation12 + $0x34] sm:$0xf]
      %v732 = vld [vmem:[#allocation12 + $0x38] sm:$0xf]
      %v733 = vld [vmem:[#allocation12 + $0x3c] sm:$0xf]
      %v734 = vld [vmem:[#allocation12 + $0x40] sm:$0xf]
      %v735 = vld [vmem:[#allocation12 + $0x44] sm:$0xf]
      %v736 = vld [vmem:[#allocation13] sm:$0x1]
      %v737 = vld [vmem:[#allocation14] sm:$0xff]
      %v738 = vld [vmem:[#allocation14 + $0x8] sm:$0xff]
      %v740 = vlaneseq
      %v741 = vshrl.u32 %v740, 7
      %v742 = vsub.s32 0, %v741
      %v743 = vrot.slane %v736, %v742
      %v747 = vunpack.c.l.b16 %v716
      %v748 = vunpack.c.h.b16 %v716
      %v749 = vunpack.c.l.b16 %v717
      %v750 = vunpack.c.h.b16 %v717
      %v751 = vpack.c.b16 %v749, %v747
      %v752 = vpack.c.b16 %v750, %v748
      %v772 = vunpack.c.l.b16 %v718
      %v773 = vunpack.c.l.b16 %v719
      %v774 = vunpack.c.l.b16 %v720
      %v775 = vunpack.c.l.b16 %v721
      %v776 = vunpack.c.l.b16 %v722
      %v777 = vunpack.c.l.b16 %v723
      %v778 = vunpack.c.l.b16 %v724
      %v779 = vunpack.c.l.b16 %v725
      %v780 = vunpack.c.l.b16 %v726
      %v781 = vunpack.c.l.b16 %v727
      %v782 = vunpack.c.l.b16 %v728
      %v783 = vunpack.c.l.b16 %v729
      %v784 = vunpack.c.l.b16 %v730
      %v785 = vunpack.c.l.b16 %v731
      %v786 = vunpack.c.l.b16 %v732
      %v787 = vunpack.c.l.b16 %v733
      %v788 = vunpack.c.l.b16 %v734
      %v789 = vunpack.c.l.b16 %v735
      %v790 = vpack.c.b16 %v773, %v772
      %v791 = vpack.c.b16 %v775, %v774
      %v792 = vpack.c.b16 %v777, %v776
      %v793 = vpack.c.b16 %v779, %v778
      %v794 = vpack.c.b16 %v781, %v780
      %v795 = vpack.c.b16 %v783, %v782
      %v796 = vpack.c.b16 %v785, %v784
      %v797 = vpack.c.b16 %v787, %v786
      %v798 = vpack.c.b16 %v789, %v788
      %vm808 = vcmask 130048
      %v810 = vsel %vm808, %v752, 0
      %812 = vmatprep.subr.bf16.mxu0 0
      %813 = vmatpush1.bf16.msra.mxu0 %v797
      %814 = vmatprep.subr.bf16.mxu0 0
      %815 = vmatpush1.bf16.msra.mxu0 %v796
      %816 = vmatprep.subr.bf16.mxu0 0
      %817 = vmatpush1.bf16.msra.mxu0 %v795
      %818 = vmatprep.subr.bf16.mxu0 0
      %819 = vmatpush1.bf16.msra.mxu0 %v794
      %820 = vmatprep.subr.bf16.mxu0 0
      %821 = vmatpush1.bf16.msra.mxu0 %v793
      %822 = vmatprep.subr.bf16.mxu0 0
      %823 = vmatpush1.bf16.msra.mxu0 %v792
      %824 = vmatprep.subr.bf16.mxu0 0
      %825 = vmatpush1.bf16.msra.mxu0 %v791
      %826 = vmatprep.subr.bf16.mxu0 0
      %827 = vmatpush1.bf16.msra.mxu0 %v790
      %828 = vmatprep.subr.bf16.mxu0 0
      %829 = vmatpush2.bf16.msra.mxu0 0
      %830 = vmatprep.subr.bf16.mxu0 0
      %831 = vmatpush2.bf16.msra.mxu0 0
      %832 = vmatprep.subr.bf16.mxu0 0
      %833 = vmatpush2.bf16.msra.mxu0 0
      %834 = vmatprep.subr.bf16.mxu0 0
      %835 = vmatpush2.bf16.msra.mxu0 0
      %836 = vmatprep.subr.bf16.mxu0 0
      %837 = vmatpush2.bf16.msra.mxu0 0
      %838 = vmatprep.subr.bf16.mxu0 0
      %839 = vmatpush2.bf16.msra.mxu0 0
      %840 = vmatprep.subr.bf16.mxu0 0
      %841 = vmatpush2.bf16.msra.mxu0 0
      %842 = vmatprep.subr.bf16.mxu0 0
      %843 = vmatpush2.bf16.msra.mxu0 %v798
      %844 = vmatprep.mubr.bf16.mxu0 %v810
      %845 = vmatmul.mubr.bf16.gmra.mxu0 %v751
      %v846 = vpop.f32.mrf.mxu0
      %v847 = vadd.f32 %v743, %v846
      %v848 = vpop.f32.mrf.mxu0
      %v849 = vpop.f32.mrf.mxu0
      %v850 = vadd.f32 %v743, %v849
      %v851 = vpop.f32.mrf.mxu0
      %852 = vdwg.mxu0
      %v853 = vadd.f32 %v847, %v737
      %v854 = vadd.f32 %v850, %v738
      %855 = vst [vmem:[%s261] sm:$0xff] %v853
      %856 = vst [vmem:[%s261 + $0x8] sm:$0xff] %v854
      %s857 = smul.u32 2, %s25
      %p858 = scmp.lt.s32.totalorder %s857, 3
      %s859 = scalar_select %p858, %s857, 3
      %s860 = smul.addr %s859, 8
      %s861 = scalar_lea.vmem %s7, %s860
      // Predicated region
      $region41: #{encoder_forward.24} parent=39 // pred_check
        %p862 = pneg %p158
      $region42: #{encoder_forward.24} parent=39 // pred_check_branch
        %864 = sbr.rel (%p862) target = $region44
      $region43: #{encoder_forward.24} parent=39 // pred_region
        %s865 = smul.u32 2, %s25
      $region44: #{encoder_forward.24} parent=39 // pred_fallthru
        _
    $region40: #{encoder_forward.24} parent=5 // pred_fallthru
      _
    %p866 = scmp.le.s32.totalorder 2, %s20
    // Predicated region
    $region45: #{encoder_forward.24} parent=5 // pred_check
      %p867 = pneg %p866
    $region46: #{encoder_forward.24} parent=5 // pred_check_branch
      %869 = sbr.rel (%p867) target = $region48
    $region47: #{encoder_forward.24} parent=5 // pred_region
      %s870 = ssub.s32 %s20, 2
      // Predicated region
      $region49: #{encoder_forward.24} parent=47 // pred_check
        %p871 = pneg %p164
      $region50: #{encoder_forward.24} parent=47 // pred_check_branch
        %873 = sbr.rel (%p871) target = $region52
      $region51: #{encoder_forward.24} parent=47 // pred_region
        %s874 = smul.u32 2, %s26
        %p875 = scmp.lt.s32.totalorder %s874, 3
        %s876 = scalar_select %p875, %s874, 3
        %s877 = smul.addr %s876, 8
        %s878 = scalar_lea.vmem %s7, %s877
      $region52: #{encoder_forward.24} parent=47 // pred_fallthru
        _
    $region48: #{encoder_forward.24} parent=5 // pred_fallthru
      _
  $region6: #{encoder_forward.24} parent=0 // loop_footer
    %s24 = sadd.s32 1, %s20
  $region7: #{encoder_forward.24} parent=0 // loop_footer_branch
    %19 = sbr.rel target = $region3
  $region8: #{encoder_forward.24} parent=0 // loop_exit
    _

</llo_original>
